<compile_context>
chip_gen: v7x
topology: tpu7x:2x2x1
jax: 0.10.0
libtpu: 0.0.40
codegen_flags: <defaults>
</compile_context>

<pallas_src>
import functools

import numpy as np
import jax
import jax.numpy as jnp
from jax.experimental import pallas as pl
from jax.experimental.pallas import tpu as pltpu

EPS = 1e-5   # torch.nn.InstanceNorm2d default (affine=False, biased variance)
LANE = 128


def _residual_block_kernel(x_ref, w1_ref, b1_ref, w2_ref, b2_ref, o_ref,
                           im2col_ref, *, height, width):
    _, HW, C = x_ref.shape        # C here is the lane-padded channel count
    inv_hw = 1.0 / HW
    x = x_ref[0]                  # (HW, C) f32

    # ---- per-tap zero-padding validity masks, generated in-kernel ----------
    # row = i // W, col = i % W computed without integer vector division
    # (float trick; exact for images up to ~2k x 2k, i.e. H*W < 2^22).
    i_idx = jax.lax.broadcasted_iota(jnp.int32, (HW, 1), 0)
    row = jnp.floor(
        (i_idx.astype(jnp.float32) + 0.5) * (1.0 / width)).astype(jnp.int32)
    col = i_idx - row * width
    row_ok = (row >= 1, None, row <= height - 2)    # dy = 0, 1, 2
    col_ok = (col >= 1, None, col <= width - 2)     # dx = 0, 1, 2

    def tap_cond(dy, dx):
        parts = [m for m in (row_ok[dy], col_ok[dx]) if m is not None]
        if not parts:
            return None
        return parts[0] if len(parts) == 1 else jnp.logical_and(*parts)

    conds = [[tap_cond(dy, dx) for dx in range(3)] for dy in range(3)]

    def conv3x3(src, w_ref, b_ref):
        # One MXU contraction per kernel row: the three taps of the row are
        # im2col'ed into the (HW, 3C) bf16 staging scratch and contracted
        # against the (3C, C) weight block.  3 dots + 2 accumulate adds
        # (+ 1 bias add) per conv instead of 9 dots + 8 f32 adds.
        acc = None
        for dy in range(3):
            for dx in range(3):
                s = (dy - 1) * width + (dx - 1)     # flat source offset
                # shifted[i] = src[i + s]; wrapped / out-of-image positions
                # are zeroed by the validity mask (realizes ZeroPad2d(1)).
                if s == 0:
                    shifted = src
                else:
                    shifted = pltpu.roll(src, shift=(-s) % HW, axis=0)
                cond = conds[dy][dx]
                if cond is not None:
                    shifted = jnp.where(cond, shifted, 0.0)
                im2col_ref[:, dx * C:(dx + 1) * C] = shifted.astype(jnp.bfloat16)
            part = jnp.dot(im2col_ref[...], w_ref[dy],
                           preferred_element_type=jnp.float32)
            acc = part if acc is None else acc + part
        return acc + b_ref[...]                      # (HW, C) f32

    def instance_norm(y):
        # Centered (two-pass) variance: closer to PyTorch than E[y^2]-mean^2
        # when |mean| >> std, at the same VPU/XLU cost.
        mean = jnp.sum(y, axis=0, keepdims=True) * inv_hw
        yc = y - mean
        var = jnp.sum(yc * yc, axis=0, keepdims=True) * inv_hw
        return yc * jax.lax.rsqrt(var + EPS)

    y = conv3x3(x, w1_ref, b1_ref)
    y = jnp.maximum(instance_norm(y), 0.0)           # ReLU
    y = conv3x3(y, w2_ref, b2_ref)
    y = instance_norm(y)
    o_ref[0] = (x + y).astype(o_ref.dtype)           # residual add


def _pad_lanes(a, axis, target):
    pad = target - a.shape[axis]
    if pad == 0:
        return a
    widths = [(0, 0)] * a.ndim
    widths[axis] = (0, pad)
    return jnp.pad(a, widths)


@jax.jit
def residual_block_nhwc(x_bhwc, w1, b1, w2, b2):
    """NHWC entry point: use this when chaining residual blocks so the
    NCHW<->NHWC transposes only happen once at the model boundary.

    x_bhwc: (B, H, W, C) f32.
    w*:     (3, 3, Cin, Cout) HWIO f32 (PyTorch OIHW -> permute(2, 3, 1, 0)).
    b*:     (Cout,) f32.
    """
    B, H, W, C = x_bhwc.shape
    HW = H * W
    # Lane-dense layout: pad C to a multiple of 128 so every vreg lane and
    # output store is dense.  Zero-padded channels stay exactly zero through
    # conv/IN/ReLU/residual and are sliced off below.  No-op for C % 128 == 0.
    Cp = ((C + LANE - 1) // LANE) * LANE

    x = x_bhwc.reshape(B, HW, C).astype(jnp.float32)
    x = _pad_lanes(x, 2, Cp)

    def prep_w(w):
        w = _pad_lanes(_pad_lanes(w.astype(jnp.float32), 2, Cp), 3, Cp)
        # (3, 3, Cp, Cp) -> per-kernel-row blocks (3, 3*Cp, Cp), bf16 for MXU.
        return w.reshape(3, 3 * Cp, Cp).astype(jnp.bfloat16)

    def prep_b(b):
        return _pad_lanes(b.reshape(1, C).astype(jnp.float32), 1, Cp)

    w1m, w2m = prep_w(w1), prep_w(w2)
    b1m, b2m = prep_b(b1), prep_b(b2)

    kernel = functools.partial(_residual_block_kernel, height=H, width=W)

    out = pl.pallas_call(
        kernel,
        out_shape=jax.ShapeDtypeStruct((B, HW, Cp), jnp.float32),
        grid_spec=pltpu.PrefetchScalarGridSpec(
            num_scalar_prefetch=0,
            grid=(B,),
            in_specs=[
                pl.BlockSpec((1, HW, Cp), lambda b: (b, 0, 0)),      # x
                pl.BlockSpec((3, 3 * Cp, Cp), lambda b: (0, 0, 0)),  # w1 (bf16)
                pl.BlockSpec((1, Cp), lambda b: (0, 0)),             # b1
                pl.BlockSpec((3, 3 * Cp, Cp), lambda b: (0, 0, 0)),  # w2 (bf16)
                pl.BlockSpec((1, Cp), lambda b: (0, 0)),             # b2
            ],
            out_specs=pl.BlockSpec((1, HW, Cp), lambda b: (b, 0, 0)),
            scratch_shapes=[pltpu.VMEM((HW, 3 * Cp), jnp.bfloat16)],  # im2col
        ),
        input_output_aliases={0: 0},   # x block and out block share HBM
        compiler_params=pltpu.CompilerParams(
            dimension_semantics=("parallel",),
            vmem_limit_bytes=48 * 1024 * 1024),
    )(x, w1m, b1m, w2m, b2m)

    return out[:, :, :C].reshape(B, H, W, C)


@jax.jit
def residual_block(x_nchw, w1, b1, w2, b2):
    """PyTorch-layout boundary wrapper: (B, C, H, W) in / out."""
    x_bhwc = jnp.transpose(x_nchw, (0, 2, 3, 1))
    y = residual_block_nhwc(x_bhwc, w1, b1, w2, b2)
    return jnp.transpose(y, (0, 3, 1, 2))


def _reference(x_nchw, w1, b1, w2, b2):
    """Pure-JAX reference of the PyTorch forward (NCHW in/out)."""
    def conv(x, w, b):
        return jax.lax.conv_general_dilated(
            x, w, window_strides=(1, 1), padding=((1, 1), (1, 1)),
            dimension_numbers=("NHWC", "HWIO", "NHWC")) + b

    def inorm(x):
        m = x.mean(axis=(1, 2), keepdims=True)
        v = ((x - m) ** 2).mean(axis=(1, 2), keepdims=True)
        return (x - m) / jnp.sqrt(v + EPS)

    xh = jnp.transpose(x_nchw, (0, 2, 3, 1))
    y = jax.nn.relu(inorm(conv(xh, w1, b1)))
    y = inorm(conv(y, w2, b2))
    return jnp.transpose(xh + y, (0, 3, 1, 2))


if __name__ == "__main__":
    B, C, H, W = 2, 4, 16, 16
    key = jax.random.PRNGKey(0)
    kx, k1, k2, k3, k4 = jax.random.split(key, 5)

    x = jax.random.normal(kx, (B, C, H, W), jnp.float32)
    scale = 1.0 / np.sqrt(9 * C)                      # fan-in style init
    w1 = jax.random.normal(k1, (3, 3, C, C), jnp.float32) * scale
    b1 = jax.random.normal(k2, (C,), jnp.float32) * 0.1
    w2 = jax.random.normal(k3, (3, 3, C, C), jnp.float32) * scale
    b2 = jax.random.normal(k4, (C,), jnp.float32) * 0.1

    out = jax.block_until_ready(residual_block(x, w1, b1, w2, b2))
    ref = jax.block_until_ready(_reference(x, w1, b1, w2, b2))

    assert out.shape == x.shape and out.dtype == jnp.float32
    max_err = float(jnp.max(jnp.abs(out - ref)))
    # bf16 matmul operands with f32 accumulation: per-element tolerance 5e-2.
    assert max_err < 5e-2, f"mismatch vs reference: max abs err {max_err}"
    print("KERNEL_OK")
</pallas_src>

<mosaic_0001>
module attributes {stable_mosaic.version = 11 : i64} {
  func.func @_residual_block_kernel(%arg0: i32, %arg1: memref<1x256x128xf32, #tpu.memory_space<vmem>>, %arg2: memref<3x384x128xbf16, #tpu.memory_space<vmem>>, %arg3: memref<1x128xf32, #tpu.memory_space<vmem>>, %arg4: memref<3x384x128xbf16, #tpu.memory_space<vmem>>, %arg5: memref<1x128xf32, #tpu.memory_space<vmem>>, %arg6: memref<1x256x128xf32, #tpu.memory_space<vmem>>, %arg7: memref<256x384xbf16, #tpu.memory_space<vmem>>) attributes {dimension_semantics = [#tpu.dimension_semantics<parallel>], iteration_bounds = array<i64: 2>, scalar_prefetch = 0 : i64, scratch_operands = 1 : i64, tpu.core_type = #tpu.core_type<tc>, window_params = [{transform_indices = @transform_0, window_bounds = array<i64: 1, 256, 128>}, {pipeline_mode = #tpu.pipeline_mode<synchronous>, transform_indices = @transform_1, window_bounds = array<i64: 3, 384, 128>}, {pipeline_mode = #tpu.pipeline_mode<synchronous>, transform_indices = @transform_2, window_bounds = array<i64: 1, 128>}, {pipeline_mode = #tpu.pipeline_mode<synchronous>, transform_indices = @transform_3, window_bounds = array<i64: 3, 384, 128>}, {pipeline_mode = #tpu.pipeline_mode<synchronous>, transform_indices = @transform_4, window_bounds = array<i64: 1, 128>}, {transform_indices = @transform_5, window_bounds = array<i64: 1, 256, 128>}]} {
    %c0 = arith.constant 0 : index
    %c0_0 = arith.constant 0 : index
    %c0_1 = arith.constant 0 : index
    %0 = vector.load %arg1[%c0, %c0_0, %c0_1] : memref<1x256x128xf32, #tpu.memory_space<vmem>>, vector<1x256x128xf32>
    %1 = vector.shape_cast %0 : vector<1x256x128xf32> to vector<256x128xf32>
    %2 = tpu.iota {dimensions = array<i32: 0>} : vector<256x1xi32>
    %3 = arith.sitofp %2 : vector<256x1xi32> to vector<256x1xf32>
    %cst = arith.constant 5.000000e-01 : f32
    %4 = vector.broadcast %cst : f32 to vector<256x1xf32>
    %5 = arith.addf %3, %4 : vector<256x1xf32>
    %cst_2 = arith.constant 6.250000e-02 : f32
    %6 = vector.broadcast %cst_2 : f32 to vector<256x1xf32>
    %7 = arith.mulf %5, %6 : vector<256x1xf32>
    %8 = math.floor %7 : vector<256x1xf32>
    %9 = arith.fptosi %8 : vector<256x1xf32> to vector<256x1xi32>
    %c16_i32 = arith.constant 16 : i32
    %10 = vector.broadcast %c16_i32 : i32 to vector<256x1xi32>
    %11 = arith.muli %9, %10 : vector<256x1xi32>
    %12 = arith.subi %2, %11 : vector<256x1xi32>
    %c1_i32 = arith.constant 1 : i32
    %13 = vector.broadcast %c1_i32 : i32 to vector<256x1xi32>
    %14 = arith.cmpi sge, %9, %13 : vector<256x1xi32>
    %c14_i32 = arith.constant 14 : i32
    %15 = vector.broadcast %c14_i32 : i32 to vector<256x1xi32>
    %16 = arith.cmpi sle, %9, %15 : vector<256x1xi32>
    %c1_i32_3 = arith.constant 1 : i32
    %17 = vector.broadcast %c1_i32_3 : i32 to vector<256x1xi32>
    %18 = arith.cmpi sge, %12, %17 : vector<256x1xi32>
    %c14_i32_4 = arith.constant 14 : i32
    %19 = vector.broadcast %c14_i32_4 : i32 to vector<256x1xi32>
    %20 = arith.cmpi sle, %12, %19 : vector<256x1xi32>
    %21 = arith.andi %14, %18 : vector<256x1xi1>
    %22 = arith.andi %14, %20 : vector<256x1xi1>
    %23 = arith.andi %16, %18 : vector<256x1xi1>
    %24 = arith.andi %16, %20 : vector<256x1xi1>
    %c17_i32 = arith.constant 17 : i32
    %25 = tpu.dynamic_rotate %1 by %c17_i32 dim 0 : vector<256x128xf32>, i32 -> vector<256x128xf32>
    %cst_5 = arith.constant 0.000000e+00 : f32
    %26 = vector.shape_cast %21 : vector<256x1xi1> to vector<256x1xi1>
    %27 = vector.broadcast %26 : vector<256x1xi1> to vector<256x128xi1>
    %28 = vector.broadcast %cst_5 : f32 to vector<256x128xf32>
    %29 = arith.select %27, %25, %28 : vector<256x128xi1>, vector<256x128xf32>
    %30 = arith.truncf %29 : vector<256x128xf32> to vector<256x128xbf16>
    %c0_6 = arith.constant 0 : index
    %c0_7 = arith.constant 0 : index
    %31 = vector.load %arg7[%c0_6, %c0_7] : memref<256x384xbf16, #tpu.memory_space<vmem>>, vector<256x128xbf16>
    tpu.vector_store %arg7[%c0_6, %c0_7], %30 {strides = array<i32>} : memref<256x384xbf16, #tpu.memory_space<vmem>>, vector<256x128xbf16>,
    %c16_i32_8 = arith.constant 16 : i32
    %32 = tpu.dynamic_rotate %1 by %c16_i32_8 dim 0 : vector<256x128xf32>, i32 -> vector<256x128xf32>
    %cst_9 = arith.constant 0.000000e+00 : f32
    %33 = vector.shape_cast %14 : vector<256x1xi1> to vector<256x1xi1>
    %34 = vector.broadcast %33 : vector<256x1xi1> to vector<256x128xi1>
    %35 = vector.broadcast %cst_9 : f32 to vector<256x128xf32>
    %36 = arith.select %34, %32, %35 : vector<256x128xi1>, vector<256x128xf32>
    %37 = arith.truncf %36 : vector<256x128xf32> to vector<256x128xbf16>
    %c0_10 = arith.constant 0 : index
    %c128 = arith.constant 128 : index
    %38 = vector.load %arg7[%c0_10, %c128] : memref<256x384xbf16, #tpu.memory_space<vmem>>, vector<256x128xbf16>
    tpu.vector_store %arg7[%c0_10, %c128], %37 {strides = array<i32>} : memref<256x384xbf16, #tpu.memory_space<vmem>>, vector<256x128xbf16>,
    %c15_i32 = arith.constant 15 : i32
    %39 = tpu.dynamic_rotate %1 by %c15_i32 dim 0 : vector<256x128xf32>, i32 -> vector<256x128xf32>
    %cst_11 = arith.constant 0.000000e+00 : f32
    %40 = vector.shape_cast %22 : vector<256x1xi1> to vector<256x1xi1>
    %41 = vector.broadcast %40 : vector<256x1xi1> to vector<256x128xi1>
    %42 = vector.broadcast %cst_11 : f32 to vector<256x128xf32>
    %43 = arith.select %41, %39, %42 : vector<256x128xi1>, vector<256x128xf32>
    %44 = arith.truncf %43 : vector<256x128xf32> to vector<256x128xbf16>
    %c0_12 = arith.constant 0 : index
    %c256 = arith.constant 256 : index
    %45 = vector.load %arg7[%c0_12, %c256] : memref<256x384xbf16, #tpu.memory_space<vmem>>, vector<256x128xbf16>
    tpu.vector_store %arg7[%c0_12, %c256], %44 {strides = array<i32>} : memref<256x384xbf16, #tpu.memory_space<vmem>>, vector<256x128xbf16>,
    %c0_13 = arith.constant 0 : index
    %c0_14 = arith.constant 0 : index
    %46 = vector.load %arg7[%c0_13, %c0_14] : memref<256x384xbf16, #tpu.memory_space<vmem>>, vector<256x384xbf16>
    %c0_15 = arith.constant 0 : index
    %c0_16 = arith.constant 0 : index
    %c0_17 = arith.constant 0 : index
    %47 = vector.load %arg2[%c0_15, %c0_16, %c0_17] : memref<3x384x128xbf16, #tpu.memory_space<vmem>>, vector<1x384x128xbf16>
    %48 = vector.shape_cast %47 : vector<1x384x128xbf16> to vector<384x128xbf16>
    %cst_18 = arith.constant dense<0.000000e+00> : vector<256x128xf32>
    %49 = tpu.matmul %46, %48, %cst_18 {dimension_numbers = #tpu.dot_dimension_numbers<[1], [0], [0], [1], [0, 0, 1, 1], [], []>} : vector<256x384xbf16>, vector<384x128xbf16>, vector<256x128xf32> -> vector<256x128xf32>
    %c1_i32_19 = arith.constant 1 : i32
    %50 = tpu.dynamic_rotate %1 by %c1_i32_19 dim 0 : vector<256x128xf32>, i32 -> vector<256x128xf32>
    %cst_20 = arith.constant 0.000000e+00 : f32
    %51 = vector.shape_cast %18 : vector<256x1xi1> to vector<256x1xi1>
    %52 = vector.broadcast %51 : vector<256x1xi1> to vector<256x128xi1>
    %53 = vector.broadcast %cst_20 : f32 to vector<256x128xf32>
    %54 = arith.select %52, %50, %53 : vector<256x128xi1>, vector<256x128xf32>
    %55 = arith.truncf %54 : vector<256x128xf32> to vector<256x128xbf16>
    %c0_21 = arith.constant 0 : index
    %c0_22 = arith.constant 0 : index
    %56 = vector.load %arg7[%c0_21, %c0_22] : memref<256x384xbf16, #tpu.memory_space<vmem>>, vector<256x128xbf16>
    tpu.vector_store %arg7[%c0_21, %c0_22], %55 {strides = array<i32>} : memref<256x384xbf16, #tpu.memory_space<vmem>>, vector<256x128xbf16>,
    %57 = arith.truncf %1 : vector<256x128xf32> to vector<256x128xbf16>
    %c0_23 = arith.constant 0 : index
    %c128_24 = arith.constant 128 : index
    %58 = vector.load %arg7[%c0_23, %c128_24] : memref<256x384xbf16, #tpu.memory_space<vmem>>, vector<256x128xbf16>
    tpu.vector_store %arg7[%c0_23, %c128_24], %57 {strides = array<i32>} : memref<256x384xbf16, #tpu.memory_space<vmem>>, vector<256x128xbf16>,
    %c255_i32 = arith.constant 255 : i32
    %59 = tpu.dynamic_rotate %1 by %c255_i32 dim 0 : vector<256x128xf32>, i32 -> vector<256x128xf32>
    %cst_25 = arith.constant 0.000000e+00 : f32
    %60 = vector.shape_cast %20 : vector<256x1xi1> to vector<256x1xi1>
    %61 = vector.broadcast %60 : vector<256x1xi1> to vector<256x128xi1>
    %62 = vector.broadcast %cst_25 : f32 to vector<256x128xf32>
    %63 = arith.select %61, %59, %62 : vector<256x128xi1>, vector<256x128xf32>
    %64 = arith.truncf %63 : vector<256x128xf32> to vector<256x128xbf16>
    %c0_26 = arith.constant 0 : index
    %c256_27 = arith.constant 256 : index
    %65 = vector.load %arg7[%c0_26, %c256_27] : memref<256x384xbf16, #tpu.memory_space<vmem>>, vector<256x128xbf16>
    tpu.vector_store %arg7[%c0_26, %c256_27], %64 {strides = array<i32>} : memref<256x384xbf16, #tpu.memory_space<vmem>>, vector<256x128xbf16>,
    %c0_28 = arith.constant 0 : index
    %c0_29 = arith.constant 0 : index
    %66 = vector.load %arg7[%c0_28, %c0_29] : memref<256x384xbf16, #tpu.memory_space<vmem>>, vector<256x384xbf16>
    %c1 = arith.constant 1 : index
    %c0_30 = arith.constant 0 : index
    %c0_31 = arith.constant 0 : index
    %67 = vector.load %arg2[%c1, %c0_30, %c0_31] : memref<3x384x128xbf16, #tpu.memory_space<vmem>>, vector<1x384x128xbf16>
    %68 = vector.shape_cast %67 : vector<1x384x128xbf16> to vector<384x128xbf16>
    %cst_32 = arith.constant dense<0.000000e+00> : vector<256x128xf32>
    %69 = tpu.matmul %66, %68, %cst_32 {dimension_numbers = #tpu.dot_dimension_numbers<[1], [0], [0], [1], [0, 0, 1, 1], [], []>} : vector<256x384xbf16>, vector<384x128xbf16>, vector<256x128xf32> -> vector<256x128xf32>
    %70 = arith.addf %49, %69 : vector<256x128xf32>
    %c241_i32 = arith.constant 241 : i32
    %71 = tpu.dynamic_rotate %1 by %c241_i32 dim 0 : vector<256x128xf32>, i32 -> vector<256x128xf32>
    %cst_33 = arith.constant 0.000000e+00 : f32
    %72 = vector.shape_cast %23 : vector<256x1xi1> to vector<256x1xi1>
    %73 = vector.broadcast %72 : vector<256x1xi1> to vector<256x128xi1>
    %74 = vector.broadcast %cst_33 : f32 to vector<256x128xf32>
    %75 = arith.select %73, %71, %74 : vector<256x128xi1>, vector<256x128xf32>
    %76 = arith.truncf %75 : vector<256x128xf32> to vector<256x128xbf16>
    %c0_34 = arith.constant 0 : index
    %c0_35 = arith.constant 0 : index
    %77 = vector.load %arg7[%c0_34, %c0_35] : memref<256x384xbf16, #tpu.memory_space<vmem>>, vector<256x128xbf16>
    tpu.vector_store %arg7[%c0_34, %c0_35], %76 {strides = array<i32>} : memref<256x384xbf16, #tpu.memory_space<vmem>>, vector<256x128xbf16>,
    %c240_i32 = arith.constant 240 : i32
    %78 = tpu.dynamic_rotate %1 by %c240_i32 dim 0 : vector<256x128xf32>, i32 -> vector<256x128xf32>
    %cst_36 = arith.constant 0.000000e+00 : f32
    %79 = vector.shape_cast %16 : vector<256x1xi1> to vector<256x1xi1>
    %80 = vector.broadcast %79 : vector<256x1xi1> to vector<256x128xi1>
    %81 = vector.broadcast %cst_36 : f32 to vector<256x128xf32>
    %82 = arith.select %80, %78, %81 : vector<256x128xi1>, vector<256x128xf32>
    %83 = arith.truncf %82 : vector<256x128xf32> to vector<256x128xbf16>
    %c0_37 = arith.constant 0 : index
    %c128_38 = arith.constant 128 : index
    %84 = vector.load %arg7[%c0_37, %c128_38] : memref<256x384xbf16, #tpu.memory_space<vmem>>, vector<256x128xbf16>
    tpu.vector_store %arg7[%c0_37, %c128_38], %83 {strides = array<i32>} : memref<256x384xbf16, #tpu.memory_space<vmem>>, vector<256x128xbf16>,
    %c239_i32 = arith.constant 239 : i32
    %85 = tpu.dynamic_rotate %1 by %c239_i32 dim 0 : vector<256x128xf32>, i32 -> vector<256x128xf32>
    %cst_39 = arith.constant 0.000000e+00 : f32
    %86 = vector.shape_cast %24 : vector<256x1xi1> to vector<256x1xi1>
    %87 = vector.broadcast %86 : vector<256x1xi1> to vector<256x128xi1>
    %88 = vector.broadcast %cst_39 : f32 to vector<256x128xf32>
    %89 = arith.select %87, %85, %88 : vector<256x128xi1>, vector<256x128xf32>
    %90 = arith.truncf %89 : vector<256x128xf32> to vector<256x128xbf16>
    %c0_40 = arith.constant 0 : index
    %c256_41 = arith.constant 256 : index
    %91 = vector.load %arg7[%c0_40, %c256_41] : memref<256x384xbf16, #tpu.memory_space<vmem>>, vector<256x128xbf16>
    tpu.vector_store %arg7[%c0_40, %c256_41], %90 {strides = array<i32>} : memref<256x384xbf16, #tpu.memory_space<vmem>>, vector<256x128xbf16>,
    %c0_42 = arith.constant 0 : index
    %c0_43 = arith.constant 0 : index
    %92 = vector.load %arg7[%c0_42, %c0_43] : memref<256x384xbf16, #tpu.memory_space<vmem>>, vector<256x384xbf16>
    %c2 = arith.constant 2 : index
    %c0_44 = arith.constant 0 : index
    %c0_45 = arith.constant 0 : index
    %93 = vector.load %arg2[%c2, %c0_44, %c0_45] : memref<3x384x128xbf16, #tpu.memory_space<vmem>>, vector<1x384x128xbf16>
    %94 = vector.shape_cast %93 : vector<1x384x128xbf16> to vector<384x128xbf16>
    %cst_46 = arith.constant dense<0.000000e+00> : vector<256x128xf32>
    %95 = tpu.matmul %92, %94, %cst_46 {dimension_numbers = #tpu.dot_dimension_numbers<[1], [0], [0], [1], [0, 0, 1, 1], [], []>} : vector<256x384xbf16>, vector<384x128xbf16>, vector<256x128xf32> -> vector<256x128xf32>
    %96 = arith.addf %70, %95 : vector<256x128xf32>
    %c0_47 = arith.constant 0 : index
    %c0_48 = arith.constant 0 : index
    %97 = vector.load %arg3[%c0_47, %c0_48] : memref<1x128xf32, #tpu.memory_space<vmem>>, vector<1x128xf32>
    %98 = vector.broadcast %97 : vector<1x128xf32> to vector<256x128xf32>
    %99 = arith.addf %96, %98 : vector<256x128xf32>
    %cst_49 = arith.constant dense<0.000000e+00> : vector<128xf32>
    %100 = vector.multi_reduction <add>, %99, %cst_49 [0] : vector<256x128xf32> to vector<128xf32>
    %101 = vector.shape_cast %100 : vector<128xf32> to vector<1x128xf32>
    %cst_50 = arith.constant 3.906250e-03 : f32
    %102 = vector.broadcast %cst_50 : f32 to vector<1x128xf32>
    %103 = arith.mulf %101, %102 : vector<1x128xf32>
    %104 = vector.broadcast %103 : vector<1x128xf32> to vector<256x128xf32>
    %105 = arith.subf %99, %104 : vector<256x128xf32>
    %106 = arith.mulf %105, %105 : vector<256x128xf32>
    %cst_51 = arith.constant dense<0.000000e+00> : vector<128xf32>
    %107 = vector.multi_reduction <add>, %106, %cst_51 [0] : vector<256x128xf32> to vector<128xf32>
    %108 = vector.shape_cast %107 : vector<128xf32> to vector<1x128xf32>
    %cst_52 = arith.constant 3.906250e-03 : f32
    %109 = vector.broadcast %cst_52 : f32 to vector<1x128xf32>
    %110 = arith.mulf %108, %109 : vector<1x128xf32>
    %cst_53 = arith.constant 9.99999974E-6 : f32
    %111 = vector.broadcast %cst_53 : f32 to vector<1x128xf32>
    %112 = arith.addf %110, %111 : vector<1x128xf32>
    %113 = math.rsqrt %112 : vector<1x128xf32>
    %114 = vector.broadcast %113 : vector<1x128xf32> to vector<256x128xf32>
    %115 = arith.mulf %105, %114 : vector<256x128xf32>
    %cst_54 = arith.constant 0.000000e+00 : f32
    %116 = vector.broadcast %cst_54 : f32 to vector<256x128xf32>
    %117 = arith.maximumf %115, %116 : vector<256x128xf32>
    %c17_i32_55 = arith.constant 17 : i32
    %118 = tpu.dynamic_rotate %117 by %c17_i32_55 dim 0 : vector<256x128xf32>, i32 -> vector<256x128xf32>
    %cst_56 = arith.constant 0.000000e+00 : f32
    %119 = vector.shape_cast %21 : vector<256x1xi1> to vector<256x1xi1>
    %120 = vector.broadcast %119 : vector<256x1xi1> to vector<256x128xi1>
    %121 = vector.broadcast %cst_56 : f32 to vector<256x128xf32>
    %122 = arith.select %120, %118, %121 : vector<256x128xi1>, vector<256x128xf32>
    %123 = arith.truncf %122 : vector<256x128xf32> to vector<256x128xbf16>
    %c0_57 = arith.constant 0 : index
    %c0_58 = arith.constant 0 : index
    %124 = vector.load %arg7[%c0_57, %c0_58] : memref<256x384xbf16, #tpu.memory_space<vmem>>, vector<256x128xbf16>
    tpu.vector_store %arg7[%c0_57, %c0_58], %123 {strides = array<i32>} : memref<256x384xbf16, #tpu.memory_space<vmem>>, vector<256x128xbf16>,
    %c16_i32_59 = arith.constant 16 : i32
    %125 = tpu.dynamic_rotate %117 by %c16_i32_59 dim 0 : vector<256x128xf32>, i32 -> vector<256x128xf32>
    %cst_60 = arith.constant 0.000000e+00 : f32
    %126 = vector.shape_cast %14 : vector<256x1xi1> to vector<256x1xi1>
    %127 = vector.broadcast %126 : vector<256x1xi1> to vector<256x128xi1>
    %128 = vector.broadcast %cst_60 : f32 to vector<256x128xf32>
    %129 = arith.select %127, %125, %128 : vector<256x128xi1>, vector<256x128xf32>
    %130 = arith.truncf %129 : vector<256x128xf32> to vector<256x128xbf16>
    %c0_61 = arith.constant 0 : index
    %c128_62 = arith.constant 128 : index
    %131 = vector.load %arg7[%c0_61, %c128_62] : memref<256x384xbf16, #tpu.memory_space<vmem>>, vector<256x128xbf16>
    tpu.vector_store %arg7[%c0_61, %c128_62], %130 {strides = array<i32>} : memref<256x384xbf16, #tpu.memory_space<vmem>>, vector<256x128xbf16>,
    %c15_i32_63 = arith.constant 15 : i32
    %132 = tpu.dynamic_rotate %117 by %c15_i32_63 dim 0 : vector<256x128xf32>, i32 -> vector<256x128xf32>
    %cst_64 = arith.constant 0.000000e+00 : f32
    %133 = vector.shape_cast %22 : vector<256x1xi1> to vector<256x1xi1>
    %134 = vector.broadcast %133 : vector<256x1xi1> to vector<256x128xi1>
    %135 = vector.broadcast %cst_64 : f32 to vector<256x128xf32>
    %136 = arith.select %134, %132, %135 : vector<256x128xi1>, vector<256x128xf32>
    %137 = arith.truncf %136 : vector<256x128xf32> to vector<256x128xbf16>
    %c0_65 = arith.constant 0 : index
    %c256_66 = arith.constant 256 : index
    %138 = vector.load %arg7[%c0_65, %c256_66] : memref<256x384xbf16, #tpu.memory_space<vmem>>, vector<256x128xbf16>
    tpu.vector_store %arg7[%c0_65, %c256_66], %137 {strides = array<i32>} : memref<256x384xbf16, #tpu.memory_space<vmem>>, vector<256x128xbf16>,
    %c0_67 = arith.constant 0 : index
    %c0_68 = arith.constant 0 : index
    %139 = vector.load %arg7[%c0_67, %c0_68] : memref<256x384xbf16, #tpu.memory_space<vmem>>, vector<256x384xbf16>
    %c0_69 = arith.constant 0 : index
    %c0_70 = arith.constant 0 : index
    %c0_71 = arith.constant 0 : index
    %140 = vector.load %arg4[%c0_69, %c0_70, %c0_71] : memref<3x384x128xbf16, #tpu.memory_space<vmem>>, vector<1x384x128xbf16>
    %141 = vector.shape_cast %140 : vector<1x384x128xbf16> to vector<384x128xbf16>
    %cst_72 = arith.constant dense<0.000000e+00> : vector<256x128xf32>
    %142 = tpu.matmul %139, %141, %cst_72 {dimension_numbers = #tpu.dot_dimension_numbers<[1], [0], [0], [1], [0, 0, 1, 1], [], []>} : vector<256x384xbf16>, vector<384x128xbf16>, vector<256x128xf32> -> vector<256x128xf32>
    %c1_i32_73 = arith.constant 1 : i32
    %143 = tpu.dynamic_rotate %117 by %c1_i32_73 dim 0 : vector<256x128xf32>, i32 -> vector<256x128xf32>
    %cst_74 = arith.constant 0.000000e+00 : f32
    %144 = vector.shape_cast %18 : vector<256x1xi1> to vector<256x1xi1>
    %145 = vector.broadcast %144 : vector<256x1xi1> to vector<256x128xi1>
    %146 = vector.broadcast %cst_74 : f32 to vector<256x128xf32>
    %147 = arith.select %145, %143, %146 : vector<256x128xi1>, vector<256x128xf32>
    %148 = arith.truncf %147 : vector<256x128xf32> to vector<256x128xbf16>
    %c0_75 = arith.constant 0 : index
    %c0_76 = arith.constant 0 : index
    %149 = vector.load %arg7[%c0_75, %c0_76] : memref<256x384xbf16, #tpu.memory_space<vmem>>, vector<256x128xbf16>
    tpu.vector_store %arg7[%c0_75, %c0_76], %148 {strides = array<i32>} : memref<256x384xbf16, #tpu.memory_space<vmem>>, vector<256x128xbf16>,
    %150 = arith.truncf %117 : vector<256x128xf32> to vector<256x128xbf16>
    %c0_77 = arith.constant 0 : index
    %c128_78 = arith.constant 128 : index
    %151 = vector.load %arg7[%c0_77, %c128_78] : memref<256x384xbf16, #tpu.memory_space<vmem>>, vector<256x128xbf16>
    tpu.vector_store %arg7[%c0_77, %c128_78], %150 {strides = array<i32>} : memref<256x384xbf16, #tpu.memory_space<vmem>>, vector<256x128xbf16>,
    %c255_i32_79 = arith.constant 255 : i32
    %152 = tpu.dynamic_rotate %117 by %c255_i32_79 dim 0 : vector<256x128xf32>, i32 -> vector<256x128xf32>
    %cst_80 = arith.constant 0.000000e+00 : f32
    %153 = vector.shape_cast %20 : vector<256x1xi1> to vector<256x1xi1>
    %154 = vector.broadcast %153 : vector<256x1xi1> to vector<256x128xi1>
    %155 = vector.broadcast %cst_80 : f32 to vector<256x128xf32>
    %156 = arith.select %154, %152, %155 : vector<256x128xi1>, vector<256x128xf32>
    %157 = arith.truncf %156 : vector<256x128xf32> to vector<256x128xbf16>
    %c0_81 = arith.constant 0 : index
    %c256_82 = arith.constant 256 : index
    %158 = vector.load %arg7[%c0_81, %c256_82] : memref<256x384xbf16, #tpu.memory_space<vmem>>, vector<256x128xbf16>
    tpu.vector_store %arg7[%c0_81, %c256_82], %157 {strides = array<i32>} : memref<256x384xbf16, #tpu.memory_space<vmem>>, vector<256x128xbf16>,
    %c0_83 = arith.constant 0 : index
    %c0_84 = arith.constant 0 : index
    %159 = vector.load %arg7[%c0_83, %c0_84] : memref<256x384xbf16, #tpu.memory_space<vmem>>, vector<256x384xbf16>
    %c1_85 = arith.constant 1 : index
    %c0_86 = arith.constant 0 : index
    %c0_87 = arith.constant 0 : index
    %160 = vector.load %arg4[%c1_85, %c0_86, %c0_87] : memref<3x384x128xbf16, #tpu.memory_space<vmem>>, vector<1x384x128xbf16>
    %161 = vector.shape_cast %160 : vector<1x384x128xbf16> to vector<384x128xbf16>
    %cst_88 = arith.constant dense<0.000000e+00> : vector<256x128xf32>
    %162 = tpu.matmul %159, %161, %cst_88 {dimension_numbers = #tpu.dot_dimension_numbers<[1], [0], [0], [1], [0, 0, 1, 1], [], []>} : vector<256x384xbf16>, vector<384x128xbf16>, vector<256x128xf32> -> vector<256x128xf32>
    %163 = arith.addf %142, %162 : vector<256x128xf32>
    %c241_i32_89 = arith.constant 241 : i32
    %164 = tpu.dynamic_rotate %117 by %c241_i32_89 dim 0 : vector<256x128xf32>, i32 -> vector<256x128xf32>
    %cst_90 = arith.constant 0.000000e+00 : f32
    %165 = vector.shape_cast %23 : vector<256x1xi1> to vector<256x1xi1>
    %166 = vector.broadcast %165 : vector<256x1xi1> to vector<256x128xi1>
    %167 = vector.broadcast %cst_90 : f32 to vector<256x128xf32>
    %168 = arith.select %166, %164, %167 : vector<256x128xi1>, vector<256x128xf32>
    %169 = arith.truncf %168 : vector<256x128xf32> to vector<256x128xbf16>
    %c0_91 = arith.constant 0 : index
    %c0_92 = arith.constant 0 : index
    %170 = vector.load %arg7[%c0_91, %c0_92] : memref<256x384xbf16, #tpu.memory_space<vmem>>, vector<256x128xbf16>
    tpu.vector_store %arg7[%c0_91, %c0_92], %169 {strides = array<i32>} : memref<256x384xbf16, #tpu.memory_space<vmem>>, vector<256x128xbf16>,
    %c240_i32_93 = arith.constant 240 : i32
    %171 = tpu.dynamic_rotate %117 by %c240_i32_93 dim 0 : vector<256x128xf32>, i32 -> vector<256x128xf32>
    %cst_94 = arith.constant 0.000000e+00 : f32
    %172 = vector.shape_cast %16 : vector<256x1xi1> to vector<256x1xi1>
    %173 = vector.broadcast %172 : vector<256x1xi1> to vector<256x128xi1>
    %174 = vector.broadcast %cst_94 : f32 to vector<256x128xf32>
    %175 = arith.select %173, %171, %174 : vector<256x128xi1>, vector<256x128xf32>
    %176 = arith.truncf %175 : vector<256x128xf32> to vector<256x128xbf16>
    %c0_95 = arith.constant 0 : index
    %c128_96 = arith.constant 128 : index
    %177 = vector.load %arg7[%c0_95, %c128_96] : memref<256x384xbf16, #tpu.memory_space<vmem>>, vector<256x128xbf16>
    tpu.vector_store %arg7[%c0_95, %c128_96], %176 {strides = array<i32>} : memref<256x384xbf16, #tpu.memory_space<vmem>>, vector<256x128xbf16>,
    %c239_i32_97 = arith.constant 239 : i32
    %178 = tpu.dynamic_rotate %117 by %c239_i32_97 dim 0 : vector<256x128xf32>, i32 -> vector<256x128xf32>
    %cst_98 = arith.constant 0.000000e+00 : f32
    %179 = vector.shape_cast %24 : vector<256x1xi1> to vector<256x1xi1>
    %180 = vector.broadcast %179 : vector<256x1xi1> to vector<256x128xi1>
    %181 = vector.broadcast %cst_98 : f32 to vector<256x128xf32>
    %182 = arith.select %180, %178, %181 : vector<256x128xi1>, vector<256x128xf32>
    %183 = arith.truncf %182 : vector<256x128xf32> to vector<256x128xbf16>
    %c0_99 = arith.constant 0 : index
    %c256_100 = arith.constant 256 : index
    %184 = vector.load %arg7[%c0_99, %c256_100] : memref<256x384xbf16, #tpu.memory_space<vmem>>, vector<256x128xbf16>
    tpu.vector_store %arg7[%c0_99, %c256_100], %183 {strides = array<i32>} : memref<256x384xbf16, #tpu.memory_space<vmem>>, vector<256x128xbf16>,
    %c0_101 = arith.constant 0 : index
    %c0_102 = arith.constant 0 : index
    %185 = vector.load %arg7[%c0_101, %c0_102] : memref<256x384xbf16, #tpu.memory_space<vmem>>, vector<256x384xbf16>
    %c2_103 = arith.constant 2 : index
    %c0_104 = arith.constant 0 : index
    %c0_105 = arith.constant 0 : index
    %186 = vector.load %arg4[%c2_103, %c0_104, %c0_105] : memref<3x384x128xbf16, #tpu.memory_space<vmem>>, vector<1x384x128xbf16>
    %187 = vector.shape_cast %186 : vector<1x384x128xbf16> to vector<384x128xbf16>
    %cst_106 = arith.constant dense<0.000000e+00> : vector<256x128xf32>
    %188 = tpu.matmul %185, %187, %cst_106 {dimension_numbers = #tpu.dot_dimension_numbers<[1], [0], [0], [1], [0, 0, 1, 1], [], []>} : vector<256x384xbf16>, vector<384x128xbf16>, vector<256x128xf32> -> vector<256x128xf32>
    %189 = arith.addf %163, %188 : vector<256x128xf32>
    %c0_107 = arith.constant 0 : index
    %c0_108 = arith.constant 0 : index
    %190 = vector.load %arg5[%c0_107, %c0_108] : memref<1x128xf32, #tpu.memory_space<vmem>>, vector<1x128xf32>
    %191 = vector.broadcast %190 : vector<1x128xf32> to vector<256x128xf32>
    %192 = arith.addf %189, %191 : vector<256x128xf32>
    %cst_109 = arith.constant dense<0.000000e+00> : vector<128xf32>
    %193 = vector.multi_reduction <add>, %192, %cst_109 [0] : vector<256x128xf32> to vector<128xf32>
    %194 = vector.shape_cast %193 : vector<128xf32> to vector<1x128xf32>
    %cst_110 = arith.constant 3.906250e-03 : f32
    %195 = vector.broadcast %cst_110 : f32 to vector<1x128xf32>
    %196 = arith.mulf %194, %195 : vector<1x128xf32>
    %197 = vector.broadcast %196 : vector<1x128xf32> to vector<256x128xf32>
    %198 = arith.subf %192, %197 : vector<256x128xf32>
    %199 = arith.mulf %198, %198 : vector<256x128xf32>
    %cst_111 = arith.constant dense<0.000000e+00> : vector<128xf32>
    %200 = vector.multi_reduction <add>, %199, %cst_111 [0] : vector<256x128xf32> to vector<128xf32>
    %201 = vector.shape_cast %200 : vector<128xf32> to vector<1x128xf32>
    %cst_112 = arith.constant 3.906250e-03 : f32
    %202 = vector.broadcast %cst_112 : f32 to vector<1x128xf32>
    %203 = arith.mulf %201, %202 : vector<1x128xf32>
    %cst_113 = arith.constant 9.99999974E-6 : f32
    %204 = vector.broadcast %cst_113 : f32 to vector<1x128xf32>
    %205 = arith.addf %203, %204 : vector<1x128xf32>
    %206 = math.rsqrt %205 : vector<1x128xf32>
    %207 = vector.broadcast %206 : vector<1x128xf32> to vector<256x128xf32>
    %208 = arith.mulf %198, %207 : vector<256x128xf32>
    %209 = arith.addf %1, %208 : vector<256x128xf32>
    %c0_114 = arith.constant 0 : index
    %c0_115 = arith.constant 0 : index
    %c0_116 = arith.constant 0 : index
    %210 = vector.load %arg6[%c0_114, %c0_115, %c0_116] : memref<1x256x128xf32, #tpu.memory_space<vmem>>, vector<1x256x128xf32>
    %211 = vector.shape_cast %210 : vector<1x256x128xf32> to vector<256x128xf32>
    %212 = vector.shape_cast %209 : vector<256x128xf32> to vector<1x256x128xf32>
    tpu.vector_store %arg6[%c0_114, %c0_115, %c0_116], %212 {strides = array<i32>} : memref<1x256x128xf32, #tpu.memory_space<vmem>>, vector<1x256x128xf32>,
    return
  }
  func.func @transform_0(%arg0: i32) -> (i32, i32, i32) {
    %c0_i32 = arith.constant 0 : i32
    %c0_i32_0 = arith.constant 0 : i32
    %c0_i32_1 = arith.constant 0 : i32
    return %arg0, %c0_i32, %c0_i32_0 : i32, i32, i32
  }
  func.func @transform_1(%arg0: i32) -> (i32, i32, i32) {
    %c0_i32 = arith.constant 0 : i32
    %c0_i32_0 = arith.constant 0 : i32
    %c0_i32_1 = arith.constant 0 : i32
    %c0_i32_2 = arith.constant 0 : i32
    return %c0_i32, %c0_i32_0, %c0_i32_1 : i32, i32, i32
  }
  func.func @transform_2(%arg0: i32) -> (i32, i32) {
    %c0_i32 = arith.constant 0 : i32
    %c0_i32_0 = arith.constant 0 : i32
    %c0_i32_1 = arith.constant 0 : i32
    return %c0_i32, %c0_i32_0 : i32, i32
  }
  func.func @transform_3(%arg0: i32) -> (i32, i32, i32) {
    %c0_i32 = arith.constant 0 : i32
    %c0_i32_0 = arith.constant 0 : i32
    %c0_i32_1 = arith.constant 0 : i32
    %c0_i32_2 = arith.constant 0 : i32
    return %c0_i32, %c0_i32_0, %c0_i32_1 : i32, i32, i32
  }
  func.func @transform_4(%arg0: i32) -> (i32, i32) {
    %c0_i32 = arith.constant 0 : i32
    %c0_i32_0 = arith.constant 0 : i32
    %c0_i32_1 = arith.constant 0 : i32
    return %c0_i32, %c0_i32_0 : i32, i32
  }
  func.func @transform_5(%arg0: i32) -> (i32, i32, i32) {
    %c0_i32 = arith.constant 0 : i32
    %c0_i32_0 = arith.constant 0 : i32
    %c0_i32_1 = arith.constant 0 : i32
    return %arg0, %c0_i32, %c0_i32_0 : i32, i32, i32
  }
}

</mosaic_0001>

<llo_original>
// kernel: residual_block_nhwc.1
$region0: #{residual_block_nhwc.1}
  #allocation0 [shape = 'u32[]', space=smem, size = 0x4, offset = 0x4, fixed_abs, tag = 'smem constant byte address 0x4 - core index']
  #allocation1 [shape = 'u32[144,128]{1,0:T(1,128)}', space=vmem, size = 0x12000, scoped, tag = 'internal scratch']
  #allocation2 [shape = 'bf16[256,384]{1,0:T(16,128)(2,1)}', space=vmem, size = 0x30000, scoped, tag = 'scratch operand']
  %s0 = inlined_call_operand.vmem [shape: f32[2,256,128], index: 0, kind: input, shape index: {}, may-alias: {0,5}]
  %s1 = inlined_call_operand.vmem [shape: bf16[3,384,128], index: 1, kind: input, shape index: {}]
  %s2 = inlined_call_operand.vmem [shape: f32[1,128], index: 2, kind: input, shape index: {}]
  %s3 = inlined_call_operand.vmem [shape: bf16[3,384,128], index: 3, kind: input, shape index: {}]
  %s4 = inlined_call_operand.vmem [shape: f32[1,128], index: 4, kind: input, shape index: {}]
  %s5 = inlined_call_operand.vmem [shape: f32[2,256,128], index: 5, kind: output, shape index: {}, may-alias: {0,5}]
  %s6 = sld [smem:[#allocation0]]
  $region53: #{residual_block_nhwc.1} parent=0
    _
  %s8 = ssub.s32 1, %s6
  %s9 = scalar_select 0, %s8, %s6
  loop: start=0, step=1, limit=4
  $region2: #{residual_block_nhwc.1} parent=0 // loop_pre_header
    _
  $region3: #{residual_block_nhwc.1} parent=0 // loop_header
    %s11 = sphi 0, %s15
    %p12 = scmp.ge.s32.totalorder %s11, 4
    %s21 = sphi 0, %s23
    %s24 = sphi 0, %s21
    %s25 = sphi 0, %s24
    %s41 = sphi 0, %s25
    %s45 = sphi 0, %s45
    %s47 = sphi 0, %s45
    %s48 = sphi 0, %s47
    %s62 = sphi 0, %s48
    %s66 = sphi 0, %s66
    %s68 = sphi 0, %s66
    %s69 = sphi 0, %s68
    %s83 = sphi 0, %s69
    %s87 = sphi 0, %s87
    %s89 = sphi 0, %s87
    %s90 = sphi 0, %s89
    %s104 = sphi 0, %s90
    %s108 = sphi 0, %s108
    %s110 = sphi 0, %s108
    %s111 = sphi 0, %s110
    %s125 = sphi 0, %s111
    %s131 = sphi 0, %s133
    %s134 = sphi 0, %s131
    %s135 = sphi 0, %s134
    %s151 = sphi 0, %s135
  $region4: #{residual_block_nhwc.1} parent=0 // loop_header_branch
    %14 = sbr.rel (%p12) target = $region8
  $region5: #{residual_block_nhwc.1} parent=0 // loop_body
    %s16 = ssub.s32 %s11, 1
    %s17 = ssub.s32 %s11, 2
    %s18 = sadd.s32 %s11, 1
    %s19 = ssub.s32 %s11, %s18
    %p20 = scmp.eq.s32.totalorder %s19, 0
    %s22 = sadd.s32 %s21, 1
    %s23 = scalar_select %p20, %s21, %s22
    %p26 = pneg %p20
    %p27 = scmp.eq.s32.totalorder %s11, 1
    %p28 = por %p26, %p27
    %p29 = scmp.ne.s32.totalorder %s21, %s24
    %p30 = scmp.eq.s32.totalorder %s11, 0
    %p31 = por %p29, %p30
    %p32 = scmp.ne.s32.totalorder %s21, %s24
    %p33 = scmp.eq.s32.totalorder %s16, 1
    %p34 = por %p32, %p33
    %p35 = scmp.ne.s32.totalorder %s24, %s25
    %p36 = scmp.eq.s32.totalorder %s16, 0
    %p37 = por %p35, %p36
    %p38 = scmp.ne.s32.totalorder %s24, %s25
    %p39 = scmp.eq.s32.totalorder %s17, 1
    %p40 = por %p38, %p39
    %p42 = scmp.ne.s32.totalorder %s25, %s41
    %p43 = scmp.eq.s32.totalorder %s17, 0
    %p44 = por %p42, %p43
    %s46 = sadd.s32 %s45, 1
    %p49 = scmp.eq.s32.totalorder %s11, 1
    %p50 = scmp.ne.s32.totalorder %s45, %s47
    %p51 = scmp.eq.s32.totalorder %s11, 0
    %p52 = por %p50, %p51
    %p53 = scmp.ne.s32.totalorder %s45, %s47
    %p54 = scmp.eq.s32.totalorder %s16, 1
    %p55 = por %p53, %p54
    %p56 = scmp.ne.s32.totalorder %s47, %s48
    %p57 = scmp.eq.s32.totalorder %s16, 0
    %p58 = por %p56, %p57
    %p59 = scmp.ne.s32.totalorder %s47, %s48
    %p60 = scmp.eq.s32.totalorder %s17, 1
    %p61 = por %p59, %p60
    %p63 = scmp.ne.s32.totalorder %s48, %s62
    %p64 = scmp.eq.s32.totalorder %s17, 0
    %p65 = por %p63, %p64
    %s67 = sadd.s32 %s66, 1
    %p70 = scmp.eq.s32.totalorder %s11, 1
    %p71 = scmp.ne.s32.totalorder %s66, %s68
    %p72 = scmp.eq.s32.totalorder %s11, 0
    %p73 = por %p71, %p72
    %p74 = scmp.ne.s32.totalorder %s66, %s68
    %p75 = scmp.eq.s32.totalorder %s16, 1
    %p76 = por %p74, %p75
    %p77 = scmp.ne.s32.totalorder %s68, %s69
    %p78 = scmp.eq.s32.totalorder %s16, 0
    %p79 = por %p77, %p78
    %p80 = scmp.ne.s32.totalorder %s68, %s69
    %p81 = scmp.eq.s32.totalorder %s17, 1
    %p82 = por %p80, %p81
    %p84 = scmp.ne.s32.totalorder %s69, %s83
    %p85 = scmp.eq.s32.totalorder %s17, 0
    %p86 = por %p84, %p85
    %s88 = sadd.s32 %s87, 1
    %p91 = scmp.eq.s32.totalorder %s11, 1
    %p92 = scmp.ne.s32.totalorder %s87, %s89
    %p93 = scmp.eq.s32.totalorder %s11, 0
    %p94 = por %p92, %p93
    %p95 = scmp.ne.s32.totalorder %s87, %s89
    %p96 = scmp.eq.s32.totalorder %s16, 1
    %p97 = por %p95, %p96
    %p98 = scmp.ne.s32.totalorder %s89, %s90
    %p99 = scmp.eq.s32.totalorder %s16, 0
    %p100 = por %p98, %p99
    %p101 = scmp.ne.s32.totalorder %s89, %s90
    %p102 = scmp.eq.s32.totalorder %s17, 1
    %p103 = por %p101, %p102
    %p105 = scmp.ne.s32.totalorder %s90, %s104
    %p106 = scmp.eq.s32.totalorder %s17, 0
    %p107 = por %p105, %p106
    %s109 = sadd.s32 %s108, 1
    %p112 = scmp.eq.s32.totalorder %s11, 1
    %p113 = scmp.ne.s32.totalorder %s108, %s110
    %p114 = scmp.eq.s32.totalorder %s11, 0
    %p115 = por %p113, %p114
    %p116 = scmp.ne.s32.totalorder %s108, %s110
    %p117 = scmp.eq.s32.totalorder %s16, 1
    %p118 = por %p116, %p117
    %p119 = scmp.ne.s32.totalorder %s110, %s111
    %p120 = scmp.eq.s32.totalorder %s16, 0
    %p121 = por %p119, %p120
    %p122 = scmp.ne.s32.totalorder %s110, %s111
    %p123 = scmp.eq.s32.totalorder %s17, 1
    %p124 = por %p122, %p123
    %p126 = scmp.ne.s32.totalorder %s111, %s125
    %p127 = scmp.eq.s32.totalorder %s17, 0
    %p128 = por %p126, %p127
    %s129 = ssub.s32 %s11, %s18
    %p130 = scmp.eq.s32.totalorder %s129, 0
    %s132 = sadd.s32 %s131, 1
    %s133 = scalar_select %p130, %s131, %s132
    %p136 = pneg %p130
    %p137 = scmp.eq.s32.totalorder %s11, 1
    %p138 = por %p136, %p137
    %p139 = scmp.ne.s32.totalorder %s131, %s134
    %p140 = scmp.eq.s32.totalorder %s11, 0
    %p141 = por %p139, %p140
    %p142 = scmp.ne.s32.totalorder %s131, %s134
    %p143 = scmp.eq.s32.totalorder %s16, 1
    %p144 = por %p142, %p143
    %p145 = scmp.ne.s32.totalorder %s134, %s135
    %p146 = scmp.eq.s32.totalorder %s16, 0
    %p147 = por %p145, %p146
    %p148 = scmp.ne.s32.totalorder %s134, %s135
    %p149 = scmp.eq.s32.totalorder %s17, 1
    %p150 = por %p148, %p149
    %p152 = scmp.ne.s32.totalorder %s135, %s151
    %p153 = scmp.eq.s32.totalorder %s17, 0
    %p154 = por %p152, %p153
    %p155 = scmp.le.s32.totalorder 1, %s11
    %p156 = scmp.lt.s32.totalorder %s11, 3
    %p157 = pnand %p155, %p156
    %p158 = pneg %p157
    // Predicated region
    $region9: #{residual_block_nhwc.1} parent=5 // pred_check
      _
    $region10: #{residual_block_nhwc.1} parent=5 // pred_check_branch
      %160 = sbr.rel (%p157) target = $region12
    $region11: #{residual_block_nhwc.1} parent=5 // pred_region
      %s161 = ssub.s32 %s11, 1
      // Predicated region
      $region13: #{residual_block_nhwc.1} parent=11 // pred_check
        %p162 = pneg %p58
      $region14: #{residual_block_nhwc.1} parent=11 // pred_check_branch
        %164 = sbr.rel (%p162) target = $region16
      $region15: #{residual_block_nhwc.1} parent=11 // pred_region
        _
      $region16: #{residual_block_nhwc.1} parent=11 // pred_fallthru
        _
      // Predicated region
      $region17: #{residual_block_nhwc.1} parent=11 // pred_check
        %p165 = pneg %p79
      $region18: #{residual_block_nhwc.1} parent=11 // pred_check_branch
        %167 = sbr.rel (%p165) target = $region20
      $region19: #{residual_block_nhwc.1} parent=11 // pred_region
        _
      $region20: #{residual_block_nhwc.1} parent=11 // pred_fallthru
        _
      // Predicated region
      $region21: #{residual_block_nhwc.1} parent=11 // pred_check
        %p168 = pneg %p100
      $region22: #{residual_block_nhwc.1} parent=11 // pred_check_branch
        %170 = sbr.rel (%p168) target = $region24
      $region23: #{residual_block_nhwc.1} parent=11 // pred_region
        _
      $region24: #{residual_block_nhwc.1} parent=11 // pred_fallthru
        _
      // Predicated region
      $region25: #{residual_block_nhwc.1} parent=11 // pred_check
        %p171 = pneg %p121
      $region26: #{residual_block_nhwc.1} parent=11 // pred_check_branch
        %173 = sbr.rel (%p171) target = $region28
      $region27: #{residual_block_nhwc.1} parent=11 // pred_region
        _
      $region28: #{residual_block_nhwc.1} parent=11 // pred_fallthru
        _
    $region12: #{residual_block_nhwc.1} parent=5 // pred_fallthru
      _
    %p174 = scmp.lt.s32.totalorder %s11, 2
    // Predicated region
    $region29: #{residual_block_nhwc.1} parent=5 // pred_check
      %p175 = pneg %p174
    $region30: #{residual_block_nhwc.1} parent=5 // pred_check_branch
      %177 = sbr.rel (%p175) target = $region32
    $region31: #{residual_block_nhwc.1} parent=5 // pred_region
      // Predicated region
      $region33: #{residual_block_nhwc.1} parent=31 // pred_check
        %p178 = pneg %p31
      $region34: #{residual_block_nhwc.1} parent=31 // pred_check_branch
        %180 = sbr.rel (%p178) target = $region36
      $region35: #{residual_block_nhwc.1} parent=31 // pred_region
        %p181 = scmp.lt.s32.totalorder %s11, 1
        %s182 = scalar_select %p181, %s11, 1
        %s183 = smul.addr %s182, 32
        %s184 = smul.addr %s183, 8
        %s185 = scalar_lea.vmem %s0, %s184
      $region36: #{residual_block_nhwc.1} parent=31 // pred_fallthru
        _
    $region32: #{residual_block_nhwc.1} parent=5 // pred_fallthru
      _
    %p186 = scmp.le.s32.totalorder 1, %s11
    %p187 = scmp.lt.s32.totalorder %s11, 3
    %p188 = pnand %p186, %p187
    %p189 = pneg %p188
    // Predicated region
    $region37: #{residual_block_nhwc.1} parent=5 // pred_check
      _
    $region38: #{residual_block_nhwc.1} parent=5 // pred_check_branch
      %191 = sbr.rel (%p188) target = $region40
    $region39: #{residual_block_nhwc.1} parent=5 // pred_region
      %s192 = ssub.s32 %s11, 1
      %p193 = scmp.lt.s32.totalorder %s16, 1
      %s194 = scalar_select %p193, %s16, 1
      %s195 = smul.addr %s194, 32
      %s196 = smul.addr %s195, 8
      %s197 = scalar_lea.vmem %s0, %s196
      %p198 = pneg %p37
      %p199 = pneg %p34
      %p200 = pneg %p58
      %p201 = pneg %p55
      %p202 = pneg %p79
      %p203 = pneg %p76
      %p204 = pneg %p100
      %p205 = pneg %p97
      %p206 = pneg %p121
      %p207 = pneg %p118
      %p208 = pneg %p147
      %p209 = pneg %p144
      %p210 = scmp.lt.s32.totalorder %s16, 1
      %s211 = scalar_select %p210, %s16, 1
      %s212 = smul.addr %s211, 32
      %s213 = smul.addr %s212, 8
      %s214 = scalar_lea.vmem %s5, %s213
      %p215 = scmp.lt.s32.totalorder %s16, 1
      %s216 = scalar_select %p215, %s16, 1
      %s217 = smul.addr %s216, 32
      %s218 = smul.addr %s217, 8
      %s219 = scalar_lea.vmem %s0, %s218
      %p220 = scmp.lt.s32.totalorder %s16, 1
      %s221 = scalar_select %p220, %s16, 1
      %s222 = smul.addr %s221, 32
      %s223 = smul.addr %s222, 8
      %s224 = scalar_lea.vmem %s5, %s223
      %v226 = vld [vmem:[%s219] sm:$0xff]
      %v227 = vld [vmem:[%s219 + $0x8] sm:$0xff]
      %v228 = vld [vmem:[%s219 + $0x10] sm:$0xff]
      %v229 = vld [vmem:[%s219 + $0x18] sm:$0xff]
      %v230 = vld [vmem:[%s219 + $0x20] sm:$0xff]
      %v231 = vld [vmem:[%s219 + $0x28] sm:$0xff]
      %v232 = vld [vmem:[%s219 + $0x30] sm:$0xff]
      %v233 = vld [vmem:[%s219 + $0x38] sm:$0xff]
      %v234 = vld [vmem:[%s219 + $0x40] sm:$0xff]
      %v235 = vld [vmem:[%s219 + $0x48] sm:$0xff]
      %v236 = vld [vmem:[%s219 + $0x50] sm:$0xff]
      %v237 = vld [vmem:[%s219 + $0x58] sm:$0xff]
      %v238 = vld [vmem:[%s219 + $0x60] sm:$0xff]
      %v239 = vld [vmem:[%s219 + $0x68] sm:$0xff]
      %v240 = vld [vmem:[%s219 + $0x70] sm:$0xff]
      %v241 = vld [vmem:[%s219 + $0x78] sm:$0xff]
      %v242 = vld [vmem:[%s219 + $0x80] sm:$0xff]
      %v243 = vld [vmem:[%s219 + $0x88] sm:$0xff]
      %v244 = vld [vmem:[%s219 + $0x90] sm:$0xff]
      %v245 = vld [vmem:[%s219 + $0x98] sm:$0xff]
      %v246 = vld [vmem:[%s219 + $0xa0] sm:$0xff]
      %v247 = vld [vmem:[%s219 + $0xa8] sm:$0xff]
      %v248 = vld [vmem:[%s219 + $0xb0] sm:$0xff]
      %v249 = vld [vmem:[%s219 + $0xb8] sm:$0xff]
      %v250 = vld [vmem:[%s219 + $0xc0] sm:$0xff]
      %v251 = vld [vmem:[%s219 + $0xc8] sm:$0xff]
      %v252 = vld [vmem:[%s219 + $0xd0] sm:$0xff]
      %v253 = vld [vmem:[%s219 + $0xd8] sm:$0xff]
      %v254 = vld [vmem:[%s219 + $0xe0] sm:$0xff]
      %v255 = vld [vmem:[%s219 + $0xe8] sm:$0xff]
      %v256 = vld [vmem:[%s219 + $0xf0] sm:$0xff]
      %v257 = vld [vmem:[%s219 + $0xf8] sm:$0xff]
      %v258 = vlaneseq
      %v259 = vshrl.u32 %v258, 7
      %v260 = vadd.s32 %v259, 8
      %v261 = vadd.s32 %v259, 16
      %v262 = vadd.s32 %v259, 24
      %v263 = vadd.s32 %v259, 32
      %v264 = vadd.s32 %v259, 40
      %v265 = vadd.s32 %v259, 48
      %v266 = vadd.s32 %v259, 56
      %v267 = vadd.s32 %v259, 64
      %v268 = vadd.s32 %v259, 72
      %v269 = vadd.s32 %v259, 80
      %v270 = vadd.s32 %v259, 88
      %v271 = vadd.s32 %v259, 96
      %v272 = vadd.s32 %v259, 104
      %v273 = vadd.s32 %v259, 112
      %v274 = vadd.s32 %v259, 120
      %v275 = vadd.s32 %v259, 128
      %v276 = vadd.s32 %v259, 136
      %v277 = vadd.s32 %v259, 144
      %v278 = vadd.s32 %v259, 152
      %v279 = vadd.s32 %v259, 160
      %v280 = vadd.s32 %v259, 168
      %v281 = vadd.s32 %v259, 176
      %v282 = vadd.s32 %v259, 184
      %v283 = vadd.s32 %v259, 192
      %v284 = vadd.s32 %v259, 200
      %v285 = vadd.s32 %v259, 208
      %v286 = vadd.s32 %v259, 216
      %v287 = vadd.s32 %v259, 224
      %v288 = vadd.s32 %v259, 232
      %v289 = vadd.s32 %v259, 240
      %v290 = vadd.s32 %v259, 248
      %v291 = vcvt.s32.f32 %v259
      %v292 = vcvt.s32.f32 %v260
      %v293 = vcvt.s32.f32 %v261
      %v294 = vcvt.s32.f32 %v262
      %v295 = vcvt.s32.f32 %v263
      %v296 = vcvt.s32.f32 %v264
      %v297 = vcvt.s32.f32 %v265
      %v298 = vcvt.s32.f32 %v266
      %v299 = vcvt.s32.f32 %v267
      %v300 = vcvt.s32.f32 %v268
      %v301 = vcvt.s32.f32 %v269
      %v302 = vcvt.s32.f32 %v270
      %v303 = vcvt.s32.f32 %v271
      %v304 = vcvt.s32.f32 %v272
      %v305 = vcvt.s32.f32 %v273
      %v306 = vcvt.s32.f32 %v274
      %v307 = vcvt.s32.f32 %v275
      %v308 = vcvt.s32.f32 %v276
      %v309 = vcvt.s32.f32 %v277
      %v310 = vcvt.s32.f32 %v278
      %v311 = vcvt.s32.f32 %v279
      %v312 = vcvt.s32.f32 %v280
      %v313 = vcvt.s32.f32 %v281
      %v314 = vcvt.s32.f32 %v282
      %v315 = vcvt.s32.f32 %v283
      %v316 = vcvt.s32.f32 %v284
      %v317 = vcvt.s32.f32 %v285
      %v318 = vcvt.s32.f32 %v286
      %v319 = vcvt.s32.f32 %v287
      %v320 = vcvt.s32.f32 %v288
      %v321 = vcvt.s32.f32 %v289
      %v322 = vcvt.s32.f32 %v290
      %v323 = vadd.f32 %v291, 0.5
      %v324 = vadd.f32 %v292, 0.5
      %v325 = vadd.f32 %v293, 0.5
      %v326 = vadd.f32 %v294, 0.5
      %v327 = vadd.f32 %v295, 0.5
      %v328 = vadd.f32 %v296, 0.5
      %v329 = vadd.f32 %v297, 0.5
      %v330 = vadd.f32 %v298, 0.5
      %v331 = vadd.f32 %v299, 0.5
      %v332 = vadd.f32 %v300, 0.5
      %v333 = vadd.f32 %v301, 0.5
      %v334 = vadd.f32 %v302, 0.5
      %v335 = vadd.f32 %v303, 0.5
      %v336 = vadd.f32 %v304, 0.5
      %v337 = vadd.f32 %v305, 0.5
      %v338 = vadd.f32 %v306, 0.5
      %v339 = vadd.f32 %v307, 0.5
      %v340 = vadd.f32 %v308, 0.5
      %v341 = vadd.f32 %v309, 0.5
      %v342 = vadd.f32 %v310, 0.5
      %v343 = vadd.f32 %v311, 0.5
      %v344 = vadd.f32 %v312, 0.5
      %v345 = vadd.f32 %v313, 0.5
      %v346 = vadd.f32 %v314, 0.5
      %v347 = vadd.f32 %v315, 0.5
      %v348 = vadd.f32 %v316, 0.5
      %v349 = vadd.f32 %v317, 0.5
      %v350 = vadd.f32 %v318, 0.5
      %v351 = vadd.f32 %v319, 0.5
      %v352 = vadd.f32 %v320, 0.5
      %v353 = vadd.f32 %v321, 0.5
      %v354 = vadd.f32 %v322, 0.5
      %v355 = vmul.f32 %v323, 0.0625
      %v356 = vmul.f32 %v324, 0.0625
      %v357 = vmul.f32 %v325, 0.0625
      %v358 = vmul.f32 %v326, 0.0625
      %v359 = vmul.f32 %v327, 0.0625
      %v360 = vmul.f32 %v328, 0.0625
      %v361 = vmul.f32 %v329, 0.0625
      %v362 = vmul.f32 %v330, 0.0625
      %v363 = vmul.f32 %v331, 0.0625
      %v364 = vmul.f32 %v332, 0.0625
      %v365 = vmul.f32 %v333, 0.0625
      %v366 = vmul.f32 %v334, 0.0625
      %v367 = vmul.f32 %v335, 0.0625
      %v368 = vmul.f32 %v336, 0.0625
      %v369 = vmul.f32 %v337, 0.0625
      %v370 = vmul.f32 %v338, 0.0625
      %v371 = vmul.f32 %v339, 0.0625
      %v372 = vmul.f32 %v340, 0.0625
      %v373 = vmul.f32 %v341, 0.0625
      %v374 = vmul.f32 %v342, 0.0625
      %v375 = vmul.f32 %v343, 0.0625
      %v376 = vmul.f32 %v344, 0.0625
      %v377 = vmul.f32 %v345, 0.0625
      %v378 = vmul.f32 %v346, 0.0625
      %v379 = vmul.f32 %v347, 0.0625
      %v380 = vmul.f32 %v348, 0.0625
      %v381 = vmul.f32 %v349, 0.0625
      %v382 = vmul.f32 %v350, 0.0625
      %v383 = vmul.f32 %v351, 0.0625
      %v384 = vmul.f32 %v352, 0.0625
      %v385 = vmul.f32 %v353, 0.0625
      %v386 = vmul.f32 %v354, 0.0625
      %v387 = vfloor.f32 %v355
      %v388 = vfloor.f32 %v356
      %v389 = vfloor.f32 %v357
      %v390 = vfloor.f32 %v358
      %v391 = vfloor.f32 %v359
      %v392 = vfloor.f32 %v360
      %v393 = vfloor.f32 %v361
      %v394 = vfloor.f32 %v362
      %v395 = vfloor.f32 %v363
      %v396 = vfloor.f32 %v364
      %v397 = vfloor.f32 %v365
      %v398 = vfloor.f32 %v366
      %v399 = vfloor.f32 %v367
      %v400 = vfloor.f32 %v368
      %v401 = vfloor.f32 %v369
      %v402 = vfloor.f32 %v370
      %v403 = vfloor.f32 %v371
      %v404 = vfloor.f32 %v372
      %v405 = vfloor.f32 %v373
      %v406 = vfloor.f32 %v374
      %v407 = vfloor.f32 %v375
      %v408 = vfloor.f32 %v376
      %v409 = vfloor.f32 %v377
      %v410 = vfloor.f32 %v378
      %v411 = vfloor.f32 %v379
      %v412 = vfloor.f32 %v380
      %v413 = vfloor.f32 %v381
      %v414 = vfloor.f32 %v382
      %v415 = vfloor.f32 %v383
      %v416 = vfloor.f32 %v384
      %v417 = vfloor.f32 %v385
      %v418 = vfloor.f32 %v386
      %v419 = vcvt.f32.s32.to.zero.pseudo %v387
      %v420 = vcvt.f32.s32.to.zero.pseudo %v388
      %v421 = vcvt.f32.s32.to.zero.pseudo %v389
      %v422 = vcvt.f32.s32.to.zero.pseudo %v390
      %v423 = vcvt.f32.s32.to.zero.pseudo %v391
      %v424 = vcvt.f32.s32.to.zero.pseudo %v392
      %v425 = vcvt.f32.s32.to.zero.pseudo %v393
      %v426 = vcvt.f32.s32.to.zero.pseudo %v394
      %v427 = vcvt.f32.s32.to.zero.pseudo %v395
      %v428 = vcvt.f32.s32.to.zero.pseudo %v396
      %v429 = vcvt.f32.s32.to.zero.pseudo %v397
      %v430 = vcvt.f32.s32.to.zero.pseudo %v398
      %v431 = vcvt.f32.s32.to.zero.pseudo %v399
      %v432 = vcvt.f32.s32.to.zero.pseudo %v400
      %v433 = vcvt.f32.s32.to.zero.pseudo %v401
      %v434 = vcvt.f32.s32.to.zero.pseudo %v402
      %v435 = vcvt.f32.s32.to.zero.pseudo %v403
      %v436 = vcvt.f32.s32.to.zero.pseudo %v404
      %v437 = vcvt.f32.s32.to.zero.pseudo %v405
      %v438 = vcvt.f32.s32.to.zero.pseudo %v406
      %v439 = vcvt.f32.s32.to.zero.pseudo %v407
      %v440 = vcvt.f32.s32.to.zero.pseudo %v408
      %v441 = vcvt.f32.s32.to.zero.pseudo %v409
      %v442 = vcvt.f32.s32.to.zero.pseudo %v410
      %v443 = vcvt.f32.s32.to.zero.pseudo %v411
      %v444 = vcvt.f32.s32.to.zero.pseudo %v412
      %v445 = vcvt.f32.s32.to.zero.pseudo %v413
      %v446 = vcvt.f32.s32.to.zero.pseudo %v414
      %v447 = vcvt.f32.s32.to.zero.pseudo %v415
      %v448 = vcvt.f32.s32.to.zero.pseudo %v416
      %v449 = vcvt.f32.s32.to.zero.pseudo %v417
      %v450 = vcvt.f32.s32.to.zero.pseudo %v418
      %v451 = vmul.u32 %v419, 16
      %v452 = vmul.u32 %v420, 16
      %v453 = vmul.u32 %v421, 16
      %v454 = vmul.u32 %v422, 16
      %v455 = vmul.u32 %v423, 16
      %v456 = vmul.u32 %v424, 16
      %v457 = vmul.u32 %v425, 16
      %v458 = vmul.u32 %v426, 16
      %v459 = vmul.u32 %v427, 16
      %v460 = vmul.u32 %v428, 16
      %v461 = vmul.u32 %v429, 16
      %v462 = vmul.u32 %v430, 16
      %v463 = vmul.u32 %v431, 16
      %v464 = vmul.u32 %v432, 16
      %v465 = vmul.u32 %v433, 16
      %v466 = vmul.u32 %v434, 16
      %v467 = vmul.u32 %v435, 16
      %v468 = vmul.u32 %v436, 16
      %v469 = vmul.u32 %v437, 16
      %v470 = vmul.u32 %v438, 16
      %v471 = vmul.u32 %v439, 16
      %v472 = vmul.u32 %v440, 16
      %v473 = vmul.u32 %v441, 16
      %v474 = vmul.u32 %v442, 16
      %v475 = vmul.u32 %v443, 16
      %v476 = vmul.u32 %v444, 16
      %v477 = vmul.u32 %v445, 16
      %v478 = vmul.u32 %v446, 16
      %v479 = vmul.u32 %v447, 16
      %v480 = vmul.u32 %v448, 16
      %v481 = vmul.u32 %v449, 16
      %v482 = vmul.u32 %v450, 16
      %v483 = vsub.s32 %v259, %v451
      %v484 = vsub.s32 %v260, %v452
      %v485 = vsub.s32 %v261, %v453
      %v486 = vsub.s32 %v262, %v454
      %v487 = vsub.s32 %v263, %v455
      %v488 = vsub.s32 %v264, %v456
      %v489 = vsub.s32 %v265, %v457
      %v490 = vsub.s32 %v266, %v458
      %v491 = vsub.s32 %v267, %v459
      %v492 = vsub.s32 %v268, %v460
      %v493 = vsub.s32 %v269, %v461
      %v494 = vsub.s32 %v270, %v462
      %v495 = vsub.s32 %v271, %v463
      %v496 = vsub.s32 %v272, %v464
      %v497 = vsub.s32 %v273, %v465
      %v498 = vsub.s32 %v274, %v466
      %v499 = vsub.s32 %v275, %v467
      %v500 = vsub.s32 %v276, %v468
      %v501 = vsub.s32 %v277, %v469
      %v502 = vsub.s32 %v278, %v470
      %v503 = vsub.s32 %v279, %v471
      %v504 = vsub.s32 %v280, %v472
      %v505 = vsub.s32 %v281, %v473
      %v506 = vsub.s32 %v282, %v474
      %v507 = vsub.s32 %v283, %v475
      %v508 = vsub.s32 %v284, %v476
      %v509 = vsub.s32 %v285, %v477
      %v510 = vsub.s32 %v286, %v478
      %v511 = vsub.s32 %v287, %v479
      %v512 = vsub.s32 %v288, %v480
      %v513 = vsub.s32 %v289, %v481
      %v514 = vsub.s32 %v290, %v482
      %vm515 = vcmp.ge.s32.totalorder %v419, 1
      %vm516 = vcmp.ge.s32.totalorder %v420, 1
      %vm517 = vcmp.ge.s32.totalorder %v421, 1
      %vm518 = vcmp.ge.s32.totalorder %v422, 1
      %vm519 = vcmp.ge.s32.totalorder %v423, 1
      %vm520 = vcmp.ge.s32.totalorder %v424, 1
      %vm521 = vcmp.ge.s32.totalorder %v425, 1
      %vm522 = vcmp.ge.s32.totalorder %v426, 1
      %vm523 = vcmp.ge.s32.totalorder %v427, 1
      %vm524 = vcmp.ge.s32.totalorder %v428, 1
      %vm525 = vcmp.ge.s32.totalorder %v429, 1
      %vm526 = vcmp.ge.s32.totalorder %v430, 1
      %vm527 = vcmp.ge.s32.totalorder %v431, 1
      %vm528 = vcmp.ge.s32.totalorder %v432, 1
      %vm529 = vcmp.ge.s32.totalorder %v433, 1
      %vm530 = vcmp.ge.s32.totalorder %v434, 1
      %vm531 = vcmp.ge.s32.totalorder %v435, 1
      %vm532 = vcmp.ge.s32.totalorder %v436, 1
      %vm533 = vcmp.ge.s32.totalorder %v437, 1
      %vm534 = vcmp.ge.s32.totalorder %v438, 1
      %vm535 = vcmp.ge.s32.totalorder %v439, 1
      %vm536 = vcmp.ge.s32.totalorder %v440, 1
      %vm537 = vcmp.ge.s32.totalorder %v441, 1
      %vm538 = vcmp.ge.s32.totalorder %v442, 1
      %vm539 = vcmp.ge.s32.totalorder %v443, 1
      %vm540 = vcmp.ge.s32.totalorder %v444, 1
      %vm541 = vcmp.ge.s32.totalorder %v445, 1
      %vm542 = vcmp.ge.s32.totalorder %v446, 1
      %vm543 = vcmp.ge.s32.totalorder %v447, 1
      %vm544 = vcmp.ge.s32.totalorder %v448, 1
      %vm545 = vcmp.ge.s32.totalorder %v449, 1
      %vm546 = vcmp.ge.s32.totalorder %v450, 1
      %vm547 = vcmp.le.s32.totalorder %v419, 14
      %vm548 = vcmp.le.s32.totalorder %v420, 14
      %vm549 = vcmp.le.s32.totalorder %v421, 14
      %vm550 = vcmp.le.s32.totalorder %v422, 14
      %vm551 = vcmp.le.s32.totalorder %v423, 14
      %vm552 = vcmp.le.s32.totalorder %v424, 14
      %vm553 = vcmp.le.s32.totalorder %v425, 14
      %vm554 = vcmp.le.s32.totalorder %v426, 14
      %vm555 = vcmp.le.s32.totalorder %v427, 14
      %vm556 = vcmp.le.s32.totalorder %v428, 14
      %vm557 = vcmp.le.s32.totalorder %v429, 14
      %vm558 = vcmp.le.s32.totalorder %v430, 14
      %vm559 = vcmp.le.s32.totalorder %v431, 14
      %vm560 = vcmp.le.s32.totalorder %v432, 14
      %vm561 = vcmp.le.s32.totalorder %v433, 14
      %vm562 = vcmp.le.s32.totalorder %v434, 14
      %vm563 = vcmp.le.s32.totalorder %v435, 14
      %vm564 = vcmp.le.s32.totalorder %v436, 14
      %vm565 = vcmp.le.s32.totalorder %v437, 14
      %vm566 = vcmp.le.s32.totalorder %v438, 14
      %vm567 = vcmp.le.s32.totalorder %v439, 14
      %vm568 = vcmp.le.s32.totalorder %v440, 14
      %vm569 = vcmp.le.s32.totalorder %v441, 14
      %vm570 = vcmp.le.s32.totalorder %v442, 14
      %vm571 = vcmp.le.s32.totalorder %v443, 14
      %vm572 = vcmp.le.s32.totalorder %v444, 14
      %vm573 = vcmp.le.s32.totalorder %v445, 14
      %vm574 = vcmp.le.s32.totalorder %v446, 14
      %vm575 = vcmp.le.s32.totalorder %v447, 14
      %vm576 = vcmp.le.s32.totalorder %v448, 14
      %vm577 = vcmp.le.s32.totalorder %v449, 14
      %vm578 = vcmp.le.s32.totalorder %v450, 14
      %vm579 = vcmp.ge.s32.totalorder %v483, 1
      %vm580 = vcmp.ge.s32.totalorder %v484, 1
      %vm581 = vcmp.ge.s32.totalorder %v485, 1
      %vm582 = vcmp.ge.s32.totalorder %v486, 1
      %vm583 = vcmp.ge.s32.totalorder %v487, 1
      %vm584 = vcmp.ge.s32.totalorder %v488, 1
      %vm585 = vcmp.ge.s32.totalorder %v489, 1
      %vm586 = vcmp.ge.s32.totalorder %v490, 1
      %vm587 = vcmp.ge.s32.totalorder %v491, 1
      %vm588 = vcmp.ge.s32.totalorder %v492, 1
      %vm589 = vcmp.ge.s32.totalorder %v493, 1
      %vm590 = vcmp.ge.s32.totalorder %v494, 1
      %vm591 = vcmp.ge.s32.totalorder %v495, 1
      %vm592 = vcmp.ge.s32.totalorder %v496, 1
      %vm593 = vcmp.ge.s32.totalorder %v497, 1
      %vm594 = vcmp.ge.s32.totalorder %v498, 1
      %vm595 = vcmp.ge.s32.totalorder %v499, 1
      %vm596 = vcmp.ge.s32.totalorder %v500, 1
      %vm597 = vcmp.ge.s32.totalorder %v501, 1
      %vm598 = vcmp.ge.s32.totalorder %v502, 1
      %vm599 = vcmp.ge.s32.totalorder %v503, 1
      %vm600 = vcmp.ge.s32.totalorder %v504, 1
      %vm601 = vcmp.ge.s32.totalorder %v505, 1
      %vm602 = vcmp.ge.s32.totalorder %v506, 1
      %vm603 = vcmp.ge.s32.totalorder %v507, 1
      %vm604 = vcmp.ge.s32.totalorder %v508, 1
      %vm605 = vcmp.ge.s32.totalorder %v509, 1
      %vm606 = vcmp.ge.s32.totalorder %v510, 1
      %vm607 = vcmp.ge.s32.totalorder %v511, 1
      %vm608 = vcmp.ge.s32.totalorder %v512, 1
      %vm609 = vcmp.ge.s32.totalorder %v513, 1
      %vm610 = vcmp.ge.s32.totalorder %v514, 1
      %vm611 = vcmp.le.s32.totalorder %v483, 14
      %vm612 = vcmp.le.s32.totalorder %v484, 14
      %vm613 = vcmp.le.s32.totalorder %v485, 14
      %vm614 = vcmp.le.s32.totalorder %v486, 14
      %vm615 = vcmp.le.s32.totalorder %v487, 14
      %vm616 = vcmp.le.s32.totalorder %v488, 14
      %vm617 = vcmp.le.s32.totalorder %v489, 14
      %vm618 = vcmp.le.s32.totalorder %v490, 14
      %vm619 = vcmp.le.s32.totalorder %v491, 14
      %vm620 = vcmp.le.s32.totalorder %v492, 14
      %vm621 = vcmp.le.s32.totalorder %v493, 14
      %vm622 = vcmp.le.s32.totalorder %v494, 14
      %vm623 = vcmp.le.s32.totalorder %v495, 14
      %vm624 = vcmp.le.s32.totalorder %v496, 14
      %vm625 = vcmp.le.s32.totalorder %v497, 14
      %vm626 = vcmp.le.s32.totalorder %v498, 14
      %vm627 = vcmp.le.s32.totalorder %v499, 14
      %vm628 = vcmp.le.s32.totalorder %v500, 14
      %vm629 = vcmp.le.s32.totalorder %v501, 14
      %vm630 = vcmp.le.s32.totalorder %v502, 14
      %vm631 = vcmp.le.s32.totalorder %v503, 14
      %vm632 = vcmp.le.s32.totalorder %v504, 14
      %vm633 = vcmp.le.s32.totalorder %v505, 14
      %vm634 = vcmp.le.s32.totalorder %v506, 14
      %vm635 = vcmp.le.s32.totalorder %v507, 14
      %vm636 = vcmp.le.s32.totalorder %v508, 14
      %vm637 = vcmp.le.s32.totalorder %v509, 14
      %vm638 = vcmp.le.s32.totalorder %v510, 14
      %vm639 = vcmp.le.s32.totalorder %v511, 14
      %vm640 = vcmp.le.s32.totalorder %v512, 14
      %vm641 = vcmp.le.s32.totalorder %v513, 14
      %vm642 = vcmp.le.s32.totalorder %v514, 14
      %vm643 = vmand %vm515, %vm579
      %vm644 = vmand %vm516, %vm580
      %vm645 = vmand %vm517, %vm581
      %vm646 = vmand %vm518, %vm582
      %vm647 = vmand %vm519, %vm583
      %vm648 = vmand %vm520, %vm584
      %vm649 = vmand %vm521, %vm585
      %vm650 = vmand %vm522, %vm586
      %vm651 = vmand %vm523, %vm587
      %vm652 = vmand %vm524, %vm588
      %vm653 = vmand %vm525, %vm589
      %vm654 = vmand %vm526, %vm590
      %vm655 = vmand %vm527, %vm591
      %vm656 = vmand %vm528, %vm592
      %vm657 = vmand %vm529, %vm593
      %vm658 = vmand %vm530, %vm594
      %vm659 = vmand %vm531, %vm595
      %vm660 = vmand %vm532, %vm596
      %vm661 = vmand %vm533, %vm597
      %vm662 = vmand %vm534, %vm598
      %vm663 = vmand %vm535, %vm599
      %vm664 = vmand %vm536, %vm600
      %vm665 = vmand %vm537, %vm601
      %vm666 = vmand %vm538, %vm602
      %vm667 = vmand %vm539, %vm603
      %vm668 = vmand %vm540, %vm604
      %vm669 = vmand %vm541, %vm605
      %vm670 = vmand %vm542, %vm606
      %vm671 = vmand %vm543, %vm607
      %vm672 = vmand %vm544, %vm608
      %vm673 = vmand %vm545, %vm609
      %vm674 = vmand %vm546, %vm610
      %vm675 = vmand %vm515, %vm611
      %vm676 = vmand %vm516, %vm612
      %vm677 = vmand %vm517, %vm613
      %vm678 = vmand %vm518, %vm614
      %vm679 = vmand %vm519, %vm615
      %vm680 = vmand %vm520, %vm616
      %vm681 = vmand %vm521, %vm617
      %vm682 = vmand %vm522, %vm618
      %vm683 = vmand %vm523, %vm619
      %vm684 = vmand %vm524, %vm620
      %vm685 = vmand %vm525, %vm621
      %vm686 = vmand %vm526, %vm622
      %vm687 = vmand %vm527, %vm623
      %vm688 = vmand %vm528, %vm624
      %vm689 = vmand %vm529, %vm625
      %vm690 = vmand %vm530, %vm626
      %vm691 = vmand %vm531, %vm627
      %vm692 = vmand %vm532, %vm628
      %vm693 = vmand %vm533, %vm629
      %vm694 = vmand %vm534, %vm630
      %vm695 = vmand %vm535, %vm631
      %vm696 = vmand %vm536, %vm632
      %vm697 = vmand %vm537, %vm633
      %vm698 = vmand %vm538, %vm634
      %vm699 = vmand %vm539, %vm635
      %vm700 = vmand %vm540, %vm636
      %vm701 = vmand %vm541, %vm637
      %vm702 = vmand %vm542, %vm638
      %vm703 = vmand %vm543, %vm639
      %vm704 = vmand %vm544, %vm640
      %vm705 = vmand %vm545, %vm641
      %vm706 = vmand %vm546, %vm642
      %vm707 = vmand %vm547, %vm579
      %vm708 = vmand %vm548, %vm580
      %vm709 = vmand %vm549, %vm581
      %vm710 = vmand %vm550, %vm582
      %vm711 = vmand %vm551, %vm583
      %vm712 = vmand %vm552, %vm584
      %vm713 = vmand %vm553, %vm585
      %vm714 = vmand %vm554, %vm586
      %vm715 = vmand %vm555, %vm587
      %vm716 = vmand %vm556, %vm588
      %vm717 = vmand %vm557, %vm589
      %vm718 = vmand %vm558, %vm590
      %vm719 = vmand %vm559, %vm591
      %vm720 = vmand %vm560, %vm592
      %vm721 = vmand %vm561, %vm593
      %vm722 = vmand %vm562, %vm594
      %vm723 = vmand %vm563, %vm595
      %vm724 = vmand %vm564, %vm596
      %vm725 = vmand %vm565, %vm597
      %vm726 = vmand %vm566, %vm598
      %vm727 = vmand %vm567, %vm599
      %vm728 = vmand %vm568, %vm600
      %vm729 = vmand %vm569, %vm601
      %vm730 = vmand %vm570, %vm602
      %vm731 = vmand %vm571, %vm603
      %vm732 = vmand %vm572, %vm604
      %vm733 = vmand %vm573, %vm605
      %vm734 = vmand %vm574, %vm606
      %vm735 = vmand %vm575, %vm607
      %vm736 = vmand %vm576, %vm608
      %vm737 = vmand %vm577, %vm609
      %vm738 = vmand %vm578, %vm610
      %vm739 = vmand %vm547, %vm611
      %vm740 = vmand %vm548, %vm612
      %vm741 = vmand %vm549, %vm613
      %vm742 = vmand %vm550, %vm614
      %vm743 = vmand %vm551, %vm615
      %vm744 = vmand %vm552, %vm616
      %vm745 = vmand %vm553, %vm617
      %vm746 = vmand %vm554, %vm618
      %vm747 = vmand %vm555, %vm619
      %vm748 = vmand %vm556, %vm620
      %vm749 = vmand %vm557, %vm621
      %vm750 = vmand %vm558, %vm622
      %vm751 = vmand %vm559, %vm623
      %vm752 = vmand %vm560, %vm624
      %vm753 = vmand %vm561, %vm625
      %vm754 = vmand %vm562, %vm626
      %vm755 = vmand %vm563, %vm627
      %vm756 = vmand %vm564, %vm628
      %vm757 = vmand %vm565, %vm629
      %vm758 = vmand %vm566, %vm630
      %vm759 = vmand %vm567, %vm631
      %vm760 = vmand %vm568, %vm632
      %vm761 = vmand %vm569, %vm633
      %vm762 = vmand %vm570, %vm634
      %vm763 = vmand %vm571, %vm635
      %vm764 = vmand %vm572, %vm636
      %vm765 = vmand %vm573, %vm637
      %vm766 = vmand %vm574, %vm638
      %vm767 = vmand %vm575, %vm639
      %vm768 = vmand %vm576, %vm640
      %vm769 = vmand %vm577, %vm641
      %vm770 = vmand %vm578, %vm642
      %v771 = vrot.slane %v226, 7
      %v772 = vrot.slane %v227, 7
      %v773 = vrot.slane %v228, 7
      %v774 = vrot.slane %v229, 7
      %v775 = vrot.slane %v230, 7
      %v776 = vrot.slane %v231, 7
      %v777 = vrot.slane %v232, 7
      %v778 = vrot.slane %v233, 7
      %v779 = vrot.slane %v234, 7
      %v780 = vrot.slane %v235, 7
      %v781 = vrot.slane %v236, 7
      %v782 = vrot.slane %v237, 7
      %v783 = vrot.slane %v238, 7
      %v784 = vrot.slane %v239, 7
      %v785 = vrot.slane %v240, 7
      %v786 = vrot.slane %v241, 7
      %v787 = vrot.slane %v242, 7
      %v788 = vrot.slane %v243, 7
      %v789 = vrot.slane %v244, 7
      %v790 = vrot.slane %v245, 7
      %v791 = vrot.slane %v246, 7
      %v792 = vrot.slane %v247, 7
      %v793 = vrot.slane %v248, 7
      %v794 = vrot.slane %v249, 7
      %v795 = vrot.slane %v250, 7
      %v796 = vrot.slane %v251, 7
      %v797 = vrot.slane %v252, 7
      %v798 = vrot.slane %v253, 7
      %v799 = vrot.slane %v254, 7
      %v800 = vrot.slane %v255, 7
      %v801 = vrot.slane %v256, 7
      %v802 = vrot.slane %v257, 7
      %vm803 = vcmp.lt.s32.totalorder %v259, 1
      %v804 = vsel %vm803, %v801, %v802
      %v805 = vsel %vm803, %v800, %v801
      %v806 = vsel %vm803, %v799, %v800
      %v807 = vsel %vm803, %v798, %v799
      %v808 = vsel %vm803, %v797, %v798
      %v809 = vsel %vm803, %v796, %v797
      %v810 = vsel %vm803, %v795, %v796
      %v811 = vsel %vm803, %v794, %v795
      %v812 = vsel %vm803, %v793, %v794
      %v813 = vsel %vm803, %v792, %v793
      %v814 = vsel %vm803, %v791, %v792
      %v815 = vsel %vm803, %v790, %v791
      %v816 = vsel %vm803, %v789, %v790
      %v817 = vsel %vm803, %v788, %v789
      %v818 = vsel %vm803, %v787, %v788
      %v819 = vsel %vm803, %v786, %v787
      %v820 = vsel %vm803, %v785, %v786
      %v821 = vsel %vm803, %v784, %v785
      %v822 = vsel %vm803, %v783, %v784
      %v823 = vsel %vm803, %v782, %v783
      %v824 = vsel %vm803, %v781, %v782
      %v825 = vsel %vm803, %v780, %v781
      %v826 = vsel %vm803, %v779, %v780
      %v827 = vsel %vm803, %v778, %v779
      %v828 = vsel %vm803, %v777, %v778
      %v829 = vsel %vm803, %v776, %v777
      %v830 = vsel %vm803, %v775, %v776
      %v831 = vsel %vm803, %v774, %v775
      %v832 = vsel %vm803, %v773, %v774
      %v833 = vsel %vm803, %v772, %v773
      %v834 = vsel %vm803, %v771, %v772
      %v835 = vsel %vm803, %v802, %v771
      %v836 = vsel %vm643, 1, 0
      %v837 = vsel %vm644, 1, 0
      %v838 = vsel %vm645, 1, 0
      %v839 = vsel %vm646, 1, 0
      %v840 = vsel %vm647, 1, 0
      %v841 = vsel %vm648, 1, 0
      %v842 = vsel %vm649, 1, 0
      %v843 = vsel %vm650, 1, 0
      %v844 = vsel %vm651, 1, 0
      %v845 = vsel %vm652, 1, 0
      %v846 = vsel %vm653, 1, 0
      %v847 = vsel %vm654, 1, 0
      %v848 = vsel %vm655, 1, 0
      %v849 = vsel %vm656, 1, 0
      %v850 = vsel %vm657, 1, 0
      %v851 = vsel %vm658, 1, 0
      %v852 = vsel %vm659, 1, 0
      %v853 = vsel %vm660, 1, 0
      %v854 = vsel %vm661, 1, 0
      %v855 = vsel %vm662, 1, 0
      %v856 = vsel %vm663, 1, 0
      %v857 = vsel %vm664, 1, 0
      %v858 = vsel %vm665, 1, 0
      %v859 = vsel %vm666, 1, 0
      %v860 = vsel %vm667, 1, 0
      %v861 = vsel %vm668, 1, 0
      %v862 = vsel %vm669, 1, 0
      %v863 = vsel %vm670, 1, 0
      %v864 = vsel %vm671, 1, 0
      %v865 = vsel %vm672, 1, 0
      %v866 = vsel %vm673, 1, 0
      %v867 = vsel %vm674, 1, 0
      %vm868 = vcmp.eq.s32.totalorder %v836, 1
      %vm869 = vcmp.eq.s32.totalorder %v837, 1
      %vm870 = vcmp.eq.s32.totalorder %v838, 1
      %vm871 = vcmp.eq.s32.totalorder %v839, 1
      %vm872 = vcmp.eq.s32.totalorder %v840, 1
      %vm873 = vcmp.eq.s32.totalorder %v841, 1
      %vm874 = vcmp.eq.s32.totalorder %v842, 1
      %vm875 = vcmp.eq.s32.totalorder %v843, 1
      %vm876 = vcmp.eq.s32.totalorder %v844, 1
      %vm877 = vcmp.eq.s32.totalorder %v845, 1
      %vm878 = vcmp.eq.s32.totalorder %v846, 1
      %vm879 = vcmp.eq.s32.totalorder %v847, 1
      %vm880 = vcmp.eq.s32.totalorder %v848, 1
      %vm881 = vcmp.eq.s32.totalorder %v849, 1
      %vm882 = vcmp.eq.s32.totalorder %v850, 1
      %vm883 = vcmp.eq.s32.totalorder %v851, 1
      %vm884 = vcmp.eq.s32.totalorder %v852, 1
      %vm885 = vcmp.eq.s32.totalorder %v853, 1
      %vm886 = vcmp.eq.s32.totalorder %v854, 1
      %vm887 = vcmp.eq.s32.totalorder %v855, 1
      %vm888 = vcmp.eq.s32.totalorder %v856, 1
      %vm889 = vcmp.eq.s32.totalorder %v857, 1
      %vm890 = vcmp.eq.s32.totalorder %v858, 1
      %vm891 = vcmp.eq.s32.totalorder %v859, 1
      %vm892 = vcmp.eq.s32.totalorder %v860, 1
      %vm893 = vcmp.eq.s32.totalorder %v861, 1
      %vm894 = vcmp.eq.s32.totalorder %v862, 1
      %vm895 = vcmp.eq.s32.totalorder %v863, 1
      %vm896 = vcmp.eq.s32.totalorder %v864, 1
      %vm897 = vcmp.eq.s32.totalorder %v865, 1
      %vm898 = vcmp.eq.s32.totalorder %v866, 1
      %vm899 = vcmp.eq.s32.totalorder %v867, 1
      %v900 = vsel %vm868, %v805, 0.0
      %v901 = vsel %vm869, %v804, 0.0
      %v902 = vsel %vm870, %v835, 0.0
      %v903 = vsel %vm871, %v834, 0.0
      %v904 = vsel %vm872, %v833, 0.0
      %v905 = vsel %vm873, %v832, 0.0
      %v906 = vsel %vm874, %v831, 0.0
      %v907 = vsel %vm875, %v830, 0.0
      %v908 = vsel %vm876, %v829, 0.0
      %v909 = vsel %vm877, %v828, 0.0
      %v910 = vsel %vm878, %v827, 0.0
      %v911 = vsel %vm879, %v826, 0.0
      %v912 = vsel %vm880, %v825, 0.0
      %v913 = vsel %vm881, %v824, 0.0
      %v914 = vsel %vm882, %v823, 0.0
      %v915 = vsel %vm883, %v822, 0.0
      %v916 = vsel %vm884, %v821, 0.0
      %v917 = vsel %vm885, %v820, 0.0
      %v918 = vsel %vm886, %v819, 0.0
      %v919 = vsel %vm887, %v818, 0.0
      %v920 = vsel %vm888, %v817, 0.0
      %v921 = vsel %vm889, %v816, 0.0
      %v922 = vsel %vm890, %v815, 0.0
      %v923 = vsel %vm891, %v814, 0.0
      %v924 = vsel %vm892, %v813, 0.0
      %v925 = vsel %vm893, %v812, 0.0
      %v926 = vsel %vm894, %v811, 0.0
      %v927 = vsel %vm895, %v810, 0.0
      %v928 = vsel %vm896, %v809, 0.0
      %v929 = vsel %vm897, %v808, 0.0
      %v930 = vsel %vm898, %v807, 0.0
      %v931 = vsel %vm899, %v806, 0.0
      %v932 = vpack.c.bf16 %v901, %v900
      %v933 = vpack.c.bf16 %v903, %v902
      %v934 = vpack.c.bf16 %v905, %v904
      %v935 = vpack.c.bf16 %v907, %v906
      %v936 = vpack.c.bf16 %v909, %v908
      %v937 = vpack.c.bf16 %v911, %v910
      %v938 = vpack.c.bf16 %v913, %v912
      %v939 = vpack.c.bf16 %v915, %v914
      %v940 = vpack.c.bf16 %v917, %v916
      %v941 = vpack.c.bf16 %v919, %v918
      %v942 = vpack.c.bf16 %v921, %v920
      %v943 = vpack.c.bf16 %v923, %v922
      %v944 = vpack.c.bf16 %v925, %v924
      %v945 = vpack.c.bf16 %v927, %v926
      %v946 = vpack.c.bf16 %v929, %v928
      %v947 = vpack.c.bf16 %v931, %v930
      %948 = vst [vmem:[#allocation2] sm:$0xff] %v932
      %949 = vst [vmem:[#allocation2 + $0x18] sm:$0xff] %v933
      %950 = vst [vmem:[#allocation2 + $0x30] sm:$0xff] %v934
      %951 = vst [vmem:[#allocation2 + $0x48] sm:$0xff] %v935
      %952 = vst [vmem:[#allocation2 + $0x60] sm:$0xff] %v936
      %953 = vst [vmem:[#allocation2 + $0x78] sm:$0xff] %v937
      %954 = vst [vmem:[#allocation2 + $0x90] sm:$0xff] %v938
      %955 = vst [vmem:[#allocation2 + $0xa8] sm:$0xff] %v939
      %956 = vst [vmem:[#allocation2 + $0xc0] sm:$0xff] %v940
      %957 = vst [vmem:[#allocation2 + $0xd8] sm:$0xff] %v941
      %958 = vst [vmem:[#allocation2 + $0xf0] sm:$0xff] %v942
      %959 = vst [vmem:[#allocation2 + $0x108] sm:$0xff] %v943
      %960 = vst [vmem:[#allocation2 + $0x120] sm:$0xff] %v944
      %961 = vst [vmem:[#allocation2 + $0x138] sm:$0xff] %v945
      %962 = vst [vmem:[#allocation2 + $0x150] sm:$0xff] %v946
      %963 = vst [vmem:[#allocation2 + $0x168] sm:$0xff] %v947
      %v964 = vsel %vm515, 1, 0
      %v965 = vsel %vm516, 1, 0
      %v966 = vsel %vm517, 1, 0
      %v967 = vsel %vm518, 1, 0
      %v968 = vsel %vm519, 1, 0
      %v969 = vsel %vm520, 1, 0
      %v970 = vsel %vm521, 1, 0
      %v971 = vsel %vm522, 1, 0
      %v972 = vsel %vm523, 1, 0
      %v973 = vsel %vm524, 1, 0
      %v974 = vsel %vm525, 1, 0
      %v975 = vsel %vm526, 1, 0
      %v976 = vsel %vm527, 1, 0
      %v977 = vsel %vm528, 1, 0
      %v978 = vsel %vm529, 1, 0
      %v979 = vsel %vm530, 1, 0
      %v980 = vsel %vm531, 1, 0
      %v981 = vsel %vm532, 1, 0
      %v982 = vsel %vm533, 1, 0
      %v983 = vsel %vm534, 1, 0
      %v984 = vsel %vm535, 1, 0
      %v985 = vsel %vm536, 1, 0
      %v986 = vsel %vm537, 1, 0
      %v987 = vsel %vm538, 1, 0
      %v988 = vsel %vm539, 1, 0
      %v989 = vsel %vm540, 1, 0
      %v990 = vsel %vm541, 1, 0
      %v991 = vsel %vm542, 1, 0
      %v992 = vsel %vm543, 1, 0
      %v993 = vsel %vm544, 1, 0
      %v994 = vsel %vm545, 1, 0
      %v995 = vsel %vm546, 1, 0
      %vm996 = vcmp.eq.s32.totalorder %v964, 1
      %vm997 = vcmp.eq.s32.totalorder %v965, 1
      %vm998 = vcmp.eq.s32.totalorder %v966, 1
      %vm999 = vcmp.eq.s32.totalorder %v967, 1
      %vm1000 = vcmp.eq.s32.totalorder %v968, 1
      %vm1001 = vcmp.eq.s32.totalorder %v969, 1
      %vm1002 = vcmp.eq.s32.totalorder %v970, 1
      %vm1003 = vcmp.eq.s32.totalorder %v971, 1
      %vm1004 = vcmp.eq.s32.totalorder %v972, 1
      %vm1005 = vcmp.eq.s32.totalorder %v973, 1
      %vm1006 = vcmp.eq.s32.totalorder %v974, 1
      %vm1007 = vcmp.eq.s32.totalorder %v975, 1
      %vm1008 = vcmp.eq.s32.totalorder %v976, 1
      %vm1009 = vcmp.eq.s32.totalorder %v977, 1
      %vm1010 = vcmp.eq.s32.totalorder %v978, 1
      %vm1011 = vcmp.eq.s32.totalorder %v979, 1
      %vm1012 = vcmp.eq.s32.totalorder %v980, 1
      %vm1013 = vcmp.eq.s32.totalorder %v981, 1
      %vm1014 = vcmp.eq.s32.totalorder %v982, 1
      %vm1015 = vcmp.eq.s32.totalorder %v983, 1
      %vm1016 = vcmp.eq.s32.totalorder %v984, 1
      %vm1017 = vcmp.eq.s32.totalorder %v985, 1
      %vm1018 = vcmp.eq.s32.totalorder %v986, 1
      %vm1019 = vcmp.eq.s32.totalorder %v987, 1
      %vm1020 = vcmp.eq.s32.totalorder %v988, 1
      %vm1021 = vcmp.eq.s32.totalorder %v989, 1
      %vm1022 = vcmp.eq.s32.totalorder %v990, 1
      %vm1023 = vcmp.eq.s32.totalorder %v991, 1
      %vm1024 = vcmp.eq.s32.totalorder %v992, 1
      %vm1025 = vcmp.eq.s32.totalorder %v993, 1
      %vm1026 = vcmp.eq.s32.totalorder %v994, 1
      %vm1027 = vcmp.eq.s32.totalorder %v995, 1
      %v1028 = vsel %vm996, %v256, 0.0
      %v1029 = vsel %vm997, %v257, 0.0
      %v1030 = vsel %vm998, %v226, 0.0
      %v1031 = vsel %vm999, %v227, 0.0
      %v1032 = vsel %vm1000, %v228, 0.0
      %v1033 = vsel %vm1001, %v229, 0.0
      %v1034 = vsel %vm1002, %v230, 0.0
      %v1035 = vsel %vm1003, %v231, 0.0
      %v1036 = vsel %vm1004, %v232, 0.0
      %v1037 = vsel %vm1005, %v233, 0.0
      %v1038 = vsel %vm1006, %v234, 0.0
      %v1039 = vsel %vm1007, %v235, 0.0
      %v1040 = vsel %vm1008, %v236, 0.0
      %v1041 = vsel %vm1009, %v237, 0.0
      %v1042 = vsel %vm1010, %v238, 0.0
      %v1043 = vsel %vm1011, %v239, 0.0
      %v1044 = vsel %vm1012, %v240, 0.0
      %v1045 = vsel %vm1013, %v241, 0.0
      %v1046 = vsel %vm1014, %v242, 0.0
      %v1047 = vsel %vm1015, %v243, 0.0
      %v1048 = vsel %vm1016, %v244, 0.0
      %v1049 = vsel %vm1017, %v245, 0.0
      %v1050 = vsel %vm1018, %v246, 0.0
      %v1051 = vsel %vm1019, %v247, 0.0
      %v1052 = vsel %vm1020, %v248, 0.0
      %v1053 = vsel %vm1021, %v249, 0.0
      %v1054 = vsel %vm1022, %v250, 0.0
      %v1055 = vsel %vm1023, %v251, 0.0
      %v1056 = vsel %vm1024, %v252, 0.0
      %v1057 = vsel %vm1025, %v253, 0.0
      %v1058 = vsel %vm1026, %v254, 0.0
      %v1059 = vsel %vm1027, %v255, 0.0
      %v1060 = vpack.c.bf16 %v1029, %v1028
      %v1061 = vpack.c.bf16 %v1031, %v1030
      %v1062 = vpack.c.bf16 %v1033, %v1032
      %v1063 = vpack.c.bf16 %v1035, %v1034
      %v1064 = vpack.c.bf16 %v1037, %v1036
      %v1065 = vpack.c.bf16 %v1039, %v1038
      %v1066 = vpack.c.bf16 %v1041, %v1040
      %v1067 = vpack.c.bf16 %v1043, %v1042
      %v1068 = vpack.c.bf16 %v1045, %v1044
      %v1069 = vpack.c.bf16 %v1047, %v1046
      %v1070 = vpack.c.bf16 %v1049, %v1048
      %v1071 = vpack.c.bf16 %v1051, %v1050
      %v1072 = vpack.c.bf16 %v1053, %v1052
      %v1073 = vpack.c.bf16 %v1055, %v1054
      %v1074 = vpack.c.bf16 %v1057, %v1056
      %v1075 = vpack.c.bf16 %v1059, %v1058
      %1076 = vst [vmem:[#allocation2 + $0x8] sm:$0xff] %v1060
      %1077 = vst [vmem:[#allocation2 + $0x20] sm:$0xff] %v1061
      %1078 = vst [vmem:[#allocation2 + $0x38] sm:$0xff] %v1062
      %1079 = vst [vmem:[#allocation2 + $0x50] sm:$0xff] %v1063
      %1080 = vst [vmem:[#allocation2 + $0x68] sm:$0xff] %v1064
      %1081 = vst [vmem:[#allocation2 + $0x80] sm:$0xff] %v1065
      %1082 = vst [vmem:[#allocation2 + $0x98] sm:$0xff] %v1066
      %1083 = vst [vmem:[#allocation2 + $0xb0] sm:$0xff] %v1067
      %1084 = vst [vmem:[#allocation2 + $0xc8] sm:$0xff] %v1068
      %1085 = vst [vmem:[#allocation2 + $0xe0] sm:$0xff] %v1069
      %1086 = vst [vmem:[#allocation2 + $0xf8] sm:$0xff] %v1070
      %1087 = vst [vmem:[#allocation2 + $0x110] sm:$0xff] %v1071
      %1088 = vst [vmem:[#allocation2 + $0x128] sm:$0xff] %v1072
      %1089 = vst [vmem:[#allocation2 + $0x140] sm:$0xff] %v1073
      %1090 = vst [vmem:[#allocation2 + $0x158] sm:$0xff] %v1074
      %1091 = vst [vmem:[#allocation2 + $0x170] sm:$0xff] %v1075
      %v1092 = vrot.slane %v226, 1
      %v1093 = vrot.slane %v227, 1
      %v1094 = vrot.slane %v228, 1
      %v1095 = vrot.slane %v229, 1
      %v1096 = vrot.slane %v230, 1
      %v1097 = vrot.slane %v231, 1
      %v1098 = vrot.slane %v232, 1
      %v1099 = vrot.slane %v233, 1
      %v1100 = vrot.slane %v234, 1
      %v1101 = vrot.slane %v235, 1
      %v1102 = vrot.slane %v236, 1
      %v1103 = vrot.slane %v237, 1
      %v1104 = vrot.slane %v238, 1
      %v1105 = vrot.slane %v239, 1
      %v1106 = vrot.slane %v240, 1
      %v1107 = vrot.slane %v241, 1
      %v1108 = vrot.slane %v242, 1
      %v1109 = vrot.slane %v243, 1
      %v1110 = vrot.slane %v244, 1
      %v1111 = vrot.slane %v245, 1
      %v1112 = vrot.slane %v246, 1
      %v1113 = vrot.slane %v247, 1
      %v1114 = vrot.slane %v248, 1
      %v1115 = vrot.slane %v249, 1
      %v1116 = vrot.slane %v250, 1
      %v1117 = vrot.slane %v251, 1
      %v1118 = vrot.slane %v252, 1
      %v1119 = vrot.slane %v253, 1
      %v1120 = vrot.slane %v254, 1
      %v1121 = vrot.slane %v255, 1
      %v1122 = vrot.slane %v256, 1
      %v1123 = vrot.slane %v257, 1
      %vm1124 = vcmp.lt.s32.totalorder %v259, 7
      %v1125 = vsel %vm1124, %v1122, %v1123
      %v1126 = vsel %vm1124, %v1121, %v1122
      %v1127 = vsel %vm1124, %v1120, %v1121
      %v1128 = vsel %vm1124, %v1119, %v1120
      %v1129 = vsel %vm1124, %v1118, %v1119
      %v1130 = vsel %vm1124, %v1117, %v1118
      %v1131 = vsel %vm1124, %v1116, %v1117
      %v1132 = vsel %vm1124, %v1115, %v1116
      %v1133 = vsel %vm1124, %v1114, %v1115
      %v1134 = vsel %vm1124, %v1113, %v1114
      %v1135 = vsel %vm1124, %v1112, %v1113
      %v1136 = vsel %vm1124, %v1111, %v1112
      %v1137 = vsel %vm1124, %v1110, %v1111
      %v1138 = vsel %vm1124, %v1109, %v1110
      %v1139 = vsel %vm1124, %v1108, %v1109
      %v1140 = vsel %vm1124, %v1107, %v1108
      %v1141 = vsel %vm1124, %v1106, %v1107
      %v1142 = vsel %vm1124, %v1105, %v1106
      %v1143 = vsel %vm1124, %v1104, %v1105
      %v1144 = vsel %vm1124, %v1103, %v1104
      %v1145 = vsel %vm1124, %v1102, %v1103
      %v1146 = vsel %vm1124, %v1101, %v1102
      %v1147 = vsel %vm1124, %v1100, %v1101
      %v1148 = vsel %vm1124, %v1099, %v1100
      %v1149 = vsel %vm1124, %v1098, %v1099
      %v1150 = vsel %vm1124, %v1097, %v1098
      %v1151 = vsel %vm1124, %v1096, %v1097
      %v1152 = vsel %vm1124, %v1095, %v1096
      %v1153 = vsel %vm1124, %v1094, %v1095
      %v1154 = vsel %vm1124, %v1093, %v1094
      %v1155 = vsel %vm1124, %v1092, %v1093
      %v1156 = vsel %vm1124, %v1123, %v1092
      %v1157 = vsel %vm675, 1, 0
      %v1158 = vsel %vm676, 1, 0
      %v1159 = vsel %vm677, 1, 0
      %v1160 = vsel %vm678, 1, 0
      %v1161 = vsel %vm679, 1, 0
      %v1162 = vsel %vm680, 1, 0
      %v1163 = vsel %vm681, 1, 0
      %v1164 = vsel %vm682, 1, 0
      %v1165 = vsel %vm683, 1, 0
      %v1166 = vsel %vm684, 1, 0
      %v1167 = vsel %vm685, 1, 0
      %v1168 = vsel %vm686, 1, 0
      %v1169 = vsel %vm687, 1, 0
      %v1170 = vsel %vm688, 1, 0
      %v1171 = vsel %vm689, 1, 0
      %v1172 = vsel %vm690, 1, 0
      %v1173 = vsel %vm691, 1, 0
      %v1174 = vsel %vm692, 1, 0
      %v1175 = vsel %vm693, 1, 0
      %v1176 = vsel %vm694, 1, 0
      %v1177 = vsel %vm695, 1, 0
      %v1178 = vsel %vm696, 1, 0
      %v1179 = vsel %vm697, 1, 0
      %v1180 = vsel %vm698, 1, 0
      %v1181 = vsel %vm699, 1, 0
      %v1182 = vsel %vm700, 1, 0
      %v1183 = vsel %vm701, 1, 0
      %v1184 = vsel %vm702, 1, 0
      %v1185 = vsel %vm703, 1, 0
      %v1186 = vsel %vm704, 1, 0
      %v1187 = vsel %vm705, 1, 0
      %v1188 = vsel %vm706, 1, 0
      %vm1189 = vcmp.eq.s32.totalorder %v1157, 1
      %vm1190 = vcmp.eq.s32.totalorder %v1158, 1
      %vm1191 = vcmp.eq.s32.totalorder %v1159, 1
      %vm1192 = vcmp.eq.s32.totalorder %v1160, 1
      %vm1193 = vcmp.eq.s32.totalorder %v1161, 1
      %vm1194 = vcmp.eq.s32.totalorder %v1162, 1
      %vm1195 = vcmp.eq.s32.totalorder %v1163, 1
      %vm1196 = vcmp.eq.s32.totalorder %v1164, 1
      %vm1197 = vcmp.eq.s32.totalorder %v1165, 1
      %vm1198 = vcmp.eq.s32.totalorder %v1166, 1
      %vm1199 = vcmp.eq.s32.totalorder %v1167, 1
      %vm1200 = vcmp.eq.s32.totalorder %v1168, 1
      %vm1201 = vcmp.eq.s32.totalorder %v1169, 1
      %vm1202 = vcmp.eq.s32.totalorder %v1170, 1
      %vm1203 = vcmp.eq.s32.totalorder %v1171, 1
      %vm1204 = vcmp.eq.s32.totalorder %v1172, 1
      %vm1205 = vcmp.eq.s32.totalorder %v1173, 1
      %vm1206 = vcmp.eq.s32.totalorder %v1174, 1
      %vm1207 = vcmp.eq.s32.totalorder %v1175, 1
      %vm1208 = vcmp.eq.s32.totalorder %v1176, 1
      %vm1209 = vcmp.eq.s32.totalorder %v1177, 1
      %vm1210 = vcmp.eq.s32.totalorder %v1178, 1
      %vm1211 = vcmp.eq.s32.totalorder %v1179, 1
      %vm1212 = vcmp.eq.s32.totalorder %v1180, 1
      %vm1213 = vcmp.eq.s32.totalorder %v1181, 1
      %vm1214 = vcmp.eq.s32.totalorder %v1182, 1
      %vm1215 = vcmp.eq.s32.totalorder %v1183, 1
      %vm1216 = vcmp.eq.s32.totalorder %v1184, 1
      %vm1217 = vcmp.eq.s32.totalorder %v1185, 1
      %vm1218 = vcmp.eq.s32.totalorder %v1186, 1
      %vm1219 = vcmp.eq.s32.totalorder %v1187, 1
      %vm1220 = vcmp.eq.s32.totalorder %v1188, 1
      %v1221 = vsel %vm1189, %v1125, 0.0
      %v1222 = vsel %vm1190, %v1156, 0.0
      %v1223 = vsel %vm1191, %v1155, 0.0
      %v1224 = vsel %vm1192, %v1154, 0.0
      %v1225 = vsel %vm1193, %v1153, 0.0
      %v1226 = vsel %vm1194, %v1152, 0.0
      %v1227 = vsel %vm1195, %v1151, 0.0
      %v1228 = vsel %vm1196, %v1150, 0.0
      %v1229 = vsel %vm1197, %v1149, 0.0
      %v1230 = vsel %vm1198, %v1148, 0.0
      %v1231 = vsel %vm1199, %v1147, 0.0
      %v1232 = vsel %vm1200, %v1146, 0.0
      %v1233 = vsel %vm1201, %v1145, 0.0
      %v1234 = vsel %vm1202, %v1144, 0.0
      %v1235 = vsel %vm1203, %v1143, 0.0
      %v1236 = vsel %vm1204, %v1142, 0.0
      %v1237 = vsel %vm1205, %v1141, 0.0
      %v1238 = vsel %vm1206, %v1140, 0.0
      %v1239 = vsel %vm1207, %v1139, 0.0
      %v1240 = vsel %vm1208, %v1138, 0.0
      %v1241 = vsel %vm1209, %v1137, 0.0
      %v1242 = vsel %vm1210, %v1136, 0.0
      %v1243 = vsel %vm1211, %v1135, 0.0
      %v1244 = vsel %vm1212, %v1134, 0.0
      %v1245 = vsel %vm1213, %v1133, 0.0
      %v1246 = vsel %vm1214, %v1132, 0.0
      %v1247 = vsel %vm1215, %v1131, 0.0
      %v1248 = vsel %vm1216, %v1130, 0.0
      %v1249 = vsel %vm1217, %v1129, 0.0
      %v1250 = vsel %vm1218, %v1128, 0.0
      %v1251 = vsel %vm1219, %v1127, 0.0
      %v1252 = vsel %vm1220, %v1126, 0.0
      %v1253 = vpack.c.bf16 %v1222, %v1221
      %v1254 = vpack.c.bf16 %v1224, %v1223
      %v1255 = vpack.c.bf16 %v1226, %v1225
      %v1256 = vpack.c.bf16 %v1228, %v1227
      %v1257 = vpack.c.bf16 %v1230, %v1229
      %v1258 = vpack.c.bf16 %v1232, %v1231
      %v1259 = vpack.c.bf16 %v1234, %v1233
      %v1260 = vpack.c.bf16 %v1236, %v1235
      %v1261 = vpack.c.bf16 %v1238, %v1237
      %v1262 = vpack.c.bf16 %v1240, %v1239
      %v1263 = vpack.c.bf16 %v1242, %v1241
      %v1264 = vpack.c.bf16 %v1244, %v1243
      %v1265 = vpack.c.bf16 %v1246, %v1245
      %v1266 = vpack.c.bf16 %v1248, %v1247
      %v1267 = vpack.c.bf16 %v1250, %v1249
      %v1268 = vpack.c.bf16 %v1252, %v1251
      %1269 = vst [vmem:[#allocation2 + $0x10] sm:$0xff] %v1253
      %1270 = vst [vmem:[#allocation2 + $0x28] sm:$0xff] %v1254
      %1271 = vst [vmem:[#allocation2 + $0x40] sm:$0xff] %v1255
      %1272 = vst [vmem:[#allocation2 + $0x58] sm:$0xff] %v1256
      %1273 = vst [vmem:[#allocation2 + $0x70] sm:$0xff] %v1257
      %1274 = vst [vmem:[#allocation2 + $0x88] sm:$0xff] %v1258
      %1275 = vst [vmem:[#allocation2 + $0xa0] sm:$0xff] %v1259
      %1276 = vst [vmem:[#allocation2 + $0xb8] sm:$0xff] %v1260
      %1277 = vst [vmem:[#allocation2 + $0xd0] sm:$0xff] %v1261
      %1278 = vst [vmem:[#allocation2 + $0xe8] sm:$0xff] %v1262
      %1279 = vst [vmem:[#allocation2 + $0x100] sm:$0xff] %v1263
      %1280 = vst [vmem:[#allocation2 + $0x118] sm:$0xff] %v1264
      %1281 = vst [vmem:[#allocation2 + $0x130] sm:$0xff] %v1265
      %1282 = vst [vmem:[#allocation2 + $0x148] sm:$0xff] %v1266
      %1283 = vst [vmem:[#allocation2 + $0x160] sm:$0xff] %v1267
      %1284 = vst [vmem:[#allocation2 + $0x178] sm:$0xff] %v1268
      %v1285 = vld [vmem:[#allocation2] sm:$0xff]
      %v1286 = vld [vmem:[#allocation2 + $0x8] sm:$0xff]
      %v1287 = vld [vmem:[#allocation2 + $0x10] sm:$0xff]
      %v1288 = vld [vmem:[#allocation2 + $0x18] sm:$0xff]
      %v1289 = vld [vmem:[#allocation2 + $0x20] sm:$0xff]
      %v1290 = vld [vmem:[#allocation2 + $0x28] sm:$0xff]
      %v1291 = vld [vmem:[#allocation2 + $0x30] sm:$0xff]
      %v1292 = vld [vmem:[#allocation2 + $0x38] sm:$0xff]
      %v1293 = vld [vmem:[#allocation2 + $0x40] sm:$0xff]
      %v1294 = vld [vmem:[#allocation2 + $0x48] sm:$0xff]
      %v1295 = vld [vmem:[#allocation2 + $0x50] sm:$0xff]
      %v1296 = vld [vmem:[#allocation2 + $0x58] sm:$0xff]
      %v1297 = vld [vmem:[#allocation2 + $0x60] sm:$0xff]
      %v1298 = vld [vmem:[#allocation2 + $0x68] sm:$0xff]
      %v1299 = vld [vmem:[#allocation2 + $0x70] sm:$0xff]
      %v1300 = vld [vmem:[#allocation2 + $0x78] sm:$0xff]
      %v1301 = vld [vmem:[#allocation2 + $0x80] sm:$0xff]
      %v1302 = vld [vmem:[#allocation2 + $0x88] sm:$0xff]
      %v1303 = vld [vmem:[#allocation2 + $0x90] sm:$0xff]
      %v1304 = vld [vmem:[#allocation2 + $0x98] sm:$0xff]
      %v1305 = vld [vmem:[#allocation2 + $0xa0] sm:$0xff]
      %v1306 = vld [vmem:[#allocation2 + $0xa8] sm:$0xff]
      %v1307 = vld [vmem:[#allocation2 + $0xb0] sm:$0xff]
      %v1308 = vld [vmem:[#allocation2 + $0xb8] sm:$0xff]
      %v1309 = vld [vmem:[#allocation2 + $0xc0] sm:$0xff]
      %v1310 = vld [vmem:[#allocation2 + $0xc8] sm:$0xff]
      %v1311 = vld [vmem:[#allocation2 + $0xd0] sm:$0xff]
      %v1312 = vld [vmem:[#allocation2 + $0xd8] sm:$0xff]
      %v1313 = vld [vmem:[#allocation2 + $0xe0] sm:$0xff]
      %v1314 = vld [vmem:[#allocation2 + $0xe8] sm:$0xff]
      %v1315 = vld [vmem:[#allocation2 + $0xf0] sm:$0xff]
      %v1316 = vld [vmem:[#allocation2 + $0xf8] sm:$0xff]
      %v1317 = vld [vmem:[#allocation2 + $0x100] sm:$0xff]
      %v1318 = vld [vmem:[#allocation2 + $0x108] sm:$0xff]
      %v1319 = vld [vmem:[#allocation2 + $0x110] sm:$0xff]
      %v1320 = vld [vmem:[#allocation2 + $0x118] sm:$0xff]
      %v1321 = vld [vmem:[#allocation2 + $0x120] sm:$0xff]
      %v1322 = vld [vmem:[#allocation2 + $0x128] sm:$0xff]
      %v1323 = vld [vmem:[#allocation2 + $0x130] sm:$0xff]
      %v1324 = vld [vmem:[#allocation2 + $0x138] sm:$0xff]
      %v1325 = vld [vmem:[#allocation2 + $0x140] sm:$0xff]
      %v1326 = vld [vmem:[#allocation2 + $0x148] sm:$0xff]
      %v1327 = vld [vmem:[#allocation2 + $0x150] sm:$0xff]
      %v1328 = vld [vmem:[#allocation2 + $0x158] sm:$0xff]
      %v1329 = vld [vmem:[#allocation2 + $0x160] sm:$0xff]
      %v1330 = vld [vmem:[#allocation2 + $0x168] sm:$0xff]
      %v1331 = vld [vmem:[#allocation2 + $0x170] sm:$0xff]
      %v1332 = vld [vmem:[#allocation2 + $0x178] sm:$0xff]
      %v1333 = vld [vmem:[%s1] sm:$0xf]
      %v1334 = vld [vmem:[%s1 + $0x4] sm:$0xf]
      %v1335 = vld [vmem:[%s1 + $0x8] sm:$0xf]
      %v1336 = vld [vmem:[%s1 + $0xc] sm:$0xf]
      %v1337 = vld [vmem:[%s1 + $0x10] sm:$0xf]
      %v1338 = vld [vmem:[%s1 + $0x14] sm:$0xf]
      %v1339 = vld [vmem:[%s1 + $0x18] sm:$0xf]
      %v1340 = vld [vmem:[%s1 + $0x1c] sm:$0xf]
      %v1341 = vld [vmem:[%s1 + $0x20] sm:$0xf]
      %v1342 = vld [vmem:[%s1 + $0x24] sm:$0xf]
      %v1343 = vld [vmem:[%s1 + $0x28] sm:$0xf]
      %v1344 = vld [vmem:[%s1 + $0x2c] sm:$0xf]
      %v1345 = vld [vmem:[%s1 + $0x30] sm:$0xf]
      %v1346 = vld [vmem:[%s1 + $0x34] sm:$0xf]
      %v1347 = vld [vmem:[%s1 + $0x38] sm:$0xf]
      %v1348 = vld [vmem:[%s1 + $0x3c] sm:$0xf]
      %v1349 = vld [vmem:[%s1 + $0x40] sm:$0xf]
      %v1350 = vld [vmem:[%s1 + $0x44] sm:$0xf]
      %v1351 = vld [vmem:[%s1 + $0x48] sm:$0xf]
      %v1352 = vld [vmem:[%s1 + $0x4c] sm:$0xf]
      %v1353 = vld [vmem:[%s1 + $0x50] sm:$0xf]
      %v1354 = vld [vmem:[%s1 + $0x54] sm:$0xf]
      %v1355 = vld [vmem:[%s1 + $0x58] sm:$0xf]
      %v1356 = vld [vmem:[%s1 + $0x5c] sm:$0xf]
      %v1357 = vld [vmem:[%s1 + $0x60] sm:$0xf]
      %v1358 = vld [vmem:[%s1 + $0x64] sm:$0xf]
      %v1359 = vld [vmem:[%s1 + $0x68] sm:$0xf]
      %v1360 = vld [vmem:[%s1 + $0x6c] sm:$0xf]
      %v1361 = vld [vmem:[%s1 + $0x70] sm:$0xf]
      %v1362 = vld [vmem:[%s1 + $0x74] sm:$0xf]
      %v1363 = vld [vmem:[%s1 + $0x78] sm:$0xf]
      %v1364 = vld [vmem:[%s1 + $0x7c] sm:$0xf]
      %v1365 = vld [vmem:[%s1 + $0x80] sm:$0xf]
      %v1366 = vld [vmem:[%s1 + $0x84] sm:$0xf]
      %v1367 = vld [vmem:[%s1 + $0x88] sm:$0xf]
      %v1368 = vld [vmem:[%s1 + $0x8c] sm:$0xf]
      %v1369 = vld [vmem:[%s1 + $0x90] sm:$0xf]
      %v1370 = vld [vmem:[%s1 + $0x94] sm:$0xf]
      %v1371 = vld [vmem:[%s1 + $0x98] sm:$0xf]
      %v1372 = vld [vmem:[%s1 + $0x9c] sm:$0xf]
      %v1373 = vld [vmem:[%s1 + $0xa0] sm:$0xf]
      %v1374 = vld [vmem:[%s1 + $0xa4] sm:$0xf]
      %v1375 = vld [vmem:[%s1 + $0xa8] sm:$0xf]
      %v1376 = vld [vmem:[%s1 + $0xac] sm:$0xf]
      %v1377 = vld [vmem:[%s1 + $0xb0] sm:$0xf]
      %v1378 = vld [vmem:[%s1 + $0xb4] sm:$0xf]
      %v1379 = vld [vmem:[%s1 + $0xb8] sm:$0xf]
      %v1380 = vld [vmem:[%s1 + $0xbc] sm:$0xf]
      %v1381 = vsel %vm579, 1, 0
      %v1382 = vsel %vm580, 1, 0
      %v1383 = vsel %vm581, 1, 0
      %v1384 = vsel %vm582, 1, 0
      %v1385 = vsel %vm583, 1, 0
      %v1386 = vsel %vm584, 1, 0
      %v1387 = vsel %vm585, 1, 0
      %v1388 = vsel %vm586, 1, 0
      %v1389 = vsel %vm587, 1, 0
      %v1390 = vsel %vm588, 1, 0
      %v1391 = vsel %vm589, 1, 0
      %v1392 = vsel %vm590, 1, 0
      %v1393 = vsel %vm591, 1, 0
      %v1394 = vsel %vm592, 1, 0
      %v1395 = vsel %vm593, 1, 0
      %v1396 = vsel %vm594, 1, 0
      %v1397 = vsel %vm595, 1, 0
      %v1398 = vsel %vm596, 1, 0
      %v1399 = vsel %vm597, 1, 0
      %v1400 = vsel %vm598, 1, 0
      %v1401 = vsel %vm599, 1, 0
      %v1402 = vsel %vm600, 1, 0
      %v1403 = vsel %vm601, 1, 0
      %v1404 = vsel %vm602, 1, 0
      %v1405 = vsel %vm603, 1, 0
      %v1406 = vsel %vm604, 1, 0
      %v1407 = vsel %vm605, 1, 0
      %v1408 = vsel %vm606, 1, 0
      %v1409 = vsel %vm607, 1, 0
      %v1410 = vsel %vm608, 1, 0
      %v1411 = vsel %vm609, 1, 0
      %v1412 = vsel %vm610, 1, 0
      %vm1413 = vcmp.eq.s32.totalorder %v1381, 1
      %vm1414 = vcmp.eq.s32.totalorder %v1382, 1
      %vm1415 = vcmp.eq.s32.totalorder %v1383, 1
      %vm1416 = vcmp.eq.s32.totalorder %v1384, 1
      %vm1417 = vcmp.eq.s32.totalorder %v1385, 1
      %vm1418 = vcmp.eq.s32.totalorder %v1386, 1
      %vm1419 = vcmp.eq.s32.totalorder %v1387, 1
      %vm1420 = vcmp.eq.s32.totalorder %v1388, 1
      %vm1421 = vcmp.eq.s32.totalorder %v1389, 1
      %vm1422 = vcmp.eq.s32.totalorder %v1390, 1
      %vm1423 = vcmp.eq.s32.totalorder %v1391, 1
      %vm1424 = vcmp.eq.s32.totalorder %v1392, 1
      %vm1425 = vcmp.eq.s32.totalorder %v1393, 1
      %vm1426 = vcmp.eq.s32.totalorder %v1394, 1
      %vm1427 = vcmp.eq.s32.totalorder %v1395, 1
      %vm1428 = vcmp.eq.s32.totalorder %v1396, 1
      %vm1429 = vcmp.eq.s32.totalorder %v1397, 1
      %vm1430 = vcmp.eq.s32.totalorder %v1398, 1
      %vm1431 = vcmp.eq.s32.totalorder %v1399, 1
      %vm1432 = vcmp.eq.s32.totalorder %v1400, 1
      %vm1433 = vcmp.eq.s32.totalorder %v1401, 1
      %vm1434 = vcmp.eq.s32.totalorder %v1402, 1
      %vm1435 = vcmp.eq.s32.totalorder %v1403, 1
      %vm1436 = vcmp.eq.s32.totalorder %v1404, 1
      %vm1437 = vcmp.eq.s32.totalorder %v1405, 1
      %vm1438 = vcmp.eq.s32.totalorder %v1406, 1
      %vm1439 = vcmp.eq.s32.totalorder %v1407, 1
      %vm1440 = vcmp.eq.s32.totalorder %v1408, 1
      %vm1441 = vcmp.eq.s32.totalorder %v1409, 1
      %vm1442 = vcmp.eq.s32.totalorder %v1410, 1
      %vm1443 = vcmp.eq.s32.totalorder %v1411, 1
      %vm1444 = vcmp.eq.s32.totalorder %v1412, 1
      %v1445 = vsel %vm1413, %v835, 0.0
      %v1446 = vsel %vm1414, %v834, 0.0
      %v1447 = vsel %vm1415, %v833, 0.0
      %v1448 = vsel %vm1416, %v832, 0.0
      %v1449 = vsel %vm1417, %v831, 0.0
      %v1450 = vsel %vm1418, %v830, 0.0
      %v1451 = vsel %vm1419, %v829, 0.0
      %v1452 = vsel %vm1420, %v828, 0.0
      %v1453 = vsel %vm1421, %v827, 0.0
      %v1454 = vsel %vm1422, %v826, 0.0
      %v1455 = vsel %vm1423, %v825, 0.0
      %v1456 = vsel %vm1424, %v824, 0.0
      %v1457 = vsel %vm1425, %v823, 0.0
      %v1458 = vsel %vm1426, %v822, 0.0
      %v1459 = vsel %vm1427, %v821, 0.0
      %v1460 = vsel %vm1428, %v820, 0.0
      %v1461 = vsel %vm1429, %v819, 0.0
      %v1462 = vsel %vm1430, %v818, 0.0
      %v1463 = vsel %vm1431, %v817, 0.0
      %v1464 = vsel %vm1432, %v816, 0.0
      %v1465 = vsel %vm1433, %v815, 0.0
      %v1466 = vsel %vm1434, %v814, 0.0
      %v1467 = vsel %vm1435, %v813, 0.0
      %v1468 = vsel %vm1436, %v812, 0.0
      %v1469 = vsel %vm1437, %v811, 0.0
      %v1470 = vsel %vm1438, %v810, 0.0
      %v1471 = vsel %vm1439, %v809, 0.0
      %v1472 = vsel %vm1440, %v808, 0.0
      %v1473 = vsel %vm1441, %v807, 0.0
      %v1474 = vsel %vm1442, %v806, 0.0
      %v1475 = vsel %vm1443, %v805, 0.0
      %v1476 = vsel %vm1444, %v804, 0.0
      %v1477 = vpack.c.bf16 %v1446, %v1445
      %v1478 = vpack.c.bf16 %v1448, %v1447
      %v1479 = vpack.c.bf16 %v1450, %v1449
      %v1480 = vpack.c.bf16 %v1452, %v1451
      %v1481 = vpack.c.bf16 %v1454, %v1453
      %v1482 = vpack.c.bf16 %v1456, %v1455
      %v1483 = vpack.c.bf16 %v1458, %v1457
      %v1484 = vpack.c.bf16 %v1460, %v1459
      %v1485 = vpack.c.bf16 %v1462, %v1461
      %v1486 = vpack.c.bf16 %v1464, %v1463
      %v1487 = vpack.c.bf16 %v1466, %v1465
      %v1488 = vpack.c.bf16 %v1468, %v1467
      %v1489 = vpack.c.bf16 %v1470, %v1469
      %v1490 = vpack.c.bf16 %v1472, %v1471
      %v1491 = vpack.c.bf16 %v1474, %v1473
      %v1492 = vpack.c.bf16 %v1476, %v1475
      %1493 = vst [vmem:[#allocation2] sm:$0xff] %v1477
      %1494 = vst [vmem:[#allocation2 + $0x18] sm:$0xff] %v1478
      %1495 = vst [vmem:[#allocation2 + $0x30] sm:$0xff] %v1479
      %1496 = vst [vmem:[#allocation2 + $0x48] sm:$0xff] %v1480
      %1497 = vst [vmem:[#allocation2 + $0x60] sm:$0xff] %v1481
      %1498 = vst [vmem:[#allocation2 + $0x78] sm:$0xff] %v1482
      %1499 = vst [vmem:[#allocation2 + $0x90] sm:$0xff] %v1483
      %1500 = vst [vmem:[#allocation2 + $0xa8] sm:$0xff] %v1484
      %1501 = vst [vmem:[#allocation2 + $0xc0] sm:$0xff] %v1485
      %1502 = vst [vmem:[#allocation2 + $0xd8] sm:$0xff] %v1486
      %1503 = vst [vmem:[#allocation2 + $0xf0] sm:$0xff] %v1487
      %1504 = vst [vmem:[#allocation2 + $0x108] sm:$0xff] %v1488
      %1505 = vst [vmem:[#allocation2 + $0x120] sm:$0xff] %v1489
      %1506 = vst [vmem:[#allocation2 + $0x138] sm:$0xff] %v1490
      %1507 = vst [vmem:[#allocation2 + $0x150] sm:$0xff] %v1491
      %1508 = vst [vmem:[#allocation2 + $0x168] sm:$0xff] %v1492
      %v1509 = vpack.c.bf16 %v227, %v226
      %v1510 = vpack.c.bf16 %v229, %v228
      %v1511 = vpack.c.bf16 %v231, %v230
      %v1512 = vpack.c.bf16 %v233, %v232
      %v1513 = vpack.c.bf16 %v235, %v234
      %v1514 = vpack.c.bf16 %v237, %v236
      %v1515 = vpack.c.bf16 %v239, %v238
      %v1516 = vpack.c.bf16 %v241, %v240
      %v1517 = vpack.c.bf16 %v243, %v242
      %v1518 = vpack.c.bf16 %v245, %v244
      %v1519 = vpack.c.bf16 %v247, %v246
      %v1520 = vpack.c.bf16 %v249, %v248
      %v1521 = vpack.c.bf16 %v251, %v250
      %v1522 = vpack.c.bf16 %v253, %v252
      %v1523 = vpack.c.bf16 %v255, %v254
      %v1524 = vpack.c.bf16 %v257, %v256
      %1525 = vst [vmem:[#allocation2 + $0x8] sm:$0xff] %v1509
      %1526 = vst [vmem:[#allocation2 + $0x20] sm:$0xff] %v1510
      %1527 = vst [vmem:[#allocation2 + $0x38] sm:$0xff] %v1511
      %1528 = vst [vmem:[#allocation2 + $0x50] sm:$0xff] %v1512
      %1529 = vst [vmem:[#allocation2 + $0x68] sm:$0xff] %v1513
      %1530 = vst [vmem:[#allocation2 + $0x80] sm:$0xff] %v1514
      %1531 = vst [vmem:[#allocation2 + $0x98] sm:$0xff] %v1515
      %1532 = vst [vmem:[#allocation2 + $0xb0] sm:$0xff] %v1516
      %1533 = vst [vmem:[#allocation2 + $0xc8] sm:$0xff] %v1517
      %1534 = vst [vmem:[#allocation2 + $0xe0] sm:$0xff] %v1518
      %1535 = vst [vmem:[#allocation2 + $0xf8] sm:$0xff] %v1519
      %1536 = vst [vmem:[#allocation2 + $0x110] sm:$0xff] %v1520
      %1537 = vst [vmem:[#allocation2 + $0x128] sm:$0xff] %v1521
      %1538 = vst [vmem:[#allocation2 + $0x140] sm:$0xff] %v1522
      %1539 = vst [vmem:[#allocation2 + $0x158] sm:$0xff] %v1523
      %1540 = vst [vmem:[#allocation2 + $0x170] sm:$0xff] %v1524
      %v1541 = vsel %vm611, 1, 0
      %v1542 = vsel %vm612, 1, 0
      %v1543 = vsel %vm613, 1, 0
      %v1544 = vsel %vm614, 1, 0
      %v1545 = vsel %vm615, 1, 0
      %v1546 = vsel %vm616, 1, 0
      %v1547 = vsel %vm617, 1, 0
      %v1548 = vsel %vm618, 1, 0
      %v1549 = vsel %vm619, 1, 0
      %v1550 = vsel %vm620, 1, 0
      %v1551 = vsel %vm621, 1, 0
      %v1552 = vsel %vm622, 1, 0
      %v1553 = vsel %vm623, 1, 0
      %v1554 = vsel %vm624, 1, 0
      %v1555 = vsel %vm625, 1, 0
      %v1556 = vsel %vm626, 1, 0
      %v1557 = vsel %vm627, 1, 0
      %v1558 = vsel %vm628, 1, 0
      %v1559 = vsel %vm629, 1, 0
      %v1560 = vsel %vm630, 1, 0
      %v1561 = vsel %vm631, 1, 0
      %v1562 = vsel %vm632, 1, 0
      %v1563 = vsel %vm633, 1, 0
      %v1564 = vsel %vm634, 1, 0
      %v1565 = vsel %vm635, 1, 0
      %v1566 = vsel %vm636, 1, 0
      %v1567 = vsel %vm637, 1, 0
      %v1568 = vsel %vm638, 1, 0
      %v1569 = vsel %vm639, 1, 0
      %v1570 = vsel %vm640, 1, 0
      %v1571 = vsel %vm641, 1, 0
      %v1572 = vsel %vm642, 1, 0
      %vm1573 = vcmp.eq.s32.totalorder %v1541, 1
      %vm1574 = vcmp.eq.s32.totalorder %v1542, 1
      %vm1575 = vcmp.eq.s32.totalorder %v1543, 1
      %vm1576 = vcmp.eq.s32.totalorder %v1544, 1
      %vm1577 = vcmp.eq.s32.totalorder %v1545, 1
      %vm1578 = vcmp.eq.s32.totalorder %v1546, 1
      %vm1579 = vcmp.eq.s32.totalorder %v1547, 1
      %vm1580 = vcmp.eq.s32.totalorder %v1548, 1
      %vm1581 = vcmp.eq.s32.totalorder %v1549, 1
      %vm1582 = vcmp.eq.s32.totalorder %v1550, 1
      %vm1583 = vcmp.eq.s32.totalorder %v1551, 1
      %vm1584 = vcmp.eq.s32.totalorder %v1552, 1
      %vm1585 = vcmp.eq.s32.totalorder %v1553, 1
      %vm1586 = vcmp.eq.s32.totalorder %v1554, 1
      %vm1587 = vcmp.eq.s32.totalorder %v1555, 1
      %vm1588 = vcmp.eq.s32.totalorder %v1556, 1
      %vm1589 = vcmp.eq.s32.totalorder %v1557, 1
      %vm1590 = vcmp.eq.s32.totalorder %v1558, 1
      %vm1591 = vcmp.eq.s32.totalorder %v1559, 1
      %vm1592 = vcmp.eq.s32.totalorder %v1560, 1
      %vm1593 = vcmp.eq.s32.totalorder %v1561, 1
      %vm1594 = vcmp.eq.s32.totalorder %v1562, 1
      %vm1595 = vcmp.eq.s32.totalorder %v1563, 1
      %vm1596 = vcmp.eq.s32.totalorder %v1564, 1
      %vm1597 = vcmp.eq.s32.totalorder %v1565, 1
      %vm1598 = vcmp.eq.s32.totalorder %v1566, 1
      %vm1599 = vcmp.eq.s32.totalorder %v1567, 1
      %vm1600 = vcmp.eq.s32.totalorder %v1568, 1
      %vm1601 = vcmp.eq.s32.totalorder %v1569, 1
      %vm1602 = vcmp.eq.s32.totalorder %v1570, 1
      %vm1603 = vcmp.eq.s32.totalorder %v1571, 1
      %vm1604 = vcmp.eq.s32.totalorder %v1572, 1
      %v1605 = vsel %vm1573, %v1155, 0.0
      %v1606 = vsel %vm1574, %v1154, 0.0
      %v1607 = vsel %vm1575, %v1153, 0.0
      %v1608 = vsel %vm1576, %v1152, 0.0
      %v1609 = vsel %vm1577, %v1151, 0.0
      %v1610 = vsel %vm1578, %v1150, 0.0
      %v1611 = vsel %vm1579, %v1149, 0.0
      %v1612 = vsel %vm1580, %v1148, 0.0
      %v1613 = vsel %vm1581, %v1147, 0.0
      %v1614 = vsel %vm1582, %v1146, 0.0
      %v1615 = vsel %vm1583, %v1145, 0.0
      %v1616 = vsel %vm1584, %v1144, 0.0
      %v1617 = vsel %vm1585, %v1143, 0.0
      %v1618 = vsel %vm1586, %v1142, 0.0
      %v1619 = vsel %vm1587, %v1141, 0.0
      %v1620 = vsel %vm1588, %v1140, 0.0
      %v1621 = vsel %vm1589, %v1139, 0.0
      %v1622 = vsel %vm1590, %v1138, 0.0
      %v1623 = vsel %vm1591, %v1137, 0.0
      %v1624 = vsel %vm1592, %v1136, 0.0
      %v1625 = vsel %vm1593, %v1135, 0.0
      %v1626 = vsel %vm1594, %v1134, 0.0
      %v1627 = vsel %vm1595, %v1133, 0.0
      %v1628 = vsel %vm1596, %v1132, 0.0
      %v1629 = vsel %vm1597, %v1131, 0.0
      %v1630 = vsel %vm1598, %v1130, 0.0
      %v1631 = vsel %vm1599, %v1129, 0.0
      %v1632 = vsel %vm1600, %v1128, 0.0
      %v1633 = vsel %vm1601, %v1127, 0.0
      %v1634 = vsel %vm1602, %v1126, 0.0
      %v1635 = vsel %vm1603, %v1125, 0.0
      %v1636 = vsel %vm1604, %v1156, 0.0
      %v1637 = vpack.c.bf16 %v1606, %v1605
      %v1638 = vpack.c.bf16 %v1608, %v1607
      %v1639 = vpack.c.bf16 %v1610, %v1609
      %v1640 = vpack.c.bf16 %v1612, %v1611
      %v1641 = vpack.c.bf16 %v1614, %v1613
      %v1642 = vpack.c.bf16 %v1616, %v1615
      %v1643 = vpack.c.bf16 %v1618, %v1617
      %v1644 = vpack.c.bf16 %v1620, %v1619
      %v1645 = vpack.c.bf16 %v1622, %v1621
      %v1646 = vpack.c.bf16 %v1624, %v1623
      %v1647 = vpack.c.bf16 %v1626, %v1625
      %v1648 = vpack.c.bf16 %v1628, %v1627
      %v1649 = vpack.c.bf16 %v1630, %v1629
      %v1650 = vpack.c.bf16 %v1632, %v1631
      %v1651 = vpack.c.bf16 %v1634, %v1633
      %v1652 = vpack.c.bf16 %v1636, %v1635
      %1653 = vst [vmem:[#allocation2 + $0x10] sm:$0xff] %v1637
      %1654 = vst [vmem:[#allocation2 + $0x28] sm:$0xff] %v1638
      %1655 = vst [vmem:[#allocation2 + $0x40] sm:$0xff] %v1639
      %1656 = vst [vmem:[#allocation2 + $0x58] sm:$0xff] %v1640
      %1657 = vst [vmem:[#allocation2 + $0x70] sm:$0xff] %v1641
      %1658 = vst [vmem:[#allocation2 + $0x88] sm:$0xff] %v1642
      %1659 = vst [vmem:[#allocation2 + $0xa0] sm:$0xff] %v1643
      %1660 = vst [vmem:[#allocation2 + $0xb8] sm:$0xff] %v1644
      %1661 = vst [vmem:[#allocation2 + $0xd0] sm:$0xff] %v1645
      %1662 = vst [vmem:[#allocation2 + $0xe8] sm:$0xff] %v1646
      %1663 = vst [vmem:[#allocation2 + $0x100] sm:$0xff] %v1647
      %1664 = vst [vmem:[#allocation2 + $0x118] sm:$0xff] %v1648
      %1665 = vst [vmem:[#allocation2 + $0x130] sm:$0xff] %v1649
      %1666 = vst [vmem:[#allocation2 + $0x148] sm:$0xff] %v1650
      %1667 = vst [vmem:[#allocation2 + $0x160] sm:$0xff] %v1651
      %1668 = vst [vmem:[#allocation2 + $0x178] sm:$0xff] %v1652
      %v1669 = vld [vmem:[#allocation2] sm:$0xff]
      %v1670 = vld [vmem:[#allocation2 + $0x8] sm:$0xff]
      %v1671 = vld [vmem:[#allocation2 + $0x10] sm:$0xff]
      %v1672 = vld [vmem:[#allocation2 + $0x18] sm:$0xff]
      %v1673 = vld [vmem:[#allocation2 + $0x20] sm:$0xff]
      %v1674 = vld [vmem:[#allocation2 + $0x28] sm:$0xff]
      %v1675 = vld [vmem:[#allocation2 + $0x30] sm:$0xff]
      %v1676 = vld [vmem:[#allocation2 + $0x38] sm:$0xff]
      %v1677 = vld [vmem:[#allocation2 + $0x40] sm:$0xff]
      %v1678 = vld [vmem:[#allocation2 + $0x48] sm:$0xff]
      %v1679 = vld [vmem:[#allocation2 + $0x50] sm:$0xff]
      %v1680 = vld [vmem:[#allocation2 + $0x58] sm:$0xff]
      %v1681 = vld [vmem:[#allocation2 + $0x60] sm:$0xff]
      %v1682 = vld [vmem:[#allocation2 + $0x68] sm:$0xff]
      %v1683 = vld [vmem:[#allocation2 + $0x70] sm:$0xff]
      %v1684 = vld [vmem:[#allocation2 + $0x78] sm:$0xff]
      %v1685 = vld [vmem:[#allocation2 + $0x80] sm:$0xff]
      %v1686 = vld [vmem:[#allocation2 + $0x88] sm:$0xff]
      %v1687 = vld [vmem:[#allocation2 + $0x90] sm:$0xff]
      %v1688 = vld [vmem:[#allocation2 + $0x98] sm:$0xff]
      %v1689 = vld [vmem:[#allocation2 + $0xa0] sm:$0xff]
      %v1690 = vld [vmem:[#allocation2 + $0xa8] sm:$0xff]
      %v1691 = vld [vmem:[#allocation2 + $0xb0] sm:$0xff]
      %v1692 = vld [vmem:[#allocation2 + $0xb8] sm:$0xff]
      %v1693 = vld [vmem:[#allocation2 + $0xc0] sm:$0xff]
      %v1694 = vld [vmem:[#allocation2 + $0xc8] sm:$0xff]
      %v1695 = vld [vmem:[#allocation2 + $0xd0] sm:$0xff]
      %v1696 = vld [vmem:[#allocation2 + $0xd8] sm:$0xff]
      %v1697 = vld [vmem:[#allocation2 + $0xe0] sm:$0xff]
      %v1698 = vld [vmem:[#allocation2 + $0xe8] sm:$0xff]
      %v1699 = vld [vmem:[#allocation2 + $0xf0] sm:$0xff]
      %v1700 = vld [vmem:[#allocation2 + $0xf8] sm:$0xff]
      %v1701 = vld [vmem:[#allocation2 + $0x100] sm:$0xff]
      %v1702 = vld [vmem:[#allocation2 + $0x108] sm:$0xff]
      %v1703 = vld [vmem:[#allocation2 + $0x110] sm:$0xff]
      %v1704 = vld [vmem:[#allocation2 + $0x118] sm:$0xff]
      %v1705 = vld [vmem:[#allocation2 + $0x120] sm:$0xff]
      %v1706 = vld [vmem:[#allocation2 + $0x128] sm:$0xff]
      %v1707 = vld [vmem:[#allocation2 + $0x130] sm:$0xff]
      %v1708 = vld [vmem:[#allocation2 + $0x138] sm:$0xff]
      %v1709 = vld [vmem:[#allocation2 + $0x140] sm:$0xff]
      %v1710 = vld [vmem:[#allocation2 + $0x148] sm:$0xff]
      %v1711 = vld [vmem:[#allocation2 + $0x150] sm:$0xff]
      %v1712 = vld [vmem:[#allocation2 + $0x158] sm:$0xff]
      %v1713 = vld [vmem:[#allocation2 + $0x160] sm:$0xff]
      %v1714 = vld [vmem:[#allocation2 + $0x168] sm:$0xff]
      %v1715 = vld [vmem:[#allocation2 + $0x170] sm:$0xff]
      %v1716 = vld [vmem:[#allocation2 + $0x178] sm:$0xff]
      %s1717 = scalar_lea.vmem %s1, 192
      %v1718 = vld [vmem:[%s1717] sm:$0xf]
      %v1719 = vld [vmem:[%s1717 + $0x4] sm:$0xf]
      %v1720 = vld [vmem:[%s1717 + $0x8] sm:$0xf]
      %v1721 = vld [vmem:[%s1717 + $0xc] sm:$0xf]
      %v1722 = vld [vmem:[%s1717 + $0x10] sm:$0xf]
      %v1723 = vld [vmem:[%s1717 + $0x14] sm:$0xf]
      %v1724 = vld [vmem:[%s1717 + $0x18] sm:$0xf]
      %v1725 = vld [vmem:[%s1717 + $0x1c] sm:$0xf]
      %v1726 = vld [vmem:[%s1717 + $0x20] sm:$0xf]
      %v1727 = vld [vmem:[%s1717 + $0x24] sm:$0xf]
      %v1728 = vld [vmem:[%s1717 + $0x28] sm:$0xf]
      %v1729 = vld [vmem:[%s1717 + $0x2c] sm:$0xf]
      %v1730 = vld [vmem:[%s1717 + $0x30] sm:$0xf]
      %v1731 = vld [vmem:[%s1717 + $0x34] sm:$0xf]
      %v1732 = vld [vmem:[%s1717 + $0x38] sm:$0xf]
      %v1733 = vld [vmem:[%s1717 + $0x3c] sm:$0xf]
      %v1734 = vld [vmem:[%s1717 + $0x40] sm:$0xf]
      %v1735 = vld [vmem:[%s1717 + $0x44] sm:$0xf]
      %v1736 = vld [vmem:[%s1717 + $0x48] sm:$0xf]
      %v1737 = vld [vmem:[%s1717 + $0x4c] sm:$0xf]
      %v1738 = vld [vmem:[%s1717 + $0x50] sm:$0xf]
      %v1739 = vld [vmem:[%s1717 + $0x54] sm:$0xf]
      %v1740 = vld [vmem:[%s1717 + $0x58] sm:$0xf]
      %v1741 = vld [vmem:[%s1717 + $0x5c] sm:$0xf]
      %v1742 = vld [vmem:[%s1717 + $0x60] sm:$0xf]
      %v1743 = vld [vmem:[%s1717 + $0x64] sm:$0xf]
      %v1744 = vld [vmem:[%s1717 + $0x68] sm:$0xf]
      %v1745 = vld [vmem:[%s1717 + $0x6c] sm:$0xf]
      %v1746 = vld [vmem:[%s1717 + $0x70] sm:$0xf]
      %v1747 = vld [vmem:[%s1717 + $0x74] sm:$0xf]
      %v1748 = vld [vmem:[%s1717 + $0x78] sm:$0xf]
      %v1749 = vld [vmem:[%s1717 + $0x7c] sm:$0xf]
      %v1750 = vld [vmem:[%s1717 + $0x80] sm:$0xf]
      %v1751 = vld [vmem:[%s1717 + $0x84] sm:$0xf]
      %v1752 = vld [vmem:[%s1717 + $0x88] sm:$0xf]
      %v1753 = vld [vmem:[%s1717 + $0x8c] sm:$0xf]
      %v1754 = vld [vmem:[%s1717 + $0x90] sm:$0xf]
      %v1755 = vld [vmem:[%s1717 + $0x94] sm:$0xf]
      %v1756 = vld [vmem:[%s1717 + $0x98] sm:$0xf]
      %v1757 = vld [vmem:[%s1717 + $0x9c] sm:$0xf]
      %v1758 = vld [vmem:[%s1717 + $0xa0] sm:$0xf]
      %v1759 = vld [vmem:[%s1717 + $0xa4] sm:$0xf]
      %v1760 = vld [vmem:[%s1717 + $0xa8] sm:$0xf]
      %v1761 = vld [vmem:[%s1717 + $0xac] sm:$0xf]
      %v1762 = vld [vmem:[%s1717 + $0xb0] sm:$0xf]
      %v1763 = vld [vmem:[%s1717 + $0xb4] sm:$0xf]
      %v1764 = vld [vmem:[%s1717 + $0xb8] sm:$0xf]
      %v1765 = vld [vmem:[%s1717 + $0xbc] sm:$0xf]
      %v1814 = vunpack.c.l.b16 %v1718
      %v1815 = vunpack.c.l.b16 %v1719
      %v1816 = vunpack.c.l.b16 %v1720
      %v1817 = vunpack.c.l.b16 %v1721
      %v1818 = vunpack.c.l.b16 %v1722
      %v1819 = vunpack.c.l.b16 %v1723
      %v1820 = vunpack.c.l.b16 %v1724
      %v1821 = vunpack.c.l.b16 %v1725
      %v1822 = vunpack.c.l.b16 %v1726
      %v1823 = vunpack.c.l.b16 %v1727
      %v1824 = vunpack.c.l.b16 %v1728
      %v1825 = vunpack.c.l.b16 %v1729
      %v1826 = vunpack.c.l.b16 %v1730
      %v1827 = vunpack.c.l.b16 %v1731
      %v1828 = vunpack.c.l.b16 %v1732
      %v1829 = vunpack.c.l.b16 %v1733
      %v1830 = vunpack.c.l.b16 %v1734
      %v1831 = vunpack.c.l.b16 %v1735
      %v1832 = vunpack.c.l.b16 %v1736
      %v1833 = vunpack.c.l.b16 %v1737
      %v1834 = vunpack.c.l.b16 %v1738
      %v1835 = vunpack.c.l.b16 %v1739
      %v1836 = vunpack.c.l.b16 %v1740
      %v1837 = vunpack.c.l.b16 %v1741
      %v1838 = vunpack.c.l.b16 %v1742
      %v1839 = vunpack.c.l.b16 %v1743
      %v1840 = vunpack.c.l.b16 %v1744
      %v1841 = vunpack.c.l.b16 %v1745
      %v1842 = vunpack.c.l.b16 %v1746
      %v1843 = vunpack.c.l.b16 %v1747
      %v1844 = vunpack.c.l.b16 %v1748
      %v1845 = vunpack.c.l.b16 %v1749
      %v1846 = vunpack.c.l.b16 %v1750
      %v1847 = vunpack.c.l.b16 %v1751
      %v1848 = vunpack.c.l.b16 %v1752
      %v1849 = vunpack.c.l.b16 %v1753
      %v1850 = vunpack.c.l.b16 %v1754
      %v1851 = vunpack.c.l.b16 %v1755
      %v1852 = vunpack.c.l.b16 %v1756
      %v1853 = vunpack.c.l.b16 %v1757
      %v1854 = vunpack.c.l.b16 %v1758
      %v1855 = vunpack.c.l.b16 %v1759
      %v1856 = vunpack.c.l.b16 %v1760
      %v1857 = vunpack.c.l.b16 %v1761
      %v1858 = vunpack.c.l.b16 %v1762
      %v1859 = vunpack.c.l.b16 %v1763
      %v1860 = vunpack.c.l.b16 %v1764
      %v1861 = vunpack.c.l.b16 %v1765
      %v1862 = vpack.c.b16 %v1815, %v1814
      %v1863 = vpack.c.b16 %v1817, %v1816
      %v1864 = vpack.c.b16 %v1819, %v1818
      %v1865 = vpack.c.b16 %v1821, %v1820
      %v1866 = vpack.c.b16 %v1823, %v1822
      %v1867 = vpack.c.b16 %v1825, %v1824
      %v1868 = vpack.c.b16 %v1827, %v1826
      %v1869 = vpack.c.b16 %v1829, %v1828
      %v1870 = vpack.c.b16 %v1831, %v1830
      %v1871 = vpack.c.b16 %v1833, %v1832
      %v1872 = vpack.c.b16 %v1835, %v1834
      %v1873 = vpack.c.b16 %v1837, %v1836
      %v1874 = vpack.c.b16 %v1839, %v1838
      %v1875 = vpack.c.b16 %v1841, %v1840
      %v1876 = vpack.c.b16 %v1843, %v1842
      %v1877 = vpack.c.b16 %v1845, %v1844
      %v1878 = vpack.c.b16 %v1847, %v1846
      %v1879 = vpack.c.b16 %v1849, %v1848
      %v1880 = vpack.c.b16 %v1851, %v1850
      %v1881 = vpack.c.b16 %v1853, %v1852
      %v1882 = vpack.c.b16 %v1855, %v1854
      %v1883 = vpack.c.b16 %v1857, %v1856
      %v1884 = vpack.c.b16 %v1859, %v1858
      %v1885 = vpack.c.b16 %v1861, %v1860
      %1910 = vmatprep.subr.bf16.mxu0 0
      %1911 = vmatpush1.bf16.msra.mxu0 %v1862
      %1912 = vmatprep.subr.bf16.mxu0 0
      %1913 = vmatpush1.bf16.msra.mxu0 %v1863
      %1914 = vmatprep.subr.bf16.mxu0 0
      %1915 = vmatpush1.bf16.msra.mxu0 %v1864
      %1916 = vmatprep.subr.bf16.mxu0 0
      %1917 = vmatpush1.bf16.msra.mxu0 %v1865
      %1918 = vmatprep.subr.bf16.mxu0 0
      %1919 = vmatpush1.bf16.msra.mxu0 %v1866
      %1920 = vmatprep.subr.bf16.mxu0 0
      %1921 = vmatpush1.bf16.msra.mxu0 %v1867
      %1922 = vmatprep.subr.bf16.mxu0 0
      %1923 = vmatpush1.bf16.msra.mxu0 %v1868
      %1924 = vmatprep.subr.bf16.mxu0 0
      %1925 = vmatpush1.bf16.msra.mxu0 %v1869
      %1926 = vmatprep.subr.bf16.mxu0 0
      %1927 = vmatpush1.bf16.msra.mxu0 %v1870
      %1928 = vmatprep.subr.bf16.mxu0 0
      %1929 = vmatpush1.bf16.msra.mxu0 %v1871
      %1930 = vmatprep.subr.bf16.mxu0 0
      %1931 = vmatpush1.bf16.msra.mxu0 %v1872
      %1932 = vmatprep.subr.bf16.mxu0 0
      %1933 = vmatpush1.bf16.msra.mxu0 %v1873
      %1934 = vmatprep.subr.bf16.mxu0 0
      %1935 = vmatpush1.bf16.msra.mxu0 %v1874
      %1936 = vmatprep.subr.bf16.mxu0 0
      %1937 = vmatpush1.bf16.msra.mxu0 %v1875
      %1938 = vmatprep.subr.bf16.mxu0 0
      %1939 = vmatpush1.bf16.msra.mxu0 %v1876
      %1940 = vmatprep.subr.bf16.mxu0 0
      %1941 = vmatpush1.bf16.msra.mxu0 %v1877
      %1942 = vmatprep.mubr.bf16.mxu0 %v1670
      %1943 = vmatmul.mubr.bf16.gmra.mrb[0].mxu0 %v1669
      %v1944 = vpop.f32.mrb[0].mxu0
      %v1945 = vadd.f32 0.0, %v1944
      %v1946 = vpop.f32.mrb[0].mxu0
      %v1947 = vpop.f32.mrb[0].mxu0
      %v1948 = vadd.f32 0.0, %v1947
      %v1949 = vpop.f32.mrb[0].mxu0
      %1950 = vmatprep.mubr.bf16.mxu0 %v1673
      %1951 = vmatmul.mubr.bf16.gmra.mrb[0].mxu0 %v1672
      %v1952 = vpop.f32.mrb[0].mxu0
      %v1953 = vadd.f32 0.0, %v1952
      %v1954 = vpop.f32.mrb[0].mxu0
      %v1955 = vpop.f32.mrb[0].mxu0
      %v1956 = vadd.f32 0.0, %v1955
      %v1957 = vpop.f32.mrb[0].mxu0
      %1958 = vmatprep.mubr.bf16.mxu0 %v1676
      %1959 = vmatmul.mubr.bf16.gmra.mrb[0].mxu0 %v1675
      %v1960 = vpop.f32.mrb[0].mxu0
      %v1961 = vadd.f32 0.0, %v1960
      %v1962 = vpop.f32.mrb[0].mxu0
      %v1963 = vpop.f32.mrb[0].mxu0
      %v1964 = vadd.f32 0.0, %v1963
      %v1965 = vpop.f32.mrb[0].mxu0
      %1966 = vmatprep.mubr.bf16.mxu0 %v1679
      %1967 = vmatmul.mubr.bf16.gmra.mrb[0].mxu0 %v1678
      %v1968 = vpop.f32.mrb[0].mxu0
      %v1969 = vadd.f32 0.0, %v1968
      %v1970 = vpop.f32.mrb[0].mxu0
      %v1971 = vpop.f32.mrb[0].mxu0
      %v1972 = vadd.f32 0.0, %v1971
      %v1973 = vpop.f32.mrb[0].mxu0
      %1974 = vmatprep.mubr.bf16.mxu0 %v1682
      %1975 = vmatmul.mubr.bf16.gmra.mrb[0].mxu0 %v1681
      %v1976 = vpop.f32.mrb[0].mxu0
      %v1977 = vadd.f32 0.0, %v1976
      %v1978 = vpop.f32.mrb[0].mxu0
      %v1979 = vpop.f32.mrb[0].mxu0
      %v1980 = vadd.f32 0.0, %v1979
      %v1981 = vpop.f32.mrb[0].mxu0
      %1982 = vmatprep.mubr.bf16.mxu0 %v1685
      %1983 = vmatmul.mubr.bf16.gmra.mrb[0].mxu0 %v1684
      %v1984 = vpop.f32.mrb[0].mxu0
      %v1985 = vadd.f32 0.0, %v1984
      %v1986 = vpop.f32.mrb[0].mxu0
      %v1987 = vpop.f32.mrb[0].mxu0
      %v1988 = vadd.f32 0.0, %v1987
      %v1989 = vpop.f32.mrb[0].mxu0
      %1990 = vmatprep.mubr.bf16.mxu0 %v1688
      %1991 = vmatmul.mubr.bf16.gmra.mrb[0].mxu0 %v1687
      %v1992 = vpop.f32.mrb[0].mxu0
      %v1993 = vadd.f32 0.0, %v1992
      %v1994 = vpop.f32.mrb[0].mxu0
      %v1995 = vpop.f32.mrb[0].mxu0
      %v1996 = vadd.f32 0.0, %v1995
      %v1997 = vpop.f32.mrb[0].mxu0
      %1998 = vmatprep.mubr.bf16.mxu0 %v1691
      %1999 = vmatmul.mubr.bf16.gmra.mrb[0].mxu0 %v1690
      %v2000 = vpop.f32.mrb[0].mxu0
      %v2001 = vadd.f32 0.0, %v2000
      %v2002 = vpop.f32.mrb[0].mxu0
      %v2003 = vpop.f32.mrb[0].mxu0
      %v2004 = vadd.f32 0.0, %v2003
      %v2005 = vpop.f32.mrb[0].mxu0
      %2006 = vmatprep.mubr.bf16.mxu0 %v1694
      %2007 = vmatmul.mubr.bf16.gmra.mrb[0].mxu0 %v1693
      %v2008 = vpop.f32.mrb[0].mxu0
      %v2009 = vadd.f32 0.0, %v2008
      %v2010 = vpop.f32.mrb[0].mxu0
      %v2011 = vpop.f32.mrb[0].mxu0
      %v2012 = vadd.f32 0.0, %v2011
      %v2013 = vpop.f32.mrb[0].mxu0
      %2014 = vmatprep.mubr.bf16.mxu0 %v1697
      %2015 = vmatmul.mubr.bf16.gmra.mrb[0].mxu0 %v1696
      %v2016 = vpop.f32.mrb[0].mxu0
      %v2017 = vadd.f32 0.0, %v2016
      %v2018 = vpop.f32.mrb[0].mxu0
      %v2019 = vpop.f32.mrb[0].mxu0
      %v2020 = vadd.f32 0.0, %v2019
      %v2021 = vpop.f32.mrb[0].mxu0
      %2022 = vmatprep.mubr.bf16.mxu0 %v1700
      %2023 = vmatmul.mubr.bf16.gmra.mrb[0].mxu0 %v1699
      %v2024 = vpop.f32.mrb[0].mxu0
      %v2025 = vadd.f32 0.0, %v2024
      %v2026 = vpop.f32.mrb[0].mxu0
      %v2027 = vpop.f32.mrb[0].mxu0
      %v2028 = vadd.f32 0.0, %v2027
      %v2029 = vpop.f32.mrb[0].mxu0
      %2030 = vmatprep.mubr.bf16.mxu0 %v1703
      %2031 = vmatmul.mubr.bf16.gmra.mrb[0].mxu0 %v1702
      %v2032 = vpop.f32.mrb[0].mxu0
      %v2033 = vadd.f32 0.0, %v2032
      %v2034 = vpop.f32.mrb[0].mxu0
      %v2035 = vpop.f32.mrb[0].mxu0
      %v2036 = vadd.f32 0.0, %v2035
      %v2037 = vpop.f32.mrb[0].mxu0
      %2038 = vmatprep.mubr.bf16.mxu0 %v1706
      %2039 = vmatmul.mubr.bf16.gmra.mrb[0].mxu0 %v1705
      %v2040 = vpop.f32.mrb[0].mxu0
      %v2041 = vadd.f32 0.0, %v2040
      %v2042 = vpop.f32.mrb[0].mxu0
      %v2043 = vpop.f32.mrb[0].mxu0
      %v2044 = vadd.f32 0.0, %v2043
      %v2045 = vpop.f32.mrb[0].mxu0
      %2046 = vmatprep.mubr.bf16.mxu0 %v1709
      %2047 = vmatmul.mubr.bf16.gmra.mrb[0].mxu0 %v1708
      %v2048 = vpop.f32.mrb[0].mxu0
      %v2049 = vadd.f32 0.0, %v2048
      %v2050 = vpop.f32.mrb[0].mxu0
      %v2051 = vpop.f32.mrb[0].mxu0
      %v2052 = vadd.f32 0.0, %v2051
      %v2053 = vpop.f32.mrb[0].mxu0
      %2054 = vmatprep.mubr.bf16.mxu0 %v1712
      %2055 = vmatmul.mubr.bf16.gmra.mrb[0].mxu0 %v1711
      %v2056 = vpop.f32.mrb[0].mxu0
      %v2057 = vadd.f32 0.0, %v2056
      %v2058 = vpop.f32.mrb[0].mxu0
      %v2059 = vpop.f32.mrb[0].mxu0
      %v2060 = vadd.f32 0.0, %v2059
      %v2061 = vpop.f32.mrb[0].mxu0
      %2062 = vmatprep.mubr.bf16.mxu0 %v1715
      %2063 = vmatmul.mubr.bf16.gmra.mrb[0].mxu0 %v1714
      %v2064 = vpop.f32.mrb[0].mxu0
      %v2065 = vadd.f32 0.0, %v2064
      %v2066 = vpop.f32.mrb[0].mxu0
      %v2067 = vpop.f32.mrb[0].mxu0
      %v2068 = vadd.f32 0.0, %v2067
      %v2069 = vpop.f32.mrb[0].mxu0
      %2070 = vdwg.mxu0
      %2071 = vmatprep.subr.bf16.mxu0 0
      %2072 = vmatpush1.bf16.msra.mxu0 %v1878
      %2073 = vmatprep.subr.bf16.mxu0 0
      %2074 = vmatpush1.bf16.msra.mxu0 %v1879
      %2075 = vmatprep.subr.bf16.mxu0 0
      %2076 = vmatpush1.bf16.msra.mxu0 %v1880
      %2077 = vmatprep.subr.bf16.mxu0 0
      %2078 = vmatpush1.bf16.msra.mxu0 %v1881
      %2079 = vmatprep.subr.bf16.mxu0 0
      %2080 = vmatpush1.bf16.msra.mxu0 %v1882
      %2081 = vmatprep.subr.bf16.mxu0 0
      %2082 = vmatpush1.bf16.msra.mxu0 %v1883
      %2083 = vmatprep.subr.bf16.mxu0 0
      %2084 = vmatpush1.bf16.msra.mxu0 %v1884
      %2085 = vmatprep.subr.bf16.mxu0 0
      %2086 = vmatpush1.bf16.msra.mxu0 %v1885
      %2087 = vmatprep.subr.bf16.mxu0 0
      %2088 = vmatpush1.bf16.msra.mxu0 0
      %2089 = vmatprep.subr.bf16.mxu0 0
      %2090 = vmatpush1.bf16.msra.mxu0 0
      %2091 = vmatprep.subr.bf16.mxu0 0
      %2092 = vmatpush1.bf16.msra.mxu0 0
      %2093 = vmatprep.subr.bf16.mxu0 0
      %2094 = vmatpush1.bf16.msra.mxu0 0
      %2095 = vmatprep.subr.bf16.mxu0 0
      %2096 = vmatpush1.bf16.msra.mxu0 0
      %2097 = vmatprep.subr.bf16.mxu0 0
      %2098 = vmatpush1.bf16.msra.mxu0 0
      %2099 = vmatprep.subr.bf16.mxu0 0
      %2100 = vmatpush1.bf16.msra.mxu0 0
      %2101 = vmatprep.subr.bf16.mxu0 0
      %2102 = vmatpush1.bf16.msra.mxu0 0
      %2103 = vmatprep.mubr.bf16.mxu0 0
      %2104 = vmatmul.mubr.bf16.gmra.mrb[0].mxu0 %v1671
      %v2105 = vpop.f32.mrb[0].mxu0
      %v2106 = vadd.f32 %v1945, %v2105
      %v2107 = vpop.f32.mrb[0].mxu0
      %v2108 = vpop.f32.mrb[0].mxu0
      %v2109 = vadd.f32 %v1948, %v2108
      %v2110 = vpop.f32.mrb[0].mxu0
      %2111 = vmatprep.mubr.bf16.mxu0 0
      %2112 = vmatmul.mubr.bf16.gmra.mrb[0].mxu0 %v1674
      %v2113 = vpop.f32.mrb[0].mxu0
      %v2114 = vadd.f32 %v1953, %v2113
      %v2115 = vpop.f32.mrb[0].mxu0
      %v2116 = vpop.f32.mrb[0].mxu0
      %v2117 = vadd.f32 %v1956, %v2116
      %v2118 = vpop.f32.mrb[0].mxu0
      %2119 = vmatprep.mubr.bf16.mxu0 0
      %2120 = vmatmul.mubr.bf16.gmra.mrb[0].mxu0 %v1677
      %v2121 = vpop.f32.mrb[0].mxu0
      %v2122 = vadd.f32 %v1961, %v2121
      %v2123 = vpop.f32.mrb[0].mxu0
      %v2124 = vpop.f32.mrb[0].mxu0
      %v2125 = vadd.f32 %v1964, %v2124
      %v2126 = vpop.f32.mrb[0].mxu0
      %2127 = vmatprep.mubr.bf16.mxu0 0
      %2128 = vmatmul.mubr.bf16.gmra.mrb[0].mxu0 %v1680
      %v2129 = vpop.f32.mrb[0].mxu0
      %v2130 = vadd.f32 %v1969, %v2129
      %v2131 = vpop.f32.mrb[0].mxu0
      %v2132 = vpop.f32.mrb[0].mxu0
      %v2133 = vadd.f32 %v1972, %v2132
      %v2134 = vpop.f32.mrb[0].mxu0
      %2135 = vmatprep.mubr.bf16.mxu0 0
      %2136 = vmatmul.mubr.bf16.gmra.mrb[0].mxu0 %v1683
      %v2137 = vpop.f32.mrb[0].mxu0
      %v2138 = vadd.f32 %v1977, %v2137
      %v2139 = vpop.f32.mrb[0].mxu0
      %v2140 = vpop.f32.mrb[0].mxu0
      %v2141 = vadd.f32 %v1980, %v2140
      %v2142 = vpop.f32.mrb[0].mxu0
      %2143 = vmatprep.mubr.bf16.mxu0 0
      %2144 = vmatmul.mubr.bf16.gmra.mrb[0].mxu0 %v1686
      %v2145 = vpop.f32.mrb[0].mxu0
      %v2146 = vadd.f32 %v1985, %v2145
      %v2147 = vpop.f32.mrb[0].mxu0
      %v2148 = vpop.f32.mrb[0].mxu0
      %v2149 = vadd.f32 %v1988, %v2148
      %v2150 = vpop.f32.mrb[0].mxu0
      %2151 = vmatprep.mubr.bf16.mxu0 0
      %2152 = vmatmul.mubr.bf16.gmra.mrb[0].mxu0 %v1689
      %v2153 = vpop.f32.mrb[0].mxu0
      %v2154 = vadd.f32 %v1993, %v2153
      %v2155 = vpop.f32.mrb[0].mxu0
      %v2156 = vpop.f32.mrb[0].mxu0
      %v2157 = vadd.f32 %v1996, %v2156
      %v2158 = vpop.f32.mrb[0].mxu0
      %2159 = vmatprep.mubr.bf16.mxu0 0
      %2160 = vmatmul.mubr.bf16.gmra.mrb[0].mxu0 %v1692
      %v2161 = vpop.f32.mrb[0].mxu0
      %v2162 = vadd.f32 %v2001, %v2161
      %v2163 = vpop.f32.mrb[0].mxu0
      %v2164 = vpop.f32.mrb[0].mxu0
      %v2165 = vadd.f32 %v2004, %v2164
      %v2166 = vpop.f32.mrb[0].mxu0
      %2167 = vmatprep.mubr.bf16.mxu0 0
      %2168 = vmatmul.mubr.bf16.gmra.mrb[0].mxu0 %v1695
      %v2169 = vpop.f32.mrb[0].mxu0
      %v2170 = vadd.f32 %v2009, %v2169
      %v2171 = vpop.f32.mrb[0].mxu0
      %v2172 = vpop.f32.mrb[0].mxu0
      %v2173 = vadd.f32 %v2012, %v2172
      %v2174 = vpop.f32.mrb[0].mxu0
      %2175 = vmatprep.mubr.bf16.mxu0 0
      %2176 = vmatmul.mubr.bf16.gmra.mrb[0].mxu0 %v1698
      %v2177 = vpop.f32.mrb[0].mxu0
      %v2178 = vadd.f32 %v2017, %v2177
      %v2179 = vpop.f32.mrb[0].mxu0
      %v2180 = vpop.f32.mrb[0].mxu0
      %v2181 = vadd.f32 %v2020, %v2180
      %v2182 = vpop.f32.mrb[0].mxu0
      %2183 = vmatprep.mubr.bf16.mxu0 0
      %2184 = vmatmul.mubr.bf16.gmra.mrb[0].mxu0 %v1701
      %v2185 = vpop.f32.mrb[0].mxu0
      %v2186 = vadd.f32 %v2025, %v2185
      %v2187 = vpop.f32.mrb[0].mxu0
      %v2188 = vpop.f32.mrb[0].mxu0
      %v2189 = vadd.f32 %v2028, %v2188
      %v2190 = vpop.f32.mrb[0].mxu0
      %2191 = vmatprep.mubr.bf16.mxu0 0
      %2192 = vmatmul.mubr.bf16.gmra.mrb[0].mxu0 %v1704
      %v2193 = vpop.f32.mrb[0].mxu0
      %v2194 = vadd.f32 %v2033, %v2193
      %v2195 = vpop.f32.mrb[0].mxu0
      %v2196 = vpop.f32.mrb[0].mxu0
      %v2197 = vadd.f32 %v2036, %v2196
      %v2198 = vpop.f32.mrb[0].mxu0
      %2199 = vmatprep.mubr.bf16.mxu0 0
      %2200 = vmatmul.mubr.bf16.gmra.mrb[0].mxu0 %v1707
      %v2201 = vpop.f32.mrb[0].mxu0
      %v2202 = vadd.f32 %v2041, %v2201
      %v2203 = vpop.f32.mrb[0].mxu0
      %v2204 = vpop.f32.mrb[0].mxu0
      %v2205 = vadd.f32 %v2044, %v2204
      %v2206 = vpop.f32.mrb[0].mxu0
      %2207 = vmatprep.mubr.bf16.mxu0 0
      %2208 = vmatmul.mubr.bf16.gmra.mrb[0].mxu0 %v1710
      %v2209 = vpop.f32.mrb[0].mxu0
      %v2210 = vadd.f32 %v2049, %v2209
      %v2211 = vpop.f32.mrb[0].mxu0
      %v2212 = vpop.f32.mrb[0].mxu0
      %v2213 = vadd.f32 %v2052, %v2212
      %v2214 = vpop.f32.mrb[0].mxu0
      %2215 = vmatprep.mubr.bf16.mxu0 0
      %2216 = vmatmul.mubr.bf16.gmra.mrb[0].mxu0 %v1713
      %v2217 = vpop.f32.mrb[0].mxu0
      %v2218 = vadd.f32 %v2057, %v2217
      %v2219 = vpop.f32.mrb[0].mxu0
      %v2220 = vpop.f32.mrb[0].mxu0
      %v2221 = vadd.f32 %v2060, %v2220
      %v2222 = vpop.f32.mrb[0].mxu0
      %2223 = vmatprep.mubr.bf16.mxu0 0
      %2224 = vmatmul.mubr.bf16.gmra.mrb[0].mxu0 %v1716
      %v2225 = vpop.f32.mrb[0].mxu0
      %v2226 = vadd.f32 %v2065, %v2225
      %v2227 = vpop.f32.mrb[0].mxu0
      %v2228 = vpop.f32.mrb[0].mxu0
      %v2229 = vadd.f32 %v2068, %v2228
      %v2230 = vpop.f32.mrb[0].mxu0
      %2231 = vdwg.mxu0
      %v2280 = vunpack.c.l.b16 %v1333
      %v2281 = vunpack.c.l.b16 %v1334
      %v2282 = vunpack.c.l.b16 %v1335
      %v2283 = vunpack.c.l.b16 %v1336
      %v2284 = vunpack.c.l.b16 %v1337
      %v2285 = vunpack.c.l.b16 %v1338
      %v2286 = vunpack.c.l.b16 %v1339
      %v2287 = vunpack.c.l.b16 %v1340
      %v2288 = vunpack.c.l.b16 %v1341
      %v2289 = vunpack.c.l.b16 %v1342
      %v2290 = vunpack.c.l.b16 %v1343
      %v2291 = vunpack.c.l.b16 %v1344
      %v2292 = vunpack.c.l.b16 %v1345
      %v2293 = vunpack.c.l.b16 %v1346
      %v2294 = vunpack.c.l.b16 %v1347
      %v2295 = vunpack.c.l.b16 %v1348
      %v2296 = vunpack.c.l.b16 %v1349
      %v2297 = vunpack.c.l.b16 %v1350
      %v2298 = vunpack.c.l.b16 %v1351
      %v2299 = vunpack.c.l.b16 %v1352
      %v2300 = vunpack.c.l.b16 %v1353
      %v2301 = vunpack.c.l.b16 %v1354
      %v2302 = vunpack.c.l.b16 %v1355
      %v2303 = vunpack.c.l.b16 %v1356
      %v2304 = vunpack.c.l.b16 %v1357
      %v2305 = vunpack.c.l.b16 %v1358
      %v2306 = vunpack.c.l.b16 %v1359
      %v2307 = vunpack.c.l.b16 %v1360
      %v2308 = vunpack.c.l.b16 %v1361
      %v2309 = vunpack.c.l.b16 %v1362
      %v2310 = vunpack.c.l.b16 %v1363
      %v2311 = vunpack.c.l.b16 %v1364
      %v2312 = vunpack.c.l.b16 %v1365
      %v2313 = vunpack.c.l.b16 %v1366
      %v2314 = vunpack.c.l.b16 %v1367
      %v2315 = vunpack.c.l.b16 %v1368
      %v2316 = vunpack.c.l.b16 %v1369
      %v2317 = vunpack.c.l.b16 %v1370
      %v2318 = vunpack.c.l.b16 %v1371
      %v2319 = vunpack.c.l.b16 %v1372
      %v2320 = vunpack.c.l.b16 %v1373
      %v2321 = vunpack.c.l.b16 %v1374
      %v2322 = vunpack.c.l.b16 %v1375
      %v2323 = vunpack.c.l.b16 %v1376
      %v2324 = vunpack.c.l.b16 %v1377
      %v2325 = vunpack.c.l.b16 %v1378
      %v2326 = vunpack.c.l.b16 %v1379
      %v2327 = vunpack.c.l.b16 %v1380
      %v2328 = vpack.c.b16 %v2281, %v2280
      %v2329 = vpack.c.b16 %v2283, %v2282
      %v2330 = vpack.c.b16 %v2285, %v2284
      %v2331 = vpack.c.b16 %v2287, %v2286
      %v2332 = vpack.c.b16 %v2289, %v2288
      %v2333 = vpack.c.b16 %v2291, %v2290
      %v2334 = vpack.c.b16 %v2293, %v2292
      %v2335 = vpack.c.b16 %v2295, %v2294
      %v2336 = vpack.c.b16 %v2297, %v2296
      %v2337 = vpack.c.b16 %v2299, %v2298
      %v2338 = vpack.c.b16 %v2301, %v2300
      %v2339 = vpack.c.b16 %v2303, %v2302
      %v2340 = vpack.c.b16 %v2305, %v2304
      %v2341 = vpack.c.b16 %v2307, %v2306
      %v2342 = vpack.c.b16 %v2309, %v2308
      %v2343 = vpack.c.b16 %v2311, %v2310
      %v2344 = vpack.c.b16 %v2313, %v2312
      %v2345 = vpack.c.b16 %v2315, %v2314
      %v2346 = vpack.c.b16 %v2317, %v2316
      %v2347 = vpack.c.b16 %v2319, %v2318
      %v2348 = vpack.c.b16 %v2321, %v2320
      %v2349 = vpack.c.b16 %v2323, %v2322
      %v2350 = vpack.c.b16 %v2325, %v2324
      %v2351 = vpack.c.b16 %v2327, %v2326
      %2376 = vmatprep.subr.bf16.mxu0 0
      %2377 = vmatpush1.bf16.msra.mxu0 %v2328
      %2378 = vmatprep.subr.bf16.mxu0 0
      %2379 = vmatpush1.bf16.msra.mxu0 %v2329
      %2380 = vmatprep.subr.bf16.mxu0 0
      %2381 = vmatpush1.bf16.msra.mxu0 %v2330
      %2382 = vmatprep.subr.bf16.mxu0 0
      %2383 = vmatpush1.bf16.msra.mxu0 %v2331
      %2384 = vmatprep.subr.bf16.mxu0 0
      %2385 = vmatpush1.bf16.msra.mxu0 %v2332
      %2386 = vmatprep.subr.bf16.mxu0 0
      %2387 = vmatpush1.bf16.msra.mxu0 %v2333
      %2388 = vmatprep.subr.bf16.mxu0 0
      %2389 = vmatpush1.bf16.msra.mxu0 %v2334
      %2390 = vmatprep.subr.bf16.mxu0 0
      %2391 = vmatpush1.bf16.msra.mxu0 %v2335
      %2392 = vmatprep.subr.bf16.mxu0 0
      %2393 = vmatpush1.bf16.msra.mxu0 %v2336
      %2394 = vmatprep.subr.bf16.mxu0 0
      %2395 = vmatpush1.bf16.msra.mxu0 %v2337
      %2396 = vmatprep.subr.bf16.mxu0 0
      %2397 = vmatpush1.bf16.msra.mxu0 %v2338
      %2398 = vmatprep.subr.bf16.mxu0 0
      %2399 = vmatpush1.bf16.msra.mxu0 %v2339
      %2400 = vmatprep.subr.bf16.mxu0 0
      %2401 = vmatpush1.bf16.msra.mxu0 %v2340
      %2402 = vmatprep.subr.bf16.mxu0 0
      %2403 = vmatpush1.bf16.msra.mxu0 %v2341
      %2404 = vmatprep.subr.bf16.mxu0 0
      %2405 = vmatpush1.bf16.msra.mxu0 %v2342
      %2406 = vmatprep.subr.bf16.mxu0 0
      %2407 = vmatpush1.bf16.msra.mxu0 %v2343
      %2408 = vmatprep.mubr.bf16.mxu0 %v1286
      %2409 = vmatmul.mubr.bf16.gmra.mrb[0].mxu0 %v1285
      %v2410 = vpop.f32.mrb[0].mxu0
      %v2411 = vadd.f32 %v2106, %v2410
      %v2412 = vpop.f32.mrb[0].mxu0
      %v2413 = vpop.f32.mrb[0].mxu0
      %v2414 = vadd.f32 %v2109, %v2413
      %v2415 = vpop.f32.mrb[0].mxu0
      %2416 = vmatprep.mubr.bf16.mxu0 %v1289
      %2417 = vmatmul.mubr.bf16.gmra.mrb[0].mxu0 %v1288
      %v2418 = vpop.f32.mrb[0].mxu0
      %v2419 = vadd.f32 %v2114, %v2418
      %v2420 = vpop.f32.mrb[0].mxu0
      %v2421 = vpop.f32.mrb[0].mxu0
      %v2422 = vadd.f32 %v2117, %v2421
      %v2423 = vpop.f32.mrb[0].mxu0
      %2424 = vmatprep.mubr.bf16.mxu0 %v1292
      %2425 = vmatmul.mubr.bf16.gmra.mrb[0].mxu0 %v1291
      %v2426 = vpop.f32.mrb[0].mxu0
      %v2427 = vadd.f32 %v2122, %v2426
      %v2428 = vpop.f32.mrb[0].mxu0
      %v2429 = vpop.f32.mrb[0].mxu0
      %v2430 = vadd.f32 %v2125, %v2429
      %v2431 = vpop.f32.mrb[0].mxu0
      %2432 = vmatprep.mubr.bf16.mxu0 %v1295
      %2433 = vmatmul.mubr.bf16.gmra.mrb[0].mxu0 %v1294
      %v2434 = vpop.f32.mrb[0].mxu0
      %v2435 = vadd.f32 %v2130, %v2434
      %v2436 = vpop.f32.mrb[0].mxu0
      %v2437 = vpop.f32.mrb[0].mxu0
      %v2438 = vadd.f32 %v2133, %v2437
      %v2439 = vpop.f32.mrb[0].mxu0
      %2440 = vmatprep.mubr.bf16.mxu0 %v1298
      %2441 = vmatmul.mubr.bf16.gmra.mrb[0].mxu0 %v1297
      %v2442 = vpop.f32.mrb[0].mxu0
      %v2443 = vadd.f32 %v2138, %v2442
      %v2444 = vpop.f32.mrb[0].mxu0
      %v2445 = vpop.f32.mrb[0].mxu0
      %v2446 = vadd.f32 %v2141, %v2445
      %v2447 = vpop.f32.mrb[0].mxu0
      %2448 = vmatprep.mubr.bf16.mxu0 %v1301
      %2449 = vmatmul.mubr.bf16.gmra.mrb[0].mxu0 %v1300
      %v2450 = vpop.f32.mrb[0].mxu0
      %v2451 = vadd.f32 %v2146, %v2450
      %v2452 = vpop.f32.mrb[0].mxu0
      %v2453 = vpop.f32.mrb[0].mxu0
      %v2454 = vadd.f32 %v2149, %v2453
      %v2455 = vpop.f32.mrb[0].mxu0
      %2456 = vmatprep.mubr.bf16.mxu0 %v1304
      %2457 = vmatmul.mubr.bf16.gmra.mrb[0].mxu0 %v1303
      %v2458 = vpop.f32.mrb[0].mxu0
      %v2459 = vadd.f32 %v2154, %v2458
      %v2460 = vpop.f32.mrb[0].mxu0
      %v2461 = vpop.f32.mrb[0].mxu0
      %v2462 = vadd.f32 %v2157, %v2461
      %v2463 = vpop.f32.mrb[0].mxu0
      %2464 = vmatprep.mubr.bf16.mxu0 %v1307
      %2465 = vmatmul.mubr.bf16.gmra.mrb[0].mxu0 %v1306
      %v2466 = vpop.f32.mrb[0].mxu0
      %v2467 = vadd.f32 %v2162, %v2466
      %v2468 = vpop.f32.mrb[0].mxu0
      %v2469 = vpop.f32.mrb[0].mxu0
      %v2470 = vadd.f32 %v2165, %v2469
      %v2471 = vpop.f32.mrb[0].mxu0
      %2472 = vmatprep.mubr.bf16.mxu0 %v1310
      %2473 = vmatmul.mubr.bf16.gmra.mrb[0].mxu0 %v1309
      %v2474 = vpop.f32.mrb[0].mxu0
      %v2475 = vadd.f32 %v2170, %v2474
      %v2476 = vpop.f32.mrb[0].mxu0
      %v2477 = vpop.f32.mrb[0].mxu0
      %v2478 = vadd.f32 %v2173, %v2477
      %v2479 = vpop.f32.mrb[0].mxu0
      %2480 = vmatprep.mubr.bf16.mxu0 %v1313
      %2481 = vmatmul.mubr.bf16.gmra.mrb[0].mxu0 %v1312
      %v2482 = vpop.f32.mrb[0].mxu0
      %v2483 = vadd.f32 %v2178, %v2482
      %v2484 = vpop.f32.mrb[0].mxu0
      %v2485 = vpop.f32.mrb[0].mxu0
      %v2486 = vadd.f32 %v2181, %v2485
      %v2487 = vpop.f32.mrb[0].mxu0
      %2488 = vmatprep.mubr.bf16.mxu0 %v1316
      %2489 = vmatmul.mubr.bf16.gmra.mrb[0].mxu0 %v1315
      %v2490 = vpop.f32.mrb[0].mxu0
      %v2491 = vadd.f32 %v2186, %v2490
      %v2492 = vpop.f32.mrb[0].mxu0
      %v2493 = vpop.f32.mrb[0].mxu0
      %v2494 = vadd.f32 %v2189, %v2493
      %v2495 = vpop.f32.mrb[0].mxu0
      %2496 = vmatprep.mubr.bf16.mxu0 %v1319
      %2497 = vmatmul.mubr.bf16.gmra.mrb[0].mxu0 %v1318
      %v2498 = vpop.f32.mrb[0].mxu0
      %v2499 = vadd.f32 %v2194, %v2498
      %v2500 = vpop.f32.mrb[0].mxu0
      %v2501 = vpop.f32.mrb[0].mxu0
      %v2502 = vadd.f32 %v2197, %v2501
      %v2503 = vpop.f32.mrb[0].mxu0
      %2504 = vmatprep.mubr.bf16.mxu0 %v1322
      %2505 = vmatmul.mubr.bf16.gmra.mrb[0].mxu0 %v1321
      %v2506 = vpop.f32.mrb[0].mxu0
      %v2507 = vadd.f32 %v2202, %v2506
      %v2508 = vpop.f32.mrb[0].mxu0
      %v2509 = vpop.f32.mrb[0].mxu0
      %v2510 = vadd.f32 %v2205, %v2509
      %v2511 = vpop.f32.mrb[0].mxu0
      %2512 = vmatprep.mubr.bf16.mxu0 %v1325
      %2513 = vmatmul.mubr.bf16.gmra.mrb[0].mxu0 %v1324
      %v2514 = vpop.f32.mrb[0].mxu0
      %v2515 = vadd.f32 %v2210, %v2514
      %v2516 = vpop.f32.mrb[0].mxu0
      %v2517 = vpop.f32.mrb[0].mxu0
      %v2518 = vadd.f32 %v2213, %v2517
      %v2519 = vpop.f32.mrb[0].mxu0
      %2520 = vmatprep.mubr.bf16.mxu0 %v1328
      %2521 = vmatmul.mubr.bf16.gmra.mrb[0].mxu0 %v1327
      %v2522 = vpop.f32.mrb[0].mxu0
      %v2523 = vadd.f32 %v2218, %v2522
      %v2524 = vpop.f32.mrb[0].mxu0
      %v2525 = vpop.f32.mrb[0].mxu0
      %v2526 = vadd.f32 %v2221, %v2525
      %v2527 = vpop.f32.mrb[0].mxu0
      %2528 = vmatprep.mubr.bf16.mxu0 %v1331
      %2529 = vmatmul.mubr.bf16.gmra.mrb[0].mxu0 %v1330
      %v2530 = vpop.f32.mrb[0].mxu0
      %v2531 = vadd.f32 %v2226, %v2530
      %v2532 = vpop.f32.mrb[0].mxu0
      %v2533 = vpop.f32.mrb[0].mxu0
      %v2534 = vadd.f32 %v2229, %v2533
      %v2535 = vpop.f32.mrb[0].mxu0
      %2536 = vdwg.mxu0
      %2537 = vmatprep.subr.bf16.mxu0 0
      %2538 = vmatpush1.bf16.msra.mxu0 %v2344
      %2539 = vmatprep.subr.bf16.mxu0 0
      %2540 = vmatpush1.bf16.msra.mxu0 %v2345
      %2541 = vmatprep.subr.bf16.mxu0 0
      %2542 = vmatpush1.bf16.msra.mxu0 %v2346
      %2543 = vmatprep.subr.bf16.mxu0 0
      %2544 = vmatpush1.bf16.msra.mxu0 %v2347
      %2545 = vmatprep.subr.bf16.mxu0 0
      %2546 = vmatpush1.bf16.msra.mxu0 %v2348
      %2547 = vmatprep.subr.bf16.mxu0 0
      %2548 = vmatpush1.bf16.msra.mxu0 %v2349
      %2549 = vmatprep.subr.bf16.mxu0 0
      %2550 = vmatpush1.bf16.msra.mxu0 %v2350
      %2551 = vmatprep.subr.bf16.mxu0 0
      %2552 = vmatpush1.bf16.msra.mxu0 %v2351
      %2553 = vmatprep.subr.bf16.mxu0 0
      %2554 = vmatpush1.bf16.msra.mxu0 0
      %2555 = vmatprep.subr.bf16.mxu0 0
      %2556 = vmatpush1.bf16.msra.mxu0 0
      %2557 = vmatprep.subr.bf16.mxu0 0
      %2558 = vmatpush1.bf16.msra.mxu0 0
      %2559 = vmatprep.subr.bf16.mxu0 0
      %2560 = vmatpush1.bf16.msra.mxu0 0
      %2561 = vmatprep.subr.bf16.mxu0 0
      %2562 = vmatpush1.bf16.msra.mxu0 0
      %2563 = vmatprep.subr.bf16.mxu0 0
      %2564 = vmatpush1.bf16.msra.mxu0 0
      %2565 = vmatprep.subr.bf16.mxu0 0
      %2566 = vmatpush1.bf16.msra.mxu0 0
      %2567 = vmatprep.subr.bf16.mxu0 0
      %2568 = vmatpush1.bf16.msra.mxu0 0
      %2569 = vmatprep.mubr.bf16.mxu0 0
      %2570 = vmatmul.mubr.bf16.gmra.mrb[0].mxu0 %v1287
      %v2571 = vpop.f32.mrb[0].mxu0
      %v2572 = vadd.f32 %v2411, %v2571
      %v2573 = vpop.f32.mrb[0].mxu0
      %v2574 = vpop.f32.mrb[0].mxu0
      %v2575 = vadd.f32 %v2414, %v2574
      %v2576 = vpop.f32.mrb[0].mxu0
      %2577 = vmatprep.mubr.bf16.mxu0 0
      %2578 = vmatmul.mubr.bf16.gmra.mrb[0].mxu0 %v1290
      %v2579 = vpop.f32.mrb[0].mxu0
      %v2580 = vadd.f32 %v2419, %v2579
      %v2581 = vpop.f32.mrb[0].mxu0
      %v2582 = vpop.f32.mrb[0].mxu0
      %v2583 = vadd.f32 %v2422, %v2582
      %v2584 = vpop.f32.mrb[0].mxu0
      %2585 = vmatprep.mubr.bf16.mxu0 0
      %2586 = vmatmul.mubr.bf16.gmra.mrb[0].mxu0 %v1293
      %v2587 = vpop.f32.mrb[0].mxu0
      %v2588 = vadd.f32 %v2427, %v2587
      %v2589 = vpop.f32.mrb[0].mxu0
      %v2590 = vpop.f32.mrb[0].mxu0
      %v2591 = vadd.f32 %v2430, %v2590
      %v2592 = vpop.f32.mrb[0].mxu0
      %2593 = vmatprep.mubr.bf16.mxu0 0
      %2594 = vmatmul.mubr.bf16.gmra.mrb[0].mxu0 %v1296
      %v2595 = vpop.f32.mrb[0].mxu0
      %v2596 = vadd.f32 %v2435, %v2595
      %v2597 = vpop.f32.mrb[0].mxu0
      %v2598 = vpop.f32.mrb[0].mxu0
      %v2599 = vadd.f32 %v2438, %v2598
      %v2600 = vpop.f32.mrb[0].mxu0
      %2601 = vmatprep.mubr.bf16.mxu0 0
      %2602 = vmatmul.mubr.bf16.gmra.mrb[0].mxu0 %v1299
      %v2603 = vpop.f32.mrb[0].mxu0
      %v2604 = vadd.f32 %v2443, %v2603
      %v2605 = vpop.f32.mrb[0].mxu0
      %v2606 = vpop.f32.mrb[0].mxu0
      %v2607 = vadd.f32 %v2446, %v2606
      %v2608 = vpop.f32.mrb[0].mxu0
      %2609 = vmatprep.mubr.bf16.mxu0 0
      %2610 = vmatmul.mubr.bf16.gmra.mrb[0].mxu0 %v1302
      %v2611 = vpop.f32.mrb[0].mxu0
      %v2612 = vadd.f32 %v2451, %v2611
      %v2613 = vpop.f32.mrb[0].mxu0
      %v2614 = vpop.f32.mrb[0].mxu0
      %v2615 = vadd.f32 %v2454, %v2614
      %v2616 = vpop.f32.mrb[0].mxu0
      %2617 = vmatprep.mubr.bf16.mxu0 0
      %2618 = vmatmul.mubr.bf16.gmra.mrb[0].mxu0 %v1305
      %v2619 = vpop.f32.mrb[0].mxu0
      %v2620 = vadd.f32 %v2459, %v2619
      %v2621 = vpop.f32.mrb[0].mxu0
      %v2622 = vpop.f32.mrb[0].mxu0
      %v2623 = vadd.f32 %v2462, %v2622
      %v2624 = vpop.f32.mrb[0].mxu0
      %2625 = vmatprep.mubr.bf16.mxu0 0
      %2626 = vmatmul.mubr.bf16.gmra.mrb[0].mxu0 %v1308
      %v2627 = vpop.f32.mrb[0].mxu0
      %v2628 = vadd.f32 %v2467, %v2627
      %v2629 = vpop.f32.mrb[0].mxu0
      %v2630 = vpop.f32.mrb[0].mxu0
      %v2631 = vadd.f32 %v2470, %v2630
      %v2632 = vpop.f32.mrb[0].mxu0
      %2633 = vmatprep.mubr.bf16.mxu0 0
      %2634 = vmatmul.mubr.bf16.gmra.mrb[0].mxu0 %v1311
      %v2635 = vpop.f32.mrb[0].mxu0
      %v2636 = vadd.f32 %v2475, %v2635
      %v2637 = vpop.f32.mrb[0].mxu0
      %v2638 = vpop.f32.mrb[0].mxu0
      %v2639 = vadd.f32 %v2478, %v2638
      %v2640 = vpop.f32.mrb[0].mxu0
      %2641 = vmatprep.mubr.bf16.mxu0 0
      %2642 = vmatmul.mubr.bf16.gmra.mrb[0].mxu0 %v1314
      %v2643 = vpop.f32.mrb[0].mxu0
      %v2644 = vadd.f32 %v2483, %v2643
      %v2645 = vpop.f32.mrb[0].mxu0
      %v2646 = vpop.f32.mrb[0].mxu0
      %v2647 = vadd.f32 %v2486, %v2646
      %v2648 = vpop.f32.mrb[0].mxu0
      %2649 = vmatprep.mubr.bf16.mxu0 0
      %2650 = vmatmul.mubr.bf16.gmra.mrb[0].mxu0 %v1317
      %v2651 = vpop.f32.mrb[0].mxu0
      %v2652 = vadd.f32 %v2491, %v2651
      %v2653 = vpop.f32.mrb[0].mxu0
      %v2654 = vpop.f32.mrb[0].mxu0
      %v2655 = vadd.f32 %v2494, %v2654
      %v2656 = vpop.f32.mrb[0].mxu0
      %2657 = vmatprep.mubr.bf16.mxu0 0
      %2658 = vmatmul.mubr.bf16.gmra.mrb[0].mxu0 %v1320
      %v2659 = vpop.f32.mrb[0].mxu0
      %v2660 = vadd.f32 %v2499, %v2659
      %v2661 = vpop.f32.mrb[0].mxu0
      %v2662 = vpop.f32.mrb[0].mxu0
      %v2663 = vadd.f32 %v2502, %v2662
      %v2664 = vpop.f32.mrb[0].mxu0
      %2665 = vmatprep.mubr.bf16.mxu0 0
      %2666 = vmatmul.mubr.bf16.gmra.mrb[0].mxu0 %v1323
      %v2667 = vpop.f32.mrb[0].mxu0
      %v2668 = vadd.f32 %v2507, %v2667
      %v2669 = vpop.f32.mrb[0].mxu0
      %v2670 = vpop.f32.mrb[0].mxu0
      %v2671 = vadd.f32 %v2510, %v2670
      %v2672 = vpop.f32.mrb[0].mxu0
      %2673 = vmatprep.mubr.bf16.mxu0 0
      %2674 = vmatmul.mubr.bf16.gmra.mrb[0].mxu0 %v1326
      %v2675 = vpop.f32.mrb[0].mxu0
      %v2676 = vadd.f32 %v2515, %v2675
      %v2677 = vpop.f32.mrb[0].mxu0
      %v2678 = vpop.f32.mrb[0].mxu0
      %v2679 = vadd.f32 %v2518, %v2678
      %v2680 = vpop.f32.mrb[0].mxu0
      %2681 = vmatprep.mubr.bf16.mxu0 0
      %2682 = vmatmul.mubr.bf16.gmra.mrb[0].mxu0 %v1329
      %v2683 = vpop.f32.mrb[0].mxu0
      %v2684 = vadd.f32 %v2523, %v2683
      %v2685 = vpop.f32.mrb[0].mxu0
      %v2686 = vpop.f32.mrb[0].mxu0
      %v2687 = vadd.f32 %v2526, %v2686
      %v2688 = vpop.f32.mrb[0].mxu0
      %2689 = vmatprep.mubr.bf16.mxu0 0
      %2690 = vmatmul.mubr.bf16.gmra.mrb[0].mxu0 %v1332
      %v2691 = vpop.f32.mrb[0].mxu0
      %v2692 = vadd.f32 %v2531, %v2691
      %v2693 = vpop.f32.mrb[0].mxu0
      %v2694 = vpop.f32.mrb[0].mxu0
      %v2695 = vadd.f32 %v2534, %v2694
      %v2696 = vpop.f32.mrb[0].mxu0
      %2697 = vdwg.mxu0
      %v2698 = vsel %vm707, 1, 0
      %v2699 = vsel %vm708, 1, 0
      %v2700 = vsel %vm709, 1, 0
      %v2701 = vsel %vm710, 1, 0
      %v2702 = vsel %vm711, 1, 0
      %v2703 = vsel %vm712, 1, 0
      %v2704 = vsel %vm713, 1, 0
      %v2705 = vsel %vm714, 1, 0
      %v2706 = vsel %vm715, 1, 0
      %v2707 = vsel %vm716, 1, 0
      %v2708 = vsel %vm717, 1, 0
      %v2709 = vsel %vm718, 1, 0
      %v2710 = vsel %vm719, 1, 0
      %v2711 = vsel %vm720, 1, 0
      %v2712 = vsel %vm721, 1, 0
      %v2713 = vsel %vm722, 1, 0
      %v2714 = vsel %vm723, 1, 0
      %v2715 = vsel %vm724, 1, 0
      %v2716 = vsel %vm725, 1, 0
      %v2717 = vsel %vm726, 1, 0
      %v2718 = vsel %vm727, 1, 0
      %v2719 = vsel %vm728, 1, 0
      %v2720 = vsel %vm729, 1, 0
      %v2721 = vsel %vm730, 1, 0
      %v2722 = vsel %vm731, 1, 0
      %v2723 = vsel %vm732, 1, 0
      %v2724 = vsel %vm733, 1, 0
      %v2725 = vsel %vm734, 1, 0
      %v2726 = vsel %vm735, 1, 0
      %v2727 = vsel %vm736, 1, 0
      %v2728 = vsel %vm737, 1, 0
      %v2729 = vsel %vm738, 1, 0
      %vm2730 = vcmp.eq.s32.totalorder %v2698, 1
      %vm2731 = vcmp.eq.s32.totalorder %v2699, 1
      %vm2732 = vcmp.eq.s32.totalorder %v2700, 1
      %vm2733 = vcmp.eq.s32.totalorder %v2701, 1
      %vm2734 = vcmp.eq.s32.totalorder %v2702, 1
      %vm2735 = vcmp.eq.s32.totalorder %v2703, 1
      %vm2736 = vcmp.eq.s32.totalorder %v2704, 1
      %vm2737 = vcmp.eq.s32.totalorder %v2705, 1
      %vm2738 = vcmp.eq.s32.totalorder %v2706, 1
      %vm2739 = vcmp.eq.s32.totalorder %v2707, 1
      %vm2740 = vcmp.eq.s32.totalorder %v2708, 1
      %vm2741 = vcmp.eq.s32.totalorder %v2709, 1
      %vm2742 = vcmp.eq.s32.totalorder %v2710, 1
      %vm2743 = vcmp.eq.s32.totalorder %v2711, 1
      %vm2744 = vcmp.eq.s32.totalorder %v2712, 1
      %vm2745 = vcmp.eq.s32.totalorder %v2713, 1
      %vm2746 = vcmp.eq.s32.totalorder %v2714, 1
      %vm2747 = vcmp.eq.s32.totalorder %v2715, 1
      %vm2748 = vcmp.eq.s32.totalorder %v2716, 1
      %vm2749 = vcmp.eq.s32.totalorder %v2717, 1
      %vm2750 = vcmp.eq.s32.totalorder %v2718, 1
      %vm2751 = vcmp.eq.s32.totalorder %v2719, 1
      %vm2752 = vcmp.eq.s32.totalorder %v2720, 1
      %vm2753 = vcmp.eq.s32.totalorder %v2721, 1
      %vm2754 = vcmp.eq.s32.totalorder %v2722, 1
      %vm2755 = vcmp.eq.s32.totalorder %v2723, 1
      %vm2756 = vcmp.eq.s32.totalorder %v2724, 1
      %vm2757 = vcmp.eq.s32.totalorder %v2725, 1
      %vm2758 = vcmp.eq.s32.totalorder %v2726, 1
      %vm2759 = vcmp.eq.s32.totalorder %v2727, 1
      %vm2760 = vcmp.eq.s32.totalorder %v2728, 1
      %vm2761 = vcmp.eq.s32.totalorder %v2729, 1
      %v2762 = vsel %vm2730, %v833, 0.0
      %v2763 = vsel %vm2731, %v832, 0.0
      %v2764 = vsel %vm2732, %v831, 0.0
      %v2765 = vsel %vm2733, %v830, 0.0
      %v2766 = vsel %vm2734, %v829, 0.0
      %v2767 = vsel %vm2735, %v828, 0.0
      %v2768 = vsel %vm2736, %v827, 0.0
      %v2769 = vsel %vm2737, %v826, 0.0
      %v2770 = vsel %vm2738, %v825, 0.0
      %v2771 = vsel %vm2739, %v824, 0.0
      %v2772 = vsel %vm2740, %v823, 0.0
      %v2773 = vsel %vm2741, %v822, 0.0
      %v2774 = vsel %vm2742, %v821, 0.0
      %v2775 = vsel %vm2743, %v820, 0.0
      %v2776 = vsel %vm2744, %v819, 0.0
      %v2777 = vsel %vm2745, %v818, 0.0
      %v2778 = vsel %vm2746, %v817, 0.0
      %v2779 = vsel %vm2747, %v816, 0.0
      %v2780 = vsel %vm2748, %v815, 0.0
      %v2781 = vsel %vm2749, %v814, 0.0
      %v2782 = vsel %vm2750, %v813, 0.0
      %v2783 = vsel %vm2751, %v812, 0.0
      %v2784 = vsel %vm2752, %v811, 0.0
      %v2785 = vsel %vm2753, %v810, 0.0
      %v2786 = vsel %vm2754, %v809, 0.0
      %v2787 = vsel %vm2755, %v808, 0.0
      %v2788 = vsel %vm2756, %v807, 0.0
      %v2789 = vsel %vm2757, %v806, 0.0
      %v2790 = vsel %vm2758, %v805, 0.0
      %v2791 = vsel %vm2759, %v804, 0.0
      %v2792 = vsel %vm2760, %v835, 0.0
      %v2793 = vsel %vm2761, %v834, 0.0
      %v2794 = vpack.c.bf16 %v2763, %v2762
      %v2795 = vpack.c.bf16 %v2765, %v2764
      %v2796 = vpack.c.bf16 %v2767, %v2766
      %v2797 = vpack.c.bf16 %v2769, %v2768
      %v2798 = vpack.c.bf16 %v2771, %v2770
      %v2799 = vpack.c.bf16 %v2773, %v2772
      %v2800 = vpack.c.bf16 %v2775, %v2774
      %v2801 = vpack.c.bf16 %v2777, %v2776
      %v2802 = vpack.c.bf16 %v2779, %v2778
      %v2803 = vpack.c.bf16 %v2781, %v2780
      %v2804 = vpack.c.bf16 %v2783, %v2782
      %v2805 = vpack.c.bf16 %v2785, %v2784
      %v2806 = vpack.c.bf16 %v2787, %v2786
      %v2807 = vpack.c.bf16 %v2789, %v2788
      %v2808 = vpack.c.bf16 %v2791, %v2790
      %v2809 = vpack.c.bf16 %v2793, %v2792
      %2810 = vst [vmem:[#allocation2] sm:$0xff] %v2794
      %2811 = vst [vmem:[#allocation2 + $0x18] sm:$0xff] %v2795
      %2812 = vst [vmem:[#allocation2 + $0x30] sm:$0xff] %v2796
      %2813 = vst [vmem:[#allocation2 + $0x48] sm:$0xff] %v2797
      %2814 = vst [vmem:[#allocation2 + $0x60] sm:$0xff] %v2798
      %2815 = vst [vmem:[#allocation2 + $0x78] sm:$0xff] %v2799
      %2816 = vst [vmem:[#allocation2 + $0x90] sm:$0xff] %v2800
      %2817 = vst [vmem:[#allocation2 + $0xa8] sm:$0xff] %v2801
      %2818 = vst [vmem:[#allocation2 + $0xc0] sm:$0xff] %v2802
      %2819 = vst [vmem:[#allocation2 + $0xd8] sm:$0xff] %v2803
      %2820 = vst [vmem:[#allocation2 + $0xf0] sm:$0xff] %v2804
      %2821 = vst [vmem:[#allocation2 + $0x108] sm:$0xff] %v2805
      %2822 = vst [vmem:[#allocation2 + $0x120] sm:$0xff] %v2806
      %2823 = vst [vmem:[#allocation2 + $0x138] sm:$0xff] %v2807
      %2824 = vst [vmem:[#allocation2 + $0x150] sm:$0xff] %v2808
      %2825 = vst [vmem:[#allocation2 + $0x168] sm:$0xff] %v2809
      %v2826 = vsel %vm547, 1, 0
      %v2827 = vsel %vm548, 1, 0
      %v2828 = vsel %vm549, 1, 0
      %v2829 = vsel %vm550, 1, 0
      %v2830 = vsel %vm551, 1, 0
      %v2831 = vsel %vm552, 1, 0
      %v2832 = vsel %vm553, 1, 0
      %v2833 = vsel %vm554, 1, 0
      %v2834 = vsel %vm555, 1, 0
      %v2835 = vsel %vm556, 1, 0
      %v2836 = vsel %vm557, 1, 0
      %v2837 = vsel %vm558, 1, 0
      %v2838 = vsel %vm559, 1, 0
      %v2839 = vsel %vm560, 1, 0
      %v2840 = vsel %vm561, 1, 0
      %v2841 = vsel %vm562, 1, 0
      %v2842 = vsel %vm563, 1, 0
      %v2843 = vsel %vm564, 1, 0
      %v2844 = vsel %vm565, 1, 0
      %v2845 = vsel %vm566, 1, 0
      %v2846 = vsel %vm567, 1, 0
      %v2847 = vsel %vm568, 1, 0
      %v2848 = vsel %vm569, 1, 0
      %v2849 = vsel %vm570, 1, 0
      %v2850 = vsel %vm571, 1, 0
      %v2851 = vsel %vm572, 1, 0
      %v2852 = vsel %vm573, 1, 0
      %v2853 = vsel %vm574, 1, 0
      %v2854 = vsel %vm575, 1, 0
      %v2855 = vsel %vm576, 1, 0
      %v2856 = vsel %vm577, 1, 0
      %v2857 = vsel %vm578, 1, 0
      %vm2858 = vcmp.eq.s32.totalorder %v2826, 1
      %vm2859 = vcmp.eq.s32.totalorder %v2827, 1
      %vm2860 = vcmp.eq.s32.totalorder %v2828, 1
      %vm2861 = vcmp.eq.s32.totalorder %v2829, 1
      %vm2862 = vcmp.eq.s32.totalorder %v2830, 1
      %vm2863 = vcmp.eq.s32.totalorder %v2831, 1
      %vm2864 = vcmp.eq.s32.totalorder %v2832, 1
      %vm2865 = vcmp.eq.s32.totalorder %v2833, 1
      %vm2866 = vcmp.eq.s32.totalorder %v2834, 1
      %vm2867 = vcmp.eq.s32.totalorder %v2835, 1
      %vm2868 = vcmp.eq.s32.totalorder %v2836, 1
      %vm2869 = vcmp.eq.s32.totalorder %v2837, 1
      %vm2870 = vcmp.eq.s32.totalorder %v2838, 1
      %vm2871 = vcmp.eq.s32.totalorder %v2839, 1
      %vm2872 = vcmp.eq.s32.totalorder %v2840, 1
      %vm2873 = vcmp.eq.s32.totalorder %v2841, 1
      %vm2874 = vcmp.eq.s32.totalorder %v2842, 1
      %vm2875 = vcmp.eq.s32.totalorder %v2843, 1
      %vm2876 = vcmp.eq.s32.totalorder %v2844, 1
      %vm2877 = vcmp.eq.s32.totalorder %v2845, 1
      %vm2878 = vcmp.eq.s32.totalorder %v2846, 1
      %vm2879 = vcmp.eq.s32.totalorder %v2847, 1
      %vm2880 = vcmp.eq.s32.totalorder %v2848, 1
      %vm2881 = vcmp.eq.s32.totalorder %v2849, 1
      %vm2882 = vcmp.eq.s32.totalorder %v2850, 1
      %vm2883 = vcmp.eq.s32.totalorder %v2851, 1
      %vm2884 = vcmp.eq.s32.totalorder %v2852, 1
      %vm2885 = vcmp.eq.s32.totalorder %v2853, 1
      %vm2886 = vcmp.eq.s32.totalorder %v2854, 1
      %vm2887 = vcmp.eq.s32.totalorder %v2855, 1
      %vm2888 = vcmp.eq.s32.totalorder %v2856, 1
      %vm2889 = vcmp.eq.s32.totalorder %v2857, 1
      %v2890 = vsel %vm2858, %v228, 0.0
      %v2891 = vsel %vm2859, %v229, 0.0
      %v2892 = vsel %vm2860, %v230, 0.0
      %v2893 = vsel %vm2861, %v231, 0.0
      %v2894 = vsel %vm2862, %v232, 0.0
      %v2895 = vsel %vm2863, %v233, 0.0
      %v2896 = vsel %vm2864, %v234, 0.0
      %v2897 = vsel %vm2865, %v235, 0.0
      %v2898 = vsel %vm2866, %v236, 0.0
      %v2899 = vsel %vm2867, %v237, 0.0
      %v2900 = vsel %vm2868, %v238, 0.0
      %v2901 = vsel %vm2869, %v239, 0.0
      %v2902 = vsel %vm2870, %v240, 0.0
      %v2903 = vsel %vm2871, %v241, 0.0
      %v2904 = vsel %vm2872, %v242, 0.0
      %v2905 = vsel %vm2873, %v243, 0.0
      %v2906 = vsel %vm2874, %v244, 0.0
      %v2907 = vsel %vm2875, %v245, 0.0
      %v2908 = vsel %vm2876, %v246, 0.0
      %v2909 = vsel %vm2877, %v247, 0.0
      %v2910 = vsel %vm2878, %v248, 0.0
      %v2911 = vsel %vm2879, %v249, 0.0
      %v2912 = vsel %vm2880, %v250, 0.0
      %v2913 = vsel %vm2881, %v251, 0.0
      %v2914 = vsel %vm2882, %v252, 0.0
      %v2915 = vsel %vm2883, %v253, 0.0
      %v2916 = vsel %vm2884, %v254, 0.0
      %v2917 = vsel %vm2885, %v255, 0.0
      %v2918 = vsel %vm2886, %v256, 0.0
      %v2919 = vsel %vm2887, %v257, 0.0
      %v2920 = vsel %vm2888, %v226, 0.0
      %v2921 = vsel %vm2889, %v227, 0.0
      %v2922 = vpack.c.bf16 %v2891, %v2890
      %v2923 = vpack.c.bf16 %v2893, %v2892
      %v2924 = vpack.c.bf16 %v2895, %v2894
      %v2925 = vpack.c.bf16 %v2897, %v2896
      %v2926 = vpack.c.bf16 %v2899, %v2898
      %v2927 = vpack.c.bf16 %v2901, %v2900
      %v2928 = vpack.c.bf16 %v2903, %v2902
      %v2929 = vpack.c.bf16 %v2905, %v2904
      %v2930 = vpack.c.bf16 %v2907, %v2906
      %v2931 = vpack.c.bf16 %v2909, %v2908
      %v2932 = vpack.c.bf16 %v2911, %v2910
      %v2933 = vpack.c.bf16 %v2913, %v2912
      %v2934 = vpack.c.bf16 %v2915, %v2914
      %v2935 = vpack.c.bf16 %v2917, %v2916
      %v2936 = vpack.c.bf16 %v2919, %v2918
      %v2937 = vpack.c.bf16 %v2921, %v2920
      %2938 = vst [vmem:[#allocation2 + $0x8] sm:$0xff] %v2922
      %2939 = vst [vmem:[#allocation2 + $0x20] sm:$0xff] %v2923
      %2940 = vst [vmem:[#allocation2 + $0x38] sm:$0xff] %v2924
      %2941 = vst [vmem:[#allocation2 + $0x50] sm:$0xff] %v2925
      %2942 = vst [vmem:[#allocation2 + $0x68] sm:$0xff] %v2926
      %2943 = vst [vmem:[#allocation2 + $0x80] sm:$0xff] %v2927
      %2944 = vst [vmem:[#allocation2 + $0x98] sm:$0xff] %v2928
      %2945 = vst [vmem:[#allocation2 + $0xb0] sm:$0xff] %v2929
      %2946 = vst [vmem:[#allocation2 + $0xc8] sm:$0xff] %v2930
      %2947 = vst [vmem:[#allocation2 + $0xe0] sm:$0xff] %v2931
      %2948 = vst [vmem:[#allocation2 + $0xf8] sm:$0xff] %v2932
      %2949 = vst [vmem:[#allocation2 + $0x110] sm:$0xff] %v2933
      %2950 = vst [vmem:[#allocation2 + $0x128] sm:$0xff] %v2934
      %2951 = vst [vmem:[#allocation2 + $0x140] sm:$0xff] %v2935
      %2952 = vst [vmem:[#allocation2 + $0x158] sm:$0xff] %v2936
      %2953 = vst [vmem:[#allocation2 + $0x170] sm:$0xff] %v2937
      %v2954 = vsel %vm739, 1, 0
      %v2955 = vsel %vm740, 1, 0
      %v2956 = vsel %vm741, 1, 0
      %v2957 = vsel %vm742, 1, 0
      %v2958 = vsel %vm743, 1, 0
      %v2959 = vsel %vm744, 1, 0
      %v2960 = vsel %vm745, 1, 0
      %v2961 = vsel %vm746, 1, 0
      %v2962 = vsel %vm747, 1, 0
      %v2963 = vsel %vm748, 1, 0
      %v2964 = vsel %vm749, 1, 0
      %v2965 = vsel %vm750, 1, 0
      %v2966 = vsel %vm751, 1, 0
      %v2967 = vsel %vm752, 1, 0
      %v2968 = vsel %vm753, 1, 0
      %v2969 = vsel %vm754, 1, 0
      %v2970 = vsel %vm755, 1, 0
      %v2971 = vsel %vm756, 1, 0
      %v2972 = vsel %vm757, 1, 0
      %v2973 = vsel %vm758, 1, 0
      %v2974 = vsel %vm759, 1, 0
      %v2975 = vsel %vm760, 1, 0
      %v2976 = vsel %vm761, 1, 0
      %v2977 = vsel %vm762, 1, 0
      %v2978 = vsel %vm763, 1, 0
      %v2979 = vsel %vm764, 1, 0
      %v2980 = vsel %vm765, 1, 0
      %v2981 = vsel %vm766, 1, 0
      %v2982 = vsel %vm767, 1, 0
      %v2983 = vsel %vm768, 1, 0
      %v2984 = vsel %vm769, 1, 0
      %v2985 = vsel %vm770, 1, 0
      %vm2986 = vcmp.eq.s32.totalorder %v2954, 1
      %vm2987 = vcmp.eq.s32.totalorder %v2955, 1
      %vm2988 = vcmp.eq.s32.totalorder %v2956, 1
      %vm2989 = vcmp.eq.s32.totalorder %v2957, 1
      %vm2990 = vcmp.eq.s32.totalorder %v2958, 1
      %vm2991 = vcmp.eq.s32.totalorder %v2959, 1
      %vm2992 = vcmp.eq.s32.totalorder %v2960, 1
      %vm2993 = vcmp.eq.s32.totalorder %v2961, 1
      %vm2994 = vcmp.eq.s32.totalorder %v2962, 1
      %vm2995 = vcmp.eq.s32.totalorder %v2963, 1
      %vm2996 = vcmp.eq.s32.totalorder %v2964, 1
      %vm2997 = vcmp.eq.s32.totalorder %v2965, 1
      %vm2998 = vcmp.eq.s32.totalorder %v2966, 1
      %vm2999 = vcmp.eq.s32.totalorder %v2967, 1
      %vm3000 = vcmp.eq.s32.totalorder %v2968, 1
      %vm3001 = vcmp.eq.s32.totalorder %v2969, 1
      %vm3002 = vcmp.eq.s32.totalorder %v2970, 1
      %vm3003 = vcmp.eq.s32.totalorder %v2971, 1
      %vm3004 = vcmp.eq.s32.totalorder %v2972, 1
      %vm3005 = vcmp.eq.s32.totalorder %v2973, 1
      %vm3006 = vcmp.eq.s32.totalorder %v2974, 1
      %vm3007 = vcmp.eq.s32.totalorder %v2975, 1
      %vm3008 = vcmp.eq.s32.totalorder %v2976, 1
      %vm3009 = vcmp.eq.s32.totalorder %v2977, 1
      %vm3010 = vcmp.eq.s32.totalorder %v2978, 1
      %vm3011 = vcmp.eq.s32.totalorder %v2979, 1
      %vm3012 = vcmp.eq.s32.totalorder %v2980, 1
      %vm3013 = vcmp.eq.s32.totalorder %v2981, 1
      %vm3014 = vcmp.eq.s32.totalorder %v2982, 1
      %vm3015 = vcmp.eq.s32.totalorder %v2983, 1
      %vm3016 = vcmp.eq.s32.totalorder %v2984, 1
      %vm3017 = vcmp.eq.s32.totalorder %v2985, 1
      %v3018 = vsel %vm2986, %v1153, 0.0
      %v3019 = vsel %vm2987, %v1152, 0.0
      %v3020 = vsel %vm2988, %v1151, 0.0
      %v3021 = vsel %vm2989, %v1150, 0.0
      %v3022 = vsel %vm2990, %v1149, 0.0
      %v3023 = vsel %vm2991, %v1148, 0.0
      %v3024 = vsel %vm2992, %v1147, 0.0
      %v3025 = vsel %vm2993, %v1146, 0.0
      %v3026 = vsel %vm2994, %v1145, 0.0
      %v3027 = vsel %vm2995, %v1144, 0.0
      %v3028 = vsel %vm2996, %v1143, 0.0
      %v3029 = vsel %vm2997, %v1142, 0.0
      %v3030 = vsel %vm2998, %v1141, 0.0
      %v3031 = vsel %vm2999, %v1140, 0.0
      %v3032 = vsel %vm3000, %v1139, 0.0
      %v3033 = vsel %vm3001, %v1138, 0.0
      %v3034 = vsel %vm3002, %v1137, 0.0
      %v3035 = vsel %vm3003, %v1136, 0.0
      %v3036 = vsel %vm3004, %v1135, 0.0
      %v3037 = vsel %vm3005, %v1134, 0.0
      %v3038 = vsel %vm3006, %v1133, 0.0
      %v3039 = vsel %vm3007, %v1132, 0.0
      %v3040 = vsel %vm3008, %v1131, 0.0
      %v3041 = vsel %vm3009, %v1130, 0.0
      %v3042 = vsel %vm3010, %v1129, 0.0
      %v3043 = vsel %vm3011, %v1128, 0.0
      %v3044 = vsel %vm3012, %v1127, 0.0
      %v3045 = vsel %vm3013, %v1126, 0.0
      %v3046 = vsel %vm3014, %v1125, 0.0
      %v3047 = vsel %vm3015, %v1156, 0.0
      %v3048 = vsel %vm3016, %v1155, 0.0
      %v3049 = vsel %vm3017, %v1154, 0.0
      %v3050 = vpack.c.bf16 %v3019, %v3018
      %v3051 = vpack.c.bf16 %v3021, %v3020
      %v3052 = vpack.c.bf16 %v3023, %v3022
      %v3053 = vpack.c.bf16 %v3025, %v3024
      %v3054 = vpack.c.bf16 %v3027, %v3026
      %v3055 = vpack.c.bf16 %v3029, %v3028
      %v3056 = vpack.c.bf16 %v3031, %v3030
      %v3057 = vpack.c.bf16 %v3033, %v3032
      %v3058 = vpack.c.bf16 %v3035, %v3034
      %v3059 = vpack.c.bf16 %v3037, %v3036
      %v3060 = vpack.c.bf16 %v3039, %v3038
      %v3061 = vpack.c.bf16 %v3041, %v3040
      %v3062 = vpack.c.bf16 %v3043, %v3042
      %v3063 = vpack.c.bf16 %v3045, %v3044
      %v3064 = vpack.c.bf16 %v3047, %v3046
      %v3065 = vpack.c.bf16 %v3049, %v3048
      %3066 = vst [vmem:[#allocation2 + $0x10] sm:$0xff] %v3050
      %3067 = vst [vmem:[#allocation2 + $0x28] sm:$0xff] %v3051
      %3068 = vst [vmem:[#allocation2 + $0x40] sm:$0xff] %v3052
      %3069 = vst [vmem:[#allocation2 + $0x58] sm:$0xff] %v3053
      %3070 = vst [vmem:[#allocation2 + $0x70] sm:$0xff] %v3054
      %3071 = vst [vmem:[#allocation2 + $0x88] sm:$0xff] %v3055
      %3072 = vst [vmem:[#allocation2 + $0xa0] sm:$0xff] %v3056
      %3073 = vst [vmem:[#allocation2 + $0xb8] sm:$0xff] %v3057
      %3074 = vst [vmem:[#allocation2 + $0xd0] sm:$0xff] %v3058
      %3075 = vst [vmem:[#allocation2 + $0xe8] sm:$0xff] %v3059
      %3076 = vst [vmem:[#allocation2 + $0x100] sm:$0xff] %v3060
      %3077 = vst [vmem:[#allocation2 + $0x118] sm:$0xff] %v3061
      %3078 = vst [vmem:[#allocation2 + $0x130] sm:$0xff] %v3062
      %3079 = vst [vmem:[#allocation2 + $0x148] sm:$0xff] %v3063
      %3080 = vst [vmem:[#allocation2 + $0x160] sm:$0xff] %v3064
      %3081 = vst [vmem:[#allocation2 + $0x178] sm:$0xff] %v3065
      %v3082 = vld [vmem:[#allocation2] sm:$0xff]
      %v3083 = vld [vmem:[#allocation2 + $0x8] sm:$0xff]
      %v3084 = vld [vmem:[#allocation2 + $0x10] sm:$0xff]
      %v3085 = vld [vmem:[#allocation2 + $0x18] sm:$0xff]
      %v3086 = vld [vmem:[#allocation2 + $0x20] sm:$0xff]
      %v3087 = vld [vmem:[#allocation2 + $0x28] sm:$0xff]
      %v3088 = vld [vmem:[#allocation2 + $0x30] sm:$0xff]
      %v3089 = vld [vmem:[#allocation2 + $0x38] sm:$0xff]
      %v3090 = vld [vmem:[#allocation2 + $0x40] sm:$0xff]
      %v3091 = vld [vmem:[#allocation2 + $0x48] sm:$0xff]
      %v3092 = vld [vmem:[#allocation2 + $0x50] sm:$0xff]
      %v3093 = vld [vmem:[#allocation2 + $0x58] sm:$0xff]
      %v3094 = vld [vmem:[#allocation2 + $0x60] sm:$0xff]
      %v3095 = vld [vmem:[#allocation2 + $0x68] sm:$0xff]
      %v3096 = vld [vmem:[#allocation2 + $0x70] sm:$0xff]
      %v3097 = vld [vmem:[#allocation2 + $0x78] sm:$0xff]
      %v3098 = vld [vmem:[#allocation2 + $0x80] sm:$0xff]
      %v3099 = vld [vmem:[#allocation2 + $0x88] sm:$0xff]
      %v3100 = vld [vmem:[#allocation2 + $0x90] sm:$0xff]
      %v3101 = vld [vmem:[#allocation2 + $0x98] sm:$0xff]
      %v3102 = vld [vmem:[#allocation2 + $0xa0] sm:$0xff]
      %v3103 = vld [vmem:[#allocation2 + $0xa8] sm:$0xff]
      %v3104 = vld [vmem:[#allocation2 + $0xb0] sm:$0xff]
      %v3105 = vld [vmem:[#allocation2 + $0xb8] sm:$0xff]
      %v3106 = vld [vmem:[#allocation2 + $0xc0] sm:$0xff]
      %v3107 = vld [vmem:[#allocation2 + $0xc8] sm:$0xff]
      %v3108 = vld [vmem:[#allocation2 + $0xd0] sm:$0xff]
      %v3109 = vld [vmem:[#allocation2 + $0xd8] sm:$0xff]
      %v3110 = vld [vmem:[#allocation2 + $0xe0] sm:$0xff]
      %v3111 = vld [vmem:[#allocation2 + $0xe8] sm:$0xff]
      %v3112 = vld [vmem:[#allocation2 + $0xf0] sm:$0xff]
      %v3113 = vld [vmem:[#allocation2 + $0xf8] sm:$0xff]
      %v3114 = vld [vmem:[#allocation2 + $0x100] sm:$0xff]
      %v3115 = vld [vmem:[#allocation2 + $0x108] sm:$0xff]
      %v3116 = vld [vmem:[#allocation2 + $0x110] sm:$0xff]
      %v3117 = vld [vmem:[#allocation2 + $0x118] sm:$0xff]
      %v3118 = vld [vmem:[#allocation2 + $0x120] sm:$0xff]
      %v3119 = vld [vmem:[#allocation2 + $0x128] sm:$0xff]
      %v3120 = vld [vmem:[#allocation2 + $0x130] sm:$0xff]
      %v3121 = vld [vmem:[#allocation2 + $0x138] sm:$0xff]
      %v3122 = vld [vmem:[#allocation2 + $0x140] sm:$0xff]
      %v3123 = vld [vmem:[#allocation2 + $0x148] sm:$0xff]
      %v3124 = vld [vmem:[#allocation2 + $0x150] sm:$0xff]
      %v3125 = vld [vmem:[#allocation2 + $0x158] sm:$0xff]
      %v3126 = vld [vmem:[#allocation2 + $0x160] sm:$0xff]
      %v3127 = vld [vmem:[#allocation2 + $0x168] sm:$0xff]
      %v3128 = vld [vmem:[#allocation2 + $0x170] sm:$0xff]
      %v3129 = vld [vmem:[#allocation2 + $0x178] sm:$0xff]
      %s3130 = scalar_lea.vmem %s1, 384
      %v3131 = vld [vmem:[%s3130] sm:$0xf]
      %v3132 = vld [vmem:[%s3130 + $0x4] sm:$0xf]
      %v3133 = vld [vmem:[%s3130 + $0x8] sm:$0xf]
      %v3134 = vld [vmem:[%s3130 + $0xc] sm:$0xf]
      %v3135 = vld [vmem:[%s3130 + $0x10] sm:$0xf]
      %v3136 = vld [vmem:[%s3130 + $0x14] sm:$0xf]
      %v3137 = vld [vmem:[%s3130 + $0x18] sm:$0xf]
      %v3138 = vld [vmem:[%s3130 + $0x1c] sm:$0xf]
      %v3139 = vld [vmem:[%s3130 + $0x20] sm:$0xf]
      %v3140 = vld [vmem:[%s3130 + $0x24] sm:$0xf]
      %v3141 = vld [vmem:[%s3130 + $0x28] sm:$0xf]
      %v3142 = vld [vmem:[%s3130 + $0x2c] sm:$0xf]
      %v3143 = vld [vmem:[%s3130 + $0x30] sm:$0xf]
      %v3144 = vld [vmem:[%s3130 + $0x34] sm:$0xf]
      %v3145 = vld [vmem:[%s3130 + $0x38] sm:$0xf]
      %v3146 = vld [vmem:[%s3130 + $0x3c] sm:$0xf]
      %v3147 = vld [vmem:[%s3130 + $0x40] sm:$0xf]
      %v3148 = vld [vmem:[%s3130 + $0x44] sm:$0xf]
      %v3149 = vld [vmem:[%s3130 + $0x48] sm:$0xf]
      %v3150 = vld [vmem:[%s3130 + $0x4c] sm:$0xf]
      %v3151 = vld [vmem:[%s3130 + $0x50] sm:$0xf]
      %v3152 = vld [vmem:[%s3130 + $0x54] sm:$0xf]
      %v3153 = vld [vmem:[%s3130 + $0x58] sm:$0xf]
      %v3154 = vld [vmem:[%s3130 + $0x5c] sm:$0xf]
      %v3155 = vld [vmem:[%s3130 + $0x60] sm:$0xf]
      %v3156 = vld [vmem:[%s3130 + $0x64] sm:$0xf]
      %v3157 = vld [vmem:[%s3130 + $0x68] sm:$0xf]
      %v3158 = vld [vmem:[%s3130 + $0x6c] sm:$0xf]
      %v3159 = vld [vmem:[%s3130 + $0x70] sm:$0xf]
      %v3160 = vld [vmem:[%s3130 + $0x74] sm:$0xf]
      %v3161 = vld [vmem:[%s3130 + $0x78] sm:$0xf]
      %v3162 = vld [vmem:[%s3130 + $0x7c] sm:$0xf]
      %v3163 = vld [vmem:[%s3130 + $0x80] sm:$0xf]
      %v3164 = vld [vmem:[%s3130 + $0x84] sm:$0xf]
      %v3165 = vld [vmem:[%s3130 + $0x88] sm:$0xf]
      %v3166 = vld [vmem:[%s3130 + $0x8c] sm:$0xf]
      %v3167 = vld [vmem:[%s3130 + $0x90] sm:$0xf]
      %v3168 = vld [vmem:[%s3130 + $0x94] sm:$0xf]
      %v3169 = vld [vmem:[%s3130 + $0x98] sm:$0xf]
      %v3170 = vld [vmem:[%s3130 + $0x9c] sm:$0xf]
      %v3171 = vld [vmem:[%s3130 + $0xa0] sm:$0xf]
      %v3172 = vld [vmem:[%s3130 + $0xa4] sm:$0xf]
      %v3173 = vld [vmem:[%s3130 + $0xa8] sm:$0xf]
      %v3174 = vld [vmem:[%s3130 + $0xac] sm:$0xf]
      %v3175 = vld [vmem:[%s3130 + $0xb0] sm:$0xf]
      %v3176 = vld [vmem:[%s3130 + $0xb4] sm:$0xf]
      %v3177 = vld [vmem:[%s3130 + $0xb8] sm:$0xf]
      %v3178 = vld [vmem:[%s3130 + $0xbc] sm:$0xf]
      %v3227 = vunpack.c.l.b16 %v3131
      %v3228 = vunpack.c.l.b16 %v3132
      %v3229 = vunpack.c.l.b16 %v3133
      %v3230 = vunpack.c.l.b16 %v3134
      %v3231 = vunpack.c.l.b16 %v3135
      %v3232 = vunpack.c.l.b16 %v3136
      %v3233 = vunpack.c.l.b16 %v3137
      %v3234 = vunpack.c.l.b16 %v3138
      %v3235 = vunpack.c.l.b16 %v3139
      %v3236 = vunpack.c.l.b16 %v3140
      %v3237 = vunpack.c.l.b16 %v3141
      %v3238 = vunpack.c.l.b16 %v3142
      %v3239 = vunpack.c.l.b16 %v3143
      %v3240 = vunpack.c.l.b16 %v3144
      %v3241 = vunpack.c.l.b16 %v3145
      %v3242 = vunpack.c.l.b16 %v3146
      %v3243 = vunpack.c.l.b16 %v3147
      %v3244 = vunpack.c.l.b16 %v3148
      %v3245 = vunpack.c.l.b16 %v3149
      %v3246 = vunpack.c.l.b16 %v3150
      %v3247 = vunpack.c.l.b16 %v3151
      %v3248 = vunpack.c.l.b16 %v3152
      %v3249 = vunpack.c.l.b16 %v3153
      %v3250 = vunpack.c.l.b16 %v3154
      %v3251 = vunpack.c.l.b16 %v3155
      %v3252 = vunpack.c.l.b16 %v3156
      %v3253 = vunpack.c.l.b16 %v3157
      %v3254 = vunpack.c.l.b16 %v3158
      %v3255 = vunpack.c.l.b16 %v3159
      %v3256 = vunpack.c.l.b16 %v3160
      %v3257 = vunpack.c.l.b16 %v3161
      %v3258 = vunpack.c.l.b16 %v3162
      %v3259 = vunpack.c.l.b16 %v3163
      %v3260 = vunpack.c.l.b16 %v3164
      %v3261 = vunpack.c.l.b16 %v3165
      %v3262 = vunpack.c.l.b16 %v3166
      %v3263 = vunpack.c.l.b16 %v3167
      %v3264 = vunpack.c.l.b16 %v3168
      %v3265 = vunpack.c.l.b16 %v3169
      %v3266 = vunpack.c.l.b16 %v3170
      %v3267 = vunpack.c.l.b16 %v3171
      %v3268 = vunpack.c.l.b16 %v3172
      %v3269 = vunpack.c.l.b16 %v3173
      %v3270 = vunpack.c.l.b16 %v3174
      %v3271 = vunpack.c.l.b16 %v3175
      %v3272 = vunpack.c.l.b16 %v3176
      %v3273 = vunpack.c.l.b16 %v3177
      %v3274 = vunpack.c.l.b16 %v3178
      %v3275 = vpack.c.b16 %v3228, %v3227
      %v3276 = vpack.c.b16 %v3230, %v3229
      %v3277 = vpack.c.b16 %v3232, %v3231
      %v3278 = vpack.c.b16 %v3234, %v3233
      %v3279 = vpack.c.b16 %v3236, %v3235
      %v3280 = vpack.c.b16 %v3238, %v3237
      %v3281 = vpack.c.b16 %v3240, %v3239
      %v3282 = vpack.c.b16 %v3242, %v3241
      %v3283 = vpack.c.b16 %v3244, %v3243
      %v3284 = vpack.c.b16 %v3246, %v3245
      %v3285 = vpack.c.b16 %v3248, %v3247
      %v3286 = vpack.c.b16 %v3250, %v3249
      %v3287 = vpack.c.b16 %v3252, %v3251
      %v3288 = vpack.c.b16 %v3254, %v3253
      %v3289 = vpack.c.b16 %v3256, %v3255
      %v3290 = vpack.c.b16 %v3258, %v3257
      %v3291 = vpack.c.b16 %v3260, %v3259
      %v3292 = vpack.c.b16 %v3262, %v3261
      %v3293 = vpack.c.b16 %v3264, %v3263
      %v3294 = vpack.c.b16 %v3266, %v3265
      %v3295 = vpack.c.b16 %v3268, %v3267
      %v3296 = vpack.c.b16 %v3270, %v3269
      %v3297 = vpack.c.b16 %v3272, %v3271
      %v3298 = vpack.c.b16 %v3274, %v3273
      %3323 = vmatprep.subr.bf16.mxu0 0
      %3324 = vmatpush1.bf16.msra.mxu0 %v3275
      %3325 = vmatprep.subr.bf16.mxu0 0
      %3326 = vmatpush1.bf16.msra.mxu0 %v3276
      %3327 = vmatprep.subr.bf16.mxu0 0
      %3328 = vmatpush1.bf16.msra.mxu0 %v3277
      %3329 = vmatprep.subr.bf16.mxu0 0
      %3330 = vmatpush1.bf16.msra.mxu0 %v3278
      %3331 = vmatprep.subr.bf16.mxu0 0
      %3332 = vmatpush1.bf16.msra.mxu0 %v3279
      %3333 = vmatprep.subr.bf16.mxu0 0
      %3334 = vmatpush1.bf16.msra.mxu0 %v3280
      %3335 = vmatprep.subr.bf16.mxu0 0
      %3336 = vmatpush1.bf16.msra.mxu0 %v3281
      %3337 = vmatprep.subr.bf16.mxu0 0
      %3338 = vmatpush1.bf16.msra.mxu0 %v3282
      %3339 = vmatprep.subr.bf16.mxu0 0
      %3340 = vmatpush1.bf16.msra.mxu0 %v3283
      %3341 = vmatprep.subr.bf16.mxu0 0
      %3342 = vmatpush1.bf16.msra.mxu0 %v3284
      %3343 = vmatprep.subr.bf16.mxu0 0
      %3344 = vmatpush1.bf16.msra.mxu0 %v3285
      %3345 = vmatprep.subr.bf16.mxu0 0
      %3346 = vmatpush1.bf16.msra.mxu0 %v3286
      %3347 = vmatprep.subr.bf16.mxu0 0
      %3348 = vmatpush1.bf16.msra.mxu0 %v3287
      %3349 = vmatprep.subr.bf16.mxu0 0
      %3350 = vmatpush1.bf16.msra.mxu0 %v3288
      %3351 = vmatprep.subr.bf16.mxu0 0
      %3352 = vmatpush1.bf16.msra.mxu0 %v3289
      %3353 = vmatprep.subr.bf16.mxu0 0
      %3354 = vmatpush1.bf16.msra.mxu0 %v3290
      %3355 = vmatprep.mubr.bf16.mxu0 %v3083
      %3356 = vmatmul.mubr.bf16.gmra.mrb[0].mxu0 %v3082
      %v3357 = vpop.f32.mrb[0].mxu0
      %v3358 = vadd.f32 0.0, %v3357
      %v3359 = vpop.f32.mrb[0].mxu0
      %v3360 = vpop.f32.mrb[0].mxu0
      %v3361 = vadd.f32 0.0, %v3360
      %v3362 = vpop.f32.mrb[0].mxu0
      %3363 = vmatprep.mubr.bf16.mxu0 %v3086
      %3364 = vmatmul.mubr.bf16.gmra.mrb[0].mxu0 %v3085
      %v3365 = vpop.f32.mrb[0].mxu0
      %v3366 = vadd.f32 0.0, %v3365
      %v3367 = vpop.f32.mrb[0].mxu0
      %v3368 = vpop.f32.mrb[0].mxu0
      %v3369 = vadd.f32 0.0, %v3368
      %v3370 = vpop.f32.mrb[0].mxu0
      %3371 = vmatprep.mubr.bf16.mxu0 %v3089
      %3372 = vmatmul.mubr.bf16.gmra.mrb[0].mxu0 %v3088
      %v3373 = vpop.f32.mrb[0].mxu0
      %v3374 = vadd.f32 0.0, %v3373
      %v3375 = vpop.f32.mrb[0].mxu0
      %v3376 = vpop.f32.mrb[0].mxu0
      %v3377 = vadd.f32 0.0, %v3376
      %v3378 = vpop.f32.mrb[0].mxu0
      %3379 = vmatprep.mubr.bf16.mxu0 %v3092
      %3380 = vmatmul.mubr.bf16.gmra.mrb[0].mxu0 %v3091
      %v3381 = vpop.f32.mrb[0].mxu0
      %v3382 = vadd.f32 0.0, %v3381
      %v3383 = vpop.f32.mrb[0].mxu0
      %v3384 = vpop.f32.mrb[0].mxu0
      %v3385 = vadd.f32 0.0, %v3384
      %v3386 = vpop.f32.mrb[0].mxu0
      %3387 = vmatprep.mubr.bf16.mxu0 %v3095
      %3388 = vmatmul.mubr.bf16.gmra.mrb[0].mxu0 %v3094
      %v3389 = vpop.f32.mrb[0].mxu0
      %v3390 = vadd.f32 0.0, %v3389
      %v3391 = vpop.f32.mrb[0].mxu0
      %v3392 = vpop.f32.mrb[0].mxu0
      %v3393 = vadd.f32 0.0, %v3392
      %v3394 = vpop.f32.mrb[0].mxu0
      %3395 = vmatprep.mubr.bf16.mxu0 %v3098
      %3396 = vmatmul.mubr.bf16.gmra.mrb[0].mxu0 %v3097
      %v3397 = vpop.f32.mrb[0].mxu0
      %v3398 = vadd.f32 0.0, %v3397
      %v3399 = vpop.f32.mrb[0].mxu0
      %v3400 = vpop.f32.mrb[0].mxu0
      %v3401 = vadd.f32 0.0, %v3400
      %v3402 = vpop.f32.mrb[0].mxu0
      %3403 = vmatprep.mubr.bf16.mxu0 %v3101
      %3404 = vmatmul.mubr.bf16.gmra.mrb[0].mxu0 %v3100
      %v3405 = vpop.f32.mrb[0].mxu0
      %v3406 = vadd.f32 0.0, %v3405
      %v3407 = vpop.f32.mrb[0].mxu0
      %v3408 = vpop.f32.mrb[0].mxu0
      %v3409 = vadd.f32 0.0, %v3408
      %v3410 = vpop.f32.mrb[0].mxu0
      %3411 = vmatprep.mubr.bf16.mxu0 %v3104
      %3412 = vmatmul.mubr.bf16.gmra.mrb[0].mxu0 %v3103
      %v3413 = vpop.f32.mrb[0].mxu0
      %v3414 = vadd.f32 0.0, %v3413
      %v3415 = vpop.f32.mrb[0].mxu0
      %v3416 = vpop.f32.mrb[0].mxu0
      %v3417 = vadd.f32 0.0, %v3416
      %v3418 = vpop.f32.mrb[0].mxu0
      %3419 = vmatprep.mubr.bf16.mxu0 %v3107
      %3420 = vmatmul.mubr.bf16.gmra.mrb[0].mxu0 %v3106
      %v3421 = vpop.f32.mrb[0].mxu0
      %v3422 = vadd.f32 0.0, %v3421
      %v3423 = vpop.f32.mrb[0].mxu0
      %v3424 = vpop.f32.mrb[0].mxu0
      %v3425 = vadd.f32 0.0, %v3424
      %v3426 = vpop.f32.mrb[0].mxu0
      %3427 = vmatprep.mubr.bf16.mxu0 %v3110
      %3428 = vmatmul.mubr.bf16.gmra.mrb[0].mxu0 %v3109
      %v3429 = vpop.f32.mrb[0].mxu0
      %v3430 = vadd.f32 0.0, %v3429
      %v3431 = vpop.f32.mrb[0].mxu0
      %v3432 = vpop.f32.mrb[0].mxu0
      %v3433 = vadd.f32 0.0, %v3432
      %v3434 = vpop.f32.mrb[0].mxu0
      %3435 = vmatprep.mubr.bf16.mxu0 %v3113
      %3436 = vmatmul.mubr.bf16.gmra.mrb[0].mxu0 %v3112
      %v3437 = vpop.f32.mrb[0].mxu0
      %v3438 = vadd.f32 0.0, %v3437
      %v3439 = vpop.f32.mrb[0].mxu0
      %v3440 = vpop.f32.mrb[0].mxu0
      %v3441 = vadd.f32 0.0, %v3440
      %v3442 = vpop.f32.mrb[0].mxu0
      %3443 = vmatprep.mubr.bf16.mxu0 %v3116
      %3444 = vmatmul.mubr.bf16.gmra.mrb[0].mxu0 %v3115
      %v3445 = vpop.f32.mrb[0].mxu0
      %v3446 = vadd.f32 0.0, %v3445
      %v3447 = vpop.f32.mrb[0].mxu0
      %v3448 = vpop.f32.mrb[0].mxu0
      %v3449 = vadd.f32 0.0, %v3448
      %v3450 = vpop.f32.mrb[0].mxu0
      %3451 = vmatprep.mubr.bf16.mxu0 %v3119
      %3452 = vmatmul.mubr.bf16.gmra.mrb[0].mxu0 %v3118
      %v3453 = vpop.f32.mrb[0].mxu0
      %v3454 = vadd.f32 0.0, %v3453
      %v3455 = vpop.f32.mrb[0].mxu0
      %v3456 = vpop.f32.mrb[0].mxu0
      %v3457 = vadd.f32 0.0, %v3456
      %v3458 = vpop.f32.mrb[0].mxu0
      %3459 = vmatprep.mubr.bf16.mxu0 %v3122
      %3460 = vmatmul.mubr.bf16.gmra.mrb[0].mxu0 %v3121
      %v3461 = vpop.f32.mrb[0].mxu0
      %v3462 = vadd.f32 0.0, %v3461
      %v3463 = vpop.f32.mrb[0].mxu0
      %v3464 = vpop.f32.mrb[0].mxu0
      %v3465 = vadd.f32 0.0, %v3464
      %v3466 = vpop.f32.mrb[0].mxu0
      %3467 = vmatprep.mubr.bf16.mxu0 %v3125
      %3468 = vmatmul.mubr.bf16.gmra.mrb[0].mxu0 %v3124
      %v3469 = vpop.f32.mrb[0].mxu0
      %v3470 = vadd.f32 0.0, %v3469
      %v3471 = vpop.f32.mrb[0].mxu0
      %v3472 = vpop.f32.mrb[0].mxu0
      %v3473 = vadd.f32 0.0, %v3472
      %v3474 = vpop.f32.mrb[0].mxu0
      %3475 = vmatprep.mubr.bf16.mxu0 %v3128
      %3476 = vmatmul.mubr.bf16.gmra.mrb[0].mxu0 %v3127
      %v3477 = vpop.f32.mrb[0].mxu0
      %v3478 = vadd.f32 0.0, %v3477
      %v3479 = vpop.f32.mrb[0].mxu0
      %v3480 = vpop.f32.mrb[0].mxu0
      %v3481 = vadd.f32 0.0, %v3480
      %v3482 = vpop.f32.mrb[0].mxu0
      %3483 = vdwg.mxu0
      %3484 = vmatprep.subr.bf16.mxu0 0
      %3485 = vmatpush1.bf16.msra.mxu0 %v3291
      %3486 = vmatprep.subr.bf16.mxu0 0
      %3487 = vmatpush1.bf16.msra.mxu0 %v3292
      %3488 = vmatprep.subr.bf16.mxu0 0
      %3489 = vmatpush1.bf16.msra.mxu0 %v3293
      %3490 = vmatprep.subr.bf16.mxu0 0
      %3491 = vmatpush1.bf16.msra.mxu0 %v3294
      %3492 = vmatprep.subr.bf16.mxu0 0
      %3493 = vmatpush1.bf16.msra.mxu0 %v3295
      %3494 = vmatprep.subr.bf16.mxu0 0
      %3495 = vmatpush1.bf16.msra.mxu0 %v3296
      %3496 = vmatprep.subr.bf16.mxu0 0
      %3497 = vmatpush1.bf16.msra.mxu0 %v3297
      %3498 = vmatprep.subr.bf16.mxu0 0
      %3499 = vmatpush1.bf16.msra.mxu0 %v3298
      %3500 = vmatprep.subr.bf16.mxu0 0
      %3501 = vmatpush1.bf16.msra.mxu0 0
      %3502 = vmatprep.subr.bf16.mxu0 0
      %3503 = vmatpush1.bf16.msra.mxu0 0
      %3504 = vmatprep.subr.bf16.mxu0 0
      %3505 = vmatpush1.bf16.msra.mxu0 0
      %3506 = vmatprep.subr.bf16.mxu0 0
      %3507 = vmatpush1.bf16.msra.mxu0 0
      %3508 = vmatprep.subr.bf16.mxu0 0
      %3509 = vmatpush1.bf16.msra.mxu0 0
      %3510 = vmatprep.subr.bf16.mxu0 0
      %3511 = vmatpush1.bf16.msra.mxu0 0
      %3512 = vmatprep.subr.bf16.mxu0 0
      %3513 = vmatpush1.bf16.msra.mxu0 0
      %3514 = vmatprep.subr.bf16.mxu0 0
      %3515 = vmatpush1.bf16.msra.mxu0 0
      %3516 = vmatprep.mubr.bf16.mxu0 0
      %3517 = vmatmul.mubr.bf16.gmra.mrb[0].mxu0 %v3084
      %v3518 = vpop.f32.mrb[0].mxu0
      %v3519 = vadd.f32 %v3358, %v3518
      %v3520 = vpop.f32.mrb[0].mxu0
      %v3521 = vpop.f32.mrb[0].mxu0
      %v3522 = vadd.f32 %v3361, %v3521
      %v3523 = vpop.f32.mrb[0].mxu0
      %3524 = vmatprep.mubr.bf16.mxu0 0
      %3525 = vmatmul.mubr.bf16.gmra.mrb[0].mxu0 %v3087
      %v3526 = vpop.f32.mrb[0].mxu0
      %v3527 = vadd.f32 %v3366, %v3526
      %v3528 = vpop.f32.mrb[0].mxu0
      %v3529 = vpop.f32.mrb[0].mxu0
      %v3530 = vadd.f32 %v3369, %v3529
      %v3531 = vpop.f32.mrb[0].mxu0
      %3532 = vmatprep.mubr.bf16.mxu0 0
      %3533 = vmatmul.mubr.bf16.gmra.mrb[0].mxu0 %v3090
      %v3534 = vpop.f32.mrb[0].mxu0
      %v3535 = vadd.f32 %v3374, %v3534
      %v3536 = vpop.f32.mrb[0].mxu0
      %v3537 = vpop.f32.mrb[0].mxu0
      %v3538 = vadd.f32 %v3377, %v3537
      %v3539 = vpop.f32.mrb[0].mxu0
      %3540 = vmatprep.mubr.bf16.mxu0 0
      %3541 = vmatmul.mubr.bf16.gmra.mrb[0].mxu0 %v3093
      %v3542 = vpop.f32.mrb[0].mxu0
      %v3543 = vadd.f32 %v3382, %v3542
      %v3544 = vpop.f32.mrb[0].mxu0
      %v3545 = vpop.f32.mrb[0].mxu0
      %v3546 = vadd.f32 %v3385, %v3545
      %v3547 = vpop.f32.mrb[0].mxu0
      %3548 = vmatprep.mubr.bf16.mxu0 0
      %3549 = vmatmul.mubr.bf16.gmra.mrb[0].mxu0 %v3096
      %v3550 = vpop.f32.mrb[0].mxu0
      %v3551 = vadd.f32 %v3390, %v3550
      %v3552 = vpop.f32.mrb[0].mxu0
      %v3553 = vpop.f32.mrb[0].mxu0
      %v3554 = vadd.f32 %v3393, %v3553
      %v3555 = vpop.f32.mrb[0].mxu0
      %3556 = vmatprep.mubr.bf16.mxu0 0
      %3557 = vmatmul.mubr.bf16.gmra.mrb[0].mxu0 %v3099
      %v3558 = vpop.f32.mrb[0].mxu0
      %v3559 = vadd.f32 %v3398, %v3558
      %v3560 = vpop.f32.mrb[0].mxu0
      %v3561 = vpop.f32.mrb[0].mxu0
      %v3562 = vadd.f32 %v3401, %v3561
      %v3563 = vpop.f32.mrb[0].mxu0
      %3564 = vmatprep.mubr.bf16.mxu0 0
      %3565 = vmatmul.mubr.bf16.gmra.mrb[0].mxu0 %v3102
      %v3566 = vpop.f32.mrb[0].mxu0
      %v3567 = vadd.f32 %v3406, %v3566
      %v3568 = vpop.f32.mrb[0].mxu0
      %v3569 = vpop.f32.mrb[0].mxu0
      %v3570 = vadd.f32 %v3409, %v3569
      %v3571 = vpop.f32.mrb[0].mxu0
      %3572 = vmatprep.mubr.bf16.mxu0 0
      %3573 = vmatmul.mubr.bf16.gmra.mrb[0].mxu0 %v3105
      %v3574 = vpop.f32.mrb[0].mxu0
      %v3575 = vadd.f32 %v3414, %v3574
      %v3576 = vpop.f32.mrb[0].mxu0
      %v3577 = vpop.f32.mrb[0].mxu0
      %v3578 = vadd.f32 %v3417, %v3577
      %v3579 = vpop.f32.mrb[0].mxu0
      %3580 = vmatprep.mubr.bf16.mxu0 0
      %3581 = vmatmul.mubr.bf16.gmra.mrb[0].mxu0 %v3108
      %v3582 = vpop.f32.mrb[0].mxu0
      %v3583 = vadd.f32 %v3422, %v3582
      %v3584 = vpop.f32.mrb[0].mxu0
      %v3585 = vpop.f32.mrb[0].mxu0
      %v3586 = vadd.f32 %v3425, %v3585
      %v3587 = vpop.f32.mrb[0].mxu0
      %3588 = vmatprep.mubr.bf16.mxu0 0
      %3589 = vmatmul.mubr.bf16.gmra.mrb[0].mxu0 %v3111
      %v3590 = vpop.f32.mrb[0].mxu0
      %v3591 = vadd.f32 %v3430, %v3590
      %v3592 = vpop.f32.mrb[0].mxu0
      %v3593 = vpop.f32.mrb[0].mxu0
      %v3594 = vadd.f32 %v3433, %v3593
      %v3595 = vpop.f32.mrb[0].mxu0
      %3596 = vmatprep.mubr.bf16.mxu0 0
      %3597 = vmatmul.mubr.bf16.gmra.mrb[0].mxu0 %v3114
      %v3598 = vpop.f32.mrb[0].mxu0
      %v3599 = vadd.f32 %v3438, %v3598
      %v3600 = vpop.f32.mrb[0].mxu0
      %v3601 = vpop.f32.mrb[0].mxu0
      %v3602 = vadd.f32 %v3441, %v3601
      %v3603 = vpop.f32.mrb[0].mxu0
      %3604 = vmatprep.mubr.bf16.mxu0 0
      %3605 = vmatmul.mubr.bf16.gmra.mrb[0].mxu0 %v3117
      %v3606 = vpop.f32.mrb[0].mxu0
      %v3607 = vadd.f32 %v3446, %v3606
      %v3608 = vpop.f32.mrb[0].mxu0
      %v3609 = vpop.f32.mrb[0].mxu0
      %v3610 = vadd.f32 %v3449, %v3609
      %v3611 = vpop.f32.mrb[0].mxu0
      %3612 = vmatprep.mubr.bf16.mxu0 0
      %3613 = vmatmul.mubr.bf16.gmra.mrb[0].mxu0 %v3120
      %v3614 = vpop.f32.mrb[0].mxu0
      %v3615 = vadd.f32 %v3454, %v3614
      %v3616 = vpop.f32.mrb[0].mxu0
      %v3617 = vpop.f32.mrb[0].mxu0
      %v3618 = vadd.f32 %v3457, %v3617
      %v3619 = vpop.f32.mrb[0].mxu0
      %3620 = vmatprep.mubr.bf16.mxu0 0
      %3621 = vmatmul.mubr.bf16.gmra.mrb[0].mxu0 %v3123
      %v3622 = vpop.f32.mrb[0].mxu0
      %v3623 = vadd.f32 %v3462, %v3622
      %v3624 = vpop.f32.mrb[0].mxu0
      %v3625 = vpop.f32.mrb[0].mxu0
      %v3626 = vadd.f32 %v3465, %v3625
      %v3627 = vpop.f32.mrb[0].mxu0
      %3628 = vmatprep.mubr.bf16.mxu0 0
      %3629 = vmatmul.mubr.bf16.gmra.mrb[0].mxu0 %v3126
      %v3630 = vpop.f32.mrb[0].mxu0
      %v3631 = vadd.f32 %v3470, %v3630
      %v3632 = vpop.f32.mrb[0].mxu0
      %v3633 = vpop.f32.mrb[0].mxu0
      %v3634 = vadd.f32 %v3473, %v3633
      %v3635 = vpop.f32.mrb[0].mxu0
      %3636 = vmatprep.mubr.bf16.mxu0 0
      %3637 = vmatmul.mubr.bf16.gmra.mrb[0].mxu0 %v3129
      %v3638 = vpop.f32.mrb[0].mxu0
      %v3639 = vadd.f32 %v3478, %v3638
      %v3640 = vpop.f32.mrb[0].mxu0
      %v3641 = vpop.f32.mrb[0].mxu0
      %v3642 = vadd.f32 %v3481, %v3641
      %v3643 = vpop.f32.mrb[0].mxu0
      %3644 = vdwg.mxu0
      %v3645 = vadd.f32 %v2572, %v3519
      %v3646 = vadd.f32 %v2575, %v3522
      %v3647 = vadd.f32 %v2580, %v3527
      %v3648 = vadd.f32 %v2583, %v3530
      %v3649 = vadd.f32 %v2588, %v3535
      %v3650 = vadd.f32 %v2591, %v3538
      %v3651 = vadd.f32 %v2596, %v3543
      %v3652 = vadd.f32 %v2599, %v3546
      %v3653 = vadd.f32 %v2604, %v3551
      %v3654 = vadd.f32 %v2607, %v3554
      %v3655 = vadd.f32 %v2612, %v3559
      %v3656 = vadd.f32 %v2615, %v3562
      %v3657 = vadd.f32 %v2620, %v3567
      %v3658 = vadd.f32 %v2623, %v3570
      %v3659 = vadd.f32 %v2628, %v3575
      %v3660 = vadd.f32 %v2631, %v3578
      %v3661 = vadd.f32 %v2636, %v3583
      %v3662 = vadd.f32 %v2639, %v3586
      %v3663 = vadd.f32 %v2644, %v3591
      %v3664 = vadd.f32 %v2647, %v3594
      %v3665 = vadd.f32 %v2652, %v3599
      %v3666 = vadd.f32 %v2655, %v3602
      %v3667 = vadd.f32 %v2660, %v3607
      %v3668 = vadd.f32 %v2663, %v3610
      %v3669 = vadd.f32 %v2668, %v3615
      %v3670 = vadd.f32 %v2671, %v3618
      %v3671 = vadd.f32 %v2676, %v3623
      %v3672 = vadd.f32 %v2679, %v3626
      %v3673 = vadd.f32 %v2684, %v3631
      %v3674 = vadd.f32 %v2687, %v3634
      %v3675 = vadd.f32 %v2692, %v3639
      %v3676 = vadd.f32 %v2695, %v3642
      %v3677 = vld [vmem:[%s2] sm:$0x1]
      %v3679 = vlaneseq
      %v3680 = vshrl.u32 %v3679, 7
      %v3681 = vsub.s32 0, %v3680
      %v3682 = vrot.slane %v3677, %v3681
      %v3684 = vadd.f32 %v3645, %v3682
      %v3685 = vadd.f32 %v3646, %v3682
      %v3686 = vadd.f32 %v3647, %v3682
      %v3687 = vadd.f32 %v3648, %v3682
      %v3688 = vadd.f32 %v3649, %v3682
      %v3689 = vadd.f32 %v3650, %v3682
      %v3690 = vadd.f32 %v3651, %v3682
      %v3691 = vadd.f32 %v3652, %v3682
      %v3692 = vadd.f32 %v3653, %v3682
      %v3693 = vadd.f32 %v3654, %v3682
      %v3694 = vadd.f32 %v3655, %v3682
      %v3695 = vadd.f32 %v3656, %v3682
      %v3696 = vadd.f32 %v3657, %v3682
      %v3697 = vadd.f32 %v3658, %v3682
      %v3698 = vadd.f32 %v3659, %v3682
      %v3699 = vadd.f32 %v3660, %v3682
      %v3700 = vadd.f32 %v3661, %v3682
      %v3701 = vadd.f32 %v3662, %v3682
      %v3702 = vadd.f32 %v3663, %v3682
      %v3703 = vadd.f32 %v3664, %v3682
      %v3704 = vadd.f32 %v3665, %v3682
      %v3705 = vadd.f32 %v3666, %v3682
      %v3706 = vadd.f32 %v3667, %v3682
      %v3707 = vadd.f32 %v3668, %v3682
      %v3708 = vadd.f32 %v3669, %v3682
      %v3709 = vadd.f32 %v3670, %v3682
      %v3710 = vadd.f32 %v3671, %v3682
      %v3711 = vadd.f32 %v3672, %v3682
      %v3712 = vadd.f32 %v3673, %v3682
      %v3713 = vadd.f32 %v3674, %v3682
      %v3714 = vadd.f32 %v3675, %v3682
      %v3715 = vadd.f32 %v3676, %v3682
      %v3716 = vadd.f32 %v3684, %v3685
      %v3717 = vadd.f32 %v3716, %v3686
      %v3718 = vadd.f32 %v3717, %v3687
      %v3719 = vadd.f32 %v3718, %v3688
      %v3720 = vadd.f32 %v3719, %v3689
      %v3721 = vadd.f32 %v3720, %v3690
      %v3722 = vadd.f32 %v3721, %v3691
      %v3723 = vadd.f32 %v3722, %v3692
      %v3724 = vadd.f32 %v3723, %v3693
      %v3725 = vadd.f32 %v3724, %v3694
      %v3726 = vadd.f32 %v3725, %v3695
      %v3727 = vadd.f32 %v3726, %v3696
      %v3728 = vadd.f32 %v3727, %v3697
      %v3729 = vadd.f32 %v3728, %v3698
      %v3730 = vadd.f32 %v3729, %v3699
      %v3731 = vadd.f32 %v3730, %v3700
      %v3732 = vadd.f32 %v3731, %v3701
      %v3733 = vadd.f32 %v3732, %v3702
      %v3734 = vadd.f32 %v3733, %v3703
      %v3735 = vadd.f32 %v3734, %v3704
      %v3736 = vadd.f32 %v3735, %v3705
      %v3737 = vadd.f32 %v3736, %v3706
      %v3738 = vadd.f32 %v3737, %v3707
      %v3739 = vadd.f32 %v3738, %v3708
      %v3740 = vadd.f32 %v3739, %v3709
      %v3741 = vadd.f32 %v3740, %v3710
      %v3742 = vadd.f32 %v3741, %v3711
      %v3743 = vadd.f32 %v3742, %v3712
      %v3744 = vadd.f32 %v3743, %v3713
      %v3745 = vadd.f32 %v3744, %v3714
      %v3746 = vadd.f32 %v3745, %v3715
      %v3747 = vrot.slane %v3746, 4
      %v3748 = vadd.f32 %v3746, %v3747
      %v3749 = vrot.slane %v3748, 2
      %v3750 = vadd.f32 %v3748, %v3749
      %v3751 = vrot.slane %v3750, 1
      %v3752 = vadd.f32 %v3750, %v3751
      %v3753 = vmul.f32 %v3752, 0.00390625
      %v3754 = vsub.f32 %v3684, %v3753
      %v3755 = vsub.f32 %v3685, %v3753
      %v3756 = vsub.f32 %v3686, %v3753
      %v3757 = vsub.f32 %v3687, %v3753
      %v3758 = vsub.f32 %v3688, %v3753
      %v3759 = vsub.f32 %v3689, %v3753
      %v3760 = vsub.f32 %v3690, %v3753
      %v3761 = vsub.f32 %v3691, %v3753
      %v3762 = vsub.f32 %v3692, %v3753
      %v3763 = vsub.f32 %v3693, %v3753
      %v3764 = vsub.f32 %v3694, %v3753
      %v3765 = vsub.f32 %v3695, %v3753
      %v3766 = vsub.f32 %v3696, %v3753
      %v3767 = vsub.f32 %v3697, %v3753
      %v3768 = vsub.f32 %v3698, %v3753
      %v3769 = vsub.f32 %v3699, %v3753
      %v3770 = vsub.f32 %v3700, %v3753
      %v3771 = vsub.f32 %v3701, %v3753
      %v3772 = vsub.f32 %v3702, %v3753
      %v3773 = vsub.f32 %v3703, %v3753
      %v3774 = vsub.f32 %v3704, %v3753
      %v3775 = vsub.f32 %v3705, %v3753
      %v3776 = vsub.f32 %v3706, %v3753
      %v3777 = vsub.f32 %v3707, %v3753
      %v3778 = vsub.f32 %v3708, %v3753
      %v3779 = vsub.f32 %v3709, %v3753
      %v3780 = vsub.f32 %v3710, %v3753
      %v3781 = vsub.f32 %v3711, %v3753
      %v3782 = vsub.f32 %v3712, %v3753
      %v3783 = vsub.f32 %v3713, %v3753
      %v3784 = vsub.f32 %v3714, %v3753
      %v3785 = vsub.f32 %v3715, %v3753
      %v3786 = vmul.f32 %v3754, %v3754
      %v3787 = vmul.f32 %v3755, %v3755
      %v3788 = vmul.f32 %v3756, %v3756
      %v3789 = vmul.f32 %v3757, %v3757
      %v3790 = vmul.f32 %v3758, %v3758
      %v3791 = vmul.f32 %v3759, %v3759
      %v3792 = vmul.f32 %v3760, %v3760
      %v3793 = vmul.f32 %v3761, %v3761
      %v3794 = vmul.f32 %v3762, %v3762
      %v3795 = vmul.f32 %v3763, %v3763
      %v3796 = vmul.f32 %v3764, %v3764
      %v3797 = vmul.f32 %v3765, %v3765
      %v3798 = vmul.f32 %v3766, %v3766
      %v3799 = vmul.f32 %v3767, %v3767
      %v3800 = vmul.f32 %v3768, %v3768
      %v3801 = vmul.f32 %v3769, %v3769
      %v3802 = vmul.f32 %v3770, %v3770
      %v3803 = vmul.f32 %v3771, %v3771
      %v3804 = vmul.f32 %v3772, %v3772
      %v3805 = vmul.f32 %v3773, %v3773
      %v3806 = vmul.f32 %v3774, %v3774
      %v3807 = vmul.f32 %v3775, %v3775
      %v3808 = vmul.f32 %v3776, %v3776
      %v3809 = vmul.f32 %v3777, %v3777
      %v3810 = vmul.f32 %v3778, %v3778
      %v3811 = vmul.f32 %v3779, %v3779
      %v3812 = vmul.f32 %v3780, %v3780
      %v3813 = vmul.f32 %v3781, %v3781
      %v3814 = vmul.f32 %v3782, %v3782
      %v3815 = vmul.f32 %v3783, %v3783
      %v3816 = vmul.f32 %v3784, %v3784
      %v3817 = vmul.f32 %v3785, %v3785
      %v3818 = vadd.f32 %v3786, %v3787
      %v3819 = vadd.f32 %v3818, %v3788
      %v3820 = vadd.f32 %v3819, %v3789
      %v3821 = vadd.f32 %v3820, %v3790
      %v3822 = vadd.f32 %v3821, %v3791
      %v3823 = vadd.f32 %v3822, %v3792
      %v3824 = vadd.f32 %v3823, %v3793
      %v3825 = vadd.f32 %v3824, %v3794
      %v3826 = vadd.f32 %v3825, %v3795
      %v3827 = vadd.f32 %v3826, %v3796
      %v3828 = vadd.f32 %v3827, %v3797
      %v3829 = vadd.f32 %v3828, %v3798
      %v3830 = vadd.f32 %v3829, %v3799
      %v3831 = vadd.f32 %v3830, %v3800
      %v3832 = vadd.f32 %v3831, %v3801
      %v3833 = vadd.f32 %v3832, %v3802
      %v3834 = vadd.f32 %v3833, %v3803
      %v3835 = vadd.f32 %v3834, %v3804
      %v3836 = vadd.f32 %v3835, %v3805
      %v3837 = vadd.f32 %v3836, %v3806
      %v3838 = vadd.f32 %v3837, %v3807
      %v3839 = vadd.f32 %v3838, %v3808
      %v3840 = vadd.f32 %v3839, %v3809
      %v3841 = vadd.f32 %v3840, %v3810
      %v3842 = vadd.f32 %v3841, %v3811
      %v3843 = vadd.f32 %v3842, %v3812
      %v3844 = vadd.f32 %v3843, %v3813
      %v3845 = vadd.f32 %v3844, %v3814
      %v3846 = vadd.f32 %v3845, %v3815
      %v3847 = vadd.f32 %v3846, %v3816
      %v3848 = vadd.f32 %v3847, %v3817
      %v3849 = vrot.slane %v3848, 4
      %v3850 = vadd.f32 %v3848, %v3849
      %v3851 = vrot.slane %v3850, 2
      %v3852 = vadd.f32 %v3850, %v3851
      %v3853 = vrot.slane %v3852, 1
      %v3854 = vadd.f32 %v3852, %v3853
      %v3855 = vmul.f32 %v3854, 0.00390625
      %v3856 = vadd.f32 %v3855, 1e-05
      %v3857 = vrsqrt.pop %v3856
      %v3858 = vmul.f32 %v3754, %v3857
      %v3859 = vmul.f32 %v3755, %v3857
      %v3860 = vmul.f32 %v3756, %v3857
      %v3861 = vmul.f32 %v3757, %v3857
      %v3862 = vmul.f32 %v3758, %v3857
      %v3863 = vmul.f32 %v3759, %v3857
      %v3864 = vmul.f32 %v3760, %v3857
      %v3865 = vmul.f32 %v3761, %v3857
      %v3866 = vmul.f32 %v3762, %v3857
      %v3867 = vmul.f32 %v3763, %v3857
      %v3868 = vmul.f32 %v3764, %v3857
      %v3869 = vmul.f32 %v3765, %v3857
      %v3870 = vmul.f32 %v3766, %v3857
      %v3871 = vmul.f32 %v3767, %v3857
      %v3872 = vmul.f32 %v3768, %v3857
      %v3873 = vmul.f32 %v3769, %v3857
      %v3874 = vmul.f32 %v3770, %v3857
      %v3875 = vmul.f32 %v3771, %v3857
      %v3876 = vmul.f32 %v3772, %v3857
      %v3877 = vmul.f32 %v3773, %v3857
      %v3878 = vmul.f32 %v3774, %v3857
      %v3879 = vmul.f32 %v3775, %v3857
      %v3880 = vmul.f32 %v3776, %v3857
      %v3881 = vmul.f32 %v3777, %v3857
      %v3882 = vmul.f32 %v3778, %v3857
      %v3883 = vmul.f32 %v3779, %v3857
      %v3884 = vmul.f32 %v3780, %v3857
      %v3885 = vmul.f32 %v3781, %v3857
      %v3886 = vmul.f32 %v3782, %v3857
      %v3887 = vmul.f32 %v3783, %v3857
      %v3888 = vmul.f32 %v3784, %v3857
      %v3889 = vmul.f32 %v3785, %v3857
      %v3890 = vmax.f32 %v3858, 0.0
      %v3891 = vmax.f32 %v3859, 0.0
      %v3892 = vmax.f32 %v3860, 0.0
      %v3893 = vmax.f32 %v3861, 0.0
      %v3894 = vmax.f32 %v3862, 0.0
      %v3895 = vmax.f32 %v3863, 0.0
      %v3896 = vmax.f32 %v3864, 0.0
      %v3897 = vmax.f32 %v3865, 0.0
      %v3898 = vmax.f32 %v3866, 0.0
      %v3899 = vmax.f32 %v3867, 0.0
      %v3900 = vmax.f32 %v3868, 0.0
      %v3901 = vmax.f32 %v3869, 0.0
      %v3902 = vmax.f32 %v3870, 0.0
      %v3903 = vmax.f32 %v3871, 0.0
      %v3904 = vmax.f32 %v3872, 0.0
      %v3905 = vmax.f32 %v3873, 0.0
      %v3906 = vmax.f32 %v3874, 0.0
      %v3907 = vmax.f32 %v3875, 0.0
      %v3908 = vmax.f32 %v3876, 0.0
      %v3909 = vmax.f32 %v3877, 0.0
      %v3910 = vmax.f32 %v3878, 0.0
      %v3911 = vmax.f32 %v3879, 0.0
      %v3912 = vmax.f32 %v3880, 0.0
      %v3913 = vmax.f32 %v3881, 0.0
      %v3914 = vmax.f32 %v3882, 0.0
      %v3915 = vmax.f32 %v3883, 0.0
      %v3916 = vmax.f32 %v3884, 0.0
      %v3917 = vmax.f32 %v3885, 0.0
      %v3918 = vmax.f32 %v3886, 0.0
      %v3919 = vmax.f32 %v3887, 0.0
      %v3920 = vmax.f32 %v3888, 0.0
      %v3921 = vmax.f32 %v3889, 0.0
      %v3922 = vrot.slane %v3890, 7
      %v3923 = vrot.slane %v3891, 7
      %v3924 = vrot.slane %v3892, 7
      %v3925 = vrot.slane %v3893, 7
      %v3926 = vrot.slane %v3894, 7
      %v3927 = vrot.slane %v3895, 7
      %v3928 = vrot.slane %v3896, 7
      %v3929 = vrot.slane %v3897, 7
      %v3930 = vrot.slane %v3898, 7
      %v3931 = vrot.slane %v3899, 7
      %v3932 = vrot.slane %v3900, 7
      %v3933 = vrot.slane %v3901, 7
      %v3934 = vrot.slane %v3902, 7
      %v3935 = vrot.slane %v3903, 7
      %v3936 = vrot.slane %v3904, 7
      %v3937 = vrot.slane %v3905, 7
      %v3938 = vrot.slane %v3906, 7
      %v3939 = vrot.slane %v3907, 7
      %v3940 = vrot.slane %v3908, 7
      %v3941 = vrot.slane %v3909, 7
      %v3942 = vrot.slane %v3910, 7
      %v3943 = vrot.slane %v3911, 7
      %v3944 = vrot.slane %v3912, 7
      %v3945 = vrot.slane %v3913, 7
      %v3946 = vrot.slane %v3914, 7
      %v3947 = vrot.slane %v3915, 7
      %v3948 = vrot.slane %v3916, 7
      %v3949 = vrot.slane %v3917, 7
      %v3950 = vrot.slane %v3918, 7
      %v3951 = vrot.slane %v3919, 7
      %v3952 = vrot.slane %v3920, 7
      %v3953 = vrot.slane %v3921, 7
      %v3954 = vsel %vm803, %v3952, %v3953
      %v3955 = vsel %vm803, %v3951, %v3952
      %v3956 = vsel %vm803, %v3950, %v3951
      %v3957 = vsel %vm803, %v3949, %v3950
      %v3958 = vsel %vm803, %v3948, %v3949
      %v3959 = vsel %vm803, %v3947, %v3948
      %v3960 = vsel %vm803, %v3946, %v3947
      %v3961 = vsel %vm803, %v3945, %v3946
      %v3962 = vsel %vm803, %v3944, %v3945
      %v3963 = vsel %vm803, %v3943, %v3944
      %v3964 = vsel %vm803, %v3942, %v3943
      %v3965 = vsel %vm803, %v3941, %v3942
      %v3966 = vsel %vm803, %v3940, %v3941
      %v3967 = vsel %vm803, %v3939, %v3940
      %v3968 = vsel %vm803, %v3938, %v3939
      %v3969 = vsel %vm803, %v3937, %v3938
      %v3970 = vsel %vm803, %v3936, %v3937
      %v3971 = vsel %vm803, %v3935, %v3936
      %v3972 = vsel %vm803, %v3934, %v3935
      %v3973 = vsel %vm803, %v3933, %v3934
      %v3974 = vsel %vm803, %v3932, %v3933
      %v3975 = vsel %vm803, %v3931, %v3932
      %v3976 = vsel %vm803, %v3930, %v3931
      %v3977 = vsel %vm803, %v3929, %v3930
      %v3978 = vsel %vm803, %v3928, %v3929
      %v3979 = vsel %vm803, %v3927, %v3928
      %v3980 = vsel %vm803, %v3926, %v3927
      %v3981 = vsel %vm803, %v3925, %v3926
      %v3982 = vsel %vm803, %v3924, %v3925
      %v3983 = vsel %vm803, %v3923, %v3924
      %v3984 = vsel %vm803, %v3922, %v3923
      %v3985 = vsel %vm803, %v3953, %v3922
      %v3986 = vsel %vm868, %v3955, 0.0
      %v3987 = vsel %vm869, %v3954, 0.0
      %v3988 = vsel %vm870, %v3985, 0.0
      %v3989 = vsel %vm871, %v3984, 0.0
      %v3990 = vsel %vm872, %v3983, 0.0
      %v3991 = vsel %vm873, %v3982, 0.0
      %v3992 = vsel %vm874, %v3981, 0.0
      %v3993 = vsel %vm875, %v3980, 0.0
      %v3994 = vsel %vm876, %v3979, 0.0
      %v3995 = vsel %vm877, %v3978, 0.0
      %v3996 = vsel %vm878, %v3977, 0.0
      %v3997 = vsel %vm879, %v3976, 0.0
      %v3998 = vsel %vm880, %v3975, 0.0
      %v3999 = vsel %vm881, %v3974, 0.0
      %v4000 = vsel %vm882, %v3973, 0.0
      %v4001 = vsel %vm883, %v3972, 0.0
      %v4002 = vsel %vm884, %v3971, 0.0
      %v4003 = vsel %vm885, %v3970, 0.0
      %v4004 = vsel %vm886, %v3969, 0.0
      %v4005 = vsel %vm887, %v3968, 0.0
      %v4006 = vsel %vm888, %v3967, 0.0
      %v4007 = vsel %vm889, %v3966, 0.0
      %v4008 = vsel %vm890, %v3965, 0.0
      %v4009 = vsel %vm891, %v3964, 0.0
      %v4010 = vsel %vm892, %v3963, 0.0
      %v4011 = vsel %vm893, %v3962, 0.0
      %v4012 = vsel %vm894, %v3961, 0.0
      %v4013 = vsel %vm895, %v3960, 0.0
      %v4014 = vsel %vm896, %v3959, 0.0
      %v4015 = vsel %vm897, %v3958, 0.0
      %v4016 = vsel %vm898, %v3957, 0.0
      %v4017 = vsel %vm899, %v3956, 0.0
      %v4018 = vpack.c.bf16 %v3987, %v3986
      %v4019 = vpack.c.bf16 %v3989, %v3988
      %v4020 = vpack.c.bf16 %v3991, %v3990
      %v4021 = vpack.c.bf16 %v3993, %v3992
      %v4022 = vpack.c.bf16 %v3995, %v3994
      %v4023 = vpack.c.bf16 %v3997, %v3996
      %v4024 = vpack.c.bf16 %v3999, %v3998
      %v4025 = vpack.c.bf16 %v4001, %v4000
      %v4026 = vpack.c.bf16 %v4003, %v4002
      %v4027 = vpack.c.bf16 %v4005, %v4004
      %v4028 = vpack.c.bf16 %v4007, %v4006
      %v4029 = vpack.c.bf16 %v4009, %v4008
      %v4030 = vpack.c.bf16 %v4011, %v4010
      %v4031 = vpack.c.bf16 %v4013, %v4012
      %v4032 = vpack.c.bf16 %v4015, %v4014
      %v4033 = vpack.c.bf16 %v4017, %v4016
      %4034 = vst [vmem:[#allocation2] sm:$0xff] %v4018
      %4035 = vst [vmem:[#allocation2 + $0x18] sm:$0xff] %v4019
      %4036 = vst [vmem:[#allocation2 + $0x30] sm:$0xff] %v4020
      %4037 = vst [vmem:[#allocation2 + $0x48] sm:$0xff] %v4021
      %4038 = vst [vmem:[#allocation2 + $0x60] sm:$0xff] %v4022
      %4039 = vst [vmem:[#allocation2 + $0x78] sm:$0xff] %v4023
      %4040 = vst [vmem:[#allocation2 + $0x90] sm:$0xff] %v4024
      %4041 = vst [vmem:[#allocation2 + $0xa8] sm:$0xff] %v4025
      %4042 = vst [vmem:[#allocation2 + $0xc0] sm:$0xff] %v4026
      %4043 = vst [vmem:[#allocation2 + $0xd8] sm:$0xff] %v4027
      %4044 = vst [vmem:[#allocation2 + $0xf0] sm:$0xff] %v4028
      %4045 = vst [vmem:[#allocation2 + $0x108] sm:$0xff] %v4029
      %4046 = vst [vmem:[#allocation2 + $0x120] sm:$0xff] %v4030
      %4047 = vst [vmem:[#allocation2 + $0x138] sm:$0xff] %v4031
      %4048 = vst [vmem:[#allocation2 + $0x150] sm:$0xff] %v4032
      %4049 = vst [vmem:[#allocation2 + $0x168] sm:$0xff] %v4033
      %v4050 = vsel %vm996, %v3920, 0.0
      %v4051 = vsel %vm997, %v3921, 0.0
      %v4052 = vsel %vm998, %v3890, 0.0
      %v4053 = vsel %vm999, %v3891, 0.0
      %v4054 = vsel %vm1000, %v3892, 0.0
      %v4055 = vsel %vm1001, %v3893, 0.0
      %v4056 = vsel %vm1002, %v3894, 0.0
      %v4057 = vsel %vm1003, %v3895, 0.0
      %v4058 = vsel %vm1004, %v3896, 0.0
      %v4059 = vsel %vm1005, %v3897, 0.0
      %v4060 = vsel %vm1006, %v3898, 0.0
      %v4061 = vsel %vm1007, %v3899, 0.0
      %v4062 = vsel %vm1008, %v3900, 0.0
      %v4063 = vsel %vm1009, %v3901, 0.0
      %v4064 = vsel %vm1010, %v3902, 0.0
      %v4065 = vsel %vm1011, %v3903, 0.0
      %v4066 = vsel %vm1012, %v3904, 0.0
      %v4067 = vsel %vm1013, %v3905, 0.0
      %v4068 = vsel %vm1014, %v3906, 0.0
      %v4069 = vsel %vm1015, %v3907, 0.0
      %v4070 = vsel %vm1016, %v3908, 0.0
      %v4071 = vsel %vm1017, %v3909, 0.0
      %v4072 = vsel %vm1018, %v3910, 0.0
      %v4073 = vsel %vm1019, %v3911, 0.0
      %v4074 = vsel %vm1020, %v3912, 0.0
      %v4075 = vsel %vm1021, %v3913, 0.0
      %v4076 = vsel %vm1022, %v3914, 0.0
      %v4077 = vsel %vm1023, %v3915, 0.0
      %v4078 = vsel %vm1024, %v3916, 0.0
      %v4079 = vsel %vm1025, %v3917, 0.0
      %v4080 = vsel %vm1026, %v3918, 0.0
      %v4081 = vsel %vm1027, %v3919, 0.0
      %v4082 = vpack.c.bf16 %v4051, %v4050
      %v4083 = vpack.c.bf16 %v4053, %v4052
      %v4084 = vpack.c.bf16 %v4055, %v4054
      %v4085 = vpack.c.bf16 %v4057, %v4056
      %v4086 = vpack.c.bf16 %v4059, %v4058
      %v4087 = vpack.c.bf16 %v4061, %v4060
      %v4088 = vpack.c.bf16 %v4063, %v4062
      %v4089 = vpack.c.bf16 %v4065, %v4064
      %v4090 = vpack.c.bf16 %v4067, %v4066
      %v4091 = vpack.c.bf16 %v4069, %v4068
      %v4092 = vpack.c.bf16 %v4071, %v4070
      %v4093 = vpack.c.bf16 %v4073, %v4072
      %v4094 = vpack.c.bf16 %v4075, %v4074
      %v4095 = vpack.c.bf16 %v4077, %v4076
      %v4096 = vpack.c.bf16 %v4079, %v4078
      %v4097 = vpack.c.bf16 %v4081, %v4080
      %4098 = vst [vmem:[#allocation2 + $0x8] sm:$0xff] %v4082
      %4099 = vst [vmem:[#allocation2 + $0x20] sm:$0xff] %v4083
      %4100 = vst [vmem:[#allocation2 + $0x38] sm:$0xff] %v4084
      %4101 = vst [vmem:[#allocation2 + $0x50] sm:$0xff] %v4085
      %4102 = vst [vmem:[#allocation2 + $0x68] sm:$0xff] %v4086
      %4103 = vst [vmem:[#allocation2 + $0x80] sm:$0xff] %v4087
      %4104 = vst [vmem:[#allocation2 + $0x98] sm:$0xff] %v4088
      %4105 = vst [vmem:[#allocation2 + $0xb0] sm:$0xff] %v4089
      %4106 = vst [vmem:[#allocation2 + $0xc8] sm:$0xff] %v4090
      %4107 = vst [vmem:[#allocation2 + $0xe0] sm:$0xff] %v4091
      %4108 = vst [vmem:[#allocation2 + $0xf8] sm:$0xff] %v4092
      %4109 = vst [vmem:[#allocation2 + $0x110] sm:$0xff] %v4093
      %4110 = vst [vmem:[#allocation2 + $0x128] sm:$0xff] %v4094
      %4111 = vst [vmem:[#allocation2 + $0x140] sm:$0xff] %v4095
      %4112 = vst [vmem:[#allocation2 + $0x158] sm:$0xff] %v4096
      %4113 = vst [vmem:[#allocation2 + $0x170] sm:$0xff] %v4097
      %v4114 = vrot.slane %v3890, 1
      %v4115 = vrot.slane %v3891, 1
      %v4116 = vrot.slane %v3892, 1
      %v4117 = vrot.slane %v3893, 1
      %v4118 = vrot.slane %v3894, 1
      %v4119 = vrot.slane %v3895, 1
      %v4120 = vrot.slane %v3896, 1
      %v4121 = vrot.slane %v3897, 1
      %v4122 = vrot.slane %v3898, 1
      %v4123 = vrot.slane %v3899, 1
      %v4124 = vrot.slane %v3900, 1
      %v4125 = vrot.slane %v3901, 1
      %v4126 = vrot.slane %v3902, 1
      %v4127 = vrot.slane %v3903, 1
      %v4128 = vrot.slane %v3904, 1
      %v4129 = vrot.slane %v3905, 1
      %v4130 = vrot.slane %v3906, 1
      %v4131 = vrot.slane %v3907, 1
      %v4132 = vrot.slane %v3908, 1
      %v4133 = vrot.slane %v3909, 1
      %v4134 = vrot.slane %v3910, 1
      %v4135 = vrot.slane %v3911, 1
      %v4136 = vrot.slane %v3912, 1
      %v4137 = vrot.slane %v3913, 1
      %v4138 = vrot.slane %v3914, 1
      %v4139 = vrot.slane %v3915, 1
      %v4140 = vrot.slane %v3916, 1
      %v4141 = vrot.slane %v3917, 1
      %v4142 = vrot.slane %v3918, 1
      %v4143 = vrot.slane %v3919, 1
      %v4144 = vrot.slane %v3920, 1
      %v4145 = vrot.slane %v3921, 1
      %v4146 = vsel %vm1124, %v4144, %v4145
      %v4147 = vsel %vm1124, %v4143, %v4144
      %v4148 = vsel %vm1124, %v4142, %v4143
      %v4149 = vsel %vm1124, %v4141, %v4142
      %v4150 = vsel %vm1124, %v4140, %v4141
      %v4151 = vsel %vm1124, %v4139, %v4140
      %v4152 = vsel %vm1124, %v4138, %v4139
      %v4153 = vsel %vm1124, %v4137, %v4138
      %v4154 = vsel %vm1124, %v4136, %v4137
      %v4155 = vsel %vm1124, %v4135, %v4136
      %v4156 = vsel %vm1124, %v4134, %v4135
      %v4157 = vsel %vm1124, %v4133, %v4134
      %v4158 = vsel %vm1124, %v4132, %v4133
      %v4159 = vsel %vm1124, %v4131, %v4132
      %v4160 = vsel %vm1124, %v4130, %v4131
      %v4161 = vsel %vm1124, %v4129, %v4130
      %v4162 = vsel %vm1124, %v4128, %v4129
      %v4163 = vsel %vm1124, %v4127, %v4128
      %v4164 = vsel %vm1124, %v4126, %v4127
      %v4165 = vsel %vm1124, %v4125, %v4126
      %v4166 = vsel %vm1124, %v4124, %v4125
      %v4167 = vsel %vm1124, %v4123, %v4124
      %v4168 = vsel %vm1124, %v4122, %v4123
      %v4169 = vsel %vm1124, %v4121, %v4122
      %v4170 = vsel %vm1124, %v4120, %v4121
      %v4171 = vsel %vm1124, %v4119, %v4120
      %v4172 = vsel %vm1124, %v4118, %v4119
      %v4173 = vsel %vm1124, %v4117, %v4118
      %v4174 = vsel %vm1124, %v4116, %v4117
      %v4175 = vsel %vm1124, %v4115, %v4116
      %v4176 = vsel %vm1124, %v4114, %v4115
      %v4177 = vsel %vm1124, %v4145, %v4114
      %v4178 = vsel %vm1189, %v4146, 0.0
      %v4179 = vsel %vm1190, %v4177, 0.0
      %v4180 = vsel %vm1191, %v4176, 0.0
      %v4181 = vsel %vm1192, %v4175, 0.0
      %v4182 = vsel %vm1193, %v4174, 0.0
      %v4183 = vsel %vm1194, %v4173, 0.0
      %v4184 = vsel %vm1195, %v4172, 0.0
      %v4185 = vsel %vm1196, %v4171, 0.0
      %v4186 = vsel %vm1197, %v4170, 0.0
      %v4187 = vsel %vm1198, %v4169, 0.0
      %v4188 = vsel %vm1199, %v4168, 0.0
      %v4189 = vsel %vm1200, %v4167, 0.0
      %v4190 = vsel %vm1201, %v4166, 0.0
      %v4191 = vsel %vm1202, %v4165, 0.0
      %v4192 = vsel %vm1203, %v4164, 0.0
      %v4193 = vsel %vm1204, %v4163, 0.0
      %v4194 = vsel %vm1205, %v4162, 0.0
      %v4195 = vsel %vm1206, %v4161, 0.0
      %v4196 = vsel %vm1207, %v4160, 0.0
      %v4197 = vsel %vm1208, %v4159, 0.0
      %v4198 = vsel %vm1209, %v4158, 0.0
      %v4199 = vsel %vm1210, %v4157, 0.0
      %v4200 = vsel %vm1211, %v4156, 0.0
      %v4201 = vsel %vm1212, %v4155, 0.0
      %v4202 = vsel %vm1213, %v4154, 0.0
      %v4203 = vsel %vm1214, %v4153, 0.0
      %v4204 = vsel %vm1215, %v4152, 0.0
      %v4205 = vsel %vm1216, %v4151, 0.0
      %v4206 = vsel %vm1217, %v4150, 0.0
      %v4207 = vsel %vm1218, %v4149, 0.0
      %v4208 = vsel %vm1219, %v4148, 0.0
      %v4209 = vsel %vm1220, %v4147, 0.0
      %v4210 = vpack.c.bf16 %v4179, %v4178
      %v4211 = vpack.c.bf16 %v4181, %v4180
      %v4212 = vpack.c.bf16 %v4183, %v4182
      %v4213 = vpack.c.bf16 %v4185, %v4184
      %v4214 = vpack.c.bf16 %v4187, %v4186
      %v4215 = vpack.c.bf16 %v4189, %v4188
      %v4216 = vpack.c.bf16 %v4191, %v4190
      %v4217 = vpack.c.bf16 %v4193, %v4192
      %v4218 = vpack.c.bf16 %v4195, %v4194
      %v4219 = vpack.c.bf16 %v4197, %v4196
      %v4220 = vpack.c.bf16 %v4199, %v4198
      %v4221 = vpack.c.bf16 %v4201, %v4200
      %v4222 = vpack.c.bf16 %v4203, %v4202
      %v4223 = vpack.c.bf16 %v4205, %v4204
      %v4224 = vpack.c.bf16 %v4207, %v4206
      %v4225 = vpack.c.bf16 %v4209, %v4208
      %4226 = vst [vmem:[#allocation2 + $0x10] sm:$0xff] %v4210
      %4227 = vst [vmem:[#allocation2 + $0x28] sm:$0xff] %v4211
      %4228 = vst [vmem:[#allocation2 + $0x40] sm:$0xff] %v4212
      %4229 = vst [vmem:[#allocation2 + $0x58] sm:$0xff] %v4213
      %4230 = vst [vmem:[#allocation2 + $0x70] sm:$0xff] %v4214
      %4231 = vst [vmem:[#allocation2 + $0x88] sm:$0xff] %v4215
      %4232 = vst [vmem:[#allocation2 + $0xa0] sm:$0xff] %v4216
      %4233 = vst [vmem:[#allocation2 + $0xb8] sm:$0xff] %v4217
      %4234 = vst [vmem:[#allocation2 + $0xd0] sm:$0xff] %v4218
      %4235 = vst [vmem:[#allocation2 + $0xe8] sm:$0xff] %v4219
      %4236 = vst [vmem:[#allocation2 + $0x100] sm:$0xff] %v4220
      %4237 = vst [vmem:[#allocation2 + $0x118] sm:$0xff] %v4221
      %4238 = vst [vmem:[#allocation2 + $0x130] sm:$0xff] %v4222
      %4239 = vst [vmem:[#allocation2 + $0x148] sm:$0xff] %v4223
      %4240 = vst [vmem:[#allocation2 + $0x160] sm:$0xff] %v4224
      %4241 = vst [vmem:[#allocation2 + $0x178] sm:$0xff] %v4225
      %v4242 = vld [vmem:[#allocation2] sm:$0xff]
      %v4243 = vld [vmem:[#allocation2 + $0x8] sm:$0xff]
      %v4244 = vld [vmem:[#allocation2 + $0x10] sm:$0xff]
      %v4245 = vld [vmem:[#allocation2 + $0x18] sm:$0xff]
      %v4246 = vld [vmem:[#allocation2 + $0x20] sm:$0xff]
      %v4247 = vld [vmem:[#allocation2 + $0x28] sm:$0xff]
      %v4248 = vld [vmem:[#allocation2 + $0x30] sm:$0xff]
      %v4249 = vld [vmem:[#allocation2 + $0x38] sm:$0xff]
      %v4250 = vld [vmem:[#allocation2 + $0x40] sm:$0xff]
      %v4251 = vld [vmem:[#allocation2 + $0x48] sm:$0xff]
      %v4252 = vld [vmem:[#allocation2 + $0x50] sm:$0xff]
      %v4253 = vld [vmem:[#allocation2 + $0x58] sm:$0xff]
      %v4254 = vld [vmem:[#allocation2 + $0x60] sm:$0xff]
      %v4255 = vld [vmem:[#allocation2 + $0x68] sm:$0xff]
      %v4256 = vld [vmem:[#allocation2 + $0x70] sm:$0xff]
      %v4257 = vld [vmem:[#allocation2 + $0x78] sm:$0xff]
      %v4258 = vld [vmem:[#allocation2 + $0x80] sm:$0xff]
      %v4259 = vld [vmem:[#allocation2 + $0x88] sm:$0xff]
      %v4260 = vld [vmem:[#allocation2 + $0x90] sm:$0xff]
      %v4261 = vld [vmem:[#allocation2 + $0x98] sm:$0xff]
      %v4262 = vld [vmem:[#allocation2 + $0xa0] sm:$0xff]
      %v4263 = vld [vmem:[#allocation2 + $0xa8] sm:$0xff]
      %v4264 = vld [vmem:[#allocation2 + $0xb0] sm:$0xff]
      %v4265 = vld [vmem:[#allocation2 + $0xb8] sm:$0xff]
      %v4266 = vld [vmem:[#allocation2 + $0xc0] sm:$0xff]
      %v4267 = vld [vmem:[#allocation2 + $0xc8] sm:$0xff]
      %v4268 = vld [vmem:[#allocation2 + $0xd0] sm:$0xff]
      %v4269 = vld [vmem:[#allocation2 + $0xd8] sm:$0xff]
      %v4270 = vld [vmem:[#allocation2 + $0xe0] sm:$0xff]
      %v4271 = vld [vmem:[#allocation2 + $0xe8] sm:$0xff]
      %v4272 = vld [vmem:[#allocation2 + $0xf0] sm:$0xff]
      %v4273 = vld [vmem:[#allocation2 + $0xf8] sm:$0xff]
      %v4274 = vld [vmem:[#allocation2 + $0x100] sm:$0xff]
      %v4275 = vld [vmem:[#allocation2 + $0x108] sm:$0xff]
      %v4276 = vld [vmem:[#allocation2 + $0x110] sm:$0xff]
      %v4277 = vld [vmem:[#allocation2 + $0x118] sm:$0xff]
      %v4278 = vld [vmem:[#allocation2 + $0x120] sm:$0xff]
      %v4279 = vld [vmem:[#allocation2 + $0x128] sm:$0xff]
      %v4280 = vld [vmem:[#allocation2 + $0x130] sm:$0xff]
      %v4281 = vld [vmem:[#allocation2 + $0x138] sm:$0xff]
      %v4282 = vld [vmem:[#allocation2 + $0x140] sm:$0xff]
      %v4283 = vld [vmem:[#allocation2 + $0x148] sm:$0xff]
      %v4284 = vld [vmem:[#allocation2 + $0x150] sm:$0xff]
      %v4285 = vld [vmem:[#allocation2 + $0x158] sm:$0xff]
      %v4286 = vld [vmem:[#allocation2 + $0x160] sm:$0xff]
      %v4287 = vld [vmem:[#allocation2 + $0x168] sm:$0xff]
      %v4288 = vld [vmem:[#allocation2 + $0x170] sm:$0xff]
      %v4289 = vld [vmem:[#allocation2 + $0x178] sm:$0xff]
      %v4290 = vld [vmem:[%s3] sm:$0xf]
      %v4291 = vld [vmem:[%s3 + $0x4] sm:$0xf]
      %v4292 = vld [vmem:[%s3 + $0x8] sm:$0xf]
      %v4293 = vld [vmem:[%s3 + $0xc] sm:$0xf]
      %v4294 = vld [vmem:[%s3 + $0x10] sm:$0xf]
      %v4295 = vld [vmem:[%s3 + $0x14] sm:$0xf]
      %v4296 = vld [vmem:[%s3 + $0x18] sm:$0xf]
      %v4297 = vld [vmem:[%s3 + $0x1c] sm:$0xf]
      %v4298 = vld [vmem:[%s3 + $0x20] sm:$0xf]
      %v4299 = vld [vmem:[%s3 + $0x24] sm:$0xf]
      %v4300 = vld [vmem:[%s3 + $0x28] sm:$0xf]
      %v4301 = vld [vmem:[%s3 + $0x2c] sm:$0xf]
      %v4302 = vld [vmem:[%s3 + $0x30] sm:$0xf]
      %v4303 = vld [vmem:[%s3 + $0x34] sm:$0xf]
      %v4304 = vld [vmem:[%s3 + $0x38] sm:$0xf]
      %v4305 = vld [vmem:[%s3 + $0x3c] sm:$0xf]
      %v4306 = vld [vmem:[%s3 + $0x40] sm:$0xf]
      %v4307 = vld [vmem:[%s3 + $0x44] sm:$0xf]
      %v4308 = vld [vmem:[%s3 + $0x48] sm:$0xf]
      %v4309 = vld [vmem:[%s3 + $0x4c] sm:$0xf]
      %v4310 = vld [vmem:[%s3 + $0x50] sm:$0xf]
      %v4311 = vld [vmem:[%s3 + $0x54] sm:$0xf]
      %v4312 = vld [vmem:[%s3 + $0x58] sm:$0xf]
      %v4313 = vld [vmem:[%s3 + $0x5c] sm:$0xf]
      %v4314 = vld [vmem:[%s3 + $0x60] sm:$0xf]
      %v4315 = vld [vmem:[%s3 + $0x64] sm:$0xf]
      %v4316 = vld [vmem:[%s3 + $0x68] sm:$0xf]
      %v4317 = vld [vmem:[%s3 + $0x6c] sm:$0xf]
      %v4318 = vld [vmem:[%s3 + $0x70] sm:$0xf]
      %v4319 = vld [vmem:[%s3 + $0x74] sm:$0xf]
      %v4320 = vld [vmem:[%s3 + $0x78] sm:$0xf]
      %v4321 = vld [vmem:[%s3 + $0x7c] sm:$0xf]
      %v4322 = vld [vmem:[%s3 + $0x80] sm:$0xf]
      %v4323 = vld [vmem:[%s3 + $0x84] sm:$0xf]
      %v4324 = vld [vmem:[%s3 + $0x88] sm:$0xf]
      %v4325 = vld [vmem:[%s3 + $0x8c] sm:$0xf]
      %v4326 = vld [vmem:[%s3 + $0x90] sm:$0xf]
      %v4327 = vld [vmem:[%s3 + $0x94] sm:$0xf]
      %v4328 = vld [vmem:[%s3 + $0x98] sm:$0xf]
      %v4329 = vld [vmem:[%s3 + $0x9c] sm:$0xf]
      %v4330 = vld [vmem:[%s3 + $0xa0] sm:$0xf]
      %v4331 = vld [vmem:[%s3 + $0xa4] sm:$0xf]
      %v4332 = vld [vmem:[%s3 + $0xa8] sm:$0xf]
      %v4333 = vld [vmem:[%s3 + $0xac] sm:$0xf]
      %v4334 = vld [vmem:[%s3 + $0xb0] sm:$0xf]
      %v4335 = vld [vmem:[%s3 + $0xb4] sm:$0xf]
      %v4336 = vld [vmem:[%s3 + $0xb8] sm:$0xf]
      %v4337 = vld [vmem:[%s3 + $0xbc] sm:$0xf]
      %v4338 = vsel %vm1413, %v3985, 0.0
      %v4339 = vsel %vm1414, %v3984, 0.0
      %v4340 = vsel %vm1415, %v3983, 0.0
      %v4341 = vsel %vm1416, %v3982, 0.0
      %v4342 = vsel %vm1417, %v3981, 0.0
      %v4343 = vsel %vm1418, %v3980, 0.0
      %v4344 = vsel %vm1419, %v3979, 0.0
      %v4345 = vsel %vm1420, %v3978, 0.0
      %v4346 = vsel %vm1421, %v3977, 0.0
      %v4347 = vsel %vm1422, %v3976, 0.0
      %v4348 = vsel %vm1423, %v3975, 0.0
      %v4349 = vsel %vm1424, %v3974, 0.0
      %v4350 = vsel %vm1425, %v3973, 0.0
      %v4351 = vsel %vm1426, %v3972, 0.0
      %v4352 = vsel %vm1427, %v3971, 0.0
      %v4353 = vsel %vm1428, %v3970, 0.0
      %v4354 = vsel %vm1429, %v3969, 0.0
      %v4355 = vsel %vm1430, %v3968, 0.0
      %v4356 = vsel %vm1431, %v3967, 0.0
      %v4357 = vsel %vm1432, %v3966, 0.0
      %v4358 = vsel %vm1433, %v3965, 0.0
      %v4359 = vsel %vm1434, %v3964, 0.0
      %v4360 = vsel %vm1435, %v3963, 0.0
      %v4361 = vsel %vm1436, %v3962, 0.0
      %v4362 = vsel %vm1437, %v3961, 0.0
      %v4363 = vsel %vm1438, %v3960, 0.0
      %v4364 = vsel %vm1439, %v3959, 0.0
      %v4365 = vsel %vm1440, %v3958, 0.0
      %v4366 = vsel %vm1441, %v3957, 0.0
      %v4367 = vsel %vm1442, %v3956, 0.0
      %v4368 = vsel %vm1443, %v3955, 0.0
      %v4369 = vsel %vm1444, %v3954, 0.0
      %v4370 = vpack.c.bf16 %v4339, %v4338
      %v4371 = vpack.c.bf16 %v4341, %v4340
      %v4372 = vpack.c.bf16 %v4343, %v4342
      %v4373 = vpack.c.bf16 %v4345, %v4344
      %v4374 = vpack.c.bf16 %v4347, %v4346
      %v4375 = vpack.c.bf16 %v4349, %v4348
      %v4376 = vpack.c.bf16 %v4351, %v4350
      %v4377 = vpack.c.bf16 %v4353, %v4352
      %v4378 = vpack.c.bf16 %v4355, %v4354
      %v4379 = vpack.c.bf16 %v4357, %v4356
      %v4380 = vpack.c.bf16 %v4359, %v4358
      %v4381 = vpack.c.bf16 %v4361, %v4360
      %v4382 = vpack.c.bf16 %v4363, %v4362
      %v4383 = vpack.c.bf16 %v4365, %v4364
      %v4384 = vpack.c.bf16 %v4367, %v4366
      %v4385 = vpack.c.bf16 %v4369, %v4368
      %4386 = vst [vmem:[#allocation2] sm:$0xff] %v4370
      %4387 = vst [vmem:[#allocation2 + $0x18] sm:$0xff] %v4371
      %4388 = vst [vmem:[#allocation2 + $0x30] sm:$0xff] %v4372
      %4389 = vst [vmem:[#allocation2 + $0x48] sm:$0xff] %v4373
      %4390 = vst [vmem:[#allocation2 + $0x60] sm:$0xff] %v4374
      %4391 = vst [vmem:[#allocation2 + $0x78] sm:$0xff] %v4375
      %4392 = vst [vmem:[#allocation2 + $0x90] sm:$0xff] %v4376
      %4393 = vst [vmem:[#allocation2 + $0xa8] sm:$0xff] %v4377
      %4394 = vst [vmem:[#allocation2 + $0xc0] sm:$0xff] %v4378
      %4395 = vst [vmem:[#allocation2 + $0xd8] sm:$0xff] %v4379
      %4396 = vst [vmem:[#allocation2 + $0xf0] sm:$0xff] %v4380
      %4397 = vst [vmem:[#allocation2 + $0x108] sm:$0xff] %v4381
      %4398 = vst [vmem:[#allocation2 + $0x120] sm:$0xff] %v4382
      %4399 = vst [vmem:[#allocation2 + $0x138] sm:$0xff] %v4383
      %4400 = vst [vmem:[#allocation2 + $0x150] sm:$0xff] %v4384
      %4401 = vst [vmem:[#allocation2 + $0x168] sm:$0xff] %v4385
      %v4402 = vpack.c.bf16 %v3891, %v3890
      %v4403 = vpack.c.bf16 %v3893, %v3892
      %v4404 = vpack.c.bf16 %v3895, %v3894
      %v4405 = vpack.c.bf16 %v3897, %v3896
      %v4406 = vpack.c.bf16 %v3899, %v3898
      %v4407 = vpack.c.bf16 %v3901, %v3900
      %v4408 = vpack.c.bf16 %v3903, %v3902
      %v4409 = vpack.c.bf16 %v3905, %v3904
      %v4410 = vpack.c.bf16 %v3907, %v3906
      %v4411 = vpack.c.bf16 %v3909, %v3908
      %v4412 = vpack.c.bf16 %v3911, %v3910
      %v4413 = vpack.c.bf16 %v3913, %v3912
      %v4414 = vpack.c.bf16 %v3915, %v3914
      %v4415 = vpack.c.bf16 %v3917, %v3916
      %v4416 = vpack.c.bf16 %v3919, %v3918
      %v4417 = vpack.c.bf16 %v3921, %v3920
      %4418 = vst [vmem:[#allocation2 + $0x8] sm:$0xff] %v4402
      %4419 = vst [vmem:[#allocation2 + $0x20] sm:$0xff] %v4403
      %4420 = vst [vmem:[#allocation2 + $0x38] sm:$0xff] %v4404
      %4421 = vst [vmem:[#allocation2 + $0x50] sm:$0xff] %v4405
      %4422 = vst [vmem:[#allocation2 + $0x68] sm:$0xff] %v4406
      %4423 = vst [vmem:[#allocation2 + $0x80] sm:$0xff] %v4407
      %4424 = vst [vmem:[#allocation2 + $0x98] sm:$0xff] %v4408
      %4425 = vst [vmem:[#allocation2 + $0xb0] sm:$0xff] %v4409
      %4426 = vst [vmem:[#allocation2 + $0xc8] sm:$0xff] %v4410
      %4427 = vst [vmem:[#allocation2 + $0xe0] sm:$0xff] %v4411
      %4428 = vst [vmem:[#allocation2 + $0xf8] sm:$0xff] %v4412
      %4429 = vst [vmem:[#allocation2 + $0x110] sm:$0xff] %v4413
      %4430 = vst [vmem:[#allocation2 + $0x128] sm:$0xff] %v4414
      %4431 = vst [vmem:[#allocation2 + $0x140] sm:$0xff] %v4415
      %4432 = vst [vmem:[#allocation2 + $0x158] sm:$0xff] %v4416
      %4433 = vst [vmem:[#allocation2 + $0x170] sm:$0xff] %v4417
      %v4434 = vsel %vm1573, %v4176, 0.0
      %v4435 = vsel %vm1574, %v4175, 0.0
      %v4436 = vsel %vm1575, %v4174, 0.0
      %v4437 = vsel %vm1576, %v4173, 0.0
      %v4438 = vsel %vm1577, %v4172, 0.0
      %v4439 = vsel %vm1578, %v4171, 0.0
      %v4440 = vsel %vm1579, %v4170, 0.0
      %v4441 = vsel %vm1580, %v4169, 0.0
      %v4442 = vsel %vm1581, %v4168, 0.0
      %v4443 = vsel %vm1582, %v4167, 0.0
      %v4444 = vsel %vm1583, %v4166, 0.0
      %v4445 = vsel %vm1584, %v4165, 0.0
      %v4446 = vsel %vm1585, %v4164, 0.0
      %v4447 = vsel %vm1586, %v4163, 0.0
      %v4448 = vsel %vm1587, %v4162, 0.0
      %v4449 = vsel %vm1588, %v4161, 0.0
      %v4450 = vsel %vm1589, %v4160, 0.0
      %v4451 = vsel %vm1590, %v4159, 0.0
      %v4452 = vsel %vm1591, %v4158, 0.0
      %v4453 = vsel %vm1592, %v4157, 0.0
      %v4454 = vsel %vm1593, %v4156, 0.0
      %v4455 = vsel %vm1594, %v4155, 0.0
      %v4456 = vsel %vm1595, %v4154, 0.0
      %v4457 = vsel %vm1596, %v4153, 0.0
      %v4458 = vsel %vm1597, %v4152, 0.0
      %v4459 = vsel %vm1598, %v4151, 0.0
      %v4460 = vsel %vm1599, %v4150, 0.0
      %v4461 = vsel %vm1600, %v4149, 0.0
      %v4462 = vsel %vm1601, %v4148, 0.0
      %v4463 = vsel %vm1602, %v4147, 0.0
      %v4464 = vsel %vm1603, %v4146, 0.0
      %v4465 = vsel %vm1604, %v4177, 0.0
      %v4466 = vpack.c.bf16 %v4435, %v4434
      %v4467 = vpack.c.bf16 %v4437, %v4436
      %v4468 = vpack.c.bf16 %v4439, %v4438
      %v4469 = vpack.c.bf16 %v4441, %v4440
      %v4470 = vpack.c.bf16 %v4443, %v4442
      %v4471 = vpack.c.bf16 %v4445, %v4444
      %v4472 = vpack.c.bf16 %v4447, %v4446
      %v4473 = vpack.c.bf16 %v4449, %v4448
      %v4474 = vpack.c.bf16 %v4451, %v4450
      %v4475 = vpack.c.bf16 %v4453, %v4452
      %v4476 = vpack.c.bf16 %v4455, %v4454
      %v4477 = vpack.c.bf16 %v4457, %v4456
      %v4478 = vpack.c.bf16 %v4459, %v4458
      %v4479 = vpack.c.bf16 %v4461, %v4460
      %v4480 = vpack.c.bf16 %v4463, %v4462
      %v4481 = vpack.c.bf16 %v4465, %v4464
      %4482 = vst [vmem:[#allocation2 + $0x10] sm:$0xff] %v4466
      %4483 = vst [vmem:[#allocation2 + $0x28] sm:$0xff] %v4467
      %4484 = vst [vmem:[#allocation2 + $0x40] sm:$0xff] %v4468
      %4485 = vst [vmem:[#allocation2 + $0x58] sm:$0xff] %v4469
      %4486 = vst [vmem:[#allocation2 + $0x70] sm:$0xff] %v4470
      %4487 = vst [vmem:[#allocation2 + $0x88] sm:$0xff] %v4471
      %4488 = vst [vmem:[#allocation2 + $0xa0] sm:$0xff] %v4472
      %4489 = vst [vmem:[#allocation2 + $0xb8] sm:$0xff] %v4473
      %4490 = vst [vmem:[#allocation2 + $0xd0] sm:$0xff] %v4474
      %4491 = vst [vmem:[#allocation2 + $0xe8] sm:$0xff] %v4475
      %4492 = vst [vmem:[#allocation2 + $0x100] sm:$0xff] %v4476
      %4493 = vst [vmem:[#allocation2 + $0x118] sm:$0xff] %v4477
      %4494 = vst [vmem:[#allocation2 + $0x130] sm:$0xff] %v4478
      %4495 = vst [vmem:[#allocation2 + $0x148] sm:$0xff] %v4479
      %4496 = vst [vmem:[#allocation2 + $0x160] sm:$0xff] %v4480
      %4497 = vst [vmem:[#allocation2 + $0x178] sm:$0xff] %v4481
      %v4498 = vld [vmem:[#allocation2] sm:$0xff]
      %v4499 = vld [vmem:[#allocation2 + $0x8] sm:$0xff]
      %v4500 = vld [vmem:[#allocation2 + $0x10] sm:$0xff]
      %v4501 = vld [vmem:[#allocation2 + $0x18] sm:$0xff]
      %v4502 = vld [vmem:[#allocation2 + $0x20] sm:$0xff]
      %v4503 = vld [vmem:[#allocation2 + $0x28] sm:$0xff]
      %v4504 = vld [vmem:[#allocation2 + $0x30] sm:$0xff]
      %v4505 = vld [vmem:[#allocation2 + $0x38] sm:$0xff]
      %v4506 = vld [vmem:[#allocation2 + $0x40] sm:$0xff]
      %v4507 = vld [vmem:[#allocation2 + $0x48] sm:$0xff]
      %v4508 = vld [vmem:[#allocation2 + $0x50] sm:$0xff]
      %v4509 = vld [vmem:[#allocation2 + $0x58] sm:$0xff]
      %v4510 = vld [vmem:[#allocation2 + $0x60] sm:$0xff]
      %v4511 = vld [vmem:[#allocation2 + $0x68] sm:$0xff]
      %v4512 = vld [vmem:[#allocation2 + $0x70] sm:$0xff]
      %v4513 = vld [vmem:[#allocation2 + $0x78] sm:$0xff]
      %v4514 = vld [vmem:[#allocation2 + $0x80] sm:$0xff]
      %v4515 = vld [vmem:[#allocation2 + $0x88] sm:$0xff]
      %v4516 = vld [vmem:[#allocation2 + $0x90] sm:$0xff]
      %v4517 = vld [vmem:[#allocation2 + $0x98] sm:$0xff]
      %v4518 = vld [vmem:[#allocation2 + $0xa0] sm:$0xff]
      %v4519 = vld [vmem:[#allocation2 + $0xa8] sm:$0xff]
      %v4520 = vld [vmem:[#allocation2 + $0xb0] sm:$0xff]
      %v4521 = vld [vmem:[#allocation2 + $0xb8] sm:$0xff]
      %v4522 = vld [vmem:[#allocation2 + $0xc0] sm:$0xff]
      %v4523 = vld [vmem:[#allocation2 + $0xc8] sm:$0xff]
      %v4524 = vld [vmem:[#allocation2 + $0xd0] sm:$0xff]
      %v4525 = vld [vmem:[#allocation2 + $0xd8] sm:$0xff]
      %v4526 = vld [vmem:[#allocation2 + $0xe0] sm:$0xff]
      %v4527 = vld [vmem:[#allocation2 + $0xe8] sm:$0xff]
      %v4528 = vld [vmem:[#allocation2 + $0xf0] sm:$0xff]
      %v4529 = vld [vmem:[#allocation2 + $0xf8] sm:$0xff]
      %v4530 = vld [vmem:[#allocation2 + $0x100] sm:$0xff]
      %v4531 = vld [vmem:[#allocation2 + $0x108] sm:$0xff]
      %v4532 = vld [vmem:[#allocation2 + $0x110] sm:$0xff]
      %v4533 = vld [vmem:[#allocation2 + $0x118] sm:$0xff]
      %v4534 = vld [vmem:[#allocation2 + $0x120] sm:$0xff]
      %v4535 = vld [vmem:[#allocation2 + $0x128] sm:$0xff]
      %v4536 = vld [vmem:[#allocation2 + $0x130] sm:$0xff]
      %v4537 = vld [vmem:[#allocation2 + $0x138] sm:$0xff]
      %v4538 = vld [vmem:[#allocation2 + $0x140] sm:$0xff]
      %v4539 = vld [vmem:[#allocation2 + $0x148] sm:$0xff]
      %v4540 = vld [vmem:[#allocation2 + $0x150] sm:$0xff]
      %v4541 = vld [vmem:[#allocation2 + $0x158] sm:$0xff]
      %v4542 = vld [vmem:[#allocation2 + $0x160] sm:$0xff]
      %v4543 = vld [vmem:[#allocation2 + $0x168] sm:$0xff]
      %v4544 = vld [vmem:[#allocation2 + $0x170] sm:$0xff]
      %v4545 = vld [vmem:[#allocation2 + $0x178] sm:$0xff]
      %s4546 = scalar_lea.vmem %s3, 192
      %v4547 = vld [vmem:[%s4546] sm:$0xf]
      %v4548 = vld [vmem:[%s4546 + $0x4] sm:$0xf]
      %v4549 = vld [vmem:[%s4546 + $0x8] sm:$0xf]
      %v4550 = vld [vmem:[%s4546 + $0xc] sm:$0xf]
      %v4551 = vld [vmem:[%s4546 + $0x10] sm:$0xf]
      %v4552 = vld [vmem:[%s4546 + $0x14] sm:$0xf]
      %v4553 = vld [vmem:[%s4546 + $0x18] sm:$0xf]
      %v4554 = vld [vmem:[%s4546 + $0x1c] sm:$0xf]
      %v4555 = vld [vmem:[%s4546 + $0x20] sm:$0xf]
      %v4556 = vld [vmem:[%s4546 + $0x24] sm:$0xf]
      %v4557 = vld [vmem:[%s4546 + $0x28] sm:$0xf]
      %v4558 = vld [vmem:[%s4546 + $0x2c] sm:$0xf]
      %v4559 = vld [vmem:[%s4546 + $0x30] sm:$0xf]
      %v4560 = vld [vmem:[%s4546 + $0x34] sm:$0xf]
      %v4561 = vld [vmem:[%s4546 + $0x38] sm:$0xf]
      %v4562 = vld [vmem:[%s4546 + $0x3c] sm:$0xf]
      %v4563 = vld [vmem:[%s4546 + $0x40] sm:$0xf]
      %v4564 = vld [vmem:[%s4546 + $0x44] sm:$0xf]
      %v4565 = vld [vmem:[%s4546 + $0x48] sm:$0xf]
      %v4566 = vld [vmem:[%s4546 + $0x4c] sm:$0xf]
      %v4567 = vld [vmem:[%s4546 + $0x50] sm:$0xf]
      %v4568 = vld [vmem:[%s4546 + $0x54] sm:$0xf]
      %v4569 = vld [vmem:[%s4546 + $0x58] sm:$0xf]
      %v4570 = vld [vmem:[%s4546 + $0x5c] sm:$0xf]
      %v4571 = vld [vmem:[%s4546 + $0x60] sm:$0xf]
      %v4572 = vld [vmem:[%s4546 + $0x64] sm:$0xf]
      %v4573 = vld [vmem:[%s4546 + $0x68] sm:$0xf]
      %v4574 = vld [vmem:[%s4546 + $0x6c] sm:$0xf]
      %v4575 = vld [vmem:[%s4546 + $0x70] sm:$0xf]
      %v4576 = vld [vmem:[%s4546 + $0x74] sm:$0xf]
      %v4577 = vld [vmem:[%s4546 + $0x78] sm:$0xf]
      %v4578 = vld [vmem:[%s4546 + $0x7c] sm:$0xf]
      %v4579 = vld [vmem:[%s4546 + $0x80] sm:$0xf]
      %v4580 = vld [vmem:[%s4546 + $0x84] sm:$0xf]
      %v4581 = vld [vmem:[%s4546 + $0x88] sm:$0xf]
      %v4582 = vld [vmem:[%s4546 + $0x8c] sm:$0xf]
      %v4583 = vld [vmem:[%s4546 + $0x90] sm:$0xf]
      %v4584 = vld [vmem:[%s4546 + $0x94] sm:$0xf]
      %v4585 = vld [vmem:[%s4546 + $0x98] sm:$0xf]
      %v4586 = vld [vmem:[%s4546 + $0x9c] sm:$0xf]
      %v4587 = vld [vmem:[%s4546 + $0xa0] sm:$0xf]
      %v4588 = vld [vmem:[%s4546 + $0xa4] sm:$0xf]
      %v4589 = vld [vmem:[%s4546 + $0xa8] sm:$0xf]
      %v4590 = vld [vmem:[%s4546 + $0xac] sm:$0xf]
      %v4591 = vld [vmem:[%s4546 + $0xb0] sm:$0xf]
      %v4592 = vld [vmem:[%s4546 + $0xb4] sm:$0xf]
      %v4593 = vld [vmem:[%s4546 + $0xb8] sm:$0xf]
      %v4594 = vld [vmem:[%s4546 + $0xbc] sm:$0xf]
      %v4643 = vunpack.c.l.b16 %v4547
      %v4644 = vunpack.c.l.b16 %v4548
      %v4645 = vunpack.c.l.b16 %v4549
      %v4646 = vunpack.c.l.b16 %v4550
      %v4647 = vunpack.c.l.b16 %v4551
      %v4648 = vunpack.c.l.b16 %v4552
      %v4649 = vunpack.c.l.b16 %v4553
      %v4650 = vunpack.c.l.b16 %v4554
      %v4651 = vunpack.c.l.b16 %v4555
      %v4652 = vunpack.c.l.b16 %v4556
      %v4653 = vunpack.c.l.b16 %v4557
      %v4654 = vunpack.c.l.b16 %v4558
      %v4655 = vunpack.c.l.b16 %v4559
      %v4656 = vunpack.c.l.b16 %v4560
      %v4657 = vunpack.c.l.b16 %v4561
      %v4658 = vunpack.c.l.b16 %v4562
      %v4659 = vunpack.c.l.b16 %v4563
      %v4660 = vunpack.c.l.b16 %v4564
      %v4661 = vunpack.c.l.b16 %v4565
      %v4662 = vunpack.c.l.b16 %v4566
      %v4663 = vunpack.c.l.b16 %v4567
      %v4664 = vunpack.c.l.b16 %v4568
      %v4665 = vunpack.c.l.b16 %v4569
      %v4666 = vunpack.c.l.b16 %v4570
      %v4667 = vunpack.c.l.b16 %v4571
      %v4668 = vunpack.c.l.b16 %v4572
      %v4669 = vunpack.c.l.b16 %v4573
      %v4670 = vunpack.c.l.b16 %v4574
      %v4671 = vunpack.c.l.b16 %v4575
      %v4672 = vunpack.c.l.b16 %v4576
      %v4673 = vunpack.c.l.b16 %v4577
      %v4674 = vunpack.c.l.b16 %v4578
      %v4675 = vunpack.c.l.b16 %v4579
      %v4676 = vunpack.c.l.b16 %v4580
      %v4677 = vunpack.c.l.b16 %v4581
      %v4678 = vunpack.c.l.b16 %v4582
      %v4679 = vunpack.c.l.b16 %v4583
      %v4680 = vunpack.c.l.b16 %v4584
      %v4681 = vunpack.c.l.b16 %v4585
      %v4682 = vunpack.c.l.b16 %v4586
      %v4683 = vunpack.c.l.b16 %v4587
      %v4684 = vunpack.c.l.b16 %v4588
      %v4685 = vunpack.c.l.b16 %v4589
      %v4686 = vunpack.c.l.b16 %v4590
      %v4687 = vunpack.c.l.b16 %v4591
      %v4688 = vunpack.c.l.b16 %v4592
      %v4689 = vunpack.c.l.b16 %v4593
      %v4690 = vunpack.c.l.b16 %v4594
      %v4691 = vpack.c.b16 %v4644, %v4643
      %v4692 = vpack.c.b16 %v4646, %v4645
      %v4693 = vpack.c.b16 %v4648, %v4647
      %v4694 = vpack.c.b16 %v4650, %v4649
      %v4695 = vpack.c.b16 %v4652, %v4651
      %v4696 = vpack.c.b16 %v4654, %v4653
      %v4697 = vpack.c.b16 %v4656, %v4655
      %v4698 = vpack.c.b16 %v4658, %v4657
      %v4699 = vpack.c.b16 %v4660, %v4659
      %v4700 = vpack.c.b16 %v4662, %v4661
      %v4701 = vpack.c.b16 %v4664, %v4663
      %v4702 = vpack.c.b16 %v4666, %v4665
      %v4703 = vpack.c.b16 %v4668, %v4667
      %v4704 = vpack.c.b16 %v4670, %v4669
      %v4705 = vpack.c.b16 %v4672, %v4671
      %v4706 = vpack.c.b16 %v4674, %v4673
      %v4707 = vpack.c.b16 %v4676, %v4675
      %v4708 = vpack.c.b16 %v4678, %v4677
      %v4709 = vpack.c.b16 %v4680, %v4679
      %v4710 = vpack.c.b16 %v4682, %v4681
      %v4711 = vpack.c.b16 %v4684, %v4683
      %v4712 = vpack.c.b16 %v4686, %v4685
      %v4713 = vpack.c.b16 %v4688, %v4687
      %v4714 = vpack.c.b16 %v4690, %v4689
      %4739 = vmatprep.subr.bf16.mxu0 0
      %4740 = vmatpush1.bf16.msra.mxu0 %v4691
      %4741 = vmatprep.subr.bf16.mxu0 0
      %4742 = vmatpush1.bf16.msra.mxu0 %v4692
      %4743 = vmatprep.subr.bf16.mxu0 0
      %4744 = vmatpush1.bf16.msra.mxu0 %v4693
      %4745 = vmatprep.subr.bf16.mxu0 0
      %4746 = vmatpush1.bf16.msra.mxu0 %v4694
      %4747 = vmatprep.subr.bf16.mxu0 0
      %4748 = vmatpush1.bf16.msra.mxu0 %v4695
      %4749 = vmatprep.subr.bf16.mxu0 0
      %4750 = vmatpush1.bf16.msra.mxu0 %v4696
      %4751 = vmatprep.subr.bf16.mxu0 0
      %4752 = vmatpush1.bf16.msra.mxu0 %v4697
      %4753 = vmatprep.subr.bf16.mxu0 0
      %4754 = vmatpush1.bf16.msra.mxu0 %v4698
      %4755 = vmatprep.subr.bf16.mxu0 0
      %4756 = vmatpush1.bf16.msra.mxu0 %v4699
      %4757 = vmatprep.subr.bf16.mxu0 0
      %4758 = vmatpush1.bf16.msra.mxu0 %v4700
      %4759 = vmatprep.subr.bf16.mxu0 0
      %4760 = vmatpush1.bf16.msra.mxu0 %v4701
      %4761 = vmatprep.subr.bf16.mxu0 0
      %4762 = vmatpush1.bf16.msra.mxu0 %v4702
      %4763 = vmatprep.subr.bf16.mxu0 0
      %4764 = vmatpush1.bf16.msra.mxu0 %v4703
      %4765 = vmatprep.subr.bf16.mxu0 0
      %4766 = vmatpush1.bf16.msra.mxu0 %v4704
      %4767 = vmatprep.subr.bf16.mxu0 0
      %4768 = vmatpush1.bf16.msra.mxu0 %v4705
      %4769 = vmatprep.subr.bf16.mxu0 0
      %4770 = vmatpush1.bf16.msra.mxu0 %v4706
      %4771 = vmatprep.mubr.bf16.mxu0 %v4499
      %4772 = vmatmul.mubr.bf16.gmra.mrb[0].mxu0 %v4498
      %v4773 = vpop.f32.mrb[0].mxu0
      %v4774 = vadd.f32 0.0, %v4773
      %v4775 = vpop.f32.mrb[0].mxu0
      %v4776 = vpop.f32.mrb[0].mxu0
      %v4777 = vadd.f32 0.0, %v4776
      %v4778 = vpop.f32.mrb[0].mxu0
      %4779 = vmatprep.mubr.bf16.mxu0 %v4502
      %4780 = vmatmul.mubr.bf16.gmra.mrb[0].mxu0 %v4501
      %v4781 = vpop.f32.mrb[0].mxu0
      %v4782 = vadd.f32 0.0, %v4781
      %v4783 = vpop.f32.mrb[0].mxu0
      %v4784 = vpop.f32.mrb[0].mxu0
      %v4785 = vadd.f32 0.0, %v4784
      %v4786 = vpop.f32.mrb[0].mxu0
      %4787 = vmatprep.mubr.bf16.mxu0 %v4505
      %4788 = vmatmul.mubr.bf16.gmra.mrb[0].mxu0 %v4504
      %v4789 = vpop.f32.mrb[0].mxu0
      %v4790 = vadd.f32 0.0, %v4789
      %v4791 = vpop.f32.mrb[0].mxu0
      %v4792 = vpop.f32.mrb[0].mxu0
      %v4793 = vadd.f32 0.0, %v4792
      %v4794 = vpop.f32.mrb[0].mxu0
      %4795 = vmatprep.mubr.bf16.mxu0 %v4508
      %4796 = vmatmul.mubr.bf16.gmra.mrb[0].mxu0 %v4507
      %v4797 = vpop.f32.mrb[0].mxu0
      %v4798 = vadd.f32 0.0, %v4797
      %v4799 = vpop.f32.mrb[0].mxu0
      %v4800 = vpop.f32.mrb[0].mxu0
      %v4801 = vadd.f32 0.0, %v4800
      %v4802 = vpop.f32.mrb[0].mxu0
      %4803 = vmatprep.mubr.bf16.mxu0 %v4511
      %4804 = vmatmul.mubr.bf16.gmra.mrb[0].mxu0 %v4510
      %v4805 = vpop.f32.mrb[0].mxu0
      %v4806 = vadd.f32 0.0, %v4805
      %v4807 = vpop.f32.mrb[0].mxu0
      %v4808 = vpop.f32.mrb[0].mxu0
      %v4809 = vadd.f32 0.0, %v4808
      %v4810 = vpop.f32.mrb[0].mxu0
      %4811 = vmatprep.mubr.bf16.mxu0 %v4514
      %4812 = vmatmul.mubr.bf16.gmra.mrb[0].mxu0 %v4513
      %v4813 = vpop.f32.mrb[0].mxu0
      %v4814 = vadd.f32 0.0, %v4813
      %v4815 = vpop.f32.mrb[0].mxu0
      %v4816 = vpop.f32.mrb[0].mxu0
      %v4817 = vadd.f32 0.0, %v4816
      %v4818 = vpop.f32.mrb[0].mxu0
      %4819 = vmatprep.mubr.bf16.mxu0 %v4517
      %4820 = vmatmul.mubr.bf16.gmra.mrb[0].mxu0 %v4516
      %v4821 = vpop.f32.mrb[0].mxu0
      %v4822 = vadd.f32 0.0, %v4821
      %v4823 = vpop.f32.mrb[0].mxu0
      %v4824 = vpop.f32.mrb[0].mxu0
      %v4825 = vadd.f32 0.0, %v4824
      %v4826 = vpop.f32.mrb[0].mxu0
      %4827 = vmatprep.mubr.bf16.mxu0 %v4520
      %4828 = vmatmul.mubr.bf16.gmra.mrb[0].mxu0 %v4519
      %v4829 = vpop.f32.mrb[0].mxu0
      %v4830 = vadd.f32 0.0, %v4829
      %v4831 = vpop.f32.mrb[0].mxu0
      %v4832 = vpop.f32.mrb[0].mxu0
      %v4833 = vadd.f32 0.0, %v4832
      %v4834 = vpop.f32.mrb[0].mxu0
      %4835 = vmatprep.mubr.bf16.mxu0 %v4523
      %4836 = vmatmul.mubr.bf16.gmra.mrb[0].mxu0 %v4522
      %v4837 = vpop.f32.mrb[0].mxu0
      %v4838 = vadd.f32 0.0, %v4837
      %v4839 = vpop.f32.mrb[0].mxu0
      %v4840 = vpop.f32.mrb[0].mxu0
      %v4841 = vadd.f32 0.0, %v4840
      %v4842 = vpop.f32.mrb[0].mxu0
      %4843 = vmatprep.mubr.bf16.mxu0 %v4526
      %4844 = vmatmul.mubr.bf16.gmra.mrb[0].mxu0 %v4525
      %v4845 = vpop.f32.mrb[0].mxu0
      %v4846 = vadd.f32 0.0, %v4845
      %v4847 = vpop.f32.mrb[0].mxu0
      %v4848 = vpop.f32.mrb[0].mxu0
      %v4849 = vadd.f32 0.0, %v4848
      %v4850 = vpop.f32.mrb[0].mxu0
      %4851 = vmatprep.mubr.bf16.mxu0 %v4529
      %4852 = vmatmul.mubr.bf16.gmra.mrb[0].mxu0 %v4528
      %v4853 = vpop.f32.mrb[0].mxu0
      %v4854 = vadd.f32 0.0, %v4853
      %v4855 = vpop.f32.mrb[0].mxu0
      %v4856 = vpop.f32.mrb[0].mxu0
      %v4857 = vadd.f32 0.0, %v4856
      %v4858 = vpop.f32.mrb[0].mxu0
      %4859 = vmatprep.mubr.bf16.mxu0 %v4532
      %4860 = vmatmul.mubr.bf16.gmra.mrb[0].mxu0 %v4531
      %v4861 = vpop.f32.mrb[0].mxu0
      %v4862 = vadd.f32 0.0, %v4861
      %v4863 = vpop.f32.mrb[0].mxu0
      %v4864 = vpop.f32.mrb[0].mxu0
      %v4865 = vadd.f32 0.0, %v4864
      %v4866 = vpop.f32.mrb[0].mxu0
      %4867 = vmatprep.mubr.bf16.mxu0 %v4535
      %4868 = vmatmul.mubr.bf16.gmra.mrb[0].mxu0 %v4534
      %v4869 = vpop.f32.mrb[0].mxu0
      %v4870 = vadd.f32 0.0, %v4869
      %v4871 = vpop.f32.mrb[0].mxu0
      %v4872 = vpop.f32.mrb[0].mxu0
      %v4873 = vadd.f32 0.0, %v4872
      %v4874 = vpop.f32.mrb[0].mxu0
      %4875 = vmatprep.mubr.bf16.mxu0 %v4538
      %4876 = vmatmul.mubr.bf16.gmra.mrb[0].mxu0 %v4537
      %v4877 = vpop.f32.mrb[0].mxu0
      %v4878 = vadd.f32 0.0, %v4877
      %v4879 = vpop.f32.mrb[0].mxu0
      %v4880 = vpop.f32.mrb[0].mxu0
      %v4881 = vadd.f32 0.0, %v4880
      %v4882 = vpop.f32.mrb[0].mxu0
      %4883 = vmatprep.mubr.bf16.mxu0 %v4541
      %4884 = vmatmul.mubr.bf16.gmra.mrb[0].mxu0 %v4540
      %v4885 = vpop.f32.mrb[0].mxu0
      %v4886 = vadd.f32 0.0, %v4885
      %v4887 = vpop.f32.mrb[0].mxu0
      %v4888 = vpop.f32.mrb[0].mxu0
      %v4889 = vadd.f32 0.0, %v4888
      %v4890 = vpop.f32.mrb[0].mxu0
      %4891 = vmatprep.mubr.bf16.mxu0 %v4544
      %4892 = vmatmul.mubr.bf16.gmra.mrb[0].mxu0 %v4543
      %v4893 = vpop.f32.mrb[0].mxu0
      %v4894 = vadd.f32 0.0, %v4893
      %v4895 = vpop.f32.mrb[0].mxu0
      %v4896 = vpop.f32.mrb[0].mxu0
      %v4897 = vadd.f32 0.0, %v4896
      %v4898 = vpop.f32.mrb[0].mxu0
      %4899 = vdwg.mxu0
      %4900 = vmatprep.subr.bf16.mxu0 0
      %4901 = vmatpush1.bf16.msra.mxu0 %v4707
      %4902 = vmatprep.subr.bf16.mxu0 0
      %4903 = vmatpush1.bf16.msra.mxu0 %v4708
      %4904 = vmatprep.subr.bf16.mxu0 0
      %4905 = vmatpush1.bf16.msra.mxu0 %v4709
      %4906 = vmatprep.subr.bf16.mxu0 0
      %4907 = vmatpush1.bf16.msra.mxu0 %v4710
      %4908 = vmatprep.subr.bf16.mxu0 0
      %4909 = vmatpush1.bf16.msra.mxu0 %v4711
      %4910 = vmatprep.subr.bf16.mxu0 0
      %4911 = vmatpush1.bf16.msra.mxu0 %v4712
      %4912 = vmatprep.subr.bf16.mxu0 0
      %4913 = vmatpush1.bf16.msra.mxu0 %v4713
      %4914 = vmatprep.subr.bf16.mxu0 0
      %4915 = vmatpush1.bf16.msra.mxu0 %v4714
      %4916 = vmatprep.subr.bf16.mxu0 0
      %4917 = vmatpush1.bf16.msra.mxu0 0
      %4918 = vmatprep.subr.bf16.mxu0 0
      %4919 = vmatpush1.bf16.msra.mxu0 0
      %4920 = vmatprep.subr.bf16.mxu0 0
      %4921 = vmatpush1.bf16.msra.mxu0 0
      %4922 = vmatprep.subr.bf16.mxu0 0
      %4923 = vmatpush1.bf16.msra.mxu0 0
      %4924 = vmatprep.subr.bf16.mxu0 0
      %4925 = vmatpush1.bf16.msra.mxu0 0
      %4926 = vmatprep.subr.bf16.mxu0 0
      %4927 = vmatpush1.bf16.msra.mxu0 0
      %4928 = vmatprep.subr.bf16.mxu0 0
      %4929 = vmatpush1.bf16.msra.mxu0 0
      %4930 = vmatprep.subr.bf16.mxu0 0
      %4931 = vmatpush1.bf16.msra.mxu0 0
      %4932 = vmatprep.mubr.bf16.mxu0 0
      %4933 = vmatmul.mubr.bf16.gmra.mrb[0].mxu0 %v4500
      %v4934 = vpop.f32.mrb[0].mxu0
      %v4935 = vadd.f32 %v4774, %v4934
      %v4936 = vpop.f32.mrb[0].mxu0
      %v4937 = vpop.f32.mrb[0].mxu0
      %v4938 = vadd.f32 %v4777, %v4937
      %v4939 = vpop.f32.mrb[0].mxu0
      %4940 = vmatprep.mubr.bf16.mxu0 0
      %4941 = vmatmul.mubr.bf16.gmra.mrb[0].mxu0 %v4503
      %v4942 = vpop.f32.mrb[0].mxu0
      %v4943 = vadd.f32 %v4782, %v4942
      %v4944 = vpop.f32.mrb[0].mxu0
      %v4945 = vpop.f32.mrb[0].mxu0
      %v4946 = vadd.f32 %v4785, %v4945
      %v4947 = vpop.f32.mrb[0].mxu0
      %4948 = vmatprep.mubr.bf16.mxu0 0
      %4949 = vmatmul.mubr.bf16.gmra.mrb[0].mxu0 %v4506
      %v4950 = vpop.f32.mrb[0].mxu0
      %v4951 = vadd.f32 %v4790, %v4950
      %v4952 = vpop.f32.mrb[0].mxu0
      %v4953 = vpop.f32.mrb[0].mxu0
      %v4954 = vadd.f32 %v4793, %v4953
      %v4955 = vpop.f32.mrb[0].mxu0
      %4956 = vmatprep.mubr.bf16.mxu0 0
      %4957 = vmatmul.mubr.bf16.gmra.mrb[0].mxu0 %v4509
      %v4958 = vpop.f32.mrb[0].mxu0
      %v4959 = vadd.f32 %v4798, %v4958
      %v4960 = vpop.f32.mrb[0].mxu0
      %v4961 = vpop.f32.mrb[0].mxu0
      %v4962 = vadd.f32 %v4801, %v4961
      %v4963 = vpop.f32.mrb[0].mxu0
      %4964 = vmatprep.mubr.bf16.mxu0 0
      %4965 = vmatmul.mubr.bf16.gmra.mrb[0].mxu0 %v4512
      %v4966 = vpop.f32.mrb[0].mxu0
      %v4967 = vadd.f32 %v4806, %v4966
      %v4968 = vpop.f32.mrb[0].mxu0
      %v4969 = vpop.f32.mrb[0].mxu0
      %v4970 = vadd.f32 %v4809, %v4969
      %v4971 = vpop.f32.mrb[0].mxu0
      %4972 = vmatprep.mubr.bf16.mxu0 0
      %4973 = vmatmul.mubr.bf16.gmra.mrb[0].mxu0 %v4515
      %v4974 = vpop.f32.mrb[0].mxu0
      %v4975 = vadd.f32 %v4814, %v4974
      %v4976 = vpop.f32.mrb[0].mxu0
      %v4977 = vpop.f32.mrb[0].mxu0
      %v4978 = vadd.f32 %v4817, %v4977
      %v4979 = vpop.f32.mrb[0].mxu0
      %4980 = vmatprep.mubr.bf16.mxu0 0
      %4981 = vmatmul.mubr.bf16.gmra.mrb[0].mxu0 %v4518
      %v4982 = vpop.f32.mrb[0].mxu0
      %v4983 = vadd.f32 %v4822, %v4982
      %v4984 = vpop.f32.mrb[0].mxu0
      %v4985 = vpop.f32.mrb[0].mxu0
      %v4986 = vadd.f32 %v4825, %v4985
      %v4987 = vpop.f32.mrb[0].mxu0
      %4988 = vmatprep.mubr.bf16.mxu0 0
      %4989 = vmatmul.mubr.bf16.gmra.mrb[0].mxu0 %v4521
      %v4990 = vpop.f32.mrb[0].mxu0
      %v4991 = vadd.f32 %v4830, %v4990
      %v4992 = vpop.f32.mrb[0].mxu0
      %v4993 = vpop.f32.mrb[0].mxu0
      %v4994 = vadd.f32 %v4833, %v4993
      %v4995 = vpop.f32.mrb[0].mxu0
      %4996 = vmatprep.mubr.bf16.mxu0 0
      %4997 = vmatmul.mubr.bf16.gmra.mrb[0].mxu0 %v4524
      %v4998 = vpop.f32.mrb[0].mxu0
      %v4999 = vadd.f32 %v4838, %v4998
      %v5000 = vpop.f32.mrb[0].mxu0
      %v5001 = vpop.f32.mrb[0].mxu0
      %v5002 = vadd.f32 %v4841, %v5001
      %v5003 = vpop.f32.mrb[0].mxu0
      %5004 = vmatprep.mubr.bf16.mxu0 0
      %5005 = vmatmul.mubr.bf16.gmra.mrb[0].mxu0 %v4527
      %v5006 = vpop.f32.mrb[0].mxu0
      %v5007 = vadd.f32 %v4846, %v5006
      %v5008 = vpop.f32.mrb[0].mxu0
      %v5009 = vpop.f32.mrb[0].mxu0
      %v5010 = vadd.f32 %v4849, %v5009
      %v5011 = vpop.f32.mrb[0].mxu0
      %5012 = vmatprep.mubr.bf16.mxu0 0
      %5013 = vmatmul.mubr.bf16.gmra.mrb[0].mxu0 %v4530
      %v5014 = vpop.f32.mrb[0].mxu0
      %v5015 = vadd.f32 %v4854, %v5014
      %v5016 = vpop.f32.mrb[0].mxu0
      %v5017 = vpop.f32.mrb[0].mxu0
      %v5018 = vadd.f32 %v4857, %v5017
      %v5019 = vpop.f32.mrb[0].mxu0
      %5020 = vmatprep.mubr.bf16.mxu0 0
      %5021 = vmatmul.mubr.bf16.gmra.mrb[0].mxu0 %v4533
      %v5022 = vpop.f32.mrb[0].mxu0
      %v5023 = vadd.f32 %v4862, %v5022
      %v5024 = vpop.f32.mrb[0].mxu0
      %v5025 = vpop.f32.mrb[0].mxu0
      %v5026 = vadd.f32 %v4865, %v5025
      %v5027 = vpop.f32.mrb[0].mxu0
      %5028 = vmatprep.mubr.bf16.mxu0 0
      %5029 = vmatmul.mubr.bf16.gmra.mrb[0].mxu0 %v4536
      %v5030 = vpop.f32.mrb[0].mxu0
      %v5031 = vadd.f32 %v4870, %v5030
      %v5032 = vpop.f32.mrb[0].mxu0
      %v5033 = vpop.f32.mrb[0].mxu0
      %v5034 = vadd.f32 %v4873, %v5033
      %v5035 = vpop.f32.mrb[0].mxu0
      %5036 = vmatprep.mubr.bf16.mxu0 0
      %5037 = vmatmul.mubr.bf16.gmra.mrb[0].mxu0 %v4539
      %v5038 = vpop.f32.mrb[0].mxu0
      %v5039 = vadd.f32 %v4878, %v5038
      %v5040 = vpop.f32.mrb[0].mxu0
      %v5041 = vpop.f32.mrb[0].mxu0
      %v5042 = vadd.f32 %v4881, %v5041
      %v5043 = vpop.f32.mrb[0].mxu0
      %5044 = vmatprep.mubr.bf16.mxu0 0
      %5045 = vmatmul.mubr.bf16.gmra.mrb[0].mxu0 %v4542
      %v5046 = vpop.f32.mrb[0].mxu0
      %v5047 = vadd.f32 %v4886, %v5046
      %v5048 = vpop.f32.mrb[0].mxu0
      %v5049 = vpop.f32.mrb[0].mxu0
      %v5050 = vadd.f32 %v4889, %v5049
      %v5051 = vpop.f32.mrb[0].mxu0
      %5052 = vmatprep.mubr.bf16.mxu0 0
      %5053 = vmatmul.mubr.bf16.gmra.mrb[0].mxu0 %v4545
      %v5054 = vpop.f32.mrb[0].mxu0
      %v5055 = vadd.f32 %v4894, %v5054
      %v5056 = vpop.f32.mrb[0].mxu0
      %v5057 = vpop.f32.mrb[0].mxu0
      %v5058 = vadd.f32 %v4897, %v5057
      %v5059 = vpop.f32.mrb[0].mxu0
      %5060 = vdwg.mxu0
      %v5109 = vunpack.c.l.b16 %v4290
      %v5110 = vunpack.c.l.b16 %v4291
      %v5111 = vunpack.c.l.b16 %v4292
      %v5112 = vunpack.c.l.b16 %v4293
      %v5113 = vunpack.c.l.b16 %v4294
      %v5114 = vunpack.c.l.b16 %v4295
      %v5115 = vunpack.c.l.b16 %v4296
      %v5116 = vunpack.c.l.b16 %v4297
      %v5117 = vunpack.c.l.b16 %v4298
      %v5118 = vunpack.c.l.b16 %v4299
      %v5119 = vunpack.c.l.b16 %v4300
      %v5120 = vunpack.c.l.b16 %v4301
      %v5121 = vunpack.c.l.b16 %v4302
      %v5122 = vunpack.c.l.b16 %v4303
      %v5123 = vunpack.c.l.b16 %v4304
      %v5124 = vunpack.c.l.b16 %v4305
      %v5125 = vunpack.c.l.b16 %v4306
      %v5126 = vunpack.c.l.b16 %v4307
      %v5127 = vunpack.c.l.b16 %v4308
      %v5128 = vunpack.c.l.b16 %v4309
      %v5129 = vunpack.c.l.b16 %v4310
      %v5130 = vunpack.c.l.b16 %v4311
      %v5131 = vunpack.c.l.b16 %v4312
      %v5132 = vunpack.c.l.b16 %v4313
      %v5133 = vunpack.c.l.b16 %v4314
      %v5134 = vunpack.c.l.b16 %v4315
      %v5135 = vunpack.c.l.b16 %v4316
      %v5136 = vunpack.c.l.b16 %v4317
      %v5137 = vunpack.c.l.b16 %v4318
      %v5138 = vunpack.c.l.b16 %v4319
      %v5139 = vunpack.c.l.b16 %v4320
      %v5140 = vunpack.c.l.b16 %v4321
      %v5141 = vunpack.c.l.b16 %v4322
      %v5142 = vunpack.c.l.b16 %v4323
      %v5143 = vunpack.c.l.b16 %v4324
      %v5144 = vunpack.c.l.b16 %v4325
      %v5145 = vunpack.c.l.b16 %v4326
      %v5146 = vunpack.c.l.b16 %v4327
      %v5147 = vunpack.c.l.b16 %v4328
      %v5148 = vunpack.c.l.b16 %v4329
      %v5149 = vunpack.c.l.b16 %v4330
      %v5150 = vunpack.c.l.b16 %v4331
      %v5151 = vunpack.c.l.b16 %v4332
      %v5152 = vunpack.c.l.b16 %v4333
      %v5153 = vunpack.c.l.b16 %v4334
      %v5154 = vunpack.c.l.b16 %v4335
      %v5155 = vunpack.c.l.b16 %v4336
      %v5156 = vunpack.c.l.b16 %v4337
      %v5157 = vpack.c.b16 %v5110, %v5109
      %v5158 = vpack.c.b16 %v5112, %v5111
      %v5159 = vpack.c.b16 %v5114, %v5113
      %v5160 = vpack.c.b16 %v5116, %v5115
      %v5161 = vpack.c.b16 %v5118, %v5117
      %v5162 = vpack.c.b16 %v5120, %v5119
      %v5163 = vpack.c.b16 %v5122, %v5121
      %v5164 = vpack.c.b16 %v5124, %v5123
      %v5165 = vpack.c.b16 %v5126, %v5125
      %v5166 = vpack.c.b16 %v5128, %v5127
      %v5167 = vpack.c.b16 %v5130, %v5129
      %v5168 = vpack.c.b16 %v5132, %v5131
      %v5169 = vpack.c.b16 %v5134, %v5133
      %v5170 = vpack.c.b16 %v5136, %v5135
      %v5171 = vpack.c.b16 %v5138, %v5137
      %v5172 = vpack.c.b16 %v5140, %v5139
      %v5173 = vpack.c.b16 %v5142, %v5141
      %v5174 = vpack.c.b16 %v5144, %v5143
      %v5175 = vpack.c.b16 %v5146, %v5145
      %v5176 = vpack.c.b16 %v5148, %v5147
      %v5177 = vpack.c.b16 %v5150, %v5149
      %v5178 = vpack.c.b16 %v5152, %v5151
      %v5179 = vpack.c.b16 %v5154, %v5153
      %v5180 = vpack.c.b16 %v5156, %v5155
      %5205 = vmatprep.subr.bf16.mxu0 0
      %5206 = vmatpush1.bf16.msra.mxu0 %v5157
      %5207 = vmatprep.subr.bf16.mxu0 0
      %5208 = vmatpush1.bf16.msra.mxu0 %v5158
      %5209 = vmatprep.subr.bf16.mxu0 0
      %5210 = vmatpush1.bf16.msra.mxu0 %v5159
      %5211 = vmatprep.subr.bf16.mxu0 0
      %5212 = vmatpush1.bf16.msra.mxu0 %v5160
      %5213 = vmatprep.subr.bf16.mxu0 0
      %5214 = vmatpush1.bf16.msra.mxu0 %v5161
      %5215 = vmatprep.subr.bf16.mxu0 0
      %5216 = vmatpush1.bf16.msra.mxu0 %v5162
      %5217 = vmatprep.subr.bf16.mxu0 0
      %5218 = vmatpush1.bf16.msra.mxu0 %v5163
      %5219 = vmatprep.subr.bf16.mxu0 0
      %5220 = vmatpush1.bf16.msra.mxu0 %v5164
      %5221 = vmatprep.subr.bf16.mxu0 0
      %5222 = vmatpush1.bf16.msra.mxu0 %v5165
      %5223 = vmatprep.subr.bf16.mxu0 0
      %5224 = vmatpush1.bf16.msra.mxu0 %v5166
      %5225 = vmatprep.subr.bf16.mxu0 0
      %5226 = vmatpush1.bf16.msra.mxu0 %v5167
      %5227 = vmatprep.subr.bf16.mxu0 0
      %5228 = vmatpush1.bf16.msra.mxu0 %v5168
      %5229 = vmatprep.subr.bf16.mxu0 0
      %5230 = vmatpush1.bf16.msra.mxu0 %v5169
      %5231 = vmatprep.subr.bf16.mxu0 0
      %5232 = vmatpush1.bf16.msra.mxu0 %v5170
      %5233 = vmatprep.subr.bf16.mxu0 0
      %5234 = vmatpush1.bf16.msra.mxu0 %v5171
      %5235 = vmatprep.subr.bf16.mxu0 0
      %5236 = vmatpush1.bf16.msra.mxu0 %v5172
      %5237 = vmatprep.mubr.bf16.mxu0 %v4243
      %5238 = vmatmul.mubr.bf16.gmra.mrb[0].mxu0 %v4242
      %v5239 = vpop.f32.mrb[0].mxu0
      %v5240 = vadd.f32 %v4935, %v5239
      %v5241 = vpop.f32.mrb[0].mxu0
      %v5242 = vpop.f32.mrb[0].mxu0
      %v5243 = vadd.f32 %v4938, %v5242
      %v5244 = vpop.f32.mrb[0].mxu0
      %5245 = vmatprep.mubr.bf16.mxu0 %v4246
      %5246 = vmatmul.mubr.bf16.gmra.mrb[0].mxu0 %v4245
      %v5247 = vpop.f32.mrb[0].mxu0
      %v5248 = vadd.f32 %v4943, %v5247
      %v5249 = vpop.f32.mrb[0].mxu0
      %v5250 = vpop.f32.mrb[0].mxu0
      %v5251 = vadd.f32 %v4946, %v5250
      %v5252 = vpop.f32.mrb[0].mxu0
      %5253 = vmatprep.mubr.bf16.mxu0 %v4249
      %5254 = vmatmul.mubr.bf16.gmra.mrb[0].mxu0 %v4248
      %v5255 = vpop.f32.mrb[0].mxu0
      %v5256 = vadd.f32 %v4951, %v5255
      %v5257 = vpop.f32.mrb[0].mxu0
      %v5258 = vpop.f32.mrb[0].mxu0
      %v5259 = vadd.f32 %v4954, %v5258
      %v5260 = vpop.f32.mrb[0].mxu0
      %5261 = vmatprep.mubr.bf16.mxu0 %v4252
      %5262 = vmatmul.mubr.bf16.gmra.mrb[0].mxu0 %v4251
      %v5263 = vpop.f32.mrb[0].mxu0
      %v5264 = vadd.f32 %v4959, %v5263
      %v5265 = vpop.f32.mrb[0].mxu0
      %v5266 = vpop.f32.mrb[0].mxu0
      %v5267 = vadd.f32 %v4962, %v5266
      %v5268 = vpop.f32.mrb[0].mxu0
      %5269 = vmatprep.mubr.bf16.mxu0 %v4255
      %5270 = vmatmul.mubr.bf16.gmra.mrb[0].mxu0 %v4254
      %v5271 = vpop.f32.mrb[0].mxu0
      %v5272 = vadd.f32 %v4967, %v5271
      %v5273 = vpop.f32.mrb[0].mxu0
      %v5274 = vpop.f32.mrb[0].mxu0
      %v5275 = vadd.f32 %v4970, %v5274
      %v5276 = vpop.f32.mrb[0].mxu0
      %5277 = vmatprep.mubr.bf16.mxu0 %v4258
      %5278 = vmatmul.mubr.bf16.gmra.mrb[0].mxu0 %v4257
      %v5279 = vpop.f32.mrb[0].mxu0
      %v5280 = vadd.f32 %v4975, %v5279
      %v5281 = vpop.f32.mrb[0].mxu0
      %v5282 = vpop.f32.mrb[0].mxu0
      %v5283 = vadd.f32 %v4978, %v5282
      %v5284 = vpop.f32.mrb[0].mxu0
      %5285 = vmatprep.mubr.bf16.mxu0 %v4261
      %5286 = vmatmul.mubr.bf16.gmra.mrb[0].mxu0 %v4260
      %v5287 = vpop.f32.mrb[0].mxu0
      %v5288 = vadd.f32 %v4983, %v5287
      %v5289 = vpop.f32.mrb[0].mxu0
      %v5290 = vpop.f32.mrb[0].mxu0
      %v5291 = vadd.f32 %v4986, %v5290
      %v5292 = vpop.f32.mrb[0].mxu0
      %5293 = vmatprep.mubr.bf16.mxu0 %v4264
      %5294 = vmatmul.mubr.bf16.gmra.mrb[0].mxu0 %v4263
      %v5295 = vpop.f32.mrb[0].mxu0
      %v5296 = vadd.f32 %v4991, %v5295
      %v5297 = vpop.f32.mrb[0].mxu0
      %v5298 = vpop.f32.mrb[0].mxu0
      %v5299 = vadd.f32 %v4994, %v5298
      %v5300 = vpop.f32.mrb[0].mxu0
      %5301 = vmatprep.mubr.bf16.mxu0 %v4267
      %5302 = vmatmul.mubr.bf16.gmra.mrb[0].mxu0 %v4266
      %v5303 = vpop.f32.mrb[0].mxu0
      %v5304 = vadd.f32 %v4999, %v5303
      %v5305 = vpop.f32.mrb[0].mxu0
      %v5306 = vpop.f32.mrb[0].mxu0
      %v5307 = vadd.f32 %v5002, %v5306
      %v5308 = vpop.f32.mrb[0].mxu0
      %5309 = vmatprep.mubr.bf16.mxu0 %v4270
      %5310 = vmatmul.mubr.bf16.gmra.mrb[0].mxu0 %v4269
      %v5311 = vpop.f32.mrb[0].mxu0
      %v5312 = vadd.f32 %v5007, %v5311
      %v5313 = vpop.f32.mrb[0].mxu0
      %v5314 = vpop.f32.mrb[0].mxu0
      %v5315 = vadd.f32 %v5010, %v5314
      %v5316 = vpop.f32.mrb[0].mxu0
      %5317 = vmatprep.mubr.bf16.mxu0 %v4273
      %5318 = vmatmul.mubr.bf16.gmra.mrb[0].mxu0 %v4272
      %v5319 = vpop.f32.mrb[0].mxu0
      %v5320 = vadd.f32 %v5015, %v5319
      %v5321 = vpop.f32.mrb[0].mxu0
      %v5322 = vpop.f32.mrb[0].mxu0
      %v5323 = vadd.f32 %v5018, %v5322
      %v5324 = vpop.f32.mrb[0].mxu0
      %5325 = vmatprep.mubr.bf16.mxu0 %v4276
      %5326 = vmatmul.mubr.bf16.gmra.mrb[0].mxu0 %v4275
      %v5327 = vpop.f32.mrb[0].mxu0
      %v5328 = vadd.f32 %v5023, %v5327
      %v5329 = vpop.f32.mrb[0].mxu0
      %v5330 = vpop.f32.mrb[0].mxu0
      %v5331 = vadd.f32 %v5026, %v5330
      %v5332 = vpop.f32.mrb[0].mxu0
      %5333 = vmatprep.mubr.bf16.mxu0 %v4279
      %5334 = vmatmul.mubr.bf16.gmra.mrb[0].mxu0 %v4278
      %v5335 = vpop.f32.mrb[0].mxu0
      %v5336 = vadd.f32 %v5031, %v5335
      %v5337 = vpop.f32.mrb[0].mxu0
      %v5338 = vpop.f32.mrb[0].mxu0
      %v5339 = vadd.f32 %v5034, %v5338
      %v5340 = vpop.f32.mrb[0].mxu0
      %5341 = vmatprep.mubr.bf16.mxu0 %v4282
      %5342 = vmatmul.mubr.bf16.gmra.mrb[0].mxu0 %v4281
      %v5343 = vpop.f32.mrb[0].mxu0
      %v5344 = vadd.f32 %v5039, %v5343
      %v5345 = vpop.f32.mrb[0].mxu0
      %v5346 = vpop.f32.mrb[0].mxu0
      %v5347 = vadd.f32 %v5042, %v5346
      %v5348 = vpop.f32.mrb[0].mxu0
      %5349 = vmatprep.mubr.bf16.mxu0 %v4285
      %5350 = vmatmul.mubr.bf16.gmra.mrb[0].mxu0 %v4284
      %v5351 = vpop.f32.mrb[0].mxu0
      %v5352 = vadd.f32 %v5047, %v5351
      %v5353 = vpop.f32.mrb[0].mxu0
      %v5354 = vpop.f32.mrb[0].mxu0
      %v5355 = vadd.f32 %v5050, %v5354
      %v5356 = vpop.f32.mrb[0].mxu0
      %5357 = vmatprep.mubr.bf16.mxu0 %v4288
      %5358 = vmatmul.mubr.bf16.gmra.mrb[0].mxu0 %v4287
      %v5359 = vpop.f32.mrb[0].mxu0
      %v5360 = vadd.f32 %v5055, %v5359
      %v5361 = vpop.f32.mrb[0].mxu0
      %v5362 = vpop.f32.mrb[0].mxu0
      %v5363 = vadd.f32 %v5058, %v5362
      %v5364 = vpop.f32.mrb[0].mxu0
      %5365 = vdwg.mxu0
      %5366 = vmatprep.subr.bf16.mxu0 0
      %5367 = vmatpush1.bf16.msra.mxu0 %v5173
      %5368 = vmatprep.subr.bf16.mxu0 0
      %5369 = vmatpush1.bf16.msra.mxu0 %v5174
      %5370 = vmatprep.subr.bf16.mxu0 0
      %5371 = vmatpush1.bf16.msra.mxu0 %v5175
      %5372 = vmatprep.subr.bf16.mxu0 0
      %5373 = vmatpush1.bf16.msra.mxu0 %v5176
      %5374 = vmatprep.subr.bf16.mxu0 0
      %5375 = vmatpush1.bf16.msra.mxu0 %v5177
      %5376 = vmatprep.subr.bf16.mxu0 0
      %5377 = vmatpush1.bf16.msra.mxu0 %v5178
      %5378 = vmatprep.subr.bf16.mxu0 0
      %5379 = vmatpush1.bf16.msra.mxu0 %v5179
      %5380 = vmatprep.subr.bf16.mxu0 0
      %5381 = vmatpush1.bf16.msra.mxu0 %v5180
      %5382 = vmatprep.subr.bf16.mxu0 0
      %5383 = vmatpush1.bf16.msra.mxu0 0
      %5384 = vmatprep.subr.bf16.mxu0 0
      %5385 = vmatpush1.bf16.msra.mxu0 0
      %5386 = vmatprep.subr.bf16.mxu0 0
      %5387 = vmatpush1.bf16.msra.mxu0 0
      %5388 = vmatprep.subr.bf16.mxu0 0
      %5389 = vmatpush1.bf16.msra.mxu0 0
      %5390 = vmatprep.subr.bf16.mxu0 0
      %5391 = vmatpush1.bf16.msra.mxu0 0
      %5392 = vmatprep.subr.bf16.mxu0 0
      %5393 = vmatpush1.bf16.msra.mxu0 0
      %5394 = vmatprep.subr.bf16.mxu0 0
      %5395 = vmatpush1.bf16.msra.mxu0 0
      %5396 = vmatprep.subr.bf16.mxu0 0
      %5397 = vmatpush1.bf16.msra.mxu0 0
      %5398 = vmatprep.mubr.bf16.mxu0 0
      %5399 = vmatmul.mubr.bf16.gmra.mrb[0].mxu0 %v4244
      %v5400 = vpop.f32.mrb[0].mxu0
      %v5401 = vadd.f32 %v5240, %v5400
      %v5402 = vpop.f32.mrb[0].mxu0
      %v5403 = vpop.f32.mrb[0].mxu0
      %v5404 = vadd.f32 %v5243, %v5403
      %v5405 = vpop.f32.mrb[0].mxu0
      %5406 = vmatprep.mubr.bf16.mxu0 0
      %5407 = vmatmul.mubr.bf16.gmra.mrb[0].mxu0 %v4247
      %v5408 = vpop.f32.mrb[0].mxu0
      %v5409 = vadd.f32 %v5248, %v5408
      %v5410 = vpop.f32.mrb[0].mxu0
      %v5411 = vpop.f32.mrb[0].mxu0
      %v5412 = vadd.f32 %v5251, %v5411
      %v5413 = vpop.f32.mrb[0].mxu0
      %5414 = vmatprep.mubr.bf16.mxu0 0
      %5415 = vmatmul.mubr.bf16.gmra.mrb[0].mxu0 %v4250
      %v5416 = vpop.f32.mrb[0].mxu0
      %v5417 = vadd.f32 %v5256, %v5416
      %v5418 = vpop.f32.mrb[0].mxu0
      %v5419 = vpop.f32.mrb[0].mxu0
      %v5420 = vadd.f32 %v5259, %v5419
      %v5421 = vpop.f32.mrb[0].mxu0
      %5422 = vmatprep.mubr.bf16.mxu0 0
      %5423 = vmatmul.mubr.bf16.gmra.mrb[0].mxu0 %v4253
      %v5424 = vpop.f32.mrb[0].mxu0
      %v5425 = vadd.f32 %v5264, %v5424
      %v5426 = vpop.f32.mrb[0].mxu0
      %v5427 = vpop.f32.mrb[0].mxu0
      %v5428 = vadd.f32 %v5267, %v5427
      %v5429 = vpop.f32.mrb[0].mxu0
      %5430 = vmatprep.mubr.bf16.mxu0 0
      %5431 = vmatmul.mubr.bf16.gmra.mrb[0].mxu0 %v4256
      %v5432 = vpop.f32.mrb[0].mxu0
      %v5433 = vadd.f32 %v5272, %v5432
      %v5434 = vpop.f32.mrb[0].mxu0
      %v5435 = vpop.f32.mrb[0].mxu0
      %v5436 = vadd.f32 %v5275, %v5435
      %v5437 = vpop.f32.mrb[0].mxu0
      %5438 = vmatprep.mubr.bf16.mxu0 0
      %5439 = vmatmul.mubr.bf16.gmra.mrb[0].mxu0 %v4259
      %v5440 = vpop.f32.mrb[0].mxu0
      %v5441 = vadd.f32 %v5280, %v5440
      %v5442 = vpop.f32.mrb[0].mxu0
      %v5443 = vpop.f32.mrb[0].mxu0
      %v5444 = vadd.f32 %v5283, %v5443
      %v5445 = vpop.f32.mrb[0].mxu0
      %5446 = vmatprep.mubr.bf16.mxu0 0
      %5447 = vmatmul.mubr.bf16.gmra.mrb[0].mxu0 %v4262
      %v5448 = vpop.f32.mrb[0].mxu0
      %v5449 = vadd.f32 %v5288, %v5448
      %v5450 = vpop.f32.mrb[0].mxu0
      %v5451 = vpop.f32.mrb[0].mxu0
      %v5452 = vadd.f32 %v5291, %v5451
      %v5453 = vpop.f32.mrb[0].mxu0
      %5454 = vmatprep.mubr.bf16.mxu0 0
      %5455 = vmatmul.mubr.bf16.gmra.mrb[0].mxu0 %v4265
      %v5456 = vpop.f32.mrb[0].mxu0
      %v5457 = vadd.f32 %v5296, %v5456
      %v5458 = vpop.f32.mrb[0].mxu0
      %v5459 = vpop.f32.mrb[0].mxu0
      %v5460 = vadd.f32 %v5299, %v5459
      %v5461 = vpop.f32.mrb[0].mxu0
      %5462 = vmatprep.mubr.bf16.mxu0 0
      %5463 = vmatmul.mubr.bf16.gmra.mrb[0].mxu0 %v4268
      %v5464 = vpop.f32.mrb[0].mxu0
      %v5465 = vadd.f32 %v5304, %v5464
      %v5466 = vpop.f32.mrb[0].mxu0
      %v5467 = vpop.f32.mrb[0].mxu0
      %v5468 = vadd.f32 %v5307, %v5467
      %v5469 = vpop.f32.mrb[0].mxu0
      %5470 = vmatprep.mubr.bf16.mxu0 0
      %5471 = vmatmul.mubr.bf16.gmra.mrb[0].mxu0 %v4271
      %v5472 = vpop.f32.mrb[0].mxu0
      %v5473 = vadd.f32 %v5312, %v5472
      %v5474 = vpop.f32.mrb[0].mxu0
      %v5475 = vpop.f32.mrb[0].mxu0
      %v5476 = vadd.f32 %v5315, %v5475
      %v5477 = vpop.f32.mrb[0].mxu0
      %5478 = vmatprep.mubr.bf16.mxu0 0
      %5479 = vmatmul.mubr.bf16.gmra.mrb[0].mxu0 %v4274
      %v5480 = vpop.f32.mrb[0].mxu0
      %v5481 = vadd.f32 %v5320, %v5480
      %v5482 = vpop.f32.mrb[0].mxu0
      %v5483 = vpop.f32.mrb[0].mxu0
      %v5484 = vadd.f32 %v5323, %v5483
      %v5485 = vpop.f32.mrb[0].mxu0
      %5486 = vmatprep.mubr.bf16.mxu0 0
      %5487 = vmatmul.mubr.bf16.gmra.mrb[0].mxu0 %v4277
      %v5488 = vpop.f32.mrb[0].mxu0
      %v5489 = vadd.f32 %v5328, %v5488
      %v5490 = vpop.f32.mrb[0].mxu0
      %v5491 = vpop.f32.mrb[0].mxu0
      %v5492 = vadd.f32 %v5331, %v5491
      %v5493 = vpop.f32.mrb[0].mxu0
      %5494 = vmatprep.mubr.bf16.mxu0 0
      %5495 = vmatmul.mubr.bf16.gmra.mrb[0].mxu0 %v4280
      %v5496 = vpop.f32.mrb[0].mxu0
      %v5497 = vadd.f32 %v5336, %v5496
      %v5498 = vpop.f32.mrb[0].mxu0
      %v5499 = vpop.f32.mrb[0].mxu0
      %v5500 = vadd.f32 %v5339, %v5499
      %v5501 = vpop.f32.mrb[0].mxu0
      %5502 = vmatprep.mubr.bf16.mxu0 0
      %5503 = vmatmul.mubr.bf16.gmra.mrb[0].mxu0 %v4283
      %v5504 = vpop.f32.mrb[0].mxu0
      %v5505 = vadd.f32 %v5344, %v5504
      %v5506 = vpop.f32.mrb[0].mxu0
      %v5507 = vpop.f32.mrb[0].mxu0
      %v5508 = vadd.f32 %v5347, %v5507
      %v5509 = vpop.f32.mrb[0].mxu0
      %5510 = vmatprep.mubr.bf16.mxu0 0
      %5511 = vmatmul.mubr.bf16.gmra.mrb[0].mxu0 %v4286
      %v5512 = vpop.f32.mrb[0].mxu0
      %v5513 = vadd.f32 %v5352, %v5512
      %v5514 = vpop.f32.mrb[0].mxu0
      %v5515 = vpop.f32.mrb[0].mxu0
      %v5516 = vadd.f32 %v5355, %v5515
      %v5517 = vpop.f32.mrb[0].mxu0
      %5518 = vmatprep.mubr.bf16.mxu0 0
      %5519 = vmatmul.mubr.bf16.gmra.mrb[0].mxu0 %v4289
      %v5520 = vpop.f32.mrb[0].mxu0
      %v5521 = vadd.f32 %v5360, %v5520
      %v5522 = vpop.f32.mrb[0].mxu0
      %v5523 = vpop.f32.mrb[0].mxu0
      %v5524 = vadd.f32 %v5363, %v5523
      %v5525 = vpop.f32.mrb[0].mxu0
      %5526 = vdwg.mxu0
      %v5527 = vsel %vm2730, %v3983, 0.0
      %v5528 = vsel %vm2731, %v3982, 0.0
      %v5529 = vsel %vm2732, %v3981, 0.0
      %v5530 = vsel %vm2733, %v3980, 0.0
      %v5531 = vsel %vm2734, %v3979, 0.0
      %v5532 = vsel %vm2735, %v3978, 0.0
      %v5533 = vsel %vm2736, %v3977, 0.0
      %v5534 = vsel %vm2737, %v3976, 0.0
      %v5535 = vsel %vm2738, %v3975, 0.0
      %v5536 = vsel %vm2739, %v3974, 0.0
      %v5537 = vsel %vm2740, %v3973, 0.0
      %v5538 = vsel %vm2741, %v3972, 0.0
      %v5539 = vsel %vm2742, %v3971, 0.0
      %v5540 = vsel %vm2743, %v3970, 0.0
      %v5541 = vsel %vm2744, %v3969, 0.0
      %v5542 = vsel %vm2745, %v3968, 0.0
      %v5543 = vsel %vm2746, %v3967, 0.0
      %v5544 = vsel %vm2747, %v3966, 0.0
      %v5545 = vsel %vm2748, %v3965, 0.0
      %v5546 = vsel %vm2749, %v3964, 0.0
      %v5547 = vsel %vm2750, %v3963, 0.0
      %v5548 = vsel %vm2751, %v3962, 0.0
      %v5549 = vsel %vm2752, %v3961, 0.0
      %v5550 = vsel %vm2753, %v3960, 0.0
      %v5551 = vsel %vm2754, %v3959, 0.0
      %v5552 = vsel %vm2755, %v3958, 0.0
      %v5553 = vsel %vm2756, %v3957, 0.0
      %v5554 = vsel %vm2757, %v3956, 0.0
      %v5555 = vsel %vm2758, %v3955, 0.0
      %v5556 = vsel %vm2759, %v3954, 0.0
      %v5557 = vsel %vm2760, %v3985, 0.0
      %v5558 = vsel %vm2761, %v3984, 0.0
      %v5559 = vpack.c.bf16 %v5528, %v5527
      %v5560 = vpack.c.bf16 %v5530, %v5529
      %v5561 = vpack.c.bf16 %v5532, %v5531
      %v5562 = vpack.c.bf16 %v5534, %v5533
      %v5563 = vpack.c.bf16 %v5536, %v5535
      %v5564 = vpack.c.bf16 %v5538, %v5537
      %v5565 = vpack.c.bf16 %v5540, %v5539
      %v5566 = vpack.c.bf16 %v5542, %v5541
      %v5567 = vpack.c.bf16 %v5544, %v5543
      %v5568 = vpack.c.bf16 %v5546, %v5545
      %v5569 = vpack.c.bf16 %v5548, %v5547
      %v5570 = vpack.c.bf16 %v5550, %v5549
      %v5571 = vpack.c.bf16 %v5552, %v5551
      %v5572 = vpack.c.bf16 %v5554, %v5553
      %v5573 = vpack.c.bf16 %v5556, %v5555
      %v5574 = vpack.c.bf16 %v5558, %v5557
      %5575 = vst [vmem:[#allocation2] sm:$0xff] %v5559
      %5576 = vst [vmem:[#allocation2 + $0x18] sm:$0xff] %v5560
      %5577 = vst [vmem:[#allocation2 + $0x30] sm:$0xff] %v5561
      %5578 = vst [vmem:[#allocation2 + $0x48] sm:$0xff] %v5562
      %5579 = vst [vmem:[#allocation2 + $0x60] sm:$0xff] %v5563
      %5580 = vst [vmem:[#allocation2 + $0x78] sm:$0xff] %v5564
      %5581 = vst [vmem:[#allocation2 + $0x90] sm:$0xff] %v5565
      %5582 = vst [vmem:[#allocation2 + $0xa8] sm:$0xff] %v5566
      %5583 = vst [vmem:[#allocation2 + $0xc0] sm:$0xff] %v5567
      %5584 = vst [vmem:[#allocation2 + $0xd8] sm:$0xff] %v5568
      %5585 = vst [vmem:[#allocation2 + $0xf0] sm:$0xff] %v5569
      %5586 = vst [vmem:[#allocation2 + $0x108] sm:$0xff] %v5570
      %5587 = vst [vmem:[#allocation2 + $0x120] sm:$0xff] %v5571
      %5588 = vst [vmem:[#allocation2 + $0x138] sm:$0xff] %v5572
      %5589 = vst [vmem:[#allocation2 + $0x150] sm:$0xff] %v5573
      %5590 = vst [vmem:[#allocation2 + $0x168] sm:$0xff] %v5574
      %v5591 = vsel %vm2858, %v3892, 0.0
      %v5592 = vsel %vm2859, %v3893, 0.0
      %v5593 = vsel %vm2860, %v3894, 0.0
      %v5594 = vsel %vm2861, %v3895, 0.0
      %v5595 = vsel %vm2862, %v3896, 0.0
      %v5596 = vsel %vm2863, %v3897, 0.0
      %v5597 = vsel %vm2864, %v3898, 0.0
      %v5598 = vsel %vm2865, %v3899, 0.0
      %v5599 = vsel %vm2866, %v3900, 0.0
      %v5600 = vsel %vm2867, %v3901, 0.0
      %v5601 = vsel %vm2868, %v3902, 0.0
      %v5602 = vsel %vm2869, %v3903, 0.0
      %v5603 = vsel %vm2870, %v3904, 0.0
      %v5604 = vsel %vm2871, %v3905, 0.0
      %v5605 = vsel %vm2872, %v3906, 0.0
      %v5606 = vsel %vm2873, %v3907, 0.0
      %v5607 = vsel %vm2874, %v3908, 0.0
      %v5608 = vsel %vm2875, %v3909, 0.0
      %v5609 = vsel %vm2876, %v3910, 0.0
      %v5610 = vsel %vm2877, %v3911, 0.0
      %v5611 = vsel %vm2878, %v3912, 0.0
      %v5612 = vsel %vm2879, %v3913, 0.0
      %v5613 = vsel %vm2880, %v3914, 0.0
      %v5614 = vsel %vm2881, %v3915, 0.0
      %v5615 = vsel %vm2882, %v3916, 0.0
      %v5616 = vsel %vm2883, %v3917, 0.0
      %v5617 = vsel %vm2884, %v3918, 0.0
      %v5618 = vsel %vm2885, %v3919, 0.0
      %v5619 = vsel %vm2886, %v3920, 0.0
      %v5620 = vsel %vm2887, %v3921, 0.0
      %v5621 = vsel %vm2888, %v3890, 0.0
      %v5622 = vsel %vm2889, %v3891, 0.0
      %v5623 = vpack.c.bf16 %v5592, %v5591
      %v5624 = vpack.c.bf16 %v5594, %v5593
      %v5625 = vpack.c.bf16 %v5596, %v5595
      %v5626 = vpack.c.bf16 %v5598, %v5597
      %v5627 = vpack.c.bf16 %v5600, %v5599
      %v5628 = vpack.c.bf16 %v5602, %v5601
      %v5629 = vpack.c.bf16 %v5604, %v5603
      %v5630 = vpack.c.bf16 %v5606, %v5605
      %v5631 = vpack.c.bf16 %v5608, %v5607
      %v5632 = vpack.c.bf16 %v5610, %v5609
      %v5633 = vpack.c.bf16 %v5612, %v5611
      %v5634 = vpack.c.bf16 %v5614, %v5613
      %v5635 = vpack.c.bf16 %v5616, %v5615
      %v5636 = vpack.c.bf16 %v5618, %v5617
      %v5637 = vpack.c.bf16 %v5620, %v5619
      %v5638 = vpack.c.bf16 %v5622, %v5621
      %5639 = vst [vmem:[#allocation2 + $0x8] sm:$0xff] %v5623
      %5640 = vst [vmem:[#allocation2 + $0x20] sm:$0xff] %v5624
      %5641 = vst [vmem:[#allocation2 + $0x38] sm:$0xff] %v5625
      %5642 = vst [vmem:[#allocation2 + $0x50] sm:$0xff] %v5626
      %5643 = vst [vmem:[#allocation2 + $0x68] sm:$0xff] %v5627
      %5644 = vst [vmem:[#allocation2 + $0x80] sm:$0xff] %v5628
      %5645 = vst [vmem:[#allocation2 + $0x98] sm:$0xff] %v5629
      %5646 = vst [vmem:[#allocation2 + $0xb0] sm:$0xff] %v5630
      %5647 = vst [vmem:[#allocation2 + $0xc8] sm:$0xff] %v5631
      %5648 = vst [vmem:[#allocation2 + $0xe0] sm:$0xff] %v5632
      %5649 = vst [vmem:[#allocation2 + $0xf8] sm:$0xff] %v5633
      %5650 = vst [vmem:[#allocation2 + $0x110] sm:$0xff] %v5634
      %5651 = vst [vmem:[#allocation2 + $0x128] sm:$0xff] %v5635
      %5652 = vst [vmem:[#allocation2 + $0x140] sm:$0xff] %v5636
      %5653 = vst [vmem:[#allocation2 + $0x158] sm:$0xff] %v5637
      %5654 = vst [vmem:[#allocation2 + $0x170] sm:$0xff] %v5638
      %v5655 = vsel %vm2986, %v4174, 0.0
      %v5656 = vsel %vm2987, %v4173, 0.0
      %v5657 = vsel %vm2988, %v4172, 0.0
      %v5658 = vsel %vm2989, %v4171, 0.0
      %v5659 = vsel %vm2990, %v4170, 0.0
      %v5660 = vsel %vm2991, %v4169, 0.0
      %v5661 = vsel %vm2992, %v4168, 0.0
      %v5662 = vsel %vm2993, %v4167, 0.0
      %v5663 = vsel %vm2994, %v4166, 0.0
      %v5664 = vsel %vm2995, %v4165, 0.0
      %v5665 = vsel %vm2996, %v4164, 0.0
      %v5666 = vsel %vm2997, %v4163, 0.0
      %v5667 = vsel %vm2998, %v4162, 0.0
      %v5668 = vsel %vm2999, %v4161, 0.0
      %v5669 = vsel %vm3000, %v4160, 0.0
      %v5670 = vsel %vm3001, %v4159, 0.0
      %v5671 = vsel %vm3002, %v4158, 0.0
      %v5672 = vsel %vm3003, %v4157, 0.0
      %v5673 = vsel %vm3004, %v4156, 0.0
      %v5674 = vsel %vm3005, %v4155, 0.0
      %v5675 = vsel %vm3006, %v4154, 0.0
      %v5676 = vsel %vm3007, %v4153, 0.0
      %v5677 = vsel %vm3008, %v4152, 0.0
      %v5678 = vsel %vm3009, %v4151, 0.0
      %v5679 = vsel %vm3010, %v4150, 0.0
      %v5680 = vsel %vm3011, %v4149, 0.0
      %v5681 = vsel %vm3012, %v4148, 0.0
      %v5682 = vsel %vm3013, %v4147, 0.0
      %v5683 = vsel %vm3014, %v4146, 0.0
      %v5684 = vsel %vm3015, %v4177, 0.0
      %v5685 = vsel %vm3016, %v4176, 0.0
      %v5686 = vsel %vm3017, %v4175, 0.0
      %v5687 = vpack.c.bf16 %v5656, %v5655
      %v5688 = vpack.c.bf16 %v5658, %v5657
      %v5689 = vpack.c.bf16 %v5660, %v5659
      %v5690 = vpack.c.bf16 %v5662, %v5661
      %v5691 = vpack.c.bf16 %v5664, %v5663
      %v5692 = vpack.c.bf16 %v5666, %v5665
      %v5693 = vpack.c.bf16 %v5668, %v5667
      %v5694 = vpack.c.bf16 %v5670, %v5669
      %v5695 = vpack.c.bf16 %v5672, %v5671
      %v5696 = vpack.c.bf16 %v5674, %v5673
      %v5697 = vpack.c.bf16 %v5676, %v5675
      %v5698 = vpack.c.bf16 %v5678, %v5677
      %v5699 = vpack.c.bf16 %v5680, %v5679
      %v5700 = vpack.c.bf16 %v5682, %v5681
      %v5701 = vpack.c.bf16 %v5684, %v5683
      %v5702 = vpack.c.bf16 %v5686, %v5685
      %5703 = vst [vmem:[#allocation2 + $0x10] sm:$0xff] %v5687
      %5704 = vst [vmem:[#allocation2 + $0x28] sm:$0xff] %v5688
      %5705 = vst [vmem:[#allocation2 + $0x40] sm:$0xff] %v5689
      %5706 = vst [vmem:[#allocation2 + $0x58] sm:$0xff] %v5690
      %5707 = vst [vmem:[#allocation2 + $0x70] sm:$0xff] %v5691
      %5708 = vst [vmem:[#allocation2 + $0x88] sm:$0xff] %v5692
      %5709 = vst [vmem:[#allocation2 + $0xa0] sm:$0xff] %v5693
      %5710 = vst [vmem:[#allocation2 + $0xb8] sm:$0xff] %v5694
      %5711 = vst [vmem:[#allocation2 + $0xd0] sm:$0xff] %v5695
      %5712 = vst [vmem:[#allocation2 + $0xe8] sm:$0xff] %v5696
      %5713 = vst [vmem:[#allocation2 + $0x100] sm:$0xff] %v5697
      %5714 = vst [vmem:[#allocation2 + $0x118] sm:$0xff] %v5698
      %5715 = vst [vmem:[#allocation2 + $0x130] sm:$0xff] %v5699
      %5716 = vst [vmem:[#allocation2 + $0x148] sm:$0xff] %v5700
      %5717 = vst [vmem:[#allocation2 + $0x160] sm:$0xff] %v5701
      %5718 = vst [vmem:[#allocation2 + $0x178] sm:$0xff] %v5702
      %v5719 = vld [vmem:[#allocation2] sm:$0xff]
      %v5720 = vld [vmem:[#allocation2 + $0x8] sm:$0xff]
      %v5721 = vld [vmem:[#allocation2 + $0x10] sm:$0xff]
      %v5722 = vld [vmem:[#allocation2 + $0x18] sm:$0xff]
      %v5723 = vld [vmem:[#allocation2 + $0x20] sm:$0xff]
      %v5724 = vld [vmem:[#allocation2 + $0x28] sm:$0xff]
      %v5725 = vld [vmem:[#allocation2 + $0x30] sm:$0xff]
      %v5726 = vld [vmem:[#allocation2 + $0x38] sm:$0xff]
      %v5727 = vld [vmem:[#allocation2 + $0x40] sm:$0xff]
      %v5728 = vld [vmem:[#allocation2 + $0x48] sm:$0xff]
      %v5729 = vld [vmem:[#allocation2 + $0x50] sm:$0xff]
      %v5730 = vld [vmem:[#allocation2 + $0x58] sm:$0xff]
      %v5731 = vld [vmem:[#allocation2 + $0x60] sm:$0xff]
      %v5732 = vld [vmem:[#allocation2 + $0x68] sm:$0xff]
      %v5733 = vld [vmem:[#allocation2 + $0x70] sm:$0xff]
      %v5734 = vld [vmem:[#allocation2 + $0x78] sm:$0xff]
      %v5735 = vld [vmem:[#allocation2 + $0x80] sm:$0xff]
      %v5736 = vld [vmem:[#allocation2 + $0x88] sm:$0xff]
      %v5737 = vld [vmem:[#allocation2 + $0x90] sm:$0xff]
      %v5738 = vld [vmem:[#allocation2 + $0x98] sm:$0xff]
      %v5739 = vld [vmem:[#allocation2 + $0xa0] sm:$0xff]
      %v5740 = vld [vmem:[#allocation2 + $0xa8] sm:$0xff]
      %v5741 = vld [vmem:[#allocation2 + $0xb0] sm:$0xff]
      %v5742 = vld [vmem:[#allocation2 + $0xb8] sm:$0xff]
      %v5743 = vld [vmem:[#allocation2 + $0xc0] sm:$0xff]
      %v5744 = vld [vmem:[#allocation2 + $0xc8] sm:$0xff]
      %v5745 = vld [vmem:[#allocation2 + $0xd0] sm:$0xff]
      %v5746 = vld [vmem:[#allocation2 + $0xd8] sm:$0xff]
      %v5747 = vld [vmem:[#allocation2 + $0xe0] sm:$0xff]
      %v5748 = vld [vmem:[#allocation2 + $0xe8] sm:$0xff]
      %v5749 = vld [vmem:[#allocation2 + $0xf0] sm:$0xff]
      %v5750 = vld [vmem:[#allocation2 + $0xf8] sm:$0xff]
      %v5751 = vld [vmem:[#allocation2 + $0x100] sm:$0xff]
      %v5752 = vld [vmem:[#allocation2 + $0x108] sm:$0xff]
      %v5753 = vld [vmem:[#allocation2 + $0x110] sm:$0xff]
      %v5754 = vld [vmem:[#allocation2 + $0x118] sm:$0xff]
      %v5755 = vld [vmem:[#allocation2 + $0x120] sm:$0xff]
      %v5756 = vld [vmem:[#allocation2 + $0x128] sm:$0xff]
      %v5757 = vld [vmem:[#allocation2 + $0x130] sm:$0xff]
      %v5758 = vld [vmem:[#allocation2 + $0x138] sm:$0xff]
      %v5759 = vld [vmem:[#allocation2 + $0x140] sm:$0xff]
      %v5760 = vld [vmem:[#allocation2 + $0x148] sm:$0xff]
      %v5761 = vld [vmem:[#allocation2 + $0x150] sm:$0xff]
      %v5762 = vld [vmem:[#allocation2 + $0x158] sm:$0xff]
      %v5763 = vld [vmem:[#allocation2 + $0x160] sm:$0xff]
      %v5764 = vld [vmem:[#allocation2 + $0x168] sm:$0xff]
      %v5765 = vld [vmem:[#allocation2 + $0x170] sm:$0xff]
      %v5766 = vld [vmem:[#allocation2 + $0x178] sm:$0xff]
      %s5767 = scalar_lea.vmem %s3, 384
      %v5768 = vld [vmem:[%s5767] sm:$0xf]
      %v5769 = vld [vmem:[%s5767 + $0x4] sm:$0xf]
      %v5770 = vld [vmem:[%s5767 + $0x8] sm:$0xf]
      %v5771 = vld [vmem:[%s5767 + $0xc] sm:$0xf]
      %v5772 = vld [vmem:[%s5767 + $0x10] sm:$0xf]
      %v5773 = vld [vmem:[%s5767 + $0x14] sm:$0xf]
      %v5774 = vld [vmem:[%s5767 + $0x18] sm:$0xf]
      %v5775 = vld [vmem:[%s5767 + $0x1c] sm:$0xf]
      %v5776 = vld [vmem:[%s5767 + $0x20] sm:$0xf]
      %v5777 = vld [vmem:[%s5767 + $0x24] sm:$0xf]
      %v5778 = vld [vmem:[%s5767 + $0x28] sm:$0xf]
      %v5779 = vld [vmem:[%s5767 + $0x2c] sm:$0xf]
      %v5780 = vld [vmem:[%s5767 + $0x30] sm:$0xf]
      %v5781 = vld [vmem:[%s5767 + $0x34] sm:$0xf]
      %v5782 = vld [vmem:[%s5767 + $0x38] sm:$0xf]
      %v5783 = vld [vmem:[%s5767 + $0x3c] sm:$0xf]
      %v5784 = vld [vmem:[%s5767 + $0x40] sm:$0xf]
      %v5785 = vld [vmem:[%s5767 + $0x44] sm:$0xf]
      %v5786 = vld [vmem:[%s5767 + $0x48] sm:$0xf]
      %v5787 = vld [vmem:[%s5767 + $0x4c] sm:$0xf]
      %v5788 = vld [vmem:[%s5767 + $0x50] sm:$0xf]
      %v5789 = vld [vmem:[%s5767 + $0x54] sm:$0xf]
      %v5790 = vld [vmem:[%s5767 + $0x58] sm:$0xf]
      %v5791 = vld [vmem:[%s5767 + $0x5c] sm:$0xf]
      %v5792 = vld [vmem:[%s5767 + $0x60] sm:$0xf]
      %v5793 = vld [vmem:[%s5767 + $0x64] sm:$0xf]
      %v5794 = vld [vmem:[%s5767 + $0x68] sm:$0xf]
      %v5795 = vld [vmem:[%s5767 + $0x6c] sm:$0xf]
      %v5796 = vld [vmem:[%s5767 + $0x70] sm:$0xf]
      %v5797 = vld [vmem:[%s5767 + $0x74] sm:$0xf]
      %v5798 = vld [vmem:[%s5767 + $0x78] sm:$0xf]
      %v5799 = vld [vmem:[%s5767 + $0x7c] sm:$0xf]
      %v5800 = vld [vmem:[%s5767 + $0x80] sm:$0xf]
      %v5801 = vld [vmem:[%s5767 + $0x84] sm:$0xf]
      %v5802 = vld [vmem:[%s5767 + $0x88] sm:$0xf]
      %v5803 = vld [vmem:[%s5767 + $0x8c] sm:$0xf]
      %v5804 = vld [vmem:[%s5767 + $0x90] sm:$0xf]
      %v5805 = vld [vmem:[%s5767 + $0x94] sm:$0xf]
      %v5806 = vld [vmem:[%s5767 + $0x98] sm:$0xf]
      %v5807 = vld [vmem:[%s5767 + $0x9c] sm:$0xf]
      %v5808 = vld [vmem:[%s5767 + $0xa0] sm:$0xf]
      %v5809 = vld [vmem:[%s5767 + $0xa4] sm:$0xf]
      %v5810 = vld [vmem:[%s5767 + $0xa8] sm:$0xf]
      %v5811 = vld [vmem:[%s5767 + $0xac] sm:$0xf]
      %v5812 = vld [vmem:[%s5767 + $0xb0] sm:$0xf]
      %v5813 = vld [vmem:[%s5767 + $0xb4] sm:$0xf]
      %v5814 = vld [vmem:[%s5767 + $0xb8] sm:$0xf]
      %v5815 = vld [vmem:[%s5767 + $0xbc] sm:$0xf]
      %v5864 = vunpack.c.l.b16 %v5768
      %v5865 = vunpack.c.l.b16 %v5769
      %v5866 = vunpack.c.l.b16 %v5770
      %v5867 = vunpack.c.l.b16 %v5771
      %v5868 = vunpack.c.l.b16 %v5772
      %v5869 = vunpack.c.l.b16 %v5773
      %v5870 = vunpack.c.l.b16 %v5774
      %v5871 = vunpack.c.l.b16 %v5775
      %v5872 = vunpack.c.l.b16 %v5776
      %v5873 = vunpack.c.l.b16 %v5777
      %v5874 = vunpack.c.l.b16 %v5778
      %v5875 = vunpack.c.l.b16 %v5779
      %v5876 = vunpack.c.l.b16 %v5780
      %v5877 = vunpack.c.l.b16 %v5781
      %v5878 = vunpack.c.l.b16 %v5782
      %v5879 = vunpack.c.l.b16 %v5783
      %v5880 = vunpack.c.l.b16 %v5784
      %v5881 = vunpack.c.l.b16 %v5785
      %v5882 = vunpack.c.l.b16 %v5786
      %v5883 = vunpack.c.l.b16 %v5787
      %v5884 = vunpack.c.l.b16 %v5788
      %v5885 = vunpack.c.l.b16 %v5789
      %v5886 = vunpack.c.l.b16 %v5790
      %v5887 = vunpack.c.l.b16 %v5791
      %v5888 = vunpack.c.l.b16 %v5792
      %v5889 = vunpack.c.l.b16 %v5793
      %v5890 = vunpack.c.l.b16 %v5794
      %v5891 = vunpack.c.l.b16 %v5795
      %v5892 = vunpack.c.l.b16 %v5796
      %v5893 = vunpack.c.l.b16 %v5797
      %v5894 = vunpack.c.l.b16 %v5798
      %v5895 = vunpack.c.l.b16 %v5799
      %v5896 = vunpack.c.l.b16 %v5800
      %v5897 = vunpack.c.l.b16 %v5801
      %v5898 = vunpack.c.l.b16 %v5802
      %v5899 = vunpack.c.l.b16 %v5803
      %v5900 = vunpack.c.l.b16 %v5804
      %v5901 = vunpack.c.l.b16 %v5805
      %v5902 = vunpack.c.l.b16 %v5806
      %v5903 = vunpack.c.l.b16 %v5807
      %v5904 = vunpack.c.l.b16 %v5808
      %v5905 = vunpack.c.l.b16 %v5809
      %v5906 = vunpack.c.l.b16 %v5810
      %v5907 = vunpack.c.l.b16 %v5811
      %v5908 = vunpack.c.l.b16 %v5812
      %v5909 = vunpack.c.l.b16 %v5813
      %v5910 = vunpack.c.l.b16 %v5814
      %v5911 = vunpack.c.l.b16 %v5815
      %v5912 = vpack.c.b16 %v5865, %v5864
      %v5913 = vpack.c.b16 %v5867, %v5866
      %v5914 = vpack.c.b16 %v5869, %v5868
      %v5915 = vpack.c.b16 %v5871, %v5870
      %v5916 = vpack.c.b16 %v5873, %v5872
      %v5917 = vpack.c.b16 %v5875, %v5874
      %v5918 = vpack.c.b16 %v5877, %v5876
      %v5919 = vpack.c.b16 %v5879, %v5878
      %v5920 = vpack.c.b16 %v5881, %v5880
      %v5921 = vpack.c.b16 %v5883, %v5882
      %v5922 = vpack.c.b16 %v5885, %v5884
      %v5923 = vpack.c.b16 %v5887, %v5886
      %v5924 = vpack.c.b16 %v5889, %v5888
      %v5925 = vpack.c.b16 %v5891, %v5890
      %v5926 = vpack.c.b16 %v5893, %v5892
      %v5927 = vpack.c.b16 %v5895, %v5894
      %v5928 = vpack.c.b16 %v5897, %v5896
      %v5929 = vpack.c.b16 %v5899, %v5898
      %v5930 = vpack.c.b16 %v5901, %v5900
      %v5931 = vpack.c.b16 %v5903, %v5902
      %v5932 = vpack.c.b16 %v5905, %v5904
      %v5933 = vpack.c.b16 %v5907, %v5906
      %v5934 = vpack.c.b16 %v5909, %v5908
      %v5935 = vpack.c.b16 %v5911, %v5910
      %5960 = vmatprep.subr.bf16.mxu0 0
      %5961 = vmatpush1.bf16.msra.mxu0 %v5912
      %5962 = vmatprep.subr.bf16.mxu0 0
      %5963 = vmatpush1.bf16.msra.mxu0 %v5913
      %5964 = vmatprep.subr.bf16.mxu0 0
      %5965 = vmatpush1.bf16.msra.mxu0 %v5914
      %5966 = vmatprep.subr.bf16.mxu0 0
      %5967 = vmatpush1.bf16.msra.mxu0 %v5915
      %5968 = vmatprep.subr.bf16.mxu0 0
      %5969 = vmatpush1.bf16.msra.mxu0 %v5916
      %5970 = vmatprep.subr.bf16.mxu0 0
      %5971 = vmatpush1.bf16.msra.mxu0 %v5917
      %5972 = vmatprep.subr.bf16.mxu0 0
      %5973 = vmatpush1.bf16.msra.mxu0 %v5918
      %5974 = vmatprep.subr.bf16.mxu0 0
      %5975 = vmatpush1.bf16.msra.mxu0 %v5919
      %5976 = vmatprep.subr.bf16.mxu0 0
      %5977 = vmatpush1.bf16.msra.mxu0 %v5920
      %5978 = vmatprep.subr.bf16.mxu0 0
      %5979 = vmatpush1.bf16.msra.mxu0 %v5921
      %5980 = vmatprep.subr.bf16.mxu0 0
      %5981 = vmatpush1.bf16.msra.mxu0 %v5922
      %5982 = vmatprep.subr.bf16.mxu0 0
      %5983 = vmatpush1.bf16.msra.mxu0 %v5923
      %5984 = vmatprep.subr.bf16.mxu0 0
      %5985 = vmatpush1.bf16.msra.mxu0 %v5924
      %5986 = vmatprep.subr.bf16.mxu0 0
      %5987 = vmatpush1.bf16.msra.mxu0 %v5925
      %5988 = vmatprep.subr.bf16.mxu0 0
      %5989 = vmatpush1.bf16.msra.mxu0 %v5926
      %5990 = vmatprep.subr.bf16.mxu0 0
      %5991 = vmatpush1.bf16.msra.mxu0 %v5927
      %5992 = vmatprep.mubr.bf16.mxu0 %v5720
      %5993 = vmatmul.mubr.bf16.gmra.mrb[0].mxu0 %v5719
      %v5994 = vpop.f32.mrb[0].mxu0
      %v5995 = vadd.f32 0.0, %v5994
      %v5996 = vpop.f32.mrb[0].mxu0
      %v5997 = vpop.f32.mrb[0].mxu0
      %v5998 = vadd.f32 0.0, %v5997
      %v5999 = vpop.f32.mrb[0].mxu0
      %6000 = vmatprep.mubr.bf16.mxu0 %v5723
      %6001 = vmatmul.mubr.bf16.gmra.mrb[0].mxu0 %v5722
      %v6002 = vpop.f32.mrb[0].mxu0
      %v6003 = vadd.f32 0.0, %v6002
      %v6004 = vpop.f32.mrb[0].mxu0
      %v6005 = vpop.f32.mrb[0].mxu0
      %v6006 = vadd.f32 0.0, %v6005
      %v6007 = vpop.f32.mrb[0].mxu0
      %6008 = vmatprep.mubr.bf16.mxu0 %v5726
      %6009 = vmatmul.mubr.bf16.gmra.mrb[0].mxu0 %v5725
      %v6010 = vpop.f32.mrb[0].mxu0
      %v6011 = vadd.f32 0.0, %v6010
      %v6012 = vpop.f32.mrb[0].mxu0
      %v6013 = vpop.f32.mrb[0].mxu0
      %v6014 = vadd.f32 0.0, %v6013
      %v6015 = vpop.f32.mrb[0].mxu0
      %6016 = vmatprep.mubr.bf16.mxu0 %v5729
      %6017 = vmatmul.mubr.bf16.gmra.mrb[0].mxu0 %v5728
      %v6018 = vpop.f32.mrb[0].mxu0
      %v6019 = vadd.f32 0.0, %v6018
      %v6020 = vpop.f32.mrb[0].mxu0
      %v6021 = vpop.f32.mrb[0].mxu0
      %v6022 = vadd.f32 0.0, %v6021
      %v6023 = vpop.f32.mrb[0].mxu0
      %6024 = vmatprep.mubr.bf16.mxu0 %v5732
      %6025 = vmatmul.mubr.bf16.gmra.mrb[0].mxu0 %v5731
      %v6026 = vpop.f32.mrb[0].mxu0
      %v6027 = vadd.f32 0.0, %v6026
      %v6028 = vpop.f32.mrb[0].mxu0
      %v6029 = vpop.f32.mrb[0].mxu0
      %v6030 = vadd.f32 0.0, %v6029
      %v6031 = vpop.f32.mrb[0].mxu0
      %6032 = vmatprep.mubr.bf16.mxu0 %v5735
      %6033 = vmatmul.mubr.bf16.gmra.mrb[0].mxu0 %v5734
      %v6034 = vpop.f32.mrb[0].mxu0
      %v6035 = vadd.f32 0.0, %v6034
      %v6036 = vpop.f32.mrb[0].mxu0
      %v6037 = vpop.f32.mrb[0].mxu0
      %v6038 = vadd.f32 0.0, %v6037
      %v6039 = vpop.f32.mrb[0].mxu0
      %6040 = vmatprep.mubr.bf16.mxu0 %v5738
      %6041 = vmatmul.mubr.bf16.gmra.mrb[0].mxu0 %v5737
      %v6042 = vpop.f32.mrb[0].mxu0
      %v6043 = vadd.f32 0.0, %v6042
      %v6044 = vpop.f32.mrb[0].mxu0
      %v6045 = vpop.f32.mrb[0].mxu0
      %v6046 = vadd.f32 0.0, %v6045
      %v6047 = vpop.f32.mrb[0].mxu0
      %6048 = vmatprep.mubr.bf16.mxu0 %v5741
      %6049 = vmatmul.mubr.bf16.gmra.mrb[0].mxu0 %v5740
      %v6050 = vpop.f32.mrb[0].mxu0
      %v6051 = vadd.f32 0.0, %v6050
      %v6052 = vpop.f32.mrb[0].mxu0
      %v6053 = vpop.f32.mrb[0].mxu0
      %v6054 = vadd.f32 0.0, %v6053
      %v6055 = vpop.f32.mrb[0].mxu0
      %6056 = vmatprep.mubr.bf16.mxu0 %v5744
      %6057 = vmatmul.mubr.bf16.gmra.mrb[0].mxu0 %v5743
      %v6058 = vpop.f32.mrb[0].mxu0
      %v6059 = vadd.f32 0.0, %v6058
      %v6060 = vpop.f32.mrb[0].mxu0
      %v6061 = vpop.f32.mrb[0].mxu0
      %v6062 = vadd.f32 0.0, %v6061
      %v6063 = vpop.f32.mrb[0].mxu0
      %6064 = vmatprep.mubr.bf16.mxu0 %v5747
      %6065 = vmatmul.mubr.bf16.gmra.mrb[0].mxu0 %v5746
      %v6066 = vpop.f32.mrb[0].mxu0
      %v6067 = vadd.f32 0.0, %v6066
      %v6068 = vpop.f32.mrb[0].mxu0
      %v6069 = vpop.f32.mrb[0].mxu0
      %v6070 = vadd.f32 0.0, %v6069
      %v6071 = vpop.f32.mrb[0].mxu0
      %6072 = vmatprep.mubr.bf16.mxu0 %v5750
      %6073 = vmatmul.mubr.bf16.gmra.mrb[0].mxu0 %v5749
      %v6074 = vpop.f32.mrb[0].mxu0
      %v6075 = vadd.f32 0.0, %v6074
      %v6076 = vpop.f32.mrb[0].mxu0
      %v6077 = vpop.f32.mrb[0].mxu0
      %v6078 = vadd.f32 0.0, %v6077
      %v6079 = vpop.f32.mrb[0].mxu0
      %6080 = vmatprep.mubr.bf16.mxu0 %v5753
      %6081 = vmatmul.mubr.bf16.gmra.mrb[0].mxu0 %v5752
      %v6082 = vpop.f32.mrb[0].mxu0
      %v6083 = vadd.f32 0.0, %v6082
      %v6084 = vpop.f32.mrb[0].mxu0
      %v6085 = vpop.f32.mrb[0].mxu0
      %v6086 = vadd.f32 0.0, %v6085
      %v6087 = vpop.f32.mrb[0].mxu0
      %6088 = vmatprep.mubr.bf16.mxu0 %v5756
      %6089 = vmatmul.mubr.bf16.gmra.mrb[0].mxu0 %v5755
      %v6090 = vpop.f32.mrb[0].mxu0
      %v6091 = vadd.f32 0.0, %v6090
      %v6092 = vpop.f32.mrb[0].mxu0
      %v6093 = vpop.f32.mrb[0].mxu0
      %v6094 = vadd.f32 0.0, %v6093
      %v6095 = vpop.f32.mrb[0].mxu0
      %6096 = vmatprep.mubr.bf16.mxu0 %v5759
      %6097 = vmatmul.mubr.bf16.gmra.mrb[0].mxu0 %v5758
      %v6098 = vpop.f32.mrb[0].mxu0
      %v6099 = vadd.f32 0.0, %v6098
      %v6100 = vpop.f32.mrb[0].mxu0
      %v6101 = vpop.f32.mrb[0].mxu0
      %v6102 = vadd.f32 0.0, %v6101
      %v6103 = vpop.f32.mrb[0].mxu0
      %6104 = vmatprep.mubr.bf16.mxu0 %v5762
      %6105 = vmatmul.mubr.bf16.gmra.mrb[0].mxu0 %v5761
      %v6106 = vpop.f32.mrb[0].mxu0
      %v6107 = vadd.f32 0.0, %v6106
      %v6108 = vpop.f32.mrb[0].mxu0
      %v6109 = vpop.f32.mrb[0].mxu0
      %v6110 = vadd.f32 0.0, %v6109
      %v6111 = vpop.f32.mrb[0].mxu0
      %6112 = vmatprep.mubr.bf16.mxu0 %v5765
      %6113 = vmatmul.mubr.bf16.gmra.mrb[0].mxu0 %v5764
      %v6114 = vpop.f32.mrb[0].mxu0
      %v6115 = vadd.f32 0.0, %v6114
      %v6116 = vpop.f32.mrb[0].mxu0
      %v6117 = vpop.f32.mrb[0].mxu0
      %v6118 = vadd.f32 0.0, %v6117
      %v6119 = vpop.f32.mrb[0].mxu0
      %6120 = vdwg.mxu0
      %6121 = vmatprep.subr.bf16.mxu0 0
      %6122 = vmatpush1.bf16.msra.mxu0 %v5928
      %6123 = vmatprep.subr.bf16.mxu0 0
      %6124 = vmatpush1.bf16.msra.mxu0 %v5929
      %6125 = vmatprep.subr.bf16.mxu0 0
      %6126 = vmatpush1.bf16.msra.mxu0 %v5930
      %6127 = vmatprep.subr.bf16.mxu0 0
      %6128 = vmatpush1.bf16.msra.mxu0 %v5931
      %6129 = vmatprep.subr.bf16.mxu0 0
      %6130 = vmatpush1.bf16.msra.mxu0 %v5932
      %6131 = vmatprep.subr.bf16.mxu0 0
      %6132 = vmatpush1.bf16.msra.mxu0 %v5933
      %6133 = vmatprep.subr.bf16.mxu0 0
      %6134 = vmatpush1.bf16.msra.mxu0 %v5934
      %6135 = vmatprep.subr.bf16.mxu0 0
      %6136 = vmatpush1.bf16.msra.mxu0 %v5935
      %6137 = vmatprep.subr.bf16.mxu0 0
      %6138 = vmatpush1.bf16.msra.mxu0 0
      %6139 = vmatprep.subr.bf16.mxu0 0
      %6140 = vmatpush1.bf16.msra.mxu0 0
      %6141 = vmatprep.subr.bf16.mxu0 0
      %6142 = vmatpush1.bf16.msra.mxu0 0
      %6143 = vmatprep.subr.bf16.mxu0 0
      %6144 = vmatpush1.bf16.msra.mxu0 0
      %6145 = vmatprep.subr.bf16.mxu0 0
      %6146 = vmatpush1.bf16.msra.mxu0 0
      %6147 = vmatprep.subr.bf16.mxu0 0
      %6148 = vmatpush1.bf16.msra.mxu0 0
      %6149 = vmatprep.subr.bf16.mxu0 0
      %6150 = vmatpush1.bf16.msra.mxu0 0
      %6151 = vmatprep.subr.bf16.mxu0 0
      %6152 = vmatpush1.bf16.msra.mxu0 0
      %6153 = vmatprep.mubr.bf16.mxu0 0
      %6154 = vmatmul.mubr.bf16.gmra.mrb[0].mxu0 %v5721
      %v6155 = vpop.f32.mrb[0].mxu0
      %v6156 = vadd.f32 %v5995, %v6155
      %v6157 = vpop.f32.mrb[0].mxu0
      %v6158 = vpop.f32.mrb[0].mxu0
      %v6159 = vadd.f32 %v5998, %v6158
      %v6160 = vpop.f32.mrb[0].mxu0
      %6161 = vmatprep.mubr.bf16.mxu0 0
      %6162 = vmatmul.mubr.bf16.gmra.mrb[0].mxu0 %v5724
      %v6163 = vpop.f32.mrb[0].mxu0
      %v6164 = vadd.f32 %v6003, %v6163
      %v6165 = vpop.f32.mrb[0].mxu0
      %v6166 = vpop.f32.mrb[0].mxu0
      %v6167 = vadd.f32 %v6006, %v6166
      %v6168 = vpop.f32.mrb[0].mxu0
      %6169 = vmatprep.mubr.bf16.mxu0 0
      %6170 = vmatmul.mubr.bf16.gmra.mrb[0].mxu0 %v5727
      %v6171 = vpop.f32.mrb[0].mxu0
      %v6172 = vadd.f32 %v6011, %v6171
      %v6173 = vpop.f32.mrb[0].mxu0
      %v6174 = vpop.f32.mrb[0].mxu0
      %v6175 = vadd.f32 %v6014, %v6174
      %v6176 = vpop.f32.mrb[0].mxu0
      %6177 = vmatprep.mubr.bf16.mxu0 0
      %6178 = vmatmul.mubr.bf16.gmra.mrb[0].mxu0 %v5730
      %v6179 = vpop.f32.mrb[0].mxu0
      %v6180 = vadd.f32 %v6019, %v6179
      %v6181 = vpop.f32.mrb[0].mxu0
      %v6182 = vpop.f32.mrb[0].mxu0
      %v6183 = vadd.f32 %v6022, %v6182
      %v6184 = vpop.f32.mrb[0].mxu0
      %6185 = vmatprep.mubr.bf16.mxu0 0
      %6186 = vmatmul.mubr.bf16.gmra.mrb[0].mxu0 %v5733
      %v6187 = vpop.f32.mrb[0].mxu0
      %v6188 = vadd.f32 %v6027, %v6187
      %v6189 = vpop.f32.mrb[0].mxu0
      %v6190 = vpop.f32.mrb[0].mxu0
      %v6191 = vadd.f32 %v6030, %v6190
      %v6192 = vpop.f32.mrb[0].mxu0
      %6193 = vmatprep.mubr.bf16.mxu0 0
      %6194 = vmatmul.mubr.bf16.gmra.mrb[0].mxu0 %v5736
      %v6195 = vpop.f32.mrb[0].mxu0
      %v6196 = vadd.f32 %v6035, %v6195
      %v6197 = vpop.f32.mrb[0].mxu0
      %v6198 = vpop.f32.mrb[0].mxu0
      %v6199 = vadd.f32 %v6038, %v6198
      %v6200 = vpop.f32.mrb[0].mxu0
      %6201 = vmatprep.mubr.bf16.mxu0 0
      %6202 = vmatmul.mubr.bf16.gmra.mrb[0].mxu0 %v5739
      %v6203 = vpop.f32.mrb[0].mxu0
      %v6204 = vadd.f32 %v6043, %v6203
      %v6205 = vpop.f32.mrb[0].mxu0
      %v6206 = vpop.f32.mrb[0].mxu0
      %v6207 = vadd.f32 %v6046, %v6206
      %v6208 = vpop.f32.mrb[0].mxu0
      %6209 = vmatprep.mubr.bf16.mxu0 0
      %6210 = vmatmul.mubr.bf16.gmra.mrb[0].mxu0 %v5742
      %v6211 = vpop.f32.mrb[0].mxu0
      %v6212 = vadd.f32 %v6051, %v6211
      %v6213 = vpop.f32.mrb[0].mxu0
      %v6214 = vpop.f32.mrb[0].mxu0
      %v6215 = vadd.f32 %v6054, %v6214
      %v6216 = vpop.f32.mrb[0].mxu0
      %6217 = vmatprep.mubr.bf16.mxu0 0
      %6218 = vmatmul.mubr.bf16.gmra.mrb[0].mxu0 %v5745
      %v6219 = vpop.f32.mrb[0].mxu0
      %v6220 = vadd.f32 %v6059, %v6219
      %v6221 = vpop.f32.mrb[0].mxu0
      %v6222 = vpop.f32.mrb[0].mxu0
      %v6223 = vadd.f32 %v6062, %v6222
      %v6224 = vpop.f32.mrb[0].mxu0
      %6225 = vmatprep.mubr.bf16.mxu0 0
      %6226 = vmatmul.mubr.bf16.gmra.mrb[0].mxu0 %v5748
      %v6227 = vpop.f32.mrb[0].mxu0
      %v6228 = vadd.f32 %v6067, %v6227
      %v6229 = vpop.f32.mrb[0].mxu0
      %v6230 = vpop.f32.mrb[0].mxu0
      %v6231 = vadd.f32 %v6070, %v6230
      %v6232 = vpop.f32.mrb[0].mxu0
      %6233 = vmatprep.mubr.bf16.mxu0 0
      %6234 = vmatmul.mubr.bf16.gmra.mrb[0].mxu0 %v5751
      %v6235 = vpop.f32.mrb[0].mxu0
      %v6236 = vadd.f32 %v6075, %v6235
      %v6237 = vpop.f32.mrb[0].mxu0
      %v6238 = vpop.f32.mrb[0].mxu0
      %v6239 = vadd.f32 %v6078, %v6238
      %v6240 = vpop.f32.mrb[0].mxu0
      %6241 = vmatprep.mubr.bf16.mxu0 0
      %6242 = vmatmul.mubr.bf16.gmra.mrb[0].mxu0 %v5754
      %v6243 = vpop.f32.mrb[0].mxu0
      %v6244 = vadd.f32 %v6083, %v6243
      %v6245 = vpop.f32.mrb[0].mxu0
      %v6246 = vpop.f32.mrb[0].mxu0
      %v6247 = vadd.f32 %v6086, %v6246
      %v6248 = vpop.f32.mrb[0].mxu0
      %6249 = vmatprep.mubr.bf16.mxu0 0
      %6250 = vmatmul.mubr.bf16.gmra.mrb[0].mxu0 %v5757
      %v6251 = vpop.f32.mrb[0].mxu0
      %v6252 = vadd.f32 %v6091, %v6251
      %v6253 = vpop.f32.mrb[0].mxu0
      %v6254 = vpop.f32.mrb[0].mxu0
      %v6255 = vadd.f32 %v6094, %v6254
      %v6256 = vpop.f32.mrb[0].mxu0
      %6257 = vmatprep.mubr.bf16.mxu0 0
      %6258 = vmatmul.mubr.bf16.gmra.mrb[0].mxu0 %v5760
      %v6259 = vpop.f32.mrb[0].mxu0
      %v6260 = vadd.f32 %v6099, %v6259
      %v6261 = vpop.f32.mrb[0].mxu0
      %v6262 = vpop.f32.mrb[0].mxu0
      %v6263 = vadd.f32 %v6102, %v6262
      %v6264 = vpop.f32.mrb[0].mxu0
      %6265 = vmatprep.mubr.bf16.mxu0 0
      %6266 = vmatmul.mubr.bf16.gmra.mrb[0].mxu0 %v5763
      %v6267 = vpop.f32.mrb[0].mxu0
      %v6268 = vadd.f32 %v6107, %v6267
      %v6269 = vpop.f32.mrb[0].mxu0
      %v6270 = vpop.f32.mrb[0].mxu0
      %v6271 = vadd.f32 %v6110, %v6270
      %v6272 = vpop.f32.mrb[0].mxu0
      %6273 = vmatprep.mubr.bf16.mxu0 0
      %6274 = vmatmul.mubr.bf16.gmra.mrb[0].mxu0 %v5766
      %v6275 = vpop.f32.mrb[0].mxu0
      %v6276 = vadd.f32 %v6115, %v6275
      %v6277 = vpop.f32.mrb[0].mxu0
      %v6278 = vpop.f32.mrb[0].mxu0
      %v6279 = vadd.f32 %v6118, %v6278
      %v6280 = vpop.f32.mrb[0].mxu0
      %6281 = vdwg.mxu0
      %v6282 = vadd.f32 %v5401, %v6156
      %v6283 = vadd.f32 %v5404, %v6159
      %v6284 = vadd.f32 %v5409, %v6164
      %v6285 = vadd.f32 %v5412, %v6167
      %v6286 = vadd.f32 %v5417, %v6172
      %v6287 = vadd.f32 %v5420, %v6175
      %v6288 = vadd.f32 %v5425, %v6180
      %v6289 = vadd.f32 %v5428, %v6183
      %v6290 = vadd.f32 %v5433, %v6188
      %v6291 = vadd.f32 %v5436, %v6191
      %v6292 = vadd.f32 %v5441, %v6196
      %v6293 = vadd.f32 %v5444, %v6199
      %v6294 = vadd.f32 %v5449, %v6204
      %v6295 = vadd.f32 %v5452, %v6207
      %v6296 = vadd.f32 %v5457, %v6212
      %v6297 = vadd.f32 %v5460, %v6215
      %v6298 = vadd.f32 %v5465, %v6220
      %v6299 = vadd.f32 %v5468, %v6223
      %v6300 = vadd.f32 %v5473, %v6228
      %v6301 = vadd.f32 %v5476, %v6231
      %v6302 = vadd.f32 %v5481, %v6236
      %v6303 = vadd.f32 %v5484, %v6239
      %v6304 = vadd.f32 %v5489, %v6244
      %v6305 = vadd.f32 %v5492, %v6247
      %v6306 = vadd.f32 %v5497, %v6252
      %v6307 = vadd.f32 %v5500, %v6255
      %v6308 = vadd.f32 %v5505, %v6260
      %v6309 = vadd.f32 %v5508, %v6263
      %v6310 = vadd.f32 %v5513, %v6268
      %v6311 = vadd.f32 %v5516, %v6271
      %v6312 = vadd.f32 %v5521, %v6276
      %v6313 = vadd.f32 %v5524, %v6279
      %v6314 = vld [vmem:[%s4] sm:$0x1]
      %v6316 = vlaneseq
      %v6317 = vshrl.u32 %v6316, 7
      %v6318 = vsub.s32 0, %v6317
      %v6319 = vrot.slane %v6314, %v6318
      %v6321 = vadd.f32 %v6282, %v6319
      %v6322 = vadd.f32 %v6283, %v6319
      %v6323 = vadd.f32 %v6284, %v6319
      %v6324 = vadd.f32 %v6285, %v6319
      %v6325 = vadd.f32 %v6286, %v6319
      %v6326 = vadd.f32 %v6287, %v6319
      %v6327 = vadd.f32 %v6288, %v6319
      %v6328 = vadd.f32 %v6289, %v6319
      %v6329 = vadd.f32 %v6290, %v6319
      %v6330 = vadd.f32 %v6291, %v6319
      %v6331 = vadd.f32 %v6292, %v6319
      %v6332 = vadd.f32 %v6293, %v6319
      %v6333 = vadd.f32 %v6294, %v6319
      %v6334 = vadd.f32 %v6295, %v6319
      %v6335 = vadd.f32 %v6296, %v6319
      %v6336 = vadd.f32 %v6297, %v6319
      %v6337 = vadd.f32 %v6298, %v6319
      %v6338 = vadd.f32 %v6299, %v6319
      %v6339 = vadd.f32 %v6300, %v6319
      %v6340 = vadd.f32 %v6301, %v6319
      %v6341 = vadd.f32 %v6302, %v6319
      %v6342 = vadd.f32 %v6303, %v6319
      %v6343 = vadd.f32 %v6304, %v6319
      %v6344 = vadd.f32 %v6305, %v6319
      %v6345 = vadd.f32 %v6306, %v6319
      %v6346 = vadd.f32 %v6307, %v6319
      %v6347 = vadd.f32 %v6308, %v6319
      %v6348 = vadd.f32 %v6309, %v6319
      %v6349 = vadd.f32 %v6310, %v6319
      %v6350 = vadd.f32 %v6311, %v6319
      %v6351 = vadd.f32 %v6312, %v6319
      %v6352 = vadd.f32 %v6313, %v6319
      %v6353 = vadd.f32 %v6321, %v6322
      %v6354 = vadd.f32 %v6353, %v6323
      %v6355 = vadd.f32 %v6354, %v6324
      %v6356 = vadd.f32 %v6355, %v6325
      %v6357 = vadd.f32 %v6356, %v6326
      %v6358 = vadd.f32 %v6357, %v6327
      %v6359 = vadd.f32 %v6358, %v6328
      %v6360 = vadd.f32 %v6359, %v6329
      %v6361 = vadd.f32 %v6360, %v6330
      %v6362 = vadd.f32 %v6361, %v6331
      %v6363 = vadd.f32 %v6362, %v6332
      %v6364 = vadd.f32 %v6363, %v6333
      %v6365 = vadd.f32 %v6364, %v6334
      %v6366 = vadd.f32 %v6365, %v6335
      %v6367 = vadd.f32 %v6366, %v6336
      %v6368 = vadd.f32 %v6367, %v6337
      %v6369 = vadd.f32 %v6368, %v6338
      %v6370 = vadd.f32 %v6369, %v6339
      %v6371 = vadd.f32 %v6370, %v6340
      %v6372 = vadd.f32 %v6371, %v6341
      %v6373 = vadd.f32 %v6372, %v6342
      %v6374 = vadd.f32 %v6373, %v6343
      %v6375 = vadd.f32 %v6374, %v6344
      %v6376 = vadd.f32 %v6375, %v6345
      %v6377 = vadd.f32 %v6376, %v6346
      %v6378 = vadd.f32 %v6377, %v6347
      %v6379 = vadd.f32 %v6378, %v6348
      %v6380 = vadd.f32 %v6379, %v6349
      %v6381 = vadd.f32 %v6380, %v6350
      %v6382 = vadd.f32 %v6381, %v6351
      %v6383 = vadd.f32 %v6382, %v6352
      %v6384 = vrot.slane %v6383, 4
      %v6385 = vadd.f32 %v6383, %v6384
      %v6386 = vrot.slane %v6385, 2
      %v6387 = vadd.f32 %v6385, %v6386
      %v6388 = vrot.slane %v6387, 1
      %v6389 = vadd.f32 %v6387, %v6388
      %v6390 = vmul.f32 %v6389, 0.00390625
      %v6391 = vsub.f32 %v6321, %v6390
      %v6392 = vsub.f32 %v6322, %v6390
      %v6393 = vsub.f32 %v6323, %v6390
      %v6394 = vsub.f32 %v6324, %v6390
      %v6395 = vsub.f32 %v6325, %v6390
      %v6396 = vsub.f32 %v6326, %v6390
      %v6397 = vsub.f32 %v6327, %v6390
      %v6398 = vsub.f32 %v6328, %v6390
      %v6399 = vsub.f32 %v6329, %v6390
      %v6400 = vsub.f32 %v6330, %v6390
      %v6401 = vsub.f32 %v6331, %v6390
      %v6402 = vsub.f32 %v6332, %v6390
      %v6403 = vsub.f32 %v6333, %v6390
      %v6404 = vsub.f32 %v6334, %v6390
      %v6405 = vsub.f32 %v6335, %v6390
      %v6406 = vsub.f32 %v6336, %v6390
      %v6407 = vsub.f32 %v6337, %v6390
      %v6408 = vsub.f32 %v6338, %v6390
      %v6409 = vsub.f32 %v6339, %v6390
      %v6410 = vsub.f32 %v6340, %v6390
      %v6411 = vsub.f32 %v6341, %v6390
      %v6412 = vsub.f32 %v6342, %v6390
      %v6413 = vsub.f32 %v6343, %v6390
      %v6414 = vsub.f32 %v6344, %v6390
      %v6415 = vsub.f32 %v6345, %v6390
      %v6416 = vsub.f32 %v6346, %v6390
      %v6417 = vsub.f32 %v6347, %v6390
      %v6418 = vsub.f32 %v6348, %v6390
      %v6419 = vsub.f32 %v6349, %v6390
      %v6420 = vsub.f32 %v6350, %v6390
      %v6421 = vsub.f32 %v6351, %v6390
      %v6422 = vsub.f32 %v6352, %v6390
      %v6423 = vmul.f32 %v6391, %v6391
      %v6424 = vmul.f32 %v6392, %v6392
      %v6425 = vmul.f32 %v6393, %v6393
      %v6426 = vmul.f32 %v6394, %v6394
      %v6427 = vmul.f32 %v6395, %v6395
      %v6428 = vmul.f32 %v6396, %v6396
      %v6429 = vmul.f32 %v6397, %v6397
      %v6430 = vmul.f32 %v6398, %v6398
      %v6431 = vmul.f32 %v6399, %v6399
      %v6432 = vmul.f32 %v6400, %v6400
      %v6433 = vmul.f32 %v6401, %v6401
      %v6434 = vmul.f32 %v6402, %v6402
      %v6435 = vmul.f32 %v6403, %v6403
      %v6436 = vmul.f32 %v6404, %v6404
      %v6437 = vmul.f32 %v6405, %v6405
      %v6438 = vmul.f32 %v6406, %v6406
      %v6439 = vmul.f32 %v6407, %v6407
      %v6440 = vmul.f32 %v6408, %v6408
      %v6441 = vmul.f32 %v6409, %v6409
      %v6442 = vmul.f32 %v6410, %v6410
      %v6443 = vmul.f32 %v6411, %v6411
      %v6444 = vmul.f32 %v6412, %v6412
      %v6445 = vmul.f32 %v6413, %v6413
      %v6446 = vmul.f32 %v6414, %v6414
      %v6447 = vmul.f32 %v6415, %v6415
      %v6448 = vmul.f32 %v6416, %v6416
      %v6449 = vmul.f32 %v6417, %v6417
      %v6450 = vmul.f32 %v6418, %v6418
      %v6451 = vmul.f32 %v6419, %v6419
      %v6452 = vmul.f32 %v6420, %v6420
      %v6453 = vmul.f32 %v6421, %v6421
      %v6454 = vmul.f32 %v6422, %v6422
      %v6455 = vadd.f32 %v6423, %v6424
      %v6456 = vadd.f32 %v6455, %v6425
      %v6457 = vadd.f32 %v6456, %v6426
      %v6458 = vadd.f32 %v6457, %v6427
      %v6459 = vadd.f32 %v6458, %v6428
      %v6460 = vadd.f32 %v6459, %v6429
      %v6461 = vadd.f32 %v6460, %v6430
      %v6462 = vadd.f32 %v6461, %v6431
      %v6463 = vadd.f32 %v6462, %v6432
      %v6464 = vadd.f32 %v6463, %v6433
      %v6465 = vadd.f32 %v6464, %v6434
      %v6466 = vadd.f32 %v6465, %v6435
      %v6467 = vadd.f32 %v6466, %v6436
      %v6468 = vadd.f32 %v6467, %v6437
      %v6469 = vadd.f32 %v6468, %v6438
      %v6470 = vadd.f32 %v6469, %v6439
      %v6471 = vadd.f32 %v6470, %v6440
      %v6472 = vadd.f32 %v6471, %v6441
      %v6473 = vadd.f32 %v6472, %v6442
      %v6474 = vadd.f32 %v6473, %v6443
      %v6475 = vadd.f32 %v6474, %v6444
      %v6476 = vadd.f32 %v6475, %v6445
      %v6477 = vadd.f32 %v6476, %v6446
      %v6478 = vadd.f32 %v6477, %v6447
      %v6479 = vadd.f32 %v6478, %v6448
      %v6480 = vadd.f32 %v6479, %v6449
      %v6481 = vadd.f32 %v6480, %v6450
      %v6482 = vadd.f32 %v6481, %v6451
      %v6483 = vadd.f32 %v6482, %v6452
      %v6484 = vadd.f32 %v6483, %v6453
      %v6485 = vadd.f32 %v6484, %v6454
      %v6486 = vrot.slane %v6485, 4
      %v6487 = vadd.f32 %v6485, %v6486
      %v6488 = vrot.slane %v6487, 2
      %v6489 = vadd.f32 %v6487, %v6488
      %v6490 = vrot.slane %v6489, 1
      %v6491 = vadd.f32 %v6489, %v6490
      %v6492 = vmul.f32 %v6491, 0.00390625
      %v6493 = vadd.f32 %v6492, 1e-05
      %v6494 = vrsqrt.pop %v6493
      %v6495 = vmul.f32 %v6391, %v6494
      %v6496 = vmul.f32 %v6392, %v6494
      %v6497 = vmul.f32 %v6393, %v6494
      %v6498 = vmul.f32 %v6394, %v6494
      %v6499 = vmul.f32 %v6395, %v6494
      %v6500 = vmul.f32 %v6396, %v6494
      %v6501 = vmul.f32 %v6397, %v6494
      %v6502 = vmul.f32 %v6398, %v6494
      %v6503 = vmul.f32 %v6399, %v6494
      %v6504 = vmul.f32 %v6400, %v6494
      %v6505 = vmul.f32 %v6401, %v6494
      %v6506 = vmul.f32 %v6402, %v6494
      %v6507 = vmul.f32 %v6403, %v6494
      %v6508 = vmul.f32 %v6404, %v6494
      %v6509 = vmul.f32 %v6405, %v6494
      %v6510 = vmul.f32 %v6406, %v6494
      %v6511 = vmul.f32 %v6407, %v6494
      %v6512 = vmul.f32 %v6408, %v6494
      %v6513 = vmul.f32 %v6409, %v6494
      %v6514 = vmul.f32 %v6410, %v6494
      %v6515 = vmul.f32 %v6411, %v6494
      %v6516 = vmul.f32 %v6412, %v6494
      %v6517 = vmul.f32 %v6413, %v6494
      %v6518 = vmul.f32 %v6414, %v6494
      %v6519 = vmul.f32 %v6415, %v6494
      %v6520 = vmul.f32 %v6416, %v6494
      %v6521 = vmul.f32 %v6417, %v6494
      %v6522 = vmul.f32 %v6418, %v6494
      %v6523 = vmul.f32 %v6419, %v6494
      %v6524 = vmul.f32 %v6420, %v6494
      %v6525 = vmul.f32 %v6421, %v6494
      %v6526 = vmul.f32 %v6422, %v6494
      %v6527 = vadd.f32 %v226, %v6495
      %v6528 = vadd.f32 %v227, %v6496
      %v6529 = vadd.f32 %v228, %v6497
      %v6530 = vadd.f32 %v229, %v6498
      %v6531 = vadd.f32 %v230, %v6499
      %v6532 = vadd.f32 %v231, %v6500
      %v6533 = vadd.f32 %v232, %v6501
      %v6534 = vadd.f32 %v233, %v6502
      %v6535 = vadd.f32 %v234, %v6503
      %v6536 = vadd.f32 %v235, %v6504
      %v6537 = vadd.f32 %v236, %v6505
      %v6538 = vadd.f32 %v237, %v6506
      %v6539 = vadd.f32 %v238, %v6507
      %v6540 = vadd.f32 %v239, %v6508
      %v6541 = vadd.f32 %v240, %v6509
      %v6542 = vadd.f32 %v241, %v6510
      %v6543 = vadd.f32 %v242, %v6511
      %v6544 = vadd.f32 %v243, %v6512
      %v6545 = vadd.f32 %v244, %v6513
      %v6546 = vadd.f32 %v245, %v6514
      %v6547 = vadd.f32 %v246, %v6515
      %v6548 = vadd.f32 %v247, %v6516
      %v6549 = vadd.f32 %v248, %v6517
      %v6550 = vadd.f32 %v249, %v6518
      %v6551 = vadd.f32 %v250, %v6519
      %v6552 = vadd.f32 %v251, %v6520
      %v6553 = vadd.f32 %v252, %v6521
      %v6554 = vadd.f32 %v253, %v6522
      %v6555 = vadd.f32 %v254, %v6523
      %v6556 = vadd.f32 %v255, %v6524
      %v6557 = vadd.f32 %v256, %v6525
      %v6558 = vadd.f32 %v257, %v6526
      %6559 = vst [vmem:[%s224] sm:$0xff] %v6527
      %6560 = vst [vmem:[%s224 + $0x8] sm:$0xff] %v6528
      %6561 = vst [vmem:[%s224 + $0x10] sm:$0xff] %v6529
      %6562 = vst [vmem:[%s224 + $0x18] sm:$0xff] %v6530
      %6563 = vst [vmem:[%s224 + $0x20] sm:$0xff] %v6531
      %6564 = vst [vmem:[%s224 + $0x28] sm:$0xff] %v6532
      %6565 = vst [vmem:[%s224 + $0x30] sm:$0xff] %v6533
      %6566 = vst [vmem:[%s224 + $0x38] sm:$0xff] %v6534
      %6567 = vst [vmem:[%s224 + $0x40] sm:$0xff] %v6535
      %6568 = vst [vmem:[%s224 + $0x48] sm:$0xff] %v6536
      %6569 = vst [vmem:[%s224 + $0x50] sm:$0xff] %v6537
      %6570 = vst [vmem:[%s224 + $0x58] sm:$0xff] %v6538
      %6571 = vst [vmem:[%s224 + $0x60] sm:$0xff] %v6539
      %6572 = vst [vmem:[%s224 + $0x68] sm:$0xff] %v6540
      %6573 = vst [vmem:[%s224 + $0x70] sm:$0xff] %v6541
      %6574 = vst [vmem:[%s224 + $0x78] sm:$0xff] %v6542
      %6575 = vst [vmem:[%s224 + $0x80] sm:$0xff] %v6543
      %6576 = vst [vmem:[%s224 + $0x88] sm:$0xff] %v6544
      %6577 = vst [vmem:[%s224 + $0x90] sm:$0xff] %v6545
      %6578 = vst [vmem:[%s224 + $0x98] sm:$0xff] %v6546
      %6579 = vst [vmem:[%s224 + $0xa0] sm:$0xff] %v6547
      %6580 = vst [vmem:[%s224 + $0xa8] sm:$0xff] %v6548
      %6581 = vst [vmem:[%s224 + $0xb0] sm:$0xff] %v6549
      %6582 = vst [vmem:[%s224 + $0xb8] sm:$0xff] %v6550
      %6583 = vst [vmem:[%s224 + $0xc0] sm:$0xff] %v6551
      %6584 = vst [vmem:[%s224 + $0xc8] sm:$0xff] %v6552
      %6585 = vst [vmem:[%s224 + $0xd0] sm:$0xff] %v6553
      %6586 = vst [vmem:[%s224 + $0xd8] sm:$0xff] %v6554
      %6587 = vst [vmem:[%s224 + $0xe0] sm:$0xff] %v6555
      %6588 = vst [vmem:[%s224 + $0xe8] sm:$0xff] %v6556
      %6589 = vst [vmem:[%s224 + $0xf0] sm:$0xff] %v6557
      %6590 = vst [vmem:[%s224 + $0xf8] sm:$0xff] %v6558
      %p6591 = scmp.lt.s32.totalorder %s16, 1
      %s6592 = scalar_select %p6591, %s16, 1
      %s6593 = smul.addr %s6592, 32
      %s6594 = smul.addr %s6593, 8
      %s6595 = scalar_lea.vmem %s5, %s6594
      // Predicated region
      $region41: #{residual_block_nhwc.1} parent=39 // pred_check
        %p6596 = pneg %p144
      $region42: #{residual_block_nhwc.1} parent=39 // pred_check_branch
        %6598 = sbr.rel (%p6596) target = $region44
      $region43: #{residual_block_nhwc.1} parent=39 // pred_region
        _
      $region44: #{residual_block_nhwc.1} parent=39 // pred_fallthru
        _
    $region40: #{residual_block_nhwc.1} parent=5 // pred_fallthru
      _
    %p6599 = scmp.le.s32.totalorder 2, %s11
    // Predicated region
    $region45: #{residual_block_nhwc.1} parent=5 // pred_check
      %p6600 = pneg %p6599
    $region46: #{residual_block_nhwc.1} parent=5 // pred_check_branch
      %6602 = sbr.rel (%p6600) target = $region48
    $region47: #{residual_block_nhwc.1} parent=5 // pred_region
      %s6603 = ssub.s32 %s11, 2
      // Predicated region
      $region49: #{residual_block_nhwc.1} parent=47 // pred_check
        %p6604 = pneg %p150
      $region50: #{residual_block_nhwc.1} parent=47 // pred_check_branch
        %6606 = sbr.rel (%p6604) target = $region52
      $region51: #{residual_block_nhwc.1} parent=47 // pred_region
        %p6607 = scmp.lt.s32.totalorder %s17, 1
        %s6608 = scalar_select %p6607, %s17, 1
        %s6609 = smul.addr %s6608, 32
        %s6610 = smul.addr %s6609, 8
        %s6611 = scalar_lea.vmem %s5, %s6610
      $region52: #{residual_block_nhwc.1} parent=47 // pred_fallthru
        _
    $region48: #{residual_block_nhwc.1} parent=5 // pred_fallthru
      _
  $region6: #{residual_block_nhwc.1} parent=0 // loop_footer
    %s15 = sadd.s32 1, %s11
  $region7: #{residual_block_nhwc.1} parent=0 // loop_footer_branch
    %10 = sbr.rel target = $region3
  $region8: #{residual_block_nhwc.1} parent=0 // loop_exit
    _

</llo_original>
